<compile_context>
chip_gen: v7x
topology: tpu7x:2x2x1
jax: 0.10.0
libtpu: 0.0.40
codegen_flags: <defaults>
</compile_context>

<pallas_src>
import jax
import jax.numpy as jnp
from jax.experimental import pallas as pl
from jax.experimental.pallas import tpu as pltpu


TK1 = 1280                                   # layer-1 K tile (lane-aligned, grid_k = 2)
K1 = 2 * 1081                                # 2162 input features after concat
K1_PAD = ((K1 + TK1 - 1) // TK1) * TK1       # 2560
M_TILE_MAX = 256                             # batch tile for the leading grid axis
ACT_DTYPE = jnp.bfloat16                     # activation dtype fed to the MXU

LAYER_DIMS = [
    (K1, 2048),
    (2048, 512),
    (512, 512),
    (512, 512),
    (512, 256),
    (256, 256),
    (256, 128),
    (128, 64),
    (64, 64),
    (64, 1),
]


def _dequant_bf16(ref):
    """int8 weight ref -> bf16 values (exact: |q| <= 127). Two-step cast for
    lowering safety; runs on the idle VPU."""
    return ref[...].astype(jnp.float32).astype(jnp.bfloat16)


def _fused_kernel(*refs):
    """Whole-network kernel.

    refs = (x, w1_q, s1, b1, (w_q, s, b) * 9, out, acc_scratch)

    Grid = (m_tiles, k_tiles). The k axis streams layer-1's int8 weight in
    1280-wide tiles into an f32 VMEM accumulator; on the last k step the
    per-column scale + bias + ReLU are applied and the 9 VMEM-resident tail
    layers run back-to-back, ending with the sigmoid output write.
    """
    x_ref, w1_ref, s1_ref, b1_ref = refs[:4]
    rest = refs[4:-2]                      # (w_q, scale, bias) * 9
    o_ref, acc_ref = refs[-2], refs[-1]

    k = pl.program_id(1)

    @pl.when(k == 0)
    def _():
        acc_ref[...] = jnp.zeros_like(acc_ref)

    acc_ref[...] += jnp.dot(
        x_ref[...], _dequant_bf16(w1_ref), preferred_element_type=jnp.float32
    )

    @pl.when(k == pl.num_programs(1) - 1)
    def _():
        # Layer-1 epilogue: per-column dequant scale + bias + ReLU (all f32).
        h = jnp.maximum(acc_ref[...] * s1_ref[...] + b1_ref[...], 0.0)
        n_rest = len(rest) // 3
        for i in range(n_rest):
            w_ref, s_ref, b_ref = rest[3 * i], rest[3 * i + 1], rest[3 * i + 2]
            y = jnp.dot(
                h.astype(ACT_DTYPE), _dequant_bf16(w_ref),
                preferred_element_type=jnp.float32,
            ) * s_ref[...] + b_ref[...]
            if i < n_rest - 1:
                h = jnp.maximum(y, 0.0)                              # fc2..fc9
            else:
                o_ref[...] = jax.nn.sigmoid(y).astype(o_ref.dtype)   # fc10


def naive_net_fused(x_padded, params, m_tile):
    """x_padded: (M, K1_PAD) bf16, M a multiple of m_tile. Returns (M, 1) f32."""
    M = x_padded.shape[0]
    w1_q, s1, b1 = params[0]
    N1 = w1_q.shape[1]
    n_k = K1_PAD // TK1
    n_m = M // m_tile

    def _resident(shape):
        # Constant-index block: fetched once, VMEM-resident across the grid.
        return pl.BlockSpec(shape, lambda m, k: (0,) * len(shape))

    in_specs = [
        pl.BlockSpec((m_tile, TK1), lambda m, k: (m, k)),   # x tiles (streamed)
        pl.BlockSpec((TK1, N1), lambda m, k: (k, 0)),       # layer-1 int8 weight tiles
        _resident((1, N1)),                                 # layer-1 column scales
        _resident((1, N1)),                                 # layer-1 bias
    ]
    flat_args = [x_padded, w1_q, s1, b1]
    for (wq, s, b) in params[1:]:
        kd, nd = wq.shape
        in_specs += [_resident((kd, nd)), _resident((1, nd)), _resident((1, nd))]
        flat_args += [wq, s, b]

    return pl.pallas_call(
        _fused_kernel,
        out_shape=jax.ShapeDtypeStruct((M, 1), jnp.float32),
        grid_spec=pltpu.PrefetchScalarGridSpec(
            num_scalar_prefetch=0,
            grid=(n_m, n_k),
            in_specs=in_specs,
            out_specs=pl.BlockSpec((m_tile, 1), lambda m, k: (m, 0)),
            scratch_shapes=[pltpu.VMEM((m_tile, N1), jnp.float32)],
        ),
        compiler_params=pltpu.CompilerParams(
            # m axis independent ("parallel" -> megacore / v7x dual-TC when
            # batched); k axis is the layer-1 reduction -> must stay arbitrary.
            dimension_semantics=("parallel", "arbitrary"),
            vmem_limit_bytes=40 * 1024 * 1024,
        ),
    )(*flat_args)


# ---------------------------------------------------------------------------
# Parameter construction: PyTorch-Linear-style uniform init, then symmetric
# per-output-column int8 quantization (weights stored as (K, N), i.e. x @ W.T
# in PyTorch terms). Layer-1 weight is K-padded once here, not per forward.
# ---------------------------------------------------------------------------

def _quantize_per_column(w):
    amax = jnp.max(jnp.abs(w), axis=0, keepdims=True)          # (1, N)
    scale = jnp.maximum(amax, 1e-8) / 127.0
    w_q = jnp.clip(jnp.round(w / scale), -127, 127).astype(jnp.int8)
    return w_q, scale.astype(jnp.float32)


def init_params(key):
    params = []
    for li, (fan_in, fan_out) in enumerate(LAYER_DIMS):
        key, kw, kb = jax.random.split(key, 3)
        bound = 1.0 / (fan_in ** 0.5)
        w = jax.random.uniform(kw, (fan_in, fan_out), jnp.float32, -bound, bound)
        b = jax.random.uniform(kb, (fan_out,), jnp.float32, -bound, bound)
        if li == 0:
            w = jnp.pad(w, ((0, K1_PAD - fan_in), (0, 0)))  # zero rows: no-op in dot
        w_q, scale = _quantize_per_column(w)
        params.append((w_q, scale, b.reshape(1, fan_out).astype(jnp.float32)))
    return params


def naive_net_forward(params, db_item_emb, query_emb):
    # torch.cat(db_item_emb, query_emb) -> concat along the feature axis.
    # TODO(synk): for very large batches, pre-concatenate/pad upstream (or pass
    # the two embeddings with their own BlockSpecs) to drop this extra XLA copy.
    x = jnp.concatenate([db_item_emb, query_emb], axis=-1)       # (B, 2162)
    B, K = x.shape
    M = ((B + 7) // 8) * 8                                        # sublane-align batch
    if M > M_TILE_MAX:
        m_tile = M_TILE_MAX
        M = ((M + m_tile - 1) // m_tile) * m_tile                 # multiple of m_tile
    else:
        m_tile = M
    x = jnp.pad(x, ((0, M - B), (0, K1_PAD - K))).astype(ACT_DTYPE)
    out = naive_net_fused(x, params, m_tile)
    return out[:B]                                                # (B, 1) sim_score


def _reference_forward(params, db_item_emb, query_emb):
    """Pure-jnp reference mirroring the kernel's int8-dequant / bf16-dot /
    f32-accumulate numerics."""
    x = jnp.concatenate([db_item_emb, query_emb], axis=-1)
    x = jnp.pad(x, ((0, 0), (0, K1_PAD - x.shape[1]))).astype(ACT_DTYPE)
    h = x
    n = len(params)
    for i, (w_q, scale, b) in enumerate(params):
        y = jnp.dot(h.astype(ACT_DTYPE), w_q.astype(jnp.bfloat16),
                    preferred_element_type=jnp.float32) * scale + b
        h = jnp.maximum(y, 0.0) if i < n - 1 else jax.nn.sigmoid(y)
    return h


if __name__ == "__main__":
    key = jax.random.PRNGKey(0)
    kp, kd, kq = jax.random.split(key, 3)

    params = init_params(kp)

    # Small primary check (single m tile, grid = (1, 2)).
    B = 4
    db_item_emb = jax.random.normal(kd, (B, 1081), jnp.float32)
    query_emb = jax.random.normal(kq, (B, 1081), jnp.float32)

    sim_score = naive_net_forward(params, db_item_emb, query_emb)
    sim_score = jax.block_until_ready(sim_score)

    assert sim_score.shape == (B, 1)
    assert bool(jnp.all(jnp.isfinite(sim_score)))
    assert bool(jnp.all((sim_score >= 0.0) & (sim_score <= 1.0)))

    ref = _reference_forward(params, db_item_emb, query_emb)
    assert bool(jnp.all(jnp.abs(sim_score - ref) < 2e-2)), "mismatch vs reference"

    # Batched / M-tiled path (amortizes the weight stream; exercises the
    # "parallel" m grid axis with 2 tiles of 256).
    kd2, kq2 = jax.random.split(jax.random.PRNGKey(1), 2)
    B2 = 300
    db2 = jax.random.normal(kd2, (B2, 1081), jnp.float32)
    q2 = jax.random.normal(kq2, (B2, 1081), jnp.float32)
    out2 = jax.block_until_ready(naive_net_forward(params, db2, q2))
    assert out2.shape == (B2, 1)
    ref2 = _reference_forward(params, db2, q2)
    assert bool(jnp.all(jnp.abs(out2 - ref2) < 2e-2)), "mismatch vs reference (batched)"

    print("KERNEL_OK")
</pallas_src>

<mosaic_0001>
module attributes {stable_mosaic.version = 11 : i64} {
  func.func @_fused_kernel(%arg0: i32, %arg1: i32, %arg2: memref<8x1280xbf16, #tpu.memory_space<vmem>>, %arg3: memref<1280x2048xi8, #tpu.memory_space<vmem>>, %arg4: memref<1x2048xf32, #tpu.memory_space<vmem>>, %arg5: memref<1x2048xf32, #tpu.memory_space<vmem>>, %arg6: memref<2048x512xi8, #tpu.memory_space<vmem>>, %arg7: memref<1x512xf32, #tpu.memory_space<vmem>>, %arg8: memref<1x512xf32, #tpu.memory_space<vmem>>, %arg9: memref<512x512xi8, #tpu.memory_space<vmem>>, %arg10: memref<1x512xf32, #tpu.memory_space<vmem>>, %arg11: memref<1x512xf32, #tpu.memory_space<vmem>>, %arg12: memref<512x512xi8, #tpu.memory_space<vmem>>, %arg13: memref<1x512xf32, #tpu.memory_space<vmem>>, %arg14: memref<1x512xf32, #tpu.memory_space<vmem>>, %arg15: memref<512x256xi8, #tpu.memory_space<vmem>>, %arg16: memref<1x256xf32, #tpu.memory_space<vmem>>, %arg17: memref<1x256xf32, #tpu.memory_space<vmem>>, %arg18: memref<256x256xi8, #tpu.memory_space<vmem>>, %arg19: memref<1x256xf32, #tpu.memory_space<vmem>>, %arg20: memref<1x256xf32, #tpu.memory_space<vmem>>, %arg21: memref<256x128xi8, #tpu.memory_space<vmem>>, %arg22: memref<1x128xf32, #tpu.memory_space<vmem>>, %arg23: memref<1x128xf32, #tpu.memory_space<vmem>>, %arg24: memref<128x64xi8, #tpu.memory_space<vmem>>, %arg25: memref<1x64xf32, #tpu.memory_space<vmem>>, %arg26: memref<1x64xf32, #tpu.memory_space<vmem>>, %arg27: memref<64x64xi8, #tpu.memory_space<vmem>>, %arg28: memref<1x64xf32, #tpu.memory_space<vmem>>, %arg29: memref<1x64xf32, #tpu.memory_space<vmem>>, %arg30: memref<64x1xi8, #tpu.memory_space<vmem>>, %arg31: memref<1x1xf32, #tpu.memory_space<vmem>>, %arg32: memref<1x1xf32, #tpu.memory_space<vmem>>, %arg33: memref<8x1xf32, #tpu.memory_space<vmem>>, %arg34: memref<8x2048xf32, #tpu.memory_space<vmem>>) attributes {dimension_semantics = [#tpu.dimension_semantics<parallel>, #tpu.dimension_semantics<arbitrary>], iteration_bounds = array<i64: 1, 2>, scalar_prefetch = 0 : i64, scratch_operands = 1 : i64, tpu.core_type = #tpu.core_type<tc>, window_params = [{transform_indices = @transform_0, window_bounds = array<i64: 8, 1280>}, {transform_indices = @transform_1, window_bounds = array<i64: 1280, 2048>}, {pipeline_mode = #tpu.pipeline_mode<synchronous>, transform_indices = @transform_2, window_bounds = array<i64: 1, 2048>}, {pipeline_mode = #tpu.pipeline_mode<synchronous>, transform_indices = @transform_3, window_bounds = array<i64: 1, 2048>}, {pipeline_mode = #tpu.pipeline_mode<synchronous>, transform_indices = @transform_4, window_bounds = array<i64: 2048, 512>}, {pipeline_mode = #tpu.pipeline_mode<synchronous>, transform_indices = @transform_5, window_bounds = array<i64: 1, 512>}, {pipeline_mode = #tpu.pipeline_mode<synchronous>, transform_indices = @transform_6, window_bounds = array<i64: 1, 512>}, {pipeline_mode = #tpu.pipeline_mode<synchronous>, transform_indices = @transform_7, window_bounds = array<i64: 512, 512>}, {pipeline_mode = #tpu.pipeline_mode<synchronous>, transform_indices = @transform_8, window_bounds = array<i64: 1, 512>}, {pipeline_mode = #tpu.pipeline_mode<synchronous>, transform_indices = @transform_9, window_bounds = array<i64: 1, 512>}, {pipeline_mode = #tpu.pipeline_mode<synchronous>, transform_indices = @transform_10, window_bounds = array<i64: 512, 512>}, {pipeline_mode = #tpu.pipeline_mode<synchronous>, transform_indices = @transform_11, window_bounds = array<i64: 1, 512>}, {pipeline_mode = #tpu.pipeline_mode<synchronous>, transform_indices = @transform_12, window_bounds = array<i64: 1, 512>}, {pipeline_mode = #tpu.pipeline_mode<synchronous>, transform_indices = @transform_13, window_bounds = array<i64: 512, 256>}, {pipeline_mode = #tpu.pipeline_mode<synchronous>, transform_indices = @transform_14, window_bounds = array<i64: 1, 256>}, {pipeline_mode = #tpu.pipeline_mode<synchronous>, transform_indices = @transform_15, window_bounds = array<i64: 1, 256>}, {pipeline_mode = #tpu.pipeline_mode<synchronous>, transform_indices = @transform_16, window_bounds = array<i64: 256, 256>}, {pipeline_mode = #tpu.pipeline_mode<synchronous>, transform_indices = @transform_17, window_bounds = array<i64: 1, 256>}, {pipeline_mode = #tpu.pipeline_mode<synchronous>, transform_indices = @transform_18, window_bounds = array<i64: 1, 256>}, {pipeline_mode = #tpu.pipeline_mode<synchronous>, transform_indices = @transform_19, window_bounds = array<i64: 256, 128>}, {pipeline_mode = #tpu.pipeline_mode<synchronous>, transform_indices = @transform_20, window_bounds = array<i64: 1, 128>}, {pipeline_mode = #tpu.pipeline_mode<synchronous>, transform_indices = @transform_21, window_bounds = array<i64: 1, 128>}, {pipeline_mode = #tpu.pipeline_mode<synchronous>, transform_indices = @transform_22, window_bounds = array<i64: 128, 64>}, {pipeline_mode = #tpu.pipeline_mode<synchronous>, transform_indices = @transform_23, window_bounds = array<i64: 1, 64>}, {pipeline_mode = #tpu.pipeline_mode<synchronous>, transform_indices = @transform_24, window_bounds = array<i64: 1, 64>}, {pipeline_mode = #tpu.pipeline_mode<synchronous>, transform_indices = @transform_25, window_bounds = array<i64: 64, 64>}, {pipeline_mode = #tpu.pipeline_mode<synchronous>, transform_indices = @transform_26, window_bounds = array<i64: 1, 64>}, {pipeline_mode = #tpu.pipeline_mode<synchronous>, transform_indices = @transform_27, window_bounds = array<i64: 1, 64>}, {pipeline_mode = #tpu.pipeline_mode<synchronous>, transform_indices = @transform_28, window_bounds = array<i64: 64, 1>}, {pipeline_mode = #tpu.pipeline_mode<synchronous>, transform_indices = @transform_29, window_bounds = array<i64: 1, 1>}, {pipeline_mode = #tpu.pipeline_mode<synchronous>, transform_indices = @transform_30, window_bounds = array<i64: 1, 1>}, {transform_indices = @transform_31, window_bounds = array<i64: 8, 1>}]} {
    %c0_i32 = arith.constant 0 : i32
    %0 = arith.cmpi eq, %arg1, %c0_i32 : i32
    %1 = arith.extui %0 : i1 to i32
    %c0_i32_0 = arith.constant 0 : i32
    %2 = arith.cmpi ne, %1, %c0_i32_0 : i32
    scf.if %2 {
      %cst_9 = arith.constant 0.000000e+00 : f32
      %14 = vector.broadcast %cst_9 : f32 to vector<8x2048xf32>
      %c0_10 = arith.constant 0 : index
      %c0_11 = arith.constant 0 : index
      %15 = vector.load %arg34[%c0_10, %c0_11] : memref<8x2048xf32, #tpu.memory_space<vmem>>, vector<8x2048xf32>
      tpu.vector_store %arg34[%c0_10, %c0_11], %14 {strides = array<i32>} : memref<8x2048xf32, #tpu.memory_space<vmem>>, vector<8x2048xf32>,
    } else {
    }
    %c0 = arith.constant 0 : index
    %c0_1 = arith.constant 0 : index
    %3 = vector.load %arg34[%c0, %c0_1] : memref<8x2048xf32, #tpu.memory_space<vmem>>, vector<8x2048xf32>
    %c0_2 = arith.constant 0 : index
    %c0_3 = arith.constant 0 : index
    %4 = vector.load %arg2[%c0_2, %c0_3] : memref<8x1280xbf16, #tpu.memory_space<vmem>>, vector<8x1280xbf16>
    %c0_4 = arith.constant 0 : index
    %c0_5 = arith.constant 0 : index
    %5 = vector.load %arg3[%c0_4, %c0_5] : memref<1280x2048xi8, #tpu.memory_space<vmem>>, vector<1280x2048xi8>
    %6 = arith.sitofp %5 : vector<1280x2048xi8> to vector<1280x2048xf32>
    %7 = arith.truncf %6 : vector<1280x2048xf32> to vector<1280x2048xbf16>
    %cst = arith.constant dense<0.000000e+00> : vector<8x2048xf32>
    %8 = tpu.matmul %4, %7, %cst {dimension_numbers = #tpu.dot_dimension_numbers<[1], [0], [0], [1], [0, 0, 1, 1], [], []>} : vector<8x1280xbf16>, vector<1280x2048xbf16>, vector<8x2048xf32> -> vector<8x2048xf32>
    %9 = arith.addf %3, %8 : vector<8x2048xf32>
    %c0_6 = arith.constant 0 : index
    %c0_7 = arith.constant 0 : index
    %10 = vector.load %arg34[%c0_6, %c0_7] : memref<8x2048xf32, #tpu.memory_space<vmem>>, vector<8x2048xf32>
    tpu.vector_store %arg34[%c0_6, %c0_7], %9 {strides = array<i32>} : memref<8x2048xf32, #tpu.memory_space<vmem>>, vector<8x2048xf32>,
    %c1_i32 = arith.constant 1 : i32
    %11 = arith.cmpi eq, %arg1, %c1_i32 : i32
    %12 = arith.extui %11 : i1 to i32
    %c0_i32_8 = arith.constant 0 : i32
    %13 = arith.cmpi ne, %12, %c0_i32_8 : i32
    scf.if %13 {
      %c0_9 = arith.constant 0 : index
      %c0_10 = arith.constant 0 : index
      %14 = vector.load %arg34[%c0_9, %c0_10] : memref<8x2048xf32, #tpu.memory_space<vmem>>, vector<8x2048xf32>
      %c0_11 = arith.constant 0 : index
      %c0_12 = arith.constant 0 : index
      %15 = vector.load %arg4[%c0_11, %c0_12] : memref<1x2048xf32, #tpu.memory_space<vmem>>, vector<1x2048xf32>
      %16 = vector.broadcast %15 : vector<1x2048xf32> to vector<8x2048xf32>
      %17 = arith.mulf %14, %16 : vector<8x2048xf32>
      %c0_13 = arith.constant 0 : index
      %c0_14 = arith.constant 0 : index
      %18 = vector.load %arg5[%c0_13, %c0_14] : memref<1x2048xf32, #tpu.memory_space<vmem>>, vector<1x2048xf32>
      %19 = vector.broadcast %18 : vector<1x2048xf32> to vector<8x2048xf32>
      %20 = arith.addf %17, %19 : vector<8x2048xf32>
      %cst_15 = arith.constant 0.000000e+00 : f32
      %21 = vector.broadcast %cst_15 : f32 to vector<8x2048xf32>
      %22 = arith.maximumf %20, %21 : vector<8x2048xf32>
      %23 = arith.truncf %22 : vector<8x2048xf32> to vector<8x2048xbf16>
      %c0_16 = arith.constant 0 : index
      %c0_17 = arith.constant 0 : index
      %24 = vector.load %arg6[%c0_16, %c0_17] : memref<2048x512xi8, #tpu.memory_space<vmem>>, vector<2048x512xi8>
      %25 = arith.sitofp %24 : vector<2048x512xi8> to vector<2048x512xf32>
      %26 = arith.truncf %25 : vector<2048x512xf32> to vector<2048x512xbf16>
      %cst_18 = arith.constant dense<0.000000e+00> : vector<8x512xf32>
      %27 = tpu.matmul %23, %26, %cst_18 {dimension_numbers = #tpu.dot_dimension_numbers<[1], [0], [0], [1], [0, 0, 1, 1], [], []>} : vector<8x2048xbf16>, vector<2048x512xbf16>, vector<8x512xf32> -> vector<8x512xf32>
      %c0_19 = arith.constant 0 : index
      %c0_20 = arith.constant 0 : index
      %28 = vector.load %arg7[%c0_19, %c0_20] : memref<1x512xf32, #tpu.memory_space<vmem>>, vector<1x512xf32>
      %29 = vector.broadcast %28 : vector<1x512xf32> to vector<8x512xf32>
      %30 = arith.mulf %27, %29 : vector<8x512xf32>
      %c0_21 = arith.constant 0 : index
      %c0_22 = arith.constant 0 : index
      %31 = vector.load %arg8[%c0_21, %c0_22] : memref<1x512xf32, #tpu.memory_space<vmem>>, vector<1x512xf32>
      %32 = vector.broadcast %31 : vector<1x512xf32> to vector<8x512xf32>
      %33 = arith.addf %30, %32 : vector<8x512xf32>
      %cst_23 = arith.constant 0.000000e+00 : f32
      %34 = vector.broadcast %cst_23 : f32 to vector<8x512xf32>
      %35 = arith.maximumf %33, %34 : vector<8x512xf32>
      %36 = arith.truncf %35 : vector<8x512xf32> to vector<8x512xbf16>
      %c0_24 = arith.constant 0 : index
      %c0_25 = arith.constant 0 : index
      %37 = vector.load %arg9[%c0_24, %c0_25] : memref<512x512xi8, #tpu.memory_space<vmem>>, vector<512x512xi8>
      %38 = arith.sitofp %37 : vector<512x512xi8> to vector<512x512xf32>
      %39 = arith.truncf %38 : vector<512x512xf32> to vector<512x512xbf16>
      %cst_26 = arith.constant dense<0.000000e+00> : vector<8x512xf32>
      %40 = tpu.matmul %36, %39, %cst_26 {dimension_numbers = #tpu.dot_dimension_numbers<[1], [0], [0], [1], [0, 0, 1, 1], [], []>} : vector<8x512xbf16>, vector<512x512xbf16>, vector<8x512xf32> -> vector<8x512xf32>
      %c0_27 = arith.constant 0 : index
      %c0_28 = arith.constant 0 : index
      %41 = vector.load %arg10[%c0_27, %c0_28] : memref<1x512xf32, #tpu.memory_space<vmem>>, vector<1x512xf32>
      %42 = vector.broadcast %41 : vector<1x512xf32> to vector<8x512xf32>
      %43 = arith.mulf %40, %42 : vector<8x512xf32>
      %c0_29 = arith.constant 0 : index
      %c0_30 = arith.constant 0 : index
      %44 = vector.load %arg11[%c0_29, %c0_30] : memref<1x512xf32, #tpu.memory_space<vmem>>, vector<1x512xf32>
      %45 = vector.broadcast %44 : vector<1x512xf32> to vector<8x512xf32>
      %46 = arith.addf %43, %45 : vector<8x512xf32>
      %cst_31 = arith.constant 0.000000e+00 : f32
      %47 = vector.broadcast %cst_31 : f32 to vector<8x512xf32>
      %48 = arith.maximumf %46, %47 : vector<8x512xf32>
      %49 = arith.truncf %48 : vector<8x512xf32> to vector<8x512xbf16>
      %c0_32 = arith.constant 0 : index
      %c0_33 = arith.constant 0 : index
      %50 = vector.load %arg12[%c0_32, %c0_33] : memref<512x512xi8, #tpu.memory_space<vmem>>, vector<512x512xi8>
      %51 = arith.sitofp %50 : vector<512x512xi8> to vector<512x512xf32>
      %52 = arith.truncf %51 : vector<512x512xf32> to vector<512x512xbf16>
      %cst_34 = arith.constant dense<0.000000e+00> : vector<8x512xf32>
      %53 = tpu.matmul %49, %52, %cst_34 {dimension_numbers = #tpu.dot_dimension_numbers<[1], [0], [0], [1], [0, 0, 1, 1], [], []>} : vector<8x512xbf16>, vector<512x512xbf16>, vector<8x512xf32> -> vector<8x512xf32>
      %c0_35 = arith.constant 0 : index
      %c0_36 = arith.constant 0 : index
      %54 = vector.load %arg13[%c0_35, %c0_36] : memref<1x512xf32, #tpu.memory_space<vmem>>, vector<1x512xf32>
      %55 = vector.broadcast %54 : vector<1x512xf32> to vector<8x512xf32>
      %56 = arith.mulf %53, %55 : vector<8x512xf32>
      %c0_37 = arith.constant 0 : index
      %c0_38 = arith.constant 0 : index
      %57 = vector.load %arg14[%c0_37, %c0_38] : memref<1x512xf32, #tpu.memory_space<vmem>>, vector<1x512xf32>
      %58 = vector.broadcast %57 : vector<1x512xf32> to vector<8x512xf32>
      %59 = arith.addf %56, %58 : vector<8x512xf32>
      %cst_39 = arith.constant 0.000000e+00 : f32
      %60 = vector.broadcast %cst_39 : f32 to vector<8x512xf32>
      %61 = arith.maximumf %59, %60 : vector<8x512xf32>
      %62 = arith.truncf %61 : vector<8x512xf32> to vector<8x512xbf16>
      %c0_40 = arith.constant 0 : index
      %c0_41 = arith.constant 0 : index
      %63 = vector.load %arg15[%c0_40, %c0_41] : memref<512x256xi8, #tpu.memory_space<vmem>>, vector<512x256xi8>
      %64 = arith.sitofp %63 : vector<512x256xi8> to vector<512x256xf32>
      %65 = arith.truncf %64 : vector<512x256xf32> to vector<512x256xbf16>
      %cst_42 = arith.constant dense<0.000000e+00> : vector<8x256xf32>
      %66 = tpu.matmul %62, %65, %cst_42 {dimension_numbers = #tpu.dot_dimension_numbers<[1], [0], [0], [1], [0, 0, 1, 1], [], []>} : vector<8x512xbf16>, vector<512x256xbf16>, vector<8x256xf32> -> vector<8x256xf32>
      %c0_43 = arith.constant 0 : index
      %c0_44 = arith.constant 0 : index
      %67 = vector.load %arg16[%c0_43, %c0_44] : memref<1x256xf32, #tpu.memory_space<vmem>>, vector<1x256xf32>
      %68 = vector.broadcast %67 : vector<1x256xf32> to vector<8x256xf32>
      %69 = arith.mulf %66, %68 : vector<8x256xf32>
      %c0_45 = arith.constant 0 : index
      %c0_46 = arith.constant 0 : index
      %70 = vector.load %arg17[%c0_45, %c0_46] : memref<1x256xf32, #tpu.memory_space<vmem>>, vector<1x256xf32>
      %71 = vector.broadcast %70 : vector<1x256xf32> to vector<8x256xf32>
      %72 = arith.addf %69, %71 : vector<8x256xf32>
      %cst_47 = arith.constant 0.000000e+00 : f32
      %73 = vector.broadcast %cst_47 : f32 to vector<8x256xf32>
      %74 = arith.maximumf %72, %73 : vector<8x256xf32>
      %75 = arith.truncf %74 : vector<8x256xf32> to vector<8x256xbf16>
      %c0_48 = arith.constant 0 : index
      %c0_49 = arith.constant 0 : index
      %76 = vector.load %arg18[%c0_48, %c0_49] : memref<256x256xi8, #tpu.memory_space<vmem>>, vector<256x256xi8>
      %77 = arith.sitofp %76 : vector<256x256xi8> to vector<256x256xf32>
      %78 = arith.truncf %77 : vector<256x256xf32> to vector<256x256xbf16>
      %cst_50 = arith.constant dense<0.000000e+00> : vector<8x256xf32>
      %79 = tpu.matmul %75, %78, %cst_50 {dimension_numbers = #tpu.dot_dimension_numbers<[1], [0], [0], [1], [0, 0, 1, 1], [], []>} : vector<8x256xbf16>, vector<256x256xbf16>, vector<8x256xf32> -> vector<8x256xf32>
      %c0_51 = arith.constant 0 : index
      %c0_52 = arith.constant 0 : index
      %80 = vector.load %arg19[%c0_51, %c0_52] : memref<1x256xf32, #tpu.memory_space<vmem>>, vector<1x256xf32>
      %81 = vector.broadcast %80 : vector<1x256xf32> to vector<8x256xf32>
      %82 = arith.mulf %79, %81 : vector<8x256xf32>
      %c0_53 = arith.constant 0 : index
      %c0_54 = arith.constant 0 : index
      %83 = vector.load %arg20[%c0_53, %c0_54] : memref<1x256xf32, #tpu.memory_space<vmem>>, vector<1x256xf32>
      %84 = vector.broadcast %83 : vector<1x256xf32> to vector<8x256xf32>
      %85 = arith.addf %82, %84 : vector<8x256xf32>
      %cst_55 = arith.constant 0.000000e+00 : f32
      %86 = vector.broadcast %cst_55 : f32 to vector<8x256xf32>
      %87 = arith.maximumf %85, %86 : vector<8x256xf32>
      %88 = arith.truncf %87 : vector<8x256xf32> to vector<8x256xbf16>
      %c0_56 = arith.constant 0 : index
      %c0_57 = arith.constant 0 : index
      %89 = vector.load %arg21[%c0_56, %c0_57] : memref<256x128xi8, #tpu.memory_space<vmem>>, vector<256x128xi8>
      %90 = arith.sitofp %89 : vector<256x128xi8> to vector<256x128xf32>
      %91 = arith.truncf %90 : vector<256x128xf32> to vector<256x128xbf16>
      %cst_58 = arith.constant dense<0.000000e+00> : vector<8x128xf32>
      %92 = tpu.matmul %88, %91, %cst_58 {dimension_numbers = #tpu.dot_dimension_numbers<[1], [0], [0], [1], [0, 0, 1, 1], [], []>} : vector<8x256xbf16>, vector<256x128xbf16>, vector<8x128xf32> -> vector<8x128xf32>
      %c0_59 = arith.constant 0 : index
      %c0_60 = arith.constant 0 : index
      %93 = vector.load %arg22[%c0_59, %c0_60] : memref<1x128xf32, #tpu.memory_space<vmem>>, vector<1x128xf32>
      %94 = vector.broadcast %93 : vector<1x128xf32> to vector<8x128xf32>
      %95 = arith.mulf %92, %94 : vector<8x128xf32>
      %c0_61 = arith.constant 0 : index
      %c0_62 = arith.constant 0 : index
      %96 = vector.load %arg23[%c0_61, %c0_62] : memref<1x128xf32, #tpu.memory_space<vmem>>, vector<1x128xf32>
      %97 = vector.broadcast %96 : vector<1x128xf32> to vector<8x128xf32>
      %98 = arith.addf %95, %97 : vector<8x128xf32>
      %cst_63 = arith.constant 0.000000e+00 : f32
      %99 = vector.broadcast %cst_63 : f32 to vector<8x128xf32>
      %100 = arith.maximumf %98, %99 : vector<8x128xf32>
      %101 = arith.truncf %100 : vector<8x128xf32> to vector<8x128xbf16>
      %c0_64 = arith.constant 0 : index
      %c0_65 = arith.constant 0 : index
      %102 = vector.load %arg24[%c0_64, %c0_65] : memref<128x64xi8, #tpu.memory_space<vmem>>, vector<128x64xi8>
      %103 = arith.sitofp %102 : vector<128x64xi8> to vector<128x64xf32>
      %104 = arith.truncf %103 : vector<128x64xf32> to vector<128x64xbf16>
      %cst_66 = arith.constant dense<0.000000e+00> : vector<8x64xf32>
      %105 = tpu.matmul %101, %104, %cst_66 {dimension_numbers = #tpu.dot_dimension_numbers<[1], [0], [0], [1], [0, 0, 1, 1], [], []>} : vector<8x128xbf16>, vector<128x64xbf16>, vector<8x64xf32> -> vector<8x64xf32>
      %c0_67 = arith.constant 0 : index
      %c0_68 = arith.constant 0 : index
      %106 = vector.load %arg25[%c0_67, %c0_68] : memref<1x64xf32, #tpu.memory_space<vmem>>, vector<1x64xf32>
      %107 = vector.broadcast %106 : vector<1x64xf32> to vector<8x64xf32>
      %108 = arith.mulf %105, %107 : vector<8x64xf32>
      %c0_69 = arith.constant 0 : index
      %c0_70 = arith.constant 0 : index
      %109 = vector.load %arg26[%c0_69, %c0_70] : memref<1x64xf32, #tpu.memory_space<vmem>>, vector<1x64xf32>
      %110 = vector.broadcast %109 : vector<1x64xf32> to vector<8x64xf32>
      %111 = arith.addf %108, %110 : vector<8x64xf32>
      %cst_71 = arith.constant 0.000000e+00 : f32
      %112 = vector.broadcast %cst_71 : f32 to vector<8x64xf32>
      %113 = arith.maximumf %111, %112 : vector<8x64xf32>
      %114 = arith.truncf %113 : vector<8x64xf32> to vector<8x64xbf16>
      %c0_72 = arith.constant 0 : index
      %c0_73 = arith.constant 0 : index
      %115 = vector.load %arg27[%c0_72, %c0_73] : memref<64x64xi8, #tpu.memory_space<vmem>>, vector<64x64xi8>
      %116 = arith.sitofp %115 : vector<64x64xi8> to vector<64x64xf32>
      %117 = arith.truncf %116 : vector<64x64xf32> to vector<64x64xbf16>
      %cst_74 = arith.constant dense<0.000000e+00> : vector<8x64xf32>
      %118 = tpu.matmul %114, %117, %cst_74 {dimension_numbers = #tpu.dot_dimension_numbers<[1], [0], [0], [1], [0, 0, 1, 1], [], []>} : vector<8x64xbf16>, vector<64x64xbf16>, vector<8x64xf32> -> vector<8x64xf32>
      %c0_75 = arith.constant 0 : index
      %c0_76 = arith.constant 0 : index
      %119 = vector.load %arg28[%c0_75, %c0_76] : memref<1x64xf32, #tpu.memory_space<vmem>>, vector<1x64xf32>
      %120 = vector.broadcast %119 : vector<1x64xf32> to vector<8x64xf32>
      %121 = arith.mulf %118, %120 : vector<8x64xf32>
      %c0_77 = arith.constant 0 : index
      %c0_78 = arith.constant 0 : index
      %122 = vector.load %arg29[%c0_77, %c0_78] : memref<1x64xf32, #tpu.memory_space<vmem>>, vector<1x64xf32>
      %123 = vector.broadcast %122 : vector<1x64xf32> to vector<8x64xf32>
      %124 = arith.addf %121, %123 : vector<8x64xf32>
      %cst_79 = arith.constant 0.000000e+00 : f32
      %125 = vector.broadcast %cst_79 : f32 to vector<8x64xf32>
      %126 = arith.maximumf %124, %125 : vector<8x64xf32>
      %127 = arith.truncf %126 : vector<8x64xf32> to vector<8x64xbf16>
      %c0_80 = arith.constant 0 : index
      %c0_81 = arith.constant 0 : index
      %128 = vector.load %arg30[%c0_80, %c0_81] : memref<64x1xi8, #tpu.memory_space<vmem>>, vector<64x1xi8>
      %129 = arith.sitofp %128 : vector<64x1xi8> to vector<64x1xf32>
      %130 = arith.truncf %129 : vector<64x1xf32> to vector<64x1xbf16>
      %cst_82 = arith.constant dense<0.000000e+00> : vector<8x1xf32>
      %131 = tpu.matmul %127, %130, %cst_82 {dimension_numbers = #tpu.dot_dimension_numbers<[1], [0], [0], [1], [0, 0, 1, 1], [], []>} : vector<8x64xbf16>, vector<64x1xbf16>, vector<8x1xf32> -> vector<8x1xf32>
      %c0_83 = arith.constant 0 : index
      %c0_84 = arith.constant 0 : index
      %132 = vector.load %arg31[%c0_83, %c0_84] : memref<1x1xf32, #tpu.memory_space<vmem>>, vector<1x1xf32>
      %133 = vector.broadcast %132 : vector<1x1xf32> to vector<8x1xf32>
      %134 = arith.mulf %131, %133 : vector<8x1xf32>
      %c0_85 = arith.constant 0 : index
      %c0_86 = arith.constant 0 : index
      %135 = vector.load %arg32[%c0_85, %c0_86] : memref<1x1xf32, #tpu.memory_space<vmem>>, vector<1x1xf32>
      %136 = vector.broadcast %135 : vector<1x1xf32> to vector<8x1xf32>
      %137 = arith.addf %134, %136 : vector<8x1xf32>
      %138 = arith.negf %137 : vector<8x1xf32>
      %139 = math.exp %138 : vector<8x1xf32>
      %cst_87 = arith.constant 1.000000e+00 : f32
      %140 = vector.broadcast %cst_87 : f32 to vector<8x1xf32>
      %141 = arith.addf %140, %139 : vector<8x1xf32>
      %142 = arith.divf %140, %141 : vector<8x1xf32>
      %c0_88 = arith.constant 0 : index
      %c0_89 = arith.constant 0 : index
      %143 = vector.load %arg33[%c0_88, %c0_89] : memref<8x1xf32, #tpu.memory_space<vmem>>, vector<8x1xf32>
      tpu.vector_store %arg33[%c0_88, %c0_89], %142 {strides = array<i32>} : memref<8x1xf32, #tpu.memory_space<vmem>>, vector<8x1xf32>,
    } else {
    }
    return
  }
  func.func @transform_0(%arg0: i32, %arg1: i32) -> (i32, i32) {
    %c0_i32 = arith.constant 0 : i32
    return %arg0, %arg1 : i32, i32
  }
  func.func @transform_1(%arg0: i32, %arg1: i32) -> (i32, i32) {
    %c0_i32 = arith.constant 0 : i32
    %c0_i32_0 = arith.constant 0 : i32
    return %arg1, %c0_i32 : i32, i32
  }
  func.func @transform_2(%arg0: i32, %arg1: i32) -> (i32, i32) {
    %c0_i32 = arith.constant 0 : i32
    %c0_i32_0 = arith.constant 0 : i32
    %c0_i32_1 = arith.constant 0 : i32
    return %c0_i32, %c0_i32_0 : i32, i32
  }
  func.func @transform_3(%arg0: i32, %arg1: i32) -> (i32, i32) {
    %c0_i32 = arith.constant 0 : i32
    %c0_i32_0 = arith.constant 0 : i32
    %c0_i32_1 = arith.constant 0 : i32
    return %c0_i32, %c0_i32_0 : i32, i32
  }
  func.func @transform_4(%arg0: i32, %arg1: i32) -> (i32, i32) {
    %c0_i32 = arith.constant 0 : i32
    %c0_i32_0 = arith.constant 0 : i32
    %c0_i32_1 = arith.constant 0 : i32
    return %c0_i32, %c0_i32_0 : i32, i32
  }
  func.func @transform_5(%arg0: i32, %arg1: i32) -> (i32, i32) {
    %c0_i32 = arith.constant 0 : i32
    %c0_i32_0 = arith.constant 0 : i32
    %c0_i32_1 = arith.constant 0 : i32
    return %c0_i32, %c0_i32_0 : i32, i32
  }
  func.func @transform_6(%arg0: i32, %arg1: i32) -> (i32, i32) {
    %c0_i32 = arith.constant 0 : i32
    %c0_i32_0 = arith.constant 0 : i32
    %c0_i32_1 = arith.constant 0 : i32
    return %c0_i32, %c0_i32_0 : i32, i32
  }
  func.func @transform_7(%arg0: i32, %arg1: i32) -> (i32, i32) {
    %c0_i32 = arith.constant 0 : i32
    %c0_i32_0 = arith.constant 0 : i32
    %c0_i32_1 = arith.constant 0 : i32
    return %c0_i32, %c0_i32_0 : i32, i32
  }
  func.func @transform_8(%arg0: i32, %arg1: i32) -> (i32, i32) {
    %c0_i32 = arith.constant 0 : i32
    %c0_i32_0 = arith.constant 0 : i32
    %c0_i32_1 = arith.constant 0 : i32
    return %c0_i32, %c0_i32_0 : i32, i32
  }
  func.func @transform_9(%arg0: i32, %arg1: i32) -> (i32, i32) {
    %c0_i32 = arith.constant 0 : i32
    %c0_i32_0 = arith.constant 0 : i32
    %c0_i32_1 = arith.constant 0 : i32
    return %c0_i32, %c0_i32_0 : i32, i32
  }
  func.func @transform_10(%arg0: i32, %arg1: i32) -> (i32, i32) {
    %c0_i32 = arith.constant 0 : i32
    %c0_i32_0 = arith.constant 0 : i32
    %c0_i32_1 = arith.constant 0 : i32
    return %c0_i32, %c0_i32_0 : i32, i32
  }
  func.func @transform_11(%arg0: i32, %arg1: i32) -> (i32, i32) {
    %c0_i32 = arith.constant 0 : i32
    %c0_i32_0 = arith.constant 0 : i32
    %c0_i32_1 = arith.constant 0 : i32
    return %c0_i32, %c0_i32_0 : i32, i32
  }
  func.func @transform_12(%arg0: i32, %arg1: i32) -> (i32, i32) {
    %c0_i32 = arith.constant 0 : i32
    %c0_i32_0 = arith.constant 0 : i32
    %c0_i32_1 = arith.constant 0 : i32
    return %c0_i32, %c0_i32_0 : i32, i32
  }
  func.func @transform_13(%arg0: i32, %arg1: i32) -> (i32, i32) {
    %c0_i32 = arith.constant 0 : i32
    %c0_i32_0 = arith.constant 0 : i32
    %c0_i32_1 = arith.constant 0 : i32
    return %c0_i32, %c0_i32_0 : i32, i32
  }
  func.func @transform_14(%arg0: i32, %arg1: i32) -> (i32, i32) {
    %c0_i32 = arith.constant 0 : i32
    %c0_i32_0 = arith.constant 0 : i32
    %c0_i32_1 = arith.constant 0 : i32
    return %c0_i32, %c0_i32_0 : i32, i32
  }
  func.func @transform_15(%arg0: i32, %arg1: i32) -> (i32, i32) {
    %c0_i32 = arith.constant 0 : i32
    %c0_i32_0 = arith.constant 0 : i32
    %c0_i32_1 = arith.constant 0 : i32
    return %c0_i32, %c0_i32_0 : i32, i32
  }
  func.func @transform_16(%arg0: i32, %arg1: i32) -> (i32, i32) {
    %c0_i32 = arith.constant 0 : i32
    %c0_i32_0 = arith.constant 0 : i32
    %c0_i32_1 = arith.constant 0 : i32
    return %c0_i32, %c0_i32_0 : i32, i32
  }
  func.func @transform_17(%arg0: i32, %arg1: i32) -> (i32, i32) {
    %c0_i32 = arith.constant 0 : i32
    %c0_i32_0 = arith.constant 0 : i32
    %c0_i32_1 = arith.constant 0 : i32
    return %c0_i32, %c0_i32_0 : i32, i32
  }
  func.func @transform_18(%arg0: i32, %arg1: i32) -> (i32, i32) {
    %c0_i32 = arith.constant 0 : i32
    %c0_i32_0 = arith.constant 0 : i32
    %c0_i32_1 = arith.constant 0 : i32
    return %c0_i32, %c0_i32_0 : i32, i32
  }
  func.func @transform_19(%arg0: i32, %arg1: i32) -> (i32, i32) {
    %c0_i32 = arith.constant 0 : i32
    %c0_i32_0 = arith.constant 0 : i32
    %c0_i32_1 = arith.constant 0 : i32
    return %c0_i32, %c0_i32_0 : i32, i32
  }
  func.func @transform_20(%arg0: i32, %arg1: i32) -> (i32, i32) {
    %c0_i32 = arith.constant 0 : i32
    %c0_i32_0 = arith.constant 0 : i32
    %c0_i32_1 = arith.constant 0 : i32
    return %c0_i32, %c0_i32_0 : i32, i32
  }
  func.func @transform_21(%arg0: i32, %arg1: i32) -> (i32, i32) {
    %c0_i32 = arith.constant 0 : i32
    %c0_i32_0 = arith.constant 0 : i32
    %c0_i32_1 = arith.constant 0 : i32
    return %c0_i32, %c0_i32_0 : i32, i32
  }
  func.func @transform_22(%arg0: i32, %arg1: i32) -> (i32, i32) {
    %c0_i32 = arith.constant 0 : i32
    %c0_i32_0 = arith.constant 0 : i32
    %c0_i32_1 = arith.constant 0 : i32
    return %c0_i32, %c0_i32_0 : i32, i32
  }
  func.func @transform_23(%arg0: i32, %arg1: i32) -> (i32, i32) {
    %c0_i32 = arith.constant 0 : i32
    %c0_i32_0 = arith.constant 0 : i32
    %c0_i32_1 = arith.constant 0 : i32
    return %c0_i32, %c0_i32_0 : i32, i32
  }
  func.func @transform_24(%arg0: i32, %arg1: i32) -> (i32, i32) {
    %c0_i32 = arith.constant 0 : i32
    %c0_i32_0 = arith.constant 0 : i32
    %c0_i32_1 = arith.constant 0 : i32
    return %c0_i32, %c0_i32_0 : i32, i32
  }
  func.func @transform_25(%arg0: i32, %arg1: i32) -> (i32, i32) {
    %c0_i32 = arith.constant 0 : i32
    %c0_i32_0 = arith.constant 0 : i32
    %c0_i32_1 = arith.constant 0 : i32
    return %c0_i32, %c0_i32_0 : i32, i32
  }
  func.func @transform_26(%arg0: i32, %arg1: i32) -> (i32, i32) {
    %c0_i32 = arith.constant 0 : i32
    %c0_i32_0 = arith.constant 0 : i32
    %c0_i32_1 = arith.constant 0 : i32
    return %c0_i32, %c0_i32_0 : i32, i32
  }
  func.func @transform_27(%arg0: i32, %arg1: i32) -> (i32, i32) {
    %c0_i32 = arith.constant 0 : i32
    %c0_i32_0 = arith.constant 0 : i32
    %c0_i32_1 = arith.constant 0 : i32
    return %c0_i32, %c0_i32_0 : i32, i32
  }
  func.func @transform_28(%arg0: i32, %arg1: i32) -> (i32, i32) {
    %c0_i32 = arith.constant 0 : i32
    %c0_i32_0 = arith.constant 0 : i32
    %c0_i32_1 = arith.constant 0 : i32
    return %c0_i32, %c0_i32_0 : i32, i32
  }
  func.func @transform_29(%arg0: i32, %arg1: i32) -> (i32, i32) {
    %c0_i32 = arith.constant 0 : i32
    %c0_i32_0 = arith.constant 0 : i32
    %c0_i32_1 = arith.constant 0 : i32
    return %c0_i32, %c0_i32_0 : i32, i32
  }
  func.func @transform_30(%arg0: i32, %arg1: i32) -> (i32, i32) {
    %c0_i32 = arith.constant 0 : i32
    %c0_i32_0 = arith.constant 0 : i32
    %c0_i32_1 = arith.constant 0 : i32
    return %c0_i32, %c0_i32_0 : i32, i32
  }
  func.func @transform_31(%arg0: i32, %arg1: i32) -> (i32, i32) {
    %c0_i32 = arith.constant 0 : i32
    %c0_i32_0 = arith.constant 0 : i32
    return %arg0, %c0_i32 : i32, i32
  }
}

</mosaic_0001>

<llo_original>
// kernel: tpu_custom_call.1
$region0: #{tpu_custom_call.1}
  #allocation0 [shape = 'u32[]', space=smem, size = 0x4, offset = 0x4, fixed_abs, tag = 'smem constant byte address 0x4 - core index']
  #allocation1 [shape = 'u32[144,128]{1,0:T(1,128)}', space=vmem, size = 0x12000, scoped, tag = 'internal scratch']
  #allocation2 [shape = 'f32[8,2048]{1,0:T(8,128)}', space=vmem, size = 0x10000, scoped, tag = 'scratch operand']
  #allocation3 [shape = 'f32[1,1]{1,0:T(1,128)S(1)}', space=vmem, size = 0x200, scoped, tag = 'scoped memory for tpu_custom_call.1']
  #allocation4 [shape = 'f32[1,1]{1,0:T(1,128)S(1)}', space=vmem, size = 0x200, scoped, tag = 'scoped memory for tpu_custom_call.1']
  %s0 = inlined_call_operand.smem [shape: u32[32], index: -1, kind: input, shape index: {}]
  %s1 = sld [smem:[%s0]]
  %s2 = scalar_lea.smem %s0, 1
  %s3 = sld [smem:[%s2]]
  %s4 = scalar_lea.smem %s0, 2
  %s5 = sld [smem:[%s4]]
  %s6 = scalar_lea.smem %s0, 3
  %s7 = sld [smem:[%s6]]
  %s8 = scalar_lea.smem %s0, 4
  %s9 = sld [smem:[%s8]]
  %s10 = scalar_lea.smem %s0, 5
  %s11 = sld [smem:[%s10]]
  %s12 = scalar_lea.smem %s0, 6
  %s13 = sld [smem:[%s12]]
  %s14 = scalar_lea.smem %s0, 7
  %s15 = sld [smem:[%s14]]
  %s16 = scalar_lea.smem %s0, 8
  %s17 = sld [smem:[%s16]]
  %s18 = scalar_lea.smem %s0, 9
  %s19 = sld [smem:[%s18]]
  %s20 = scalar_lea.smem %s0, 10
  %s21 = sld [smem:[%s20]]
  %s22 = scalar_lea.smem %s0, 11
  %s23 = sld [smem:[%s22]]
  %s24 = scalar_lea.smem %s0, 12
  %s25 = sld [smem:[%s24]]
  %s26 = scalar_lea.smem %s0, 13
  %s27 = sld [smem:[%s26]]
  %s28 = scalar_lea.smem %s0, 14
  %s29 = sld [smem:[%s28]]
  %s30 = scalar_lea.smem %s0, 15
  %s31 = sld [smem:[%s30]]
  %s32 = scalar_lea.smem %s0, 16
  %s33 = sld [smem:[%s32]]
  %s34 = scalar_lea.smem %s0, 17
  %s35 = sld [smem:[%s34]]
  %s36 = scalar_lea.smem %s0, 18
  %s37 = sld [smem:[%s36]]
  %s38 = scalar_lea.smem %s0, 19
  %s39 = sld [smem:[%s38]]
  %s40 = scalar_lea.smem %s0, 20
  %s41 = sld [smem:[%s40]]
  %s42 = scalar_lea.smem %s0, 21
  %s43 = sld [smem:[%s42]]
  %s44 = scalar_lea.smem %s0, 22
  %s45 = sld [smem:[%s44]]
  %s46 = scalar_lea.smem %s0, 23
  %s47 = sld [smem:[%s46]]
  %s48 = scalar_lea.smem %s0, 24
  %s49 = sld [smem:[%s48]]
  %s50 = scalar_lea.smem %s0, 25
  %s51 = sld [smem:[%s50]]
  %s52 = scalar_lea.smem %s0, 26
  %s53 = sld [smem:[%s52]]
  %s54 = scalar_lea.smem %s0, 27
  %s55 = sld [smem:[%s54]]
  %s56 = scalar_lea.smem %s0, 28
  %s57 = sld [smem:[%s56]]
  %s58 = scalar_lea.smem %s0, 29
  %s59 = sld [smem:[%s58]]
  %s60 = scalar_lea.smem %s0, 30
  %s61 = sld [smem:[%s60]]
  %s62 = scalar_lea.smem %s0, 31
  %s63 = sld [smem:[%s62]]
  %s64 = sld [smem:[#allocation0]]
  $region273: #{tpu_custom_call.1} parent=0
    _
  %s66 = ssub.s32 1, %s64
  %s67 = scalar_select 0, %s66, %s64
  %v68 = vstv %s59
  %69 = vst [vmem:[#allocation3] sm:$0x1] %v68
  %v70 = vstv %s61
  %71 = vst [vmem:[#allocation4] sm:$0x1] %v70
  $region1: #{tpu_custom_call.1} parent=0
    #allocation5 [shape = 'u8[40960]{0}', space=vmem, size = 0xa000, scoped, tag = 'input window, operand 0']
    #allocation6 [shape = 's32[2]{0}', space=sflag, size = 0x8, scoped, tag = 'scoped memory for tpu_custom_call.1']
    #allocation7 [shape = 'u8[5242880]{0}', space=vmem, size = 0x500000, scoped, tag = 'input window, operand 1']
    #allocation8 [shape = 's32[2]{0}', space=sflag, size = 0x8, scoped, tag = 'scoped memory for tpu_custom_call.1']
    #allocation9 [shape = 'u8[8192]{0}', space=vmem, size = 0x2000, scoped, tag = 'input window, operand 2, single buffered']
    #allocation10 [shape = 'u8[8192]{0}', space=vmem, size = 0x2000, scoped, tag = 'input window, operand 3, single buffered']
    #allocation11 [shape = 's32[1]{0}', space=sflag, size = 0x4, scoped, tag = 'scoped memory for tpu_custom_call.1']
    #allocation12 [shape = 'u8[1048576]{0}', space=vmem, size = 0x100000, scoped, tag = 'input window, operand 4, single buffered']
    #allocation13 [shape = 'u8[2048]{0}', space=vmem, size = 0x800, scoped, tag = 'input window, operand 5, single buffered']
    #allocation14 [shape = 's32[1]{0}', space=sflag, size = 0x4, scoped, tag = 'scoped memory for tpu_custom_call.1']
    #allocation15 [shape = 'u8[2048]{0}', space=vmem, size = 0x800, scoped, tag = 'input window, operand 6, single buffered']
    #allocation16 [shape = 'u8[262144]{0}', space=vmem, size = 0x40000, scoped, tag = 'input window, operand 7, single buffered']
    #allocation17 [shape = 's32[1]{0}', space=sflag, size = 0x4, scoped, tag = 'scoped memory for tpu_custom_call.1']
    #allocation18 [shape = 'u8[2048]{0}', space=vmem, size = 0x800, scoped, tag = 'input window, operand 8, single buffered']
    #allocation19 [shape = 'u8[2048]{0}', space=vmem, size = 0x800, scoped, tag = 'input window, operand 9, single buffered']
    #allocation20 [shape = 's32[1]{0}', space=sflag, size = 0x4, scoped, tag = 'scoped memory for tpu_custom_call.1']
    #allocation21 [shape = 'u8[262144]{0}', space=vmem, size = 0x40000, scoped, tag = 'input window, operand 10, single buffered']
    #allocation22 [shape = 'u8[2048]{0}', space=vmem, size = 0x800, scoped, tag = 'input window, operand 11, single buffered']
    #allocation23 [shape = 's32[1]{0}', space=sflag, size = 0x4, scoped, tag = 'scoped memory for tpu_custom_call.1']
    #allocation24 [shape = 'u8[2048]{0}', space=vmem, size = 0x800, scoped, tag = 'input window, operand 12, single buffered']
    #allocation25 [shape = 'u8[131072]{0}', space=vmem, size = 0x20000, scoped, tag = 'input window, operand 13, single buffered']
    #allocation26 [shape = 's32[1]{0}', space=sflag, size = 0x4, scoped, tag = 'scoped memory for tpu_custom_call.1']
    #allocation27 [shape = 'u8[1024]{0}', space=vmem, size = 0x400, scoped, tag = 'input window, operand 14, single buffered']
    #allocation28 [shape = 'u8[1024]{0}', space=vmem, size = 0x400, scoped, tag = 'input window, operand 15, single buffered']
    #allocation29 [shape = 's32[1]{0}', space=sflag, size = 0x4, scoped, tag = 'scoped memory for tpu_custom_call.1']
    #allocation30 [shape = 'u8[65536]{0}', space=vmem, size = 0x10000, scoped, tag = 'input window, operand 16, single buffered']
    #allocation31 [shape = 'u8[1024]{0}', space=vmem, size = 0x400, scoped, tag = 'input window, operand 17, single buffered']
    #allocation32 [shape = 's32[1]{0}', space=sflag, size = 0x4, scoped, tag = 'scoped memory for tpu_custom_call.1']
    #allocation33 [shape = 'u8[1024]{0}', space=vmem, size = 0x400, scoped, tag = 'input window, operand 18, single buffered']
    #allocation34 [shape = 'u8[32768]{0}', space=vmem, size = 0x8000, scoped, tag = 'input window, operand 19, single buffered']
    #allocation35 [shape = 's32[1]{0}', space=sflag, size = 0x4, scoped, tag = 'scoped memory for tpu_custom_call.1']
    #allocation36 [shape = 'u8[512]{0}', space=vmem, size = 0x400, scoped, tag = 'input window, operand 20, single buffered']
    #allocation37 [shape = 'u8[512]{0}', space=vmem, size = 0x400, scoped, tag = 'input window, operand 21, single buffered']
    #allocation38 [shape = 's32[1]{0}', space=sflag, size = 0x4, scoped, tag = 'scoped memory for tpu_custom_call.1']
    #allocation39 [shape = 'u8[512]{0}', space=vmem, size = 0x400, scoped, tag = 'input window, operand 23, single buffered']
    #allocation40 [shape = 'u8[512]{0}', space=vmem, size = 0x400, scoped, tag = 'input window, operand 24, single buffered']
    #allocation41 [shape = 's32[1]{0}', space=sflag, size = 0x4, scoped, tag = 'scoped memory for tpu_custom_call.1']
    #allocation42 [shape = 'u8[8192]{0}', space=vmem, size = 0x2000, scoped, tag = 'input window, operand 25, single buffered']
    #allocation43 [shape = 'u8[512]{0}', space=vmem, size = 0x400, scoped, tag = 'input window, operand 26, single buffered']
    #allocation44 [shape = 's32[1]{0}', space=sflag, size = 0x4, scoped, tag = 'scoped memory for tpu_custom_call.1']
    #allocation45 [shape = 'u8[512]{0}', space=vmem, size = 0x400, scoped, tag = 'input window, operand 27, single buffered']
    %72 = vsyncpa [#allocation6], 0
    %s73 = scalar_lea.sflag [#allocation6], 1
    %74 = vsyncpa %s73, 0
    %75 = vsyncpa [#allocation8], 0
    %s76 = scalar_lea.sflag [#allocation8], 1
    %77 = vsyncpa %s76, 0
    %78 = vsyncpa [#allocation11], 0
    %79 = vsyncpa [#allocation14], 0
    %80 = vsyncpa [#allocation17], 0
    %81 = vsyncpa [#allocation20], 0
    %82 = vsyncpa [#allocation23], 0
    %83 = vsyncpa [#allocation26], 0
    %84 = vsyncpa [#allocation29], 0
    %85 = vsyncpa [#allocation32], 0
    %86 = vsyncpa [#allocation35], 0
    %87 = vsyncpa [#allocation38], 0
    %88 = vsyncpa [#allocation41], 0
    %89 = vsyncpa [#allocation44], 0
    loop: start=0, step=1, limit=4
    $region2: #{tpu_custom_call.1} parent=1 // loop_pre_header
      _
    $region3: #{tpu_custom_call.1} parent=1 // loop_header
      %s91 = sphi 0, %s95
      %p92 = scmp.ge.s32.totalorder %s91, 4
      %s98 = sphi 0, %s110
      %s99 = sphi 0, %s106
      %s100 = sphi 0, %s98
      %s101 = sphi 0, %s99
      %s102 = sphi 0, %s100
      %s103 = sphi 0, %s101
      %s115 = sphi 0, %s117
      %s118 = sphi 0, %s115
      %s119 = sphi 0, %s118
      %s135 = sphi 0, %s119
      %s141 = sphi 0, %s143
      %s144 = sphi 0, %s141
      %s145 = sphi 0, %s144
      %s161 = sphi 0, %s145
      %s165 = sphi 0, %s165
      %s167 = sphi 0, %s165
      %s168 = sphi 0, %s167
      %s182 = sphi 0, %s168
      %s186 = sphi 0, %s186
      %s188 = sphi 0, %s186
      %s189 = sphi 0, %s188
      %s203 = sphi 0, %s189
      %s207 = sphi 0, %s207
      %s209 = sphi 0, %s207
      %s210 = sphi 0, %s209
      %s224 = sphi 0, %s210
      %s228 = sphi 0, %s228
      %s230 = sphi 0, %s228
      %s231 = sphi 0, %s230
      %s245 = sphi 0, %s231
      %s249 = sphi 0, %s249
      %s251 = sphi 0, %s249
      %s252 = sphi 0, %s251
      %s266 = sphi 0, %s252
      %s270 = sphi 0, %s270
      %s272 = sphi 0, %s270
      %s273 = sphi 0, %s272
      %s287 = sphi 0, %s273
      %s291 = sphi 0, %s291
      %s293 = sphi 0, %s291
      %s294 = sphi 0, %s293
      %s308 = sphi 0, %s294
      %s312 = sphi 0, %s312
      %s314 = sphi 0, %s312
      %s315 = sphi 0, %s314
      %s329 = sphi 0, %s315
      %s333 = sphi 0, %s333
      %s335 = sphi 0, %s333
      %s336 = sphi 0, %s335
      %s350 = sphi 0, %s336
      %s354 = sphi 0, %s354
      %s356 = sphi 0, %s354
      %s357 = sphi 0, %s356
      %s371 = sphi 0, %s357
      %s375 = sphi 0, %s375
      %s377 = sphi 0, %s375
      %s378 = sphi 0, %s377
      %s392 = sphi 0, %s378
      %s396 = sphi 0, %s396
      %s398 = sphi 0, %s396
      %s399 = sphi 0, %s398
      %s413 = sphi 0, %s399
      %s417 = sphi 0, %s417
      %s419 = sphi 0, %s417
      %s420 = sphi 0, %s419
      %s434 = sphi 0, %s420
      %s438 = sphi 0, %s438
      %s440 = sphi 0, %s438
      %s441 = sphi 0, %s440
      %s455 = sphi 0, %s441
      %s459 = sphi 0, %s459
      %s461 = sphi 0, %s459
      %s462 = sphi 0, %s461
      %s476 = sphi 0, %s462
      %s480 = sphi 0, %s480
      %s482 = sphi 0, %s480
      %s483 = sphi 0, %s482
      %s497 = sphi 0, %s483
      %s501 = sphi 0, %s501
      %s503 = sphi 0, %s501
      %s504 = sphi 0, %s503
      %s518 = sphi 0, %s504
      %s522 = sphi 0, %s522
      %s524 = sphi 0, %s522
      %s525 = sphi 0, %s524
      %s539 = sphi 0, %s525
      %s543 = sphi 0, %s543
      %s545 = sphi 0, %s543
      %s546 = sphi 0, %s545
      %s560 = sphi 0, %s546
      %s564 = sphi 0, %s564
      %s566 = sphi 0, %s564
      %s567 = sphi 0, %s566
      %s581 = sphi 0, %s567
      %s585 = sphi 0, %s585
      %s587 = sphi 0, %s585
      %s588 = sphi 0, %s587
      %s602 = sphi 0, %s588
      %s606 = sphi 0, %s606
      %s608 = sphi 0, %s606
      %s609 = sphi 0, %s608
      %s623 = sphi 0, %s609
      %s627 = sphi 0, %s627
      %s629 = sphi 0, %s627
      %s630 = sphi 0, %s629
      %s644 = sphi 0, %s630
      %s648 = sphi 0, %s648
      %s650 = sphi 0, %s648
      %s651 = sphi 0, %s650
      %s665 = sphi 0, %s651
      %s669 = sphi 0, %s669
      %s671 = sphi 0, %s669
      %s672 = sphi 0, %s671
      %s686 = sphi 0, %s672
      %s690 = sphi 0, %s690
      %s692 = sphi 0, %s690
      %s693 = sphi 0, %s692
      %s707 = sphi 0, %s693
      %s711 = sphi 0, %s711
      %s713 = sphi 0, %s711
      %s714 = sphi 0, %s713
      %s728 = sphi 0, %s714
      %s732 = sphi 0, %s732
      %s734 = sphi 0, %s732
      %s735 = sphi 0, %s734
      %s749 = sphi 0, %s735
      %s753 = sphi 0, %s753
      %s755 = sphi 0, %s753
      %s756 = sphi 0, %s755
      %s770 = sphi 0, %s756
      %s776 = sphi 0, %s778
      %s779 = sphi 0, %s776
      %s780 = sphi 0, %s779
      %s796 = sphi 0, %s780
    $region4: #{tpu_custom_call.1} parent=1 // loop_header_branch
      %94 = sbr.rel (%p92) target = $region8
    $region5: #{tpu_custom_call.1} parent=1 // loop_body
      %s96 = ssub.s32 %s91, 1
      %s97 = ssub.s32 %s91, 2
      %s104 = sadd.s32 1, %s99
      %p105 = scmp.ge.s32.totalorder %s104, 2
      %s106 = scalar_select %p105, 0, %s104
      %s107 = sadd.s32 1, %s98
      %s108 = scalar_select %p105, %s107, %s98
      %p109 = scmp.ge.s32.totalorder %s108, 1
      %s110 = scalar_select %p109, 0, %s108
      %s111 = ssub.s32 %s98, %s110
      %s112 = ssub.s32 %s99, %s106
      %s113 = sor.u32 %s111, %s112
      %p114 = scmp.eq.s32.totalorder %s113, 0
      %s116 = sadd.s32 %s115, 1
      %s117 = scalar_select %p114, %s115, %s116
      %p120 = pneg %p114
      %p121 = scmp.eq.s32.totalorder %s91, 1
      %p122 = por %p120, %p121
      %p123 = scmp.ne.s32.totalorder %s115, %s118
      %p124 = scmp.eq.s32.totalorder %s91, 0
      %p125 = por %p123, %p124
      %p126 = scmp.ne.s32.totalorder %s115, %s118
      %p127 = scmp.eq.s32.totalorder %s96, 1
      %p128 = por %p126, %p127
      %p129 = scmp.ne.s32.totalorder %s118, %s119
      %p130 = scmp.eq.s32.totalorder %s96, 0
      %p131 = por %p129, %p130
      %p132 = scmp.ne.s32.totalorder %s118, %s119
      %p133 = scmp.eq.s32.totalorder %s97, 1
      %p134 = por %p132, %p133
      %p136 = scmp.ne.s32.totalorder %s119, %s135
      %p137 = scmp.eq.s32.totalorder %s97, 0
      %p138 = por %p136, %p137
      %s139 = ssub.s32 %s99, %s106
      %p140 = scmp.eq.s32.totalorder %s139, 0
      %s142 = sadd.s32 %s141, 1
      %s143 = scalar_select %p140, %s141, %s142
      %p146 = pneg %p140
      %p147 = scmp.eq.s32.totalorder %s91, 1
      %p148 = por %p146, %p147
      %p149 = scmp.ne.s32.totalorder %s141, %s144
      %p150 = scmp.eq.s32.totalorder %s91, 0
      %p151 = por %p149, %p150
      %p152 = scmp.ne.s32.totalorder %s141, %s144
      %p153 = scmp.eq.s32.totalorder %s96, 1
      %p154 = por %p152, %p153
      %p155 = scmp.ne.s32.totalorder %s144, %s145
      %p156 = scmp.eq.s32.totalorder %s96, 0
      %p157 = por %p155, %p156
      %p158 = scmp.ne.s32.totalorder %s144, %s145
      %p159 = scmp.eq.s32.totalorder %s97, 1
      %p160 = por %p158, %p159
      %p162 = scmp.ne.s32.totalorder %s145, %s161
      %p163 = scmp.eq.s32.totalorder %s97, 0
      %p164 = por %p162, %p163
      %s166 = sadd.s32 %s165, 1
      %p169 = scmp.eq.s32.totalorder %s91, 1
      %p170 = scmp.ne.s32.totalorder %s165, %s167
      %p171 = scmp.eq.s32.totalorder %s91, 0
      %p172 = por %p170, %p171
      %p173 = scmp.ne.s32.totalorder %s165, %s167
      %p174 = scmp.eq.s32.totalorder %s96, 1
      %p175 = por %p173, %p174
      %p176 = scmp.ne.s32.totalorder %s167, %s168
      %p177 = scmp.eq.s32.totalorder %s96, 0
      %p178 = por %p176, %p177
      %p179 = scmp.ne.s32.totalorder %s167, %s168
      %p180 = scmp.eq.s32.totalorder %s97, 1
      %p181 = por %p179, %p180
      %p183 = scmp.ne.s32.totalorder %s168, %s182
      %p184 = scmp.eq.s32.totalorder %s97, 0
      %p185 = por %p183, %p184
      %s187 = sadd.s32 %s186, 1
      %p190 = scmp.eq.s32.totalorder %s91, 1
      %p191 = scmp.ne.s32.totalorder %s186, %s188
      %p192 = scmp.eq.s32.totalorder %s91, 0
      %p193 = por %p191, %p192
      %p194 = scmp.ne.s32.totalorder %s186, %s188
      %p195 = scmp.eq.s32.totalorder %s96, 1
      %p196 = por %p194, %p195
      %p197 = scmp.ne.s32.totalorder %s188, %s189
      %p198 = scmp.eq.s32.totalorder %s96, 0
      %p199 = por %p197, %p198
      %p200 = scmp.ne.s32.totalorder %s188, %s189
      %p201 = scmp.eq.s32.totalorder %s97, 1
      %p202 = por %p200, %p201
      %p204 = scmp.ne.s32.totalorder %s189, %s203
      %p205 = scmp.eq.s32.totalorder %s97, 0
      %p206 = por %p204, %p205
      %s208 = sadd.s32 %s207, 1
      %p211 = scmp.eq.s32.totalorder %s91, 1
      %p212 = scmp.ne.s32.totalorder %s207, %s209
      %p213 = scmp.eq.s32.totalorder %s91, 0
      %p214 = por %p212, %p213
      %p215 = scmp.ne.s32.totalorder %s207, %s209
      %p216 = scmp.eq.s32.totalorder %s96, 1
      %p217 = por %p215, %p216
      %p218 = scmp.ne.s32.totalorder %s209, %s210
      %p219 = scmp.eq.s32.totalorder %s96, 0
      %p220 = por %p218, %p219
      %p221 = scmp.ne.s32.totalorder %s209, %s210
      %p222 = scmp.eq.s32.totalorder %s97, 1
      %p223 = por %p221, %p222
      %p225 = scmp.ne.s32.totalorder %s210, %s224
      %p226 = scmp.eq.s32.totalorder %s97, 0
      %p227 = por %p225, %p226
      %s229 = sadd.s32 %s228, 1
      %p232 = scmp.eq.s32.totalorder %s91, 1
      %p233 = scmp.ne.s32.totalorder %s228, %s230
      %p234 = scmp.eq.s32.totalorder %s91, 0
      %p235 = por %p233, %p234
      %p236 = scmp.ne.s32.totalorder %s228, %s230
      %p237 = scmp.eq.s32.totalorder %s96, 1
      %p238 = por %p236, %p237
      %p239 = scmp.ne.s32.totalorder %s230, %s231
      %p240 = scmp.eq.s32.totalorder %s96, 0
      %p241 = por %p239, %p240
      %p242 = scmp.ne.s32.totalorder %s230, %s231
      %p243 = scmp.eq.s32.totalorder %s97, 1
      %p244 = por %p242, %p243
      %p246 = scmp.ne.s32.totalorder %s231, %s245
      %p247 = scmp.eq.s32.totalorder %s97, 0
      %p248 = por %p246, %p247
      %s250 = sadd.s32 %s249, 1
      %p253 = scmp.eq.s32.totalorder %s91, 1
      %p254 = scmp.ne.s32.totalorder %s249, %s251
      %p255 = scmp.eq.s32.totalorder %s91, 0
      %p256 = por %p254, %p255
      %p257 = scmp.ne.s32.totalorder %s249, %s251
      %p258 = scmp.eq.s32.totalorder %s96, 1
      %p259 = por %p257, %p258
      %p260 = scmp.ne.s32.totalorder %s251, %s252
      %p261 = scmp.eq.s32.totalorder %s96, 0
      %p262 = por %p260, %p261
      %p263 = scmp.ne.s32.totalorder %s251, %s252
      %p264 = scmp.eq.s32.totalorder %s97, 1
      %p265 = por %p263, %p264
      %p267 = scmp.ne.s32.totalorder %s252, %s266
      %p268 = scmp.eq.s32.totalorder %s97, 0
      %p269 = por %p267, %p268
      %s271 = sadd.s32 %s270, 1
      %p274 = scmp.eq.s32.totalorder %s91, 1
      %p275 = scmp.ne.s32.totalorder %s270, %s272
      %p276 = scmp.eq.s32.totalorder %s91, 0
      %p277 = por %p275, %p276
      %p278 = scmp.ne.s32.totalorder %s270, %s272
      %p279 = scmp.eq.s32.totalorder %s96, 1
      %p280 = por %p278, %p279
      %p281 = scmp.ne.s32.totalorder %s272, %s273
      %p282 = scmp.eq.s32.totalorder %s96, 0
      %p283 = por %p281, %p282
      %p284 = scmp.ne.s32.totalorder %s272, %s273
      %p285 = scmp.eq.s32.totalorder %s97, 1
      %p286 = por %p284, %p285
      %p288 = scmp.ne.s32.totalorder %s273, %s287
      %p289 = scmp.eq.s32.totalorder %s97, 0
      %p290 = por %p288, %p289
      %s292 = sadd.s32 %s291, 1
      %p295 = scmp.eq.s32.totalorder %s91, 1
      %p296 = scmp.ne.s32.totalorder %s291, %s293
      %p297 = scmp.eq.s32.totalorder %s91, 0
      %p298 = por %p296, %p297
      %p299 = scmp.ne.s32.totalorder %s291, %s293
      %p300 = scmp.eq.s32.totalorder %s96, 1
      %p301 = por %p299, %p300
      %p302 = scmp.ne.s32.totalorder %s293, %s294
      %p303 = scmp.eq.s32.totalorder %s96, 0
      %p304 = por %p302, %p303
      %p305 = scmp.ne.s32.totalorder %s293, %s294
      %p306 = scmp.eq.s32.totalorder %s97, 1
      %p307 = por %p305, %p306
      %p309 = scmp.ne.s32.totalorder %s294, %s308
      %p310 = scmp.eq.s32.totalorder %s97, 0
      %p311 = por %p309, %p310
      %s313 = sadd.s32 %s312, 1
      %p316 = scmp.eq.s32.totalorder %s91, 1
      %p317 = scmp.ne.s32.totalorder %s312, %s314
      %p318 = scmp.eq.s32.totalorder %s91, 0
      %p319 = por %p317, %p318
      %p320 = scmp.ne.s32.totalorder %s312, %s314
      %p321 = scmp.eq.s32.totalorder %s96, 1
      %p322 = por %p320, %p321
      %p323 = scmp.ne.s32.totalorder %s314, %s315
      %p324 = scmp.eq.s32.totalorder %s96, 0
      %p325 = por %p323, %p324
      %p326 = scmp.ne.s32.totalorder %s314, %s315
      %p327 = scmp.eq.s32.totalorder %s97, 1
      %p328 = por %p326, %p327
      %p330 = scmp.ne.s32.totalorder %s315, %s329
      %p331 = scmp.eq.s32.totalorder %s97, 0
      %p332 = por %p330, %p331
      %s334 = sadd.s32 %s333, 1
      %p337 = scmp.eq.s32.totalorder %s91, 1
      %p338 = scmp.ne.s32.totalorder %s333, %s335
      %p339 = scmp.eq.s32.totalorder %s91, 0
      %p340 = por %p338, %p339
      %p341 = scmp.ne.s32.totalorder %s333, %s335
      %p342 = scmp.eq.s32.totalorder %s96, 1
      %p343 = por %p341, %p342
      %p344 = scmp.ne.s32.totalorder %s335, %s336
      %p345 = scmp.eq.s32.totalorder %s96, 0
      %p346 = por %p344, %p345
      %p347 = scmp.ne.s32.totalorder %s335, %s336
      %p348 = scmp.eq.s32.totalorder %s97, 1
      %p349 = por %p347, %p348
      %p351 = scmp.ne.s32.totalorder %s336, %s350
      %p352 = scmp.eq.s32.totalorder %s97, 0
      %p353 = por %p351, %p352
      %s355 = sadd.s32 %s354, 1
      %p358 = scmp.eq.s32.totalorder %s91, 1
      %p359 = scmp.ne.s32.totalorder %s354, %s356
      %p360 = scmp.eq.s32.totalorder %s91, 0
      %p361 = por %p359, %p360
      %p362 = scmp.ne.s32.totalorder %s354, %s356
      %p363 = scmp.eq.s32.totalorder %s96, 1
      %p364 = por %p362, %p363
      %p365 = scmp.ne.s32.totalorder %s356, %s357
      %p366 = scmp.eq.s32.totalorder %s96, 0
      %p367 = por %p365, %p366
      %p368 = scmp.ne.s32.totalorder %s356, %s357
      %p369 = scmp.eq.s32.totalorder %s97, 1
      %p370 = por %p368, %p369
      %p372 = scmp.ne.s32.totalorder %s357, %s371
      %p373 = scmp.eq.s32.totalorder %s97, 0
      %p374 = por %p372, %p373
      %s376 = sadd.s32 %s375, 1
      %p379 = scmp.eq.s32.totalorder %s91, 1
      %p380 = scmp.ne.s32.totalorder %s375, %s377
      %p381 = scmp.eq.s32.totalorder %s91, 0
      %p382 = por %p380, %p381
      %p383 = scmp.ne.s32.totalorder %s375, %s377
      %p384 = scmp.eq.s32.totalorder %s96, 1
      %p385 = por %p383, %p384
      %p386 = scmp.ne.s32.totalorder %s377, %s378
      %p387 = scmp.eq.s32.totalorder %s96, 0
      %p388 = por %p386, %p387
      %p389 = scmp.ne.s32.totalorder %s377, %s378
      %p390 = scmp.eq.s32.totalorder %s97, 1
      %p391 = por %p389, %p390
      %p393 = scmp.ne.s32.totalorder %s378, %s392
      %p394 = scmp.eq.s32.totalorder %s97, 0
      %p395 = por %p393, %p394
      %s397 = sadd.s32 %s396, 1
      %p400 = scmp.eq.s32.totalorder %s91, 1
      %p401 = scmp.ne.s32.totalorder %s396, %s398
      %p402 = scmp.eq.s32.totalorder %s91, 0
      %p403 = por %p401, %p402
      %p404 = scmp.ne.s32.totalorder %s396, %s398
      %p405 = scmp.eq.s32.totalorder %s96, 1
      %p406 = por %p404, %p405
      %p407 = scmp.ne.s32.totalorder %s398, %s399
      %p408 = scmp.eq.s32.totalorder %s96, 0
      %p409 = por %p407, %p408
      %p410 = scmp.ne.s32.totalorder %s398, %s399
      %p411 = scmp.eq.s32.totalorder %s97, 1
      %p412 = por %p410, %p411
      %p414 = scmp.ne.s32.totalorder %s399, %s413
      %p415 = scmp.eq.s32.totalorder %s97, 0
      %p416 = por %p414, %p415
      %s418 = sadd.s32 %s417, 1
      %p421 = scmp.eq.s32.totalorder %s91, 1
      %p422 = scmp.ne.s32.totalorder %s417, %s419
      %p423 = scmp.eq.s32.totalorder %s91, 0
      %p424 = por %p422, %p423
      %p425 = scmp.ne.s32.totalorder %s417, %s419
      %p426 = scmp.eq.s32.totalorder %s96, 1
      %p427 = por %p425, %p426
      %p428 = scmp.ne.s32.totalorder %s419, %s420
      %p429 = scmp.eq.s32.totalorder %s96, 0
      %p430 = por %p428, %p429
      %p431 = scmp.ne.s32.totalorder %s419, %s420
      %p432 = scmp.eq.s32.totalorder %s97, 1
      %p433 = por %p431, %p432
      %p435 = scmp.ne.s32.totalorder %s420, %s434
      %p436 = scmp.eq.s32.totalorder %s97, 0
      %p437 = por %p435, %p436
      %s439 = sadd.s32 %s438, 1
      %p442 = scmp.eq.s32.totalorder %s91, 1
      %p443 = scmp.ne.s32.totalorder %s438, %s440
      %p444 = scmp.eq.s32.totalorder %s91, 0
      %p445 = por %p443, %p444
      %p446 = scmp.ne.s32.totalorder %s438, %s440
      %p447 = scmp.eq.s32.totalorder %s96, 1
      %p448 = por %p446, %p447
      %p449 = scmp.ne.s32.totalorder %s440, %s441
      %p450 = scmp.eq.s32.totalorder %s96, 0
      %p451 = por %p449, %p450
      %p452 = scmp.ne.s32.totalorder %s440, %s441
      %p453 = scmp.eq.s32.totalorder %s97, 1
      %p454 = por %p452, %p453
      %p456 = scmp.ne.s32.totalorder %s441, %s455
      %p457 = scmp.eq.s32.totalorder %s97, 0
      %p458 = por %p456, %p457
      %s460 = sadd.s32 %s459, 1
      %p463 = scmp.eq.s32.totalorder %s91, 1
      %p464 = scmp.ne.s32.totalorder %s459, %s461
      %p465 = scmp.eq.s32.totalorder %s91, 0
      %p466 = por %p464, %p465
      %p467 = scmp.ne.s32.totalorder %s459, %s461
      %p468 = scmp.eq.s32.totalorder %s96, 1
      %p469 = por %p467, %p468
      %p470 = scmp.ne.s32.totalorder %s461, %s462
      %p471 = scmp.eq.s32.totalorder %s96, 0
      %p472 = por %p470, %p471
      %p473 = scmp.ne.s32.totalorder %s461, %s462
      %p474 = scmp.eq.s32.totalorder %s97, 1
      %p475 = por %p473, %p474
      %p477 = scmp.ne.s32.totalorder %s462, %s476
      %p478 = scmp.eq.s32.totalorder %s97, 0
      %p479 = por %p477, %p478
      %s481 = sadd.s32 %s480, 1
      %p484 = scmp.eq.s32.totalorder %s91, 1
      %p485 = scmp.ne.s32.totalorder %s480, %s482
      %p486 = scmp.eq.s32.totalorder %s91, 0
      %p487 = por %p485, %p486
      %p488 = scmp.ne.s32.totalorder %s480, %s482
      %p489 = scmp.eq.s32.totalorder %s96, 1
      %p490 = por %p488, %p489
      %p491 = scmp.ne.s32.totalorder %s482, %s483
      %p492 = scmp.eq.s32.totalorder %s96, 0
      %p493 = por %p491, %p492
      %p494 = scmp.ne.s32.totalorder %s482, %s483
      %p495 = scmp.eq.s32.totalorder %s97, 1
      %p496 = por %p494, %p495
      %p498 = scmp.ne.s32.totalorder %s483, %s497
      %p499 = scmp.eq.s32.totalorder %s97, 0
      %p500 = por %p498, %p499
      %s502 = sadd.s32 %s501, 1
      %p505 = scmp.eq.s32.totalorder %s91, 1
      %p506 = scmp.ne.s32.totalorder %s501, %s503
      %p507 = scmp.eq.s32.totalorder %s91, 0
      %p508 = por %p506, %p507
      %p509 = scmp.ne.s32.totalorder %s501, %s503
      %p510 = scmp.eq.s32.totalorder %s96, 1
      %p511 = por %p509, %p510
      %p512 = scmp.ne.s32.totalorder %s503, %s504
      %p513 = scmp.eq.s32.totalorder %s96, 0
      %p514 = por %p512, %p513
      %p515 = scmp.ne.s32.totalorder %s503, %s504
      %p516 = scmp.eq.s32.totalorder %s97, 1
      %p517 = por %p515, %p516
      %p519 = scmp.ne.s32.totalorder %s504, %s518
      %p520 = scmp.eq.s32.totalorder %s97, 0
      %p521 = por %p519, %p520
      %s523 = sadd.s32 %s522, 1
      %p526 = scmp.eq.s32.totalorder %s91, 1
      %p527 = scmp.ne.s32.totalorder %s522, %s524
      %p528 = scmp.eq.s32.totalorder %s91, 0
      %p529 = por %p527, %p528
      %p530 = scmp.ne.s32.totalorder %s522, %s524
      %p531 = scmp.eq.s32.totalorder %s96, 1
      %p532 = por %p530, %p531
      %p533 = scmp.ne.s32.totalorder %s524, %s525
      %p534 = scmp.eq.s32.totalorder %s96, 0
      %p535 = por %p533, %p534
      %p536 = scmp.ne.s32.totalorder %s524, %s525
      %p537 = scmp.eq.s32.totalorder %s97, 1
      %p538 = por %p536, %p537
      %p540 = scmp.ne.s32.totalorder %s525, %s539
      %p541 = scmp.eq.s32.totalorder %s97, 0
      %p542 = por %p540, %p541
      %s544 = sadd.s32 %s543, 1
      %p547 = scmp.eq.s32.totalorder %s91, 1
      %p548 = scmp.ne.s32.totalorder %s543, %s545
      %p549 = scmp.eq.s32.totalorder %s91, 0
      %p550 = por %p548, %p549
      %p551 = scmp.ne.s32.totalorder %s543, %s545
      %p552 = scmp.eq.s32.totalorder %s96, 1
      %p553 = por %p551, %p552
      %p554 = scmp.ne.s32.totalorder %s545, %s546
      %p555 = scmp.eq.s32.totalorder %s96, 0
      %p556 = por %p554, %p555
      %p557 = scmp.ne.s32.totalorder %s545, %s546
      %p558 = scmp.eq.s32.totalorder %s97, 1
      %p559 = por %p557, %p558
      %p561 = scmp.ne.s32.totalorder %s546, %s560
      %p562 = scmp.eq.s32.totalorder %s97, 0
      %p563 = por %p561, %p562
      %s565 = sadd.s32 %s564, 1
      %p568 = scmp.eq.s32.totalorder %s91, 1
      %p569 = scmp.ne.s32.totalorder %s564, %s566
      %p570 = scmp.eq.s32.totalorder %s91, 0
      %p571 = por %p569, %p570
      %p572 = scmp.ne.s32.totalorder %s564, %s566
      %p573 = scmp.eq.s32.totalorder %s96, 1
      %p574 = por %p572, %p573
      %p575 = scmp.ne.s32.totalorder %s566, %s567
      %p576 = scmp.eq.s32.totalorder %s96, 0
      %p577 = por %p575, %p576
      %p578 = scmp.ne.s32.totalorder %s566, %s567
      %p579 = scmp.eq.s32.totalorder %s97, 1
      %p580 = por %p578, %p579
      %p582 = scmp.ne.s32.totalorder %s567, %s581
      %p583 = scmp.eq.s32.totalorder %s97, 0
      %p584 = por %p582, %p583
      %s586 = sadd.s32 %s585, 1
      %p589 = scmp.eq.s32.totalorder %s91, 1
      %p590 = scmp.ne.s32.totalorder %s585, %s587
      %p591 = scmp.eq.s32.totalorder %s91, 0
      %p592 = por %p590, %p591
      %p593 = scmp.ne.s32.totalorder %s585, %s587
      %p594 = scmp.eq.s32.totalorder %s96, 1
      %p595 = por %p593, %p594
      %p596 = scmp.ne.s32.totalorder %s587, %s588
      %p597 = scmp.eq.s32.totalorder %s96, 0
      %p598 = por %p596, %p597
      %p599 = scmp.ne.s32.totalorder %s587, %s588
      %p600 = scmp.eq.s32.totalorder %s97, 1
      %p601 = por %p599, %p600
      %p603 = scmp.ne.s32.totalorder %s588, %s602
      %p604 = scmp.eq.s32.totalorder %s97, 0
      %p605 = por %p603, %p604
      %s607 = sadd.s32 %s606, 1
      %p610 = scmp.eq.s32.totalorder %s91, 1
      %p611 = scmp.ne.s32.totalorder %s606, %s608
      %p612 = scmp.eq.s32.totalorder %s91, 0
      %p613 = por %p611, %p612
      %p614 = scmp.ne.s32.totalorder %s606, %s608
      %p615 = scmp.eq.s32.totalorder %s96, 1
      %p616 = por %p614, %p615
      %p617 = scmp.ne.s32.totalorder %s608, %s609
      %p618 = scmp.eq.s32.totalorder %s96, 0
      %p619 = por %p617, %p618
      %p620 = scmp.ne.s32.totalorder %s608, %s609
      %p621 = scmp.eq.s32.totalorder %s97, 1
      %p622 = por %p620, %p621
      %p624 = scmp.ne.s32.totalorder %s609, %s623
      %p625 = scmp.eq.s32.totalorder %s97, 0
      %p626 = por %p624, %p625
      %s628 = sadd.s32 %s627, 1
      %p631 = scmp.eq.s32.totalorder %s91, 1
      %p632 = scmp.ne.s32.totalorder %s627, %s629
      %p633 = scmp.eq.s32.totalorder %s91, 0
      %p634 = por %p632, %p633
      %p635 = scmp.ne.s32.totalorder %s627, %s629
      %p636 = scmp.eq.s32.totalorder %s96, 1
      %p637 = por %p635, %p636
      %p638 = scmp.ne.s32.totalorder %s629, %s630
      %p639 = scmp.eq.s32.totalorder %s96, 0
      %p640 = por %p638, %p639
      %p641 = scmp.ne.s32.totalorder %s629, %s630
      %p642 = scmp.eq.s32.totalorder %s97, 1
      %p643 = por %p641, %p642
      %p645 = scmp.ne.s32.totalorder %s630, %s644
      %p646 = scmp.eq.s32.totalorder %s97, 0
      %p647 = por %p645, %p646
      %s649 = sadd.s32 %s648, 1
      %p652 = scmp.eq.s32.totalorder %s91, 1
      %p653 = scmp.ne.s32.totalorder %s648, %s650
      %p654 = scmp.eq.s32.totalorder %s91, 0
      %p655 = por %p653, %p654
      %p656 = scmp.ne.s32.totalorder %s648, %s650
      %p657 = scmp.eq.s32.totalorder %s96, 1
      %p658 = por %p656, %p657
      %p659 = scmp.ne.s32.totalorder %s650, %s651
      %p660 = scmp.eq.s32.totalorder %s96, 0
      %p661 = por %p659, %p660
      %p662 = scmp.ne.s32.totalorder %s650, %s651
      %p663 = scmp.eq.s32.totalorder %s97, 1
      %p664 = por %p662, %p663
      %p666 = scmp.ne.s32.totalorder %s651, %s665
      %p667 = scmp.eq.s32.totalorder %s97, 0
      %p668 = por %p666, %p667
      %s670 = sadd.s32 %s669, 1
      %p673 = scmp.eq.s32.totalorder %s91, 1
      %p674 = scmp.ne.s32.totalorder %s669, %s671
      %p675 = scmp.eq.s32.totalorder %s91, 0
      %p676 = por %p674, %p675
      %p677 = scmp.ne.s32.totalorder %s669, %s671
      %p678 = scmp.eq.s32.totalorder %s96, 1
      %p679 = por %p677, %p678
      %p680 = scmp.ne.s32.totalorder %s671, %s672
      %p681 = scmp.eq.s32.totalorder %s96, 0
      %p682 = por %p680, %p681
      %p683 = scmp.ne.s32.totalorder %s671, %s672
      %p684 = scmp.eq.s32.totalorder %s97, 1
      %p685 = por %p683, %p684
      %p687 = scmp.ne.s32.totalorder %s672, %s686
      %p688 = scmp.eq.s32.totalorder %s97, 0
      %p689 = por %p687, %p688
      %s691 = sadd.s32 %s690, 1
      %p694 = scmp.eq.s32.totalorder %s91, 1
      %p695 = scmp.ne.s32.totalorder %s690, %s692
      %p696 = scmp.eq.s32.totalorder %s91, 0
      %p697 = por %p695, %p696
      %p698 = scmp.ne.s32.totalorder %s690, %s692
      %p699 = scmp.eq.s32.totalorder %s96, 1
      %p700 = por %p698, %p699
      %p701 = scmp.ne.s32.totalorder %s692, %s693
      %p702 = scmp.eq.s32.totalorder %s96, 0
      %p703 = por %p701, %p702
      %p704 = scmp.ne.s32.totalorder %s692, %s693
      %p705 = scmp.eq.s32.totalorder %s97, 1
      %p706 = por %p704, %p705
      %p708 = scmp.ne.s32.totalorder %s693, %s707
      %p709 = scmp.eq.s32.totalorder %s97, 0
      %p710 = por %p708, %p709
      %s712 = sadd.s32 %s711, 1
      %p715 = scmp.eq.s32.totalorder %s91, 1
      %p716 = scmp.ne.s32.totalorder %s711, %s713
      %p717 = scmp.eq.s32.totalorder %s91, 0
      %p718 = por %p716, %p717
      %p719 = scmp.ne.s32.totalorder %s711, %s713
      %p720 = scmp.eq.s32.totalorder %s96, 1
      %p721 = por %p719, %p720
      %p722 = scmp.ne.s32.totalorder %s713, %s714
      %p723 = scmp.eq.s32.totalorder %s96, 0
      %p724 = por %p722, %p723
      %p725 = scmp.ne.s32.totalorder %s713, %s714
      %p726 = scmp.eq.s32.totalorder %s97, 1
      %p727 = por %p725, %p726
      %p729 = scmp.ne.s32.totalorder %s714, %s728
      %p730 = scmp.eq.s32.totalorder %s97, 0
      %p731 = por %p729, %p730
      %s733 = sadd.s32 %s732, 1
      %p736 = scmp.eq.s32.totalorder %s91, 1
      %p737 = scmp.ne.s32.totalorder %s732, %s734
      %p738 = scmp.eq.s32.totalorder %s91, 0
      %p739 = por %p737, %p738
      %p740 = scmp.ne.s32.totalorder %s732, %s734
      %p741 = scmp.eq.s32.totalorder %s96, 1
      %p742 = por %p740, %p741
      %p743 = scmp.ne.s32.totalorder %s734, %s735
      %p744 = scmp.eq.s32.totalorder %s96, 0
      %p745 = por %p743, %p744
      %p746 = scmp.ne.s32.totalorder %s734, %s735
      %p747 = scmp.eq.s32.totalorder %s97, 1
      %p748 = por %p746, %p747
      %p750 = scmp.ne.s32.totalorder %s735, %s749
      %p751 = scmp.eq.s32.totalorder %s97, 0
      %p752 = por %p750, %p751
      %s754 = sadd.s32 %s753, 1
      %p757 = scmp.eq.s32.totalorder %s91, 1
      %p758 = scmp.ne.s32.totalorder %s753, %s755
      %p759 = scmp.eq.s32.totalorder %s91, 0
      %p760 = por %p758, %p759
      %p761 = scmp.ne.s32.totalorder %s753, %s755
      %p762 = scmp.eq.s32.totalorder %s96, 1
      %p763 = por %p761, %p762
      %p764 = scmp.ne.s32.totalorder %s755, %s756
      %p765 = scmp.eq.s32.totalorder %s96, 0
      %p766 = por %p764, %p765
      %p767 = scmp.ne.s32.totalorder %s755, %s756
      %p768 = scmp.eq.s32.totalorder %s97, 1
      %p769 = por %p767, %p768
      %p771 = scmp.ne.s32.totalorder %s756, %s770
      %p772 = scmp.eq.s32.totalorder %s97, 0
      %p773 = por %p771, %p772
      %s774 = ssub.s32 %s98, %s110
      %p775 = scmp.eq.s32.totalorder %s774, 0
      %s777 = sadd.s32 %s776, 1
      %s778 = scalar_select %p775, %s776, %s777
      %p781 = pneg %p775
      %p782 = scmp.eq.s32.totalorder %s91, 1
      %p783 = por %p781, %p782
      %p784 = scmp.ne.s32.totalorder %s776, %s779
      %p785 = scmp.eq.s32.totalorder %s91, 0
      %p786 = por %p784, %p785
      %p787 = scmp.ne.s32.totalorder %s776, %s779
      %p788 = scmp.eq.s32.totalorder %s96, 1
      %p789 = por %p787, %p788
      %p790 = scmp.ne.s32.totalorder %s779, %s780
      %p791 = scmp.eq.s32.totalorder %s96, 0
      %p792 = por %p790, %p791
      %p793 = scmp.ne.s32.totalorder %s779, %s780
      %p794 = scmp.eq.s32.totalorder %s97, 1
      %p795 = por %p793, %p794
      %p797 = scmp.ne.s32.totalorder %s780, %s796
      %p798 = scmp.eq.s32.totalorder %s97, 0
      %p799 = por %p797, %p798
      %p800 = scmp.le.s32.totalorder 1, %s91
      %p801 = scmp.lt.s32.totalorder %s91, 3
      %p802 = pnand %p800, %p801
      %p803 = pneg %p802
      // Predicated region
      $region9: #{tpu_custom_call.1} parent=5 // pred_check
        _
      $region10: #{tpu_custom_call.1} parent=5 // pred_check_branch
        %805 = sbr.rel (%p802) target = $region12
      $region11: #{tpu_custom_call.1} parent=5 // pred_region
        %s806 = ssub.s32 %s91, 1
        // Predicated region
        $region13: #{tpu_custom_call.1} parent=11 // pred_check
          %p807 = pneg %p178
        $region14: #{tpu_custom_call.1} parent=11 // pred_check_branch
          %809 = sbr.rel (%p807) target = $region16
        $region15: #{tpu_custom_call.1} parent=11 // pred_region
          %s811 = ssub.s32 256, 256
          %812 = vsyncadd [#allocation8], %s811
          %s814 = sshll.u32 [#allocation9], 4
          %s815 = int_to_ptr.vmem [resolvable:$true] %s814
          %817 = dma.hbm_to_vmem [thread:$0]  %s5, 256, %s815, [#allocation8]
        $region16: #{tpu_custom_call.1} parent=11 // pred_fallthru
          _
        // Predicated region
        $region17: #{tpu_custom_call.1} parent=11 // pred_check
          %p818 = pneg %p199
        $region18: #{tpu_custom_call.1} parent=11 // pred_check_branch
          %820 = sbr.rel (%p818) target = $region20
        $region19: #{tpu_custom_call.1} parent=11 // pred_region
          %s822 = ssub.s32 256, 256
          %823 = vsyncadd [#allocation11], %s822
          %s825 = sshll.u32 [#allocation10], 4
          %s826 = int_to_ptr.vmem [resolvable:$true] %s825
          %828 = dma.hbm_to_vmem [thread:$0]  %s7, 256, %s826, [#allocation11]
        $region20: #{tpu_custom_call.1} parent=11 // pred_fallthru
          _
        // Predicated region
        $region21: #{tpu_custom_call.1} parent=11 // pred_check
          %p829 = pneg %p220
        $region22: #{tpu_custom_call.1} parent=11 // pred_check_branch
          %831 = sbr.rel (%p829) target = $region24
        $region23: #{tpu_custom_call.1} parent=11 // pred_region
          %s833 = ssub.s32 32768, 32768
          %834 = vsyncadd [#allocation11], %s833
          %s835 = sshll.u32 [#allocation12], 4
          %s836 = int_to_ptr.vmem [resolvable:$true] %s835
          %841 = dma.hbm_to_vmem [thread:$0]  %s9, 32768, %s836, [#allocation11], 512, 512, 32
        $region24: #{tpu_custom_call.1} parent=11 // pred_fallthru
          _
        // Predicated region
        $region25: #{tpu_custom_call.1} parent=11 // pred_check
          %p842 = pneg %p241
        $region26: #{tpu_custom_call.1} parent=11 // pred_check_branch
          %844 = sbr.rel (%p842) target = $region28
        $region27: #{tpu_custom_call.1} parent=11 // pred_region
          %s846 = ssub.s32 64, 64
          %847 = vsyncadd [#allocation14], %s846
          %s849 = sshll.u32 [#allocation13], 4
          %s850 = int_to_ptr.vmem [resolvable:$true] %s849
          %852 = dma.hbm_to_vmem [thread:$0]  %s11, 64, %s850, [#allocation14]
        $region28: #{tpu_custom_call.1} parent=11 // pred_fallthru
          _
        // Predicated region
        $region29: #{tpu_custom_call.1} parent=11 // pred_check
          %p853 = pneg %p262
        $region30: #{tpu_custom_call.1} parent=11 // pred_check_branch
          %855 = sbr.rel (%p853) target = $region32
        $region31: #{tpu_custom_call.1} parent=11 // pred_region
          %s857 = ssub.s32 64, 64
          %858 = vsyncadd [#allocation14], %s857
          %s860 = sshll.u32 [#allocation15], 4
          %s861 = int_to_ptr.vmem [resolvable:$true] %s860
          %863 = dma.hbm_to_vmem [thread:$0]  %s13, 64, %s861, [#allocation14]
        $region32: #{tpu_custom_call.1} parent=11 // pred_fallthru
          _
        // Predicated region
        $region33: #{tpu_custom_call.1} parent=11 // pred_check
          %p864 = pneg %p283
        $region34: #{tpu_custom_call.1} parent=11 // pred_check_branch
          %866 = sbr.rel (%p864) target = $region36
        $region35: #{tpu_custom_call.1} parent=11 // pred_region
          %s868 = ssub.s32 8192, 8192
          %869 = vsyncadd [#allocation17], %s868
          %s870 = sshll.u32 [#allocation16], 4
          %s871 = int_to_ptr.vmem [resolvable:$true] %s870
          %876 = dma.hbm_to_vmem [thread:$0]  %s15, 8192, %s871, [#allocation17], 512, 512, 32
        $region36: #{tpu_custom_call.1} parent=11 // pred_fallthru
          _
        // Predicated region
        $region37: #{tpu_custom_call.1} parent=11 // pred_check
          %p877 = pneg %p304
        $region38: #{tpu_custom_call.1} parent=11 // pred_check_branch
          %879 = sbr.rel (%p877) target = $region40
        $region39: #{tpu_custom_call.1} parent=11 // pred_region
          %s881 = ssub.s32 64, 64
          %882 = vsyncadd [#allocation17], %s881
          %s884 = sshll.u32 [#allocation18], 4
          %s885 = int_to_ptr.vmem [resolvable:$true] %s884
          %887 = dma.hbm_to_vmem [thread:$0]  %s17, 64, %s885, [#allocation17]
        $region40: #{tpu_custom_call.1} parent=11 // pred_fallthru
          _
        // Predicated region
        $region41: #{tpu_custom_call.1} parent=11 // pred_check
          %p888 = pneg %p325
        $region42: #{tpu_custom_call.1} parent=11 // pred_check_branch
          %890 = sbr.rel (%p888) target = $region44
        $region43: #{tpu_custom_call.1} parent=11 // pred_region
          %s892 = ssub.s32 64, 64
          %893 = vsyncadd [#allocation20], %s892
          %s895 = sshll.u32 [#allocation19], 4
          %s896 = int_to_ptr.vmem [resolvable:$true] %s895
          %898 = dma.hbm_to_vmem [thread:$0]  %s19, 64, %s896, [#allocation20]
        $region44: #{tpu_custom_call.1} parent=11 // pred_fallthru
          _
        // Predicated region
        $region45: #{tpu_custom_call.1} parent=11 // pred_check
          %p899 = pneg %p346
        $region46: #{tpu_custom_call.1} parent=11 // pred_check_branch
          %901 = sbr.rel (%p899) target = $region48
        $region47: #{tpu_custom_call.1} parent=11 // pred_region
          %s903 = ssub.s32 8192, 8192
          %904 = vsyncadd [#allocation20], %s903
          %s905 = sshll.u32 [#allocation21], 4
          %s906 = int_to_ptr.vmem [resolvable:$true] %s905
          %911 = dma.hbm_to_vmem [thread:$0]  %s21, 8192, %s906, [#allocation20], 512, 512, 32
        $region48: #{tpu_custom_call.1} parent=11 // pred_fallthru
          _
        // Predicated region
        $region49: #{tpu_custom_call.1} parent=11 // pred_check
          %p912 = pneg %p367
        $region50: #{tpu_custom_call.1} parent=11 // pred_check_branch
          %914 = sbr.rel (%p912) target = $region52
        $region51: #{tpu_custom_call.1} parent=11 // pred_region
          %s916 = ssub.s32 64, 64
          %917 = vsyncadd [#allocation23], %s916
          %s919 = sshll.u32 [#allocation22], 4
          %s920 = int_to_ptr.vmem [resolvable:$true] %s919
          %922 = dma.hbm_to_vmem [thread:$0]  %s23, 64, %s920, [#allocation23]
        $region52: #{tpu_custom_call.1} parent=11 // pred_fallthru
          _
        // Predicated region
        $region53: #{tpu_custom_call.1} parent=11 // pred_check
          %p923 = pneg %p388
        $region54: #{tpu_custom_call.1} parent=11 // pred_check_branch
          %925 = sbr.rel (%p923) target = $region56
        $region55: #{tpu_custom_call.1} parent=11 // pred_region
          %s927 = ssub.s32 64, 64
          %928 = vsyncadd [#allocation23], %s927
          %s930 = sshll.u32 [#allocation24], 4
          %s931 = int_to_ptr.vmem [resolvable:$true] %s930
          %933 = dma.hbm_to_vmem [thread:$0]  %s25, 64, %s931, [#allocation23]
        $region56: #{tpu_custom_call.1} parent=11 // pred_fallthru
          _
        // Predicated region
        $region57: #{tpu_custom_call.1} parent=11 // pred_check
          %p934 = pneg %p409
        $region58: #{tpu_custom_call.1} parent=11 // pred_check_branch
          %936 = sbr.rel (%p934) target = $region60
        $region59: #{tpu_custom_call.1} parent=11 // pred_region
          %s938 = ssub.s32 4096, 4096
          %939 = vsyncadd [#allocation26], %s938
          %s940 = sshll.u32 [#allocation25], 4
          %s941 = int_to_ptr.vmem [resolvable:$true] %s940
          %946 = dma.hbm_to_vmem [thread:$0]  %s27, 4096, %s941, [#allocation26], 256, 256, 16
        $region60: #{tpu_custom_call.1} parent=11 // pred_fallthru
          _
        // Predicated region
        $region61: #{tpu_custom_call.1} parent=11 // pred_check
          %p947 = pneg %p430
        $region62: #{tpu_custom_call.1} parent=11 // pred_check_branch
          %949 = sbr.rel (%p947) target = $region64
        $region63: #{tpu_custom_call.1} parent=11 // pred_region
          %s951 = ssub.s32 32, 32
          %952 = vsyncadd [#allocation26], %s951
          %s954 = sshll.u32 [#allocation27], 4
          %s955 = int_to_ptr.vmem [resolvable:$true] %s954
          %957 = dma.hbm_to_vmem [thread:$0]  %s29, 32, %s955, [#allocation26]
        $region64: #{tpu_custom_call.1} parent=11 // pred_fallthru
          _
        // Predicated region
        $region65: #{tpu_custom_call.1} parent=11 // pred_check
          %p958 = pneg %p451
        $region66: #{tpu_custom_call.1} parent=11 // pred_check_branch
          %960 = sbr.rel (%p958) target = $region68
        $region67: #{tpu_custom_call.1} parent=11 // pred_region
          %s962 = ssub.s32 32, 32
          %963 = vsyncadd [#allocation29], %s962
          %s965 = sshll.u32 [#allocation28], 4
          %s966 = int_to_ptr.vmem [resolvable:$true] %s965
          %968 = dma.hbm_to_vmem [thread:$0]  %s31, 32, %s966, [#allocation29]
        $region68: #{tpu_custom_call.1} parent=11 // pred_fallthru
          _
        // Predicated region
        $region69: #{tpu_custom_call.1} parent=11 // pred_check
          %p969 = pneg %p472
        $region70: #{tpu_custom_call.1} parent=11 // pred_check_branch
          %971 = sbr.rel (%p969) target = $region72
        $region71: #{tpu_custom_call.1} parent=11 // pred_region
          %s973 = ssub.s32 2048, 2048
          %974 = vsyncadd [#allocation29], %s973
          %s975 = sshll.u32 [#allocation30], 4
          %s976 = int_to_ptr.vmem [resolvable:$true] %s975
          %981 = dma.hbm_to_vmem [thread:$0]  %s33, 2048, %s976, [#allocation29], 256, 256, 16
        $region72: #{tpu_custom_call.1} parent=11 // pred_fallthru
          _
        // Predicated region
        $region73: #{tpu_custom_call.1} parent=11 // pred_check
          %p982 = pneg %p493
        $region74: #{tpu_custom_call.1} parent=11 // pred_check_branch
          %984 = sbr.rel (%p982) target = $region76
        $region75: #{tpu_custom_call.1} parent=11 // pred_region
          %s986 = ssub.s32 32, 32
          %987 = vsyncadd [#allocation32], %s986
          %s989 = sshll.u32 [#allocation31], 4
          %s990 = int_to_ptr.vmem [resolvable:$true] %s989
          %992 = dma.hbm_to_vmem [thread:$0]  %s35, 32, %s990, [#allocation32]
        $region76: #{tpu_custom_call.1} parent=11 // pred_fallthru
          _
        // Predicated region
        $region77: #{tpu_custom_call.1} parent=11 // pred_check
          %p993 = pneg %p514
        $region78: #{tpu_custom_call.1} parent=11 // pred_check_branch
          %995 = sbr.rel (%p993) target = $region80
        $region79: #{tpu_custom_call.1} parent=11 // pred_region
          %s997 = ssub.s32 32, 32
          %998 = vsyncadd [#allocation32], %s997
          %s1000 = sshll.u32 [#allocation33], 4
          %s1001 = int_to_ptr.vmem [resolvable:$true] %s1000
          %1003 = dma.hbm_to_vmem [thread:$0]  %s37, 32, %s1001, [#allocation32]
        $region80: #{tpu_custom_call.1} parent=11 // pred_fallthru
          _
        // Predicated region
        $region81: #{tpu_custom_call.1} parent=11 // pred_check
          %p1004 = pneg %p535
        $region82: #{tpu_custom_call.1} parent=11 // pred_check_branch
          %1006 = sbr.rel (%p1004) target = $region84
        $region83: #{tpu_custom_call.1} parent=11 // pred_region
          %s1008 = ssub.s32 1024, 1024
          %1009 = vsyncadd [#allocation35], %s1008
          %s1010 = sshll.u32 [#allocation34], 4
          %s1011 = int_to_ptr.vmem [resolvable:$true] %s1010
          %1016 = dma.hbm_to_vmem [thread:$0]  %s39, 1024, %s1011, [#allocation35], 128, 128, 8
        $region84: #{tpu_custom_call.1} parent=11 // pred_fallthru
          _
        // Predicated region
        $region85: #{tpu_custom_call.1} parent=11 // pred_check
          %p1017 = pneg %p556
        $region86: #{tpu_custom_call.1} parent=11 // pred_check_branch
          %1019 = sbr.rel (%p1017) target = $region88
        $region87: #{tpu_custom_call.1} parent=11 // pred_region
          %s1021 = ssub.s32 16, 16
          %1022 = vsyncadd [#allocation35], %s1021
          %s1024 = sshll.u32 [#allocation36], 4
          %s1025 = int_to_ptr.vmem [resolvable:$true] %s1024
          %1027 = dma.hbm_to_vmem [thread:$0]  %s41, 16, %s1025, [#allocation35]
        $region88: #{tpu_custom_call.1} parent=11 // pred_fallthru
          _
        // Predicated region
        $region89: #{tpu_custom_call.1} parent=11 // pred_check
          %p1028 = pneg %p577
        $region90: #{tpu_custom_call.1} parent=11 // pred_check_branch
          %1030 = sbr.rel (%p1028) target = $region92
        $region91: #{tpu_custom_call.1} parent=11 // pred_region
          %s1032 = ssub.s32 16, 16
          %1033 = vsyncadd [#allocation38], %s1032
          %s1035 = sshll.u32 [#allocation37], 4
          %s1036 = int_to_ptr.vmem [resolvable:$true] %s1035
          %1038 = dma.hbm_to_vmem [thread:$0]  %s43, 16, %s1036, [#allocation38]
        $region92: #{tpu_custom_call.1} parent=11 // pred_fallthru
          _
        // Predicated region
        $region93: #{tpu_custom_call.1} parent=11 // pred_check
          %p1039 = pneg %p598
        $region94: #{tpu_custom_call.1} parent=11 // pred_check_branch
          %1041 = sbr.rel (%p1039) target = $region96
        $region95: #{tpu_custom_call.1} parent=11 // pred_region
          _
        $region96: #{tpu_custom_call.1} parent=11 // pred_fallthru
          _
        // Predicated region
        $region97: #{tpu_custom_call.1} parent=11 // pred_check
          %p1042 = pneg %p619
        $region98: #{tpu_custom_call.1} parent=11 // pred_check_branch
          %1044 = sbr.rel (%p1042) target = $region100
        $region99: #{tpu_custom_call.1} parent=11 // pred_region
          %s1046 = ssub.s32 16, 16
          %1047 = vsyncadd [#allocation38], %s1046
          %s1049 = sshll.u32 [#allocation39], 4
          %s1050 = int_to_ptr.vmem [resolvable:$true] %s1049
          %1052 = dma.hbm_to_vmem [thread:$0]  %s47, 16, %s1050, [#allocation38]
        $region100: #{tpu_custom_call.1} parent=11 // pred_fallthru
          _
        // Predicated region
        $region101: #{tpu_custom_call.1} parent=11 // pred_check
          %p1053 = pneg %p640
        $region102: #{tpu_custom_call.1} parent=11 // pred_check_branch
          %1055 = sbr.rel (%p1053) target = $region104
        $region103: #{tpu_custom_call.1} parent=11 // pred_region
          %s1057 = ssub.s32 16, 16
          %1058 = vsyncadd [#allocation41], %s1057
          %s1060 = sshll.u32 [#allocation40], 4
          %s1061 = int_to_ptr.vmem [resolvable:$true] %s1060
          %1063 = dma.hbm_to_vmem [thread:$0]  %s49, 16, %s1061, [#allocation41]
        $region104: #{tpu_custom_call.1} parent=11 // pred_fallthru
          _
        // Predicated region
        $region105: #{tpu_custom_call.1} parent=11 // pred_check
          %p1064 = pneg %p661
        $region106: #{tpu_custom_call.1} parent=11 // pred_check_branch
          %1066 = sbr.rel (%p1064) target = $region108
        $region107: #{tpu_custom_call.1} parent=11 // pred_region
          %s1068 = ssub.s32 256, 256
          %1069 = vsyncadd [#allocation41], %s1068
          %s1070 = sshll.u32 [#allocation42], 4
          %s1071 = int_to_ptr.vmem [resolvable:$true] %s1070
          %1076 = dma.hbm_to_vmem [thread:$0]  %s51, 256, %s1071, [#allocation41], 128, 128, 8
        $region108: #{tpu_custom_call.1} parent=11 // pred_fallthru
          _
        // Predicated region
        $region109: #{tpu_custom_call.1} parent=11 // pred_check
          %p1077 = pneg %p682
        $region110: #{tpu_custom_call.1} parent=11 // pred_check_branch
          %1079 = sbr.rel (%p1077) target = $region112
        $region111: #{tpu_custom_call.1} parent=11 // pred_region
          %s1081 = ssub.s32 16, 16
          %1082 = vsyncadd [#allocation44], %s1081
          %s1084 = sshll.u32 [#allocation43], 4
          %s1085 = int_to_ptr.vmem [resolvable:$true] %s1084
          %1087 = dma.hbm_to_vmem [thread:$0]  %s53, 16, %s1085, [#allocation44]
        $region112: #{tpu_custom_call.1} parent=11 // pred_fallthru
          _
        // Predicated region
        $region113: #{tpu_custom_call.1} parent=11 // pred_check
          %p1088 = pneg %p703
        $region114: #{tpu_custom_call.1} parent=11 // pred_check_branch
          %1090 = sbr.rel (%p1088) target = $region116
        $region115: #{tpu_custom_call.1} parent=11 // pred_region
          %s1092 = ssub.s32 16, 16
          %1093 = vsyncadd [#allocation44], %s1092
          %s1095 = sshll.u32 [#allocation45], 4
          %s1096 = int_to_ptr.vmem [resolvable:$true] %s1095
          %1098 = dma.hbm_to_vmem [thread:$0]  %s55, 16, %s1096, [#allocation44]
        $region116: #{tpu_custom_call.1} parent=11 // pred_fallthru
          _
        // Predicated region
        $region117: #{tpu_custom_call.1} parent=11 // pred_check
          %p1099 = pneg %p724
        $region118: #{tpu_custom_call.1} parent=11 // pred_check_branch
          %1101 = sbr.rel (%p1099) target = $region120
        $region119: #{tpu_custom_call.1} parent=11 // pred_region
          _
        $region120: #{tpu_custom_call.1} parent=11 // pred_fallthru
          _
        // Predicated region
        $region121: #{tpu_custom_call.1} parent=11 // pred_check
          %p1102 = pneg %p745
        $region122: #{tpu_custom_call.1} parent=11 // pred_check_branch
          %1104 = sbr.rel (%p1102) target = $region124
        $region123: #{tpu_custom_call.1} parent=11 // pred_region
          _
        $region124: #{tpu_custom_call.1} parent=11 // pred_fallthru
          _
        // Predicated region
        $region125: #{tpu_custom_call.1} parent=11 // pred_check
          %p1105 = pneg %p766
        $region126: #{tpu_custom_call.1} parent=11 // pred_check_branch
          %1107 = sbr.rel (%p1105) target = $region128
        $region127: #{tpu_custom_call.1} parent=11 // pred_region
          _
        $region128: #{tpu_custom_call.1} parent=11 // pred_fallthru
          _
      $region12: #{tpu_custom_call.1} parent=5 // pred_fallthru
        _
      %p1108 = scmp.lt.s32.totalorder %s91, 2
      // Predicated region
      $region129: #{tpu_custom_call.1} parent=5 // pred_check
        %p1109 = pneg %p1108
      $region130: #{tpu_custom_call.1} parent=5 // pred_check_branch
        %1111 = sbr.rel (%p1109) target = $region132
      $region131: #{tpu_custom_call.1} parent=5 // pred_region
        // Predicated region
        $region133: #{tpu_custom_call.1} parent=131 // pred_check
          %p1112 = pneg %p125
        $region134: #{tpu_custom_call.1} parent=131 // pred_check_branch
          %1114 = sbr.rel (%p1112) target = $region136
        $region135: #{tpu_custom_call.1} parent=131 // pred_region
          %s1115 = sand.u32 %s115, 1
          %s1116 = scalar_lea.sflag [#allocation6], %s1115
          %s1117 = sand.u32 %s115, 1
          %s1118 = smul.addr %s1117, 40
          %s1119 = scalar_lea.vmem [#allocation5], %s1118
          %s1120 = smul.u32 10, %s99
          %s1122 = ssub.s32 640, 640
          %1123 = vsyncadd %s1116, %s1122
          %s1124 = smul.addr %s98, 20
          %s1125 = sadd.s32 %s1120, %s1124
          %s1126 = smul.addr %s1125, 64
          %s1127 = scalar_lea.hbm %s1, %s1126
          %s1129 = sshll.u32 %s1119, 4
          %s1130 = int_to_ptr.vmem [resolvable:$true] %s1129
          %1132 = dma.hbm_to_vmem [thread:$0]  %s1127, 640, %s1130, %s1116
        $region136: #{tpu_custom_call.1} parent=131 // pred_fallthru
          _
        // Predicated region
        $region137: #{tpu_custom_call.1} parent=131 // pred_check
          %p1133 = pneg %p151
        $region138: #{tpu_custom_call.1} parent=131 // pred_check_branch
          %1135 = sbr.rel (%p1133) target = $region140
        $region139: #{tpu_custom_call.1} parent=131 // pred_region
          %s1136 = sand.u32 %s91, 1
          %s1137 = scalar_lea.sflag [#allocation8], %s1136
          %s1138 = sand.u32 %s141, 1
          %s1139 = smul.addr %s1138, 5120
          %s1140 = scalar_lea.vmem [#allocation7], %s1139
          %s1141 = smul.u32 40, %s99
          %s1143 = ssub.s32 81920, 81920
          %1144 = vsyncadd %s1137, %s1143
          %s1145 = smul.addr %s1141, 16
          %s1146 = smul.addr %s1145, 128
          %s1147 = scalar_lea.hbm %s3, %s1146
          %s1148 = sshll.u32 %s1140, 4
          %s1149 = int_to_ptr.vmem [resolvable:$true] %s1148
          %1154 = dma.hbm_to_vmem [thread:$0]  %s1147, 81920, %s1149, %s1137, 2048, 2048, 128
        $region140: #{tpu_custom_call.1} parent=131 // pred_fallthru
          _
      $region132: #{tpu_custom_call.1} parent=5 // pred_fallthru
        _
      %p1155 = scmp.le.s32.totalorder 1, %s91
      %p1156 = scmp.lt.s32.totalorder %s91, 3
      %p1157 = pnand %p1155, %p1156
      %p1158 = pneg %p1157
      // Predicated region
      $region141: #{tpu_custom_call.1} parent=5 // pred_check
        _
      $region142: #{tpu_custom_call.1} parent=5 // pred_check_branch
        %1160 = sbr.rel (%p1157) target = $region144
      $region143: #{tpu_custom_call.1} parent=5 // pred_region
        %s1161 = ssub.s32 %s91, 1
        %s1162 = sand.u32 %s118, 1
        %s1163 = scalar_lea.sflag [#allocation6], %s1162
        %s1164 = sand.u32 %s118, 1
        %s1165 = smul.addr %s1164, 40
        %s1166 = scalar_lea.vmem [#allocation5], %s1165
        // Predicated region
        $region145: #{tpu_custom_call.1} parent=143 // pred_check
          %p1167 = pneg %p131
        $region146: #{tpu_custom_call.1} parent=143 // pred_check_branch
          %1169 = sbr.rel (%p1167) target = $region148
        $region147: #{tpu_custom_call.1} parent=143 // pred_region
          %1170 = dma.done %s1163, 640
        $region148: #{tpu_custom_call.1} parent=143 // pred_fallthru
          _
        %s1171 = sand.u32 %s96, 1
        %s1172 = scalar_lea.sflag [#allocation8], %s1171
        %s1173 = sand.u32 %s144, 1
        %s1174 = smul.addr %s1173, 5120
        %s1175 = scalar_lea.vmem [#allocation7], %s1174
        // Predicated region
        $region149: #{tpu_custom_call.1} parent=143 // pred_check
          %p1176 = pneg %p157
        $region150: #{tpu_custom_call.1} parent=143 // pred_check_branch
          %1178 = sbr.rel (%p1176) target = $region152
        $region151: #{tpu_custom_call.1} parent=143 // pred_region
          %1179 = dma.done %s1172, 81920
        $region152: #{tpu_custom_call.1} parent=143 // pred_fallthru
          _
        // Predicated region
        $region153: #{tpu_custom_call.1} parent=143 // pred_check
          %p1180 = pneg %p178
        $region154: #{tpu_custom_call.1} parent=143 // pred_check_branch
          %1182 = sbr.rel (%p1180) target = $region156
        $region155: #{tpu_custom_call.1} parent=143 // pred_region
          %1183 = dma.done [#allocation8], 256
        $region156: #{tpu_custom_call.1} parent=143 // pred_fallthru
          _
        // Predicated region
        $region157: #{tpu_custom_call.1} parent=143 // pred_check
          %p1184 = pneg %p199
        $region158: #{tpu_custom_call.1} parent=143 // pred_check_branch
          %1186 = sbr.rel (%p1184) target = $region160
        $region159: #{tpu_custom_call.1} parent=143 // pred_region
          %1187 = dma.done [#allocation11], 256
        $region160: #{tpu_custom_call.1} parent=143 // pred_fallthru
          _
        // Predicated region
        $region161: #{tpu_custom_call.1} parent=143 // pred_check
          %p1188 = pneg %p220
        $region162: #{tpu_custom_call.1} parent=143 // pred_check_branch
          %1190 = sbr.rel (%p1188) target = $region164
        $region163: #{tpu_custom_call.1} parent=143 // pred_region
          %1191 = dma.done [#allocation11], 32768
        $region164: #{tpu_custom_call.1} parent=143 // pred_fallthru
          _
        // Predicated region
        $region165: #{tpu_custom_call.1} parent=143 // pred_check
          %p1192 = pneg %p241
        $region166: #{tpu_custom_call.1} parent=143 // pred_check_branch
          %1194 = sbr.rel (%p1192) target = $region168
        $region167: #{tpu_custom_call.1} parent=143 // pred_region
          %1195 = dma.done [#allocation14], 64
        $region168: #{tpu_custom_call.1} parent=143 // pred_fallthru
          _
        // Predicated region
        $region169: #{tpu_custom_call.1} parent=143 // pred_check
          %p1196 = pneg %p262
        $region170: #{tpu_custom_call.1} parent=143 // pred_check_branch
          %1198 = sbr.rel (%p1196) target = $region172
        $region171: #{tpu_custom_call.1} parent=143 // pred_region
          %1199 = dma.done [#allocation14], 64
        $region172: #{tpu_custom_call.1} parent=143 // pred_fallthru
          _
        // Predicated region
        $region173: #{tpu_custom_call.1} parent=143 // pred_check
          %p1200 = pneg %p283
        $region174: #{tpu_custom_call.1} parent=143 // pred_check_branch
          %1202 = sbr.rel (%p1200) target = $region176
        $region175: #{tpu_custom_call.1} parent=143 // pred_region
          %1203 = dma.done [#allocation17], 8192
        $region176: #{tpu_custom_call.1} parent=143 // pred_fallthru
          _
        // Predicated region
        $region177: #{tpu_custom_call.1} parent=143 // pred_check
          %p1204 = pneg %p304
        $region178: #{tpu_custom_call.1} parent=143 // pred_check_branch
          %1206 = sbr.rel (%p1204) target = $region180
        $region179: #{tpu_custom_call.1} parent=143 // pred_region
          %1207 = dma.done [#allocation17], 64
        $region180: #{tpu_custom_call.1} parent=143 // pred_fallthru
          _
        // Predicated region
        $region181: #{tpu_custom_call.1} parent=143 // pred_check
          %p1208 = pneg %p325
        $region182: #{tpu_custom_call.1} parent=143 // pred_check_branch
          %1210 = sbr.rel (%p1208) target = $region184
        $region183: #{tpu_custom_call.1} parent=143 // pred_region
          %1211 = dma.done [#allocation20], 64
        $region184: #{tpu_custom_call.1} parent=143 // pred_fallthru
          _
        // Predicated region
        $region185: #{tpu_custom_call.1} parent=143 // pred_check
          %p1212 = pneg %p346
        $region186: #{tpu_custom_call.1} parent=143 // pred_check_branch
          %1214 = sbr.rel (%p1212) target = $region188
        $region187: #{tpu_custom_call.1} parent=143 // pred_region
          %1215 = dma.done [#allocation20], 8192
        $region188: #{tpu_custom_call.1} parent=143 // pred_fallthru
          _
        // Predicated region
        $region189: #{tpu_custom_call.1} parent=143 // pred_check
          %p1216 = pneg %p367
        $region190: #{tpu_custom_call.1} parent=143 // pred_check_branch
          %1218 = sbr.rel (%p1216) target = $region192
        $region191: #{tpu_custom_call.1} parent=143 // pred_region
          %1219 = dma.done [#allocation23], 64
        $region192: #{tpu_custom_call.1} parent=143 // pred_fallthru
          _
        // Predicated region
        $region193: #{tpu_custom_call.1} parent=143 // pred_check
          %p1220 = pneg %p388
        $region194: #{tpu_custom_call.1} parent=143 // pred_check_branch
          %1222 = sbr.rel (%p1220) target = $region196
        $region195: #{tpu_custom_call.1} parent=143 // pred_region
          %1223 = dma.done [#allocation23], 64
        $region196: #{tpu_custom_call.1} parent=143 // pred_fallthru
          _
        // Predicated region
        $region197: #{tpu_custom_call.1} parent=143 // pred_check
          %p1224 = pneg %p409
        $region198: #{tpu_custom_call.1} parent=143 // pred_check_branch
          %1226 = sbr.rel (%p1224) target = $region200
        $region199: #{tpu_custom_call.1} parent=143 // pred_region
          %1227 = dma.done [#allocation26], 4096
        $region200: #{tpu_custom_call.1} parent=143 // pred_fallthru
          _
        // Predicated region
        $region201: #{tpu_custom_call.1} parent=143 // pred_check
          %p1228 = pneg %p430
        $region202: #{tpu_custom_call.1} parent=143 // pred_check_branch
          %1230 = sbr.rel (%p1228) target = $region204
        $region203: #{tpu_custom_call.1} parent=143 // pred_region
          %1231 = dma.done [#allocation26], 32
        $region204: #{tpu_custom_call.1} parent=143 // pred_fallthru
          _
        // Predicated region
        $region205: #{tpu_custom_call.1} parent=143 // pred_check
          %p1232 = pneg %p451
        $region206: #{tpu_custom_call.1} parent=143 // pred_check_branch
          %1234 = sbr.rel (%p1232) target = $region208
        $region207: #{tpu_custom_call.1} parent=143 // pred_region
          %1235 = dma.done [#allocation29], 32
        $region208: #{tpu_custom_call.1} parent=143 // pred_fallthru
          _
        // Predicated region
        $region209: #{tpu_custom_call.1} parent=143 // pred_check
          %p1236 = pneg %p472
        $region210: #{tpu_custom_call.1} parent=143 // pred_check_branch
          %1238 = sbr.rel (%p1236) target = $region212
        $region211: #{tpu_custom_call.1} parent=143 // pred_region
          %1239 = dma.done [#allocation29], 2048
        $region212: #{tpu_custom_call.1} parent=143 // pred_fallthru
          _
        // Predicated region
        $region213: #{tpu_custom_call.1} parent=143 // pred_check
          %p1240 = pneg %p493
        $region214: #{tpu_custom_call.1} parent=143 // pred_check_branch
          %1242 = sbr.rel (%p1240) target = $region216
        $region215: #{tpu_custom_call.1} parent=143 // pred_region
          %1243 = dma.done [#allocation32], 32
        $region216: #{tpu_custom_call.1} parent=143 // pred_fallthru
          _
        // Predicated region
        $region217: #{tpu_custom_call.1} parent=143 // pred_check
          %p1244 = pneg %p514
        $region218: #{tpu_custom_call.1} parent=143 // pred_check_branch
          %1246 = sbr.rel (%p1244) target = $region220
        $region219: #{tpu_custom_call.1} parent=143 // pred_region
          %1247 = dma.done [#allocation32], 32
        $region220: #{tpu_custom_call.1} parent=143 // pred_fallthru
          _
        // Predicated region
        $region221: #{tpu_custom_call.1} parent=143 // pred_check
          %p1248 = pneg %p535
        $region222: #{tpu_custom_call.1} parent=143 // pred_check_branch
          %1250 = sbr.rel (%p1248) target = $region224
        $region223: #{tpu_custom_call.1} parent=143 // pred_region
          %1251 = dma.done [#allocation35], 1024
        $region224: #{tpu_custom_call.1} parent=143 // pred_fallthru
          _
        // Predicated region
        $region225: #{tpu_custom_call.1} parent=143 // pred_check
          %p1252 = pneg %p556
        $region226: #{tpu_custom_call.1} parent=143 // pred_check_branch
          %1254 = sbr.rel (%p1252) target = $region228
        $region227: #{tpu_custom_call.1} parent=143 // pred_region
          %1255 = dma.done [#allocation35], 16
        $region228: #{tpu_custom_call.1} parent=143 // pred_fallthru
          _
        // Predicated region
        $region229: #{tpu_custom_call.1} parent=143 // pred_check
          %p1256 = pneg %p577
        $region230: #{tpu_custom_call.1} parent=143 // pred_check_branch
          %1258 = sbr.rel (%p1256) target = $region232
        $region231: #{tpu_custom_call.1} parent=143 // pred_region
          %1259 = dma.done [#allocation38], 16
        $region232: #{tpu_custom_call.1} parent=143 // pred_fallthru
          _
        // Predicated region
        $region233: #{tpu_custom_call.1} parent=143 // pred_check
          %p1260 = pneg %p619
        $region234: #{tpu_custom_call.1} parent=143 // pred_check_branch
          %1262 = sbr.rel (%p1260) target = $region236
        $region235: #{tpu_custom_call.1} parent=143 // pred_region
          %1263 = dma.done [#allocation38], 16
        $region236: #{tpu_custom_call.1} parent=143 // pred_fallthru
          _
        // Predicated region
        $region237: #{tpu_custom_call.1} parent=143 // pred_check
          %p1264 = pneg %p640
        $region238: #{tpu_custom_call.1} parent=143 // pred_check_branch
          %1266 = sbr.rel (%p1264) target = $region240
        $region239: #{tpu_custom_call.1} parent=143 // pred_region
          %1267 = dma.done [#allocation41], 16
        $region240: #{tpu_custom_call.1} parent=143 // pred_fallthru
          _
        // Predicated region
        $region241: #{tpu_custom_call.1} parent=143 // pred_check
          %p1268 = pneg %p661
        $region242: #{tpu_custom_call.1} parent=143 // pred_check_branch
          %1270 = sbr.rel (%p1268) target = $region244
        $region243: #{tpu_custom_call.1} parent=143 // pred_region
          %1271 = dma.done [#allocation41], 256
        $region244: #{tpu_custom_call.1} parent=143 // pred_fallthru
          _
        // Predicated region
        $region245: #{tpu_custom_call.1} parent=143 // pred_check
          %p1272 = pneg %p682
        $region246: #{tpu_custom_call.1} parent=143 // pred_check_branch
          %1274 = sbr.rel (%p1272) target = $region248
        $region247: #{tpu_custom_call.1} parent=143 // pred_region
          %1275 = dma.done [#allocation44], 16
        $region248: #{tpu_custom_call.1} parent=143 // pred_fallthru
          _
        // Predicated region
        $region249: #{tpu_custom_call.1} parent=143 // pred_check
          %p1276 = pneg %p703
        $region250: #{tpu_custom_call.1} parent=143 // pred_check_branch
          %1278 = sbr.rel (%p1276) target = $region252
        $region251: #{tpu_custom_call.1} parent=143 // pred_region
          %1279 = dma.done [#allocation44], 16
        $region252: #{tpu_custom_call.1} parent=143 // pred_fallthru
          _
        %s1280 = sand.u32 %s118, 1
        %s1281 = scalar_lea.sflag [#allocation6], %s1280
        %s1282 = sand.u32 %s118, 1
        %s1283 = smul.addr %s1282, 40
        %s1284 = scalar_lea.vmem [#allocation5], %s1283
        %p1285 = pneg %p131
        %p1286 = pneg %p128
        %s1287 = sand.u32 %s96, 1
        %s1288 = scalar_lea.sflag [#allocation8], %s1287
        %s1289 = sand.u32 %s144, 1
        %s1290 = smul.addr %s1289, 5120
        %s1291 = scalar_lea.vmem [#allocation7], %s1290
        %p1292 = pneg %p157
        %p1293 = pneg %p154
        %p1294 = pneg %p178
        %p1295 = pneg %p175
        %p1296 = pneg %p199
        %p1297 = pneg %p196
        %p1298 = pneg %p220
        %p1299 = pneg %p217
        %p1300 = pneg %p241
        %p1301 = pneg %p238
        %p1302 = pneg %p262
        %p1303 = pneg %p259
        %p1304 = pneg %p283
        %p1305 = pneg %p280
        %p1306 = pneg %p304
        %p1307 = pneg %p301
        %p1308 = pneg %p325
        %p1309 = pneg %p322
        %p1310 = pneg %p346
        %p1311 = pneg %p343
        %p1312 = pneg %p367
        %p1313 = pneg %p364
        %p1314 = pneg %p388
        %p1315 = pneg %p385
        %p1316 = pneg %p409
        %p1317 = pneg %p406
        %p1318 = pneg %p430
        %p1319 = pneg %p427
        %p1320 = pneg %p451
        %p1321 = pneg %p448
        %p1322 = pneg %p472
        %p1323 = pneg %p469
        %p1324 = pneg %p493
        %p1325 = pneg %p490
        %p1326 = pneg %p514
        %p1327 = pneg %p511
        %p1328 = pneg %p535
        %p1329 = pneg %p532
        %p1330 = pneg %p556
        %p1331 = pneg %p553
        %p1332 = pneg %p577
        %p1333 = pneg %p574
        %p1334 = pneg %p598
        %p1335 = pneg %p595
        %p1336 = pneg %p619
        %p1337 = pneg %p616
        %p1338 = pneg %p640
        %p1339 = pneg %p637
        %p1340 = pneg %p661
        %p1341 = pneg %p658
        %p1342 = pneg %p682
        %p1343 = pneg %p679
        %p1344 = pneg %p703
        %p1345 = pneg %p700
        %p1346 = pneg %p724
        %p1347 = pneg %p721
        %p1348 = pneg %p745
        %p1349 = pneg %p742
        %p1350 = pneg %p766
        %p1351 = pneg %p763
        %p1352 = pneg %p792
        %p1353 = pneg %p789
        %p1354 = scmp.lt.s32.totalorder %s100, 0
        %s1355 = scalar_select %p1354, %s100, 0
        %s1356 = smul.addr %s1355, 8
        %s1357 = scalar_lea.vmem %s63, %s1356
        %s1358 = smul.u32 10, %s101
        %s1359 = smul.u32 40, %s101
        %p1360 = scmp.lt.s32.totalorder %s100, 0
        %s1361 = scalar_select %p1360, %s100, 0
        %s1362 = smul.addr %s1361, 8
        %s1363 = scalar_lea.vmem %s63, %s1362
        %p1365 = scmp.eq.s32.totalorder %s101, 0
        // Predicated region
        $region253: #{tpu_custom_call.1} parent=143 // pred_check
          %p1366 = pneg %p1365
        $region254: #{tpu_custom_call.1} parent=143 // pred_check_branch
          %1368 = sbr.rel (%p1366) target = $region256
        $region255: #{tpu_custom_call.1} parent=143 // pred_region
          %1369 = vst [vmem:[#allocation2] sm:$0xff] 0.0
          %1370 = vst [vmem:[#allocation2 + $0x8] sm:$0xff] 0.0
          %1371 = vst [vmem:[#allocation2 + $0x10] sm:$0xff] 0.0
          %1372 = vst [vmem:[#allocation2 + $0x18] sm:$0xff] 0.0
          %1373 = vst [vmem:[#allocation2 + $0x20] sm:$0xff] 0.0
          %1374 = vst [vmem:[#allocation2 + $0x28] sm:$0xff] 0.0
          %1375 = vst [vmem:[#allocation2 + $0x30] sm:$0xff] 0.0
          %1376 = vst [vmem:[#allocation2 + $0x38] sm:$0xff] 0.0
          %1377 = vst [vmem:[#allocation2 + $0x40] sm:$0xff] 0.0
          %1378 = vst [vmem:[#allocation2 + $0x48] sm:$0xff] 0.0
          %1379 = vst [vmem:[#allocation2 + $0x50] sm:$0xff] 0.0
          %1380 = vst [vmem:[#allocation2 + $0x58] sm:$0xff] 0.0
          %1381 = vst [vmem:[#allocation2 + $0x60] sm:$0xff] 0.0
          %1382 = vst [vmem:[#allocation2 + $0x68] sm:$0xff] 0.0
          %1383 = vst [vmem:[#allocation2 + $0x70] sm:$0xff] 0.0
          %1384 = vst [vmem:[#allocation2 + $0x78] sm:$0xff] 0.0
        $region256: #{tpu_custom_call.1} parent=143 // pred_fallthru
          _
        %v1385 = vld [vmem:[#allocation2] sm:$0xff]
        %v1386 = vld [vmem:[#allocation2 + $0x8] sm:$0xff]
        %v1387 = vld [vmem:[#allocation2 + $0x10] sm:$0xff]
        %v1388 = vld [vmem:[#allocation2 + $0x18] sm:$0xff]
        %v1389 = vld [vmem:[#allocation2 + $0x20] sm:$0xff]
        %v1390 = vld [vmem:[#allocation2 + $0x28] sm:$0xff]
        %v1391 = vld [vmem:[#allocation2 + $0x30] sm:$0xff]
        %v1392 = vld [vmem:[#allocation2 + $0x38] sm:$0xff]
        %v1393 = vld [vmem:[#allocation2 + $0x40] sm:$0xff]
        %v1394 = vld [vmem:[#allocation2 + $0x48] sm:$0xff]
        %v1395 = vld [vmem:[#allocation2 + $0x50] sm:$0xff]
        %v1396 = vld [vmem:[#allocation2 + $0x58] sm:$0xff]
        %v1397 = vld [vmem:[#allocation2 + $0x60] sm:$0xff]
        %v1398 = vld [vmem:[#allocation2 + $0x68] sm:$0xff]
        %v1399 = vld [vmem:[#allocation2 + $0x70] sm:$0xff]
        %v1400 = vld [vmem:[#allocation2 + $0x78] sm:$0xff]
        %v1401 = vld [vmem:[%s1166] sm:$0xff]
        %v1402 = vld [vmem:[%s1166 + $0x8] sm:$0xff]
        %v1403 = vld [vmem:[%s1166 + $0x10] sm:$0xff]
        %v1404 = vld [vmem:[%s1166 + $0x18] sm:$0xff]
        %v1405 = vld [vmem:[%s1166 + $0x20] sm:$0xff]
        %v1406 = vld [vmem:[%s1175] sm:$0xff]
        %v1407 = vld [vmem:[%s1175 + $0x8] sm:$0xff]
        %v1408 = vld [vmem:[%s1175 + $0x10] sm:$0xff]
        %v1409 = vld [vmem:[%s1175 + $0x18] sm:$0xff]
        %v1410 = vld [vmem:[%s1175 + $0x20] sm:$0xff]
        %v1411 = vld [vmem:[%s1175 + $0x28] sm:$0xff]
        %v1412 = vld [vmem:[%s1175 + $0x30] sm:$0xff]
        %v1413 = vld [vmem:[%s1175 + $0x38] sm:$0xff]
        %v1414 = vld [vmem:[%s1175 + $0x40] sm:$0xff]
        %v1415 = vld [vmem:[%s1175 + $0x48] sm:$0xff]
        %v1416 = vld [vmem:[%s1175 + $0x50] sm:$0xff]
        %v1417 = vld [vmem:[%s1175 + $0x58] sm:$0xff]
        %v1418 = vld [vmem:[%s1175 + $0x60] sm:$0xff]
        %v1419 = vld [vmem:[%s1175 + $0x68] sm:$0xff]
        %v1420 = vld [vmem:[%s1175 + $0x70] sm:$0xff]
        %v1421 = vld [vmem:[%s1175 + $0x78] sm:$0xff]
        %v1422 = vld [vmem:[%s1175 + $0x80] sm:$0xff]
        %v1423 = vld [vmem:[%s1175 + $0x88] sm:$0xff]
        %v1424 = vld [vmem:[%s1175 + $0x90] sm:$0xff]
        %v1425 = vld [vmem:[%s1175 + $0x98] sm:$0xff]
        %v1426 = vld [vmem:[%s1175 + $0xa0] sm:$0xff]
        %v1427 = vld [vmem:[%s1175 + $0xa8] sm:$0xff]
        %v1428 = vld [vmem:[%s1175 + $0xb0] sm:$0xff]
        %v1429 = vld [vmem:[%s1175 + $0xb8] sm:$0xff]
        %v1430 = vld [vmem:[%s1175 + $0xc0] sm:$0xff]
        %v1431 = vld [vmem:[%s1175 + $0xc8] sm:$0xff]
        %v1432 = vld [vmem:[%s1175 + $0xd0] sm:$0xff]
        %v1433 = vld [vmem:[%s1175 + $0xd8] sm:$0xff]
        %v1434 = vld [vmem:[%s1175 + $0xe0] sm:$0xff]
        %v1435 = vld [vmem:[%s1175 + $0xe8] sm:$0xff]
        %v1436 = vld [vmem:[%s1175 + $0xf0] sm:$0xff]
        %v1437 = vld [vmem:[%s1175 + $0xf8] sm:$0xff]
        %v1438 = vld [vmem:[%s1175 + $0x100] sm:$0xff]
        %v1439 = vld [vmem:[%s1175 + $0x108] sm:$0xff]
        %v1440 = vld [vmem:[%s1175 + $0x110] sm:$0xff]
        %v1441 = vld [vmem:[%s1175 + $0x118] sm:$0xff]
        %v1442 = vld [vmem:[%s1175 + $0x120] sm:$0xff]
        %v1443 = vld [vmem:[%s1175 + $0x128] sm:$0xff]
        %v1444 = vld [vmem:[%s1175 + $0x130] sm:$0xff]
        %v1445 = vld [vmem:[%s1175 + $0x138] sm:$0xff]
        %v1446 = vld [vmem:[%s1175 + $0x140] sm:$0xff]
        %v1447 = vld [vmem:[%s1175 + $0x148] sm:$0xff]
        %v1448 = vld [vmem:[%s1175 + $0x150] sm:$0xff]
        %v1449 = vld [vmem:[%s1175 + $0x158] sm:$0xff]
        %v1450 = vld [vmem:[%s1175 + $0x160] sm:$0xff]
        %v1451 = vld [vmem:[%s1175 + $0x168] sm:$0xff]
        %v1452 = vld [vmem:[%s1175 + $0x170] sm:$0xff]
        %v1453 = vld [vmem:[%s1175 + $0x178] sm:$0xff]
        %v1454 = vld [vmem:[%s1175 + $0x180] sm:$0xff]
        %v1455 = vld [vmem:[%s1175 + $0x188] sm:$0xff]
        %v1456 = vld [vmem:[%s1175 + $0x190] sm:$0xff]
        %v1457 = vld [vmem:[%s1175 + $0x198] sm:$0xff]
        %v1458 = vld [vmem:[%s1175 + $0x1a0] sm:$0xff]
        %v1459 = vld [vmem:[%s1175 + $0x1a8] sm:$0xff]
        %v1460 = vld [vmem:[%s1175 + $0x1b0] sm:$0xff]
        %v1461 = vld [vmem:[%s1175 + $0x1b8] sm:$0xff]
        %v1462 = vld [vmem:[%s1175 + $0x1c0] sm:$0xff]
        %v1463 = vld [vmem:[%s1175 + $0x1c8] sm:$0xff]
        %v1464 = vld [vmem:[%s1175 + $0x1d0] sm:$0xff]
        %v1465 = vld [vmem:[%s1175 + $0x1d8] sm:$0xff]
        %v1466 = vld [vmem:[%s1175 + $0x1e0] sm:$0xff]
        %v1467 = vld [vmem:[%s1175 + $0x1e8] sm:$0xff]
        %v1468 = vld [vmem:[%s1175 + $0x1f0] sm:$0xff]
        %v1469 = vld [vmem:[%s1175 + $0x1f8] sm:$0xff]
        %v1470 = vld [vmem:[%s1175 + $0x200] sm:$0xff]
        %v1471 = vld [vmem:[%s1175 + $0x208] sm:$0xff]
        %v1472 = vld [vmem:[%s1175 + $0x210] sm:$0xff]
        %v1473 = vld [vmem:[%s1175 + $0x218] sm:$0xff]
        %v1474 = vld [vmem:[%s1175 + $0x220] sm:$0xff]
        %v1475 = vld [vmem:[%s1175 + $0x228] sm:$0xff]
        %v1476 = vld [vmem:[%s1175 + $0x230] sm:$0xff]
        %v1477 = vld [vmem:[%s1175 + $0x238] sm:$0xff]
        %v1478 = vld [vmem:[%s1175 + $0x240] sm:$0xff]
        %v1479 = vld [vmem:[%s1175 + $0x248] sm:$0xff]
        %v1480 = vld [vmem:[%s1175 + $0x250] sm:$0xff]
        %v1481 = vld [vmem:[%s1175 + $0x258] sm:$0xff]
        %v1482 = vld [vmem:[%s1175 + $0x260] sm:$0xff]
        %v1483 = vld [vmem:[%s1175 + $0x268] sm:$0xff]
        %v1484 = vld [vmem:[%s1175 + $0x270] sm:$0xff]
        %v1485 = vld [vmem:[%s1175 + $0x278] sm:$0xff]
        %v1486 = vld [vmem:[%s1175 + $0x280] sm:$0xff]
        %v1487 = vld [vmem:[%s1175 + $0x288] sm:$0xff]
        %v1488 = vld [vmem:[%s1175 + $0x290] sm:$0xff]
        %v1489 = vld [vmem:[%s1175 + $0x298] sm:$0xff]
        %v1490 = vld [vmem:[%s1175 + $0x2a0] sm:$0xff]
        %v1491 = vld [vmem:[%s1175 + $0x2a8] sm:$0xff]
        %v1492 = vld [vmem:[%s1175 + $0x2b0] sm:$0xff]
        %v1493 = vld [vmem:[%s1175 + $0x2b8] sm:$0xff]
        %v1494 = vld [vmem:[%s1175 + $0x2c0] sm:$0xff]
        %v1495 = vld [vmem:[%s1175 + $0x2c8] sm:$0xff]
        %v1496 = vld [vmem:[%s1175 + $0x2d0] sm:$0xff]
        %v1497 = vld [vmem:[%s1175 + $0x2d8] sm:$0xff]
        %v1498 = vld [vmem:[%s1175 + $0x2e0] sm:$0xff]
        %v1499 = vld [vmem:[%s1175 + $0x2e8] sm:$0xff]
        %v1500 = vld [vmem:[%s1175 + $0x2f0] sm:$0xff]
        %v1501 = vld [vmem:[%s1175 + $0x2f8] sm:$0xff]
        %v1502 = vld [vmem:[%s1175 + $0x300] sm:$0xff]
        %v1503 = vld [vmem:[%s1175 + $0x308] sm:$0xff]
        %v1504 = vld [vmem:[%s1175 + $0x310] sm:$0xff]
        %v1505 = vld [vmem:[%s1175 + $0x318] sm:$0xff]
        %v1506 = vld [vmem:[%s1175 + $0x320] sm:$0xff]
        %v1507 = vld [vmem:[%s1175 + $0x328] sm:$0xff]
        %v1508 = vld [vmem:[%s1175 + $0x330] sm:$0xff]
        %v1509 = vld [vmem:[%s1175 + $0x338] sm:$0xff]
        %v1510 = vld [vmem:[%s1175 + $0x340] sm:$0xff]
        %v1511 = vld [vmem:[%s1175 + $0x348] sm:$0xff]
        %v1512 = vld [vmem:[%s1175 + $0x350] sm:$0xff]
        %v1513 = vld [vmem:[%s1175 + $0x358] sm:$0xff]
        %v1514 = vld [vmem:[%s1175 + $0x360] sm:$0xff]
        %v1515 = vld [vmem:[%s1175 + $0x368] sm:$0xff]
        %v1516 = vld [vmem:[%s1175 + $0x370] sm:$0xff]
        %v1517 = vld [vmem:[%s1175 + $0x378] sm:$0xff]
        %v1518 = vld [vmem:[%s1175 + $0x380] sm:$0xff]
        %v1519 = vld [vmem:[%s1175 + $0x388] sm:$0xff]
        %v1520 = vld [vmem:[%s1175 + $0x390] sm:$0xff]
        %v1521 = vld [vmem:[%s1175 + $0x398] sm:$0xff]
        %v1522 = vld [vmem:[%s1175 + $0x3a0] sm:$0xff]
        %v1523 = vld [vmem:[%s1175 + $0x3a8] sm:$0xff]
        %v1524 = vld [vmem:[%s1175 + $0x3b0] sm:$0xff]
        %v1525 = vld [vmem:[%s1175 + $0x3b8] sm:$0xff]
        %v1526 = vld [vmem:[%s1175 + $0x3c0] sm:$0xff]
        %v1527 = vld [vmem:[%s1175 + $0x3c8] sm:$0xff]
        %v1528 = vld [vmem:[%s1175 + $0x3d0] sm:$0xff]
        %v1529 = vld [vmem:[%s1175 + $0x3d8] sm:$0xff]
        %v1530 = vld [vmem:[%s1175 + $0x3e0] sm:$0xff]
        %v1531 = vld [vmem:[%s1175 + $0x3e8] sm:$0xff]
        %v1532 = vld [vmem:[%s1175 + $0x3f0] sm:$0xff]
        %v1533 = vld [vmem:[%s1175 + $0x3f8] sm:$0xff]
        %v1534 = vld [vmem:[%s1175 + $0x400] sm:$0xff]
        %v1535 = vld [vmem:[%s1175 + $0x408] sm:$0xff]
        %v1536 = vld [vmem:[%s1175 + $0x410] sm:$0xff]
        %v1537 = vld [vmem:[%s1175 + $0x418] sm:$0xff]
        %v1538 = vld [vmem:[%s1175 + $0x420] sm:$0xff]
        %v1539 = vld [vmem:[%s1175 + $0x428] sm:$0xff]
        %v1540 = vld [vmem:[%s1175 + $0x430] sm:$0xff]
        %v1541 = vld [vmem:[%s1175 + $0x438] sm:$0xff]
        %v1542 = vld [vmem:[%s1175 + $0x440] sm:$0xff]
        %v1543 = vld [vmem:[%s1175 + $0x448] sm:$0xff]
        %v1544 = vld [vmem:[%s1175 + $0x450] sm:$0xff]
        %v1545 = vld [vmem:[%s1175 + $0x458] sm:$0xff]
        %v1546 = vld [vmem:[%s1175 + $0x460] sm:$0xff]
        %v1547 = vld [vmem:[%s1175 + $0x468] sm:$0xff]
        %v1548 = vld [vmem:[%s1175 + $0x470] sm:$0xff]
        %v1549 = vld [vmem:[%s1175 + $0x478] sm:$0xff]
        %v1550 = vld [vmem:[%s1175 + $0x480] sm:$0xff]
        %v1551 = vld [vmem:[%s1175 + $0x488] sm:$0xff]
        %v1552 = vld [vmem:[%s1175 + $0x490] sm:$0xff]
        %v1553 = vld [vmem:[%s1175 + $0x498] sm:$0xff]
        %v1554 = vld [vmem:[%s1175 + $0x4a0] sm:$0xff]
        %v1555 = vld [vmem:[%s1175 + $0x4a8] sm:$0xff]
        %v1556 = vld [vmem:[%s1175 + $0x4b0] sm:$0xff]
        %v1557 = vld [vmem:[%s1175 + $0x4b8] sm:$0xff]
        %v1558 = vld [vmem:[%s1175 + $0x4c0] sm:$0xff]
        %v1559 = vld [vmem:[%s1175 + $0x4c8] sm:$0xff]
        %v1560 = vld [vmem:[%s1175 + $0x4d0] sm:$0xff]
        %v1561 = vld [vmem:[%s1175 + $0x4d8] sm:$0xff]
        %v1562 = vld [vmem:[%s1175 + $0x4e0] sm:$0xff]
        %v1563 = vld [vmem:[%s1175 + $0x4e8] sm:$0xff]
        %v1564 = vld [vmem:[%s1175 + $0x4f0] sm:$0xff]
        %v1565 = vld [vmem:[%s1175 + $0x4f8] sm:$0xff]
        %v1566 = vld [vmem:[%s1175 + $0x500] sm:$0xff]
        %v1567 = vld [vmem:[%s1175 + $0x508] sm:$0xff]
        %v1568 = vld [vmem:[%s1175 + $0x510] sm:$0xff]
        %v1569 = vld [vmem:[%s1175 + $0x518] sm:$0xff]
        %v1570 = vld [vmem:[%s1175 + $0x520] sm:$0xff]
        %v1571 = vld [vmem:[%s1175 + $0x528] sm:$0xff]
        %v1572 = vld [vmem:[%s1175 + $0x530] sm:$0xff]
        %v1573 = vld [vmem:[%s1175 + $0x538] sm:$0xff]
        %v1574 = vld [vmem:[%s1175 + $0x540] sm:$0xff]
        %v1575 = vld [vmem:[%s1175 + $0x548] sm:$0xff]
        %v1576 = vld [vmem:[%s1175 + $0x550] sm:$0xff]
        %v1577 = vld [vmem:[%s1175 + $0x558] sm:$0xff]
        %v1578 = vld [vmem:[%s1175 + $0x560] sm:$0xff]
        %v1579 = vld [vmem:[%s1175 + $0x568] sm:$0xff]
        %v1580 = vld [vmem:[%s1175 + $0x570] sm:$0xff]
        %v1581 = vld [vmem:[%s1175 + $0x578] sm:$0xff]
        %v1582 = vld [vmem:[%s1175 + $0x580] sm:$0xff]
        %v1583 = vld [vmem:[%s1175 + $0x588] sm:$0xff]
        %v1584 = vld [vmem:[%s1175 + $0x590] sm:$0xff]
        %v1585 = vld [vmem:[%s1175 + $0x598] sm:$0xff]
        %v1586 = vld [vmem:[%s1175 + $0x5a0] sm:$0xff]
        %v1587 = vld [vmem:[%s1175 + $0x5a8] sm:$0xff]
        %v1588 = vld [vmem:[%s1175 + $0x5b0] sm:$0xff]
        %v1589 = vld [vmem:[%s1175 + $0x5b8] sm:$0xff]
        %v1590 = vld [vmem:[%s1175 + $0x5c0] sm:$0xff]
        %v1591 = vld [vmem:[%s1175 + $0x5c8] sm:$0xff]
        %v1592 = vld [vmem:[%s1175 + $0x5d0] sm:$0xff]
        %v1593 = vld [vmem:[%s1175 + $0x5d8] sm:$0xff]
        %v1594 = vld [vmem:[%s1175 + $0x5e0] sm:$0xff]
        %v1595 = vld [vmem:[%s1175 + $0x5e8] sm:$0xff]
        %v1596 = vld [vmem:[%s1175 + $0x5f0] sm:$0xff]
        %v1597 = vld [vmem:[%s1175 + $0x5f8] sm:$0xff]
        %v1598 = vld [vmem:[%s1175 + $0x600] sm:$0xff]
        %v1599 = vld [vmem:[%s1175 + $0x608] sm:$0xff]
        %v1600 = vld [vmem:[%s1175 + $0x610] sm:$0xff]
        %v1601 = vld [vmem:[%s1175 + $0x618] sm:$0xff]
        %v1602 = vld [vmem:[%s1175 + $0x620] sm:$0xff]
        %v1603 = vld [vmem:[%s1175 + $0x628] sm:$0xff]
        %v1604 = vld [vmem:[%s1175 + $0x630] sm:$0xff]
        %v1605 = vld [vmem:[%s1175 + $0x638] sm:$0xff]
        %v1606 = vld [vmem:[%s1175 + $0x640] sm:$0xff]
        %v1607 = vld [vmem:[%s1175 + $0x648] sm:$0xff]
        %v1608 = vld [vmem:[%s1175 + $0x650] sm:$0xff]
        %v1609 = vld [vmem:[%s1175 + $0x658] sm:$0xff]
        %v1610 = vld [vmem:[%s1175 + $0x660] sm:$0xff]
        %v1611 = vld [vmem:[%s1175 + $0x668] sm:$0xff]
        %v1612 = vld [vmem:[%s1175 + $0x670] sm:$0xff]
        %v1613 = vld [vmem:[%s1175 + $0x678] sm:$0xff]
        %v1614 = vld [vmem:[%s1175 + $0x680] sm:$0xff]
        %v1615 = vld [vmem:[%s1175 + $0x688] sm:$0xff]
        %v1616 = vld [vmem:[%s1175 + $0x690] sm:$0xff]
        %v1617 = vld [vmem:[%s1175 + $0x698] sm:$0xff]
        %v1618 = vld [vmem:[%s1175 + $0x6a0] sm:$0xff]
        %v1619 = vld [vmem:[%s1175 + $0x6a8] sm:$0xff]
        %v1620 = vld [vmem:[%s1175 + $0x6b0] sm:$0xff]
        %v1621 = vld [vmem:[%s1175 + $0x6b8] sm:$0xff]
        %v1622 = vld [vmem:[%s1175 + $0x6c0] sm:$0xff]
        %v1623 = vld [vmem:[%s1175 + $0x6c8] sm:$0xff]
        %v1624 = vld [vmem:[%s1175 + $0x6d0] sm:$0xff]
        %v1625 = vld [vmem:[%s1175 + $0x6d8] sm:$0xff]
        %v1626 = vld [vmem:[%s1175 + $0x6e0] sm:$0xff]
        %v1627 = vld [vmem:[%s1175 + $0x6e8] sm:$0xff]
        %v1628 = vld [vmem:[%s1175 + $0x6f0] sm:$0xff]
        %v1629 = vld [vmem:[%s1175 + $0x6f8] sm:$0xff]
        %v1630 = vld [vmem:[%s1175 + $0x700] sm:$0xff]
        %v1631 = vld [vmem:[%s1175 + $0x708] sm:$0xff]
        %v1632 = vld [vmem:[%s1175 + $0x710] sm:$0xff]
        %v1633 = vld [vmem:[%s1175 + $0x718] sm:$0xff]
        %v1634 = vld [vmem:[%s1175 + $0x720] sm:$0xff]
        %v1635 = vld [vmem:[%s1175 + $0x728] sm:$0xff]
        %v1636 = vld [vmem:[%s1175 + $0x730] sm:$0xff]
        %v1637 = vld [vmem:[%s1175 + $0x738] sm:$0xff]
        %v1638 = vld [vmem:[%s1175 + $0x740] sm:$0xff]
        %v1639 = vld [vmem:[%s1175 + $0x748] sm:$0xff]
        %v1640 = vld [vmem:[%s1175 + $0x750] sm:$0xff]
        %v1641 = vld [vmem:[%s1175 + $0x758] sm:$0xff]
        %v1642 = vld [vmem:[%s1175 + $0x760] sm:$0xff]
        %v1643 = vld [vmem:[%s1175 + $0x768] sm:$0xff]
        %v1644 = vld [vmem:[%s1175 + $0x770] sm:$0xff]
        %v1645 = vld [vmem:[%s1175 + $0x778] sm:$0xff]
        %v1646 = vld [vmem:[%s1175 + $0x780] sm:$0xff]
        %v1647 = vld [vmem:[%s1175 + $0x788] sm:$0xff]
        %v1648 = vld [vmem:[%s1175 + $0x790] sm:$0xff]
        %v1649 = vld [vmem:[%s1175 + $0x798] sm:$0xff]
        %v1650 = vld [vmem:[%s1175 + $0x7a0] sm:$0xff]
        %v1651 = vld [vmem:[%s1175 + $0x7a8] sm:$0xff]
        %v1652 = vld [vmem:[%s1175 + $0x7b0] sm:$0xff]
        %v1653 = vld [vmem:[%s1175 + $0x7b8] sm:$0xff]
        %v1654 = vld [vmem:[%s1175 + $0x7c0] sm:$0xff]
        %v1655 = vld [vmem:[%s1175 + $0x7c8] sm:$0xff]
        %v1656 = vld [vmem:[%s1175 + $0x7d0] sm:$0xff]
        %v1657 = vld [vmem:[%s1175 + $0x7d8] sm:$0xff]
        %v1658 = vld [vmem:[%s1175 + $0x7e0] sm:$0xff]
        %v1659 = vld [vmem:[%s1175 + $0x7e8] sm:$0xff]
        %v1660 = vld [vmem:[%s1175 + $0x7f0] sm:$0xff]
        %v1661 = vld [vmem:[%s1175 + $0x7f8] sm:$0xff]
        %v1662 = vld [vmem:[%s1175 + $0x800] sm:$0xff]
        %v1663 = vld [vmem:[%s1175 + $0x808] sm:$0xff]
        %v1664 = vld [vmem:[%s1175 + $0x810] sm:$0xff]
        %v1665 = vld [vmem:[%s1175 + $0x818] sm:$0xff]
        %v1666 = vld [vmem:[%s1175 + $0x820] sm:$0xff]
        %v1667 = vld [vmem:[%s1175 + $0x828] sm:$0xff]
        %v1668 = vld [vmem:[%s1175 + $0x830] sm:$0xff]
        %v1669 = vld [vmem:[%s1175 + $0x838] sm:$0xff]
        %v1670 = vld [vmem:[%s1175 + $0x840] sm:$0xff]
        %v1671 = vld [vmem:[%s1175 + $0x848] sm:$0xff]
        %v1672 = vld [vmem:[%s1175 + $0x850] sm:$0xff]
        %v1673 = vld [vmem:[%s1175 + $0x858] sm:$0xff]
        %v1674 = vld [vmem:[%s1175 + $0x860] sm:$0xff]
        %v1675 = vld [vmem:[%s1175 + $0x868] sm:$0xff]
        %v1676 = vld [vmem:[%s1175 + $0x870] sm:$0xff]
        %v1677 = vld [vmem:[%s1175 + $0x878] sm:$0xff]
        %v1678 = vld [vmem:[%s1175 + $0x880] sm:$0xff]
        %v1679 = vld [vmem:[%s1175 + $0x888] sm:$0xff]
        %v1680 = vld [vmem:[%s1175 + $0x890] sm:$0xff]
        %v1681 = vld [vmem:[%s1175 + $0x898] sm:$0xff]
        %v1682 = vld [vmem:[%s1175 + $0x8a0] sm:$0xff]
        %v1683 = vld [vmem:[%s1175 + $0x8a8] sm:$0xff]
        %v1684 = vld [vmem:[%s1175 + $0x8b0] sm:$0xff]
        %v1685 = vld [vmem:[%s1175 + $0x8b8] sm:$0xff]
        %v1686 = vld [vmem:[%s1175 + $0x8c0] sm:$0xff]
        %v1687 = vld [vmem:[%s1175 + $0x8c8] sm:$0xff]
        %v1688 = vld [vmem:[%s1175 + $0x8d0] sm:$0xff]
        %v1689 = vld [vmem:[%s1175 + $0x8d8] sm:$0xff]
        %v1690 = vld [vmem:[%s1175 + $0x8e0] sm:$0xff]
        %v1691 = vld [vmem:[%s1175 + $0x8e8] sm:$0xff]
        %v1692 = vld [vmem:[%s1175 + $0x8f0] sm:$0xff]
        %v1693 = vld [vmem:[%s1175 + $0x8f8] sm:$0xff]
        %v1694 = vld [vmem:[%s1175 + $0x900] sm:$0xff]
        %v1695 = vld [vmem:[%s1175 + $0x908] sm:$0xff]
        %v1696 = vld [vmem:[%s1175 + $0x910] sm:$0xff]
        %v1697 = vld [vmem:[%s1175 + $0x918] sm:$0xff]
        %v1698 = vld [vmem:[%s1175 + $0x920] sm:$0xff]
        %v1699 = vld [vmem:[%s1175 + $0x928] sm:$0xff]
        %v1700 = vld [vmem:[%s1175 + $0x930] sm:$0xff]
        %v1701 = vld [vmem:[%s1175 + $0x938] sm:$0xff]
        %v1702 = vld [vmem:[%s1175 + $0x940] sm:$0xff]
        %v1703 = vld [vmem:[%s1175 + $0x948] sm:$0xff]
        %v1704 = vld [vmem:[%s1175 + $0x950] sm:$0xff]
        %v1705 = vld [vmem:[%s1175 + $0x958] sm:$0xff]
        %v1706 = vld [vmem:[%s1175 + $0x960] sm:$0xff]
        %v1707 = vld [vmem:[%s1175 + $0x968] sm:$0xff]
        %v1708 = vld [vmem:[%s1175 + $0x970] sm:$0xff]
        %v1709 = vld [vmem:[%s1175 + $0x978] sm:$0xff]
        %v1710 = vld [vmem:[%s1175 + $0x980] sm:$0xff]
        %v1711 = vld [vmem:[%s1175 + $0x988] sm:$0xff]
        %v1712 = vld [vmem:[%s1175 + $0x990] sm:$0xff]
        %v1713 = vld [vmem:[%s1175 + $0x998] sm:$0xff]
        %v1714 = vld [vmem:[%s1175 + $0x9a0] sm:$0xff]
        %v1715 = vld [vmem:[%s1175 + $0x9a8] sm:$0xff]
        %v1716 = vld [vmem:[%s1175 + $0x9b0] sm:$0xff]
        %v1717 = vld [vmem:[%s1175 + $0x9b8] sm:$0xff]
        %v1718 = vld [vmem:[%s1175 + $0x9c0] sm:$0xff]
        %v1719 = vld [vmem:[%s1175 + $0x9c8] sm:$0xff]
        %v1720 = vld [vmem:[%s1175 + $0x9d0] sm:$0xff]
        %v1721 = vld [vmem:[%s1175 + $0x9d8] sm:$0xff]
        %v1722 = vld [vmem:[%s1175 + $0x9e0] sm:$0xff]
        %v1723 = vld [vmem:[%s1175 + $0x9e8] sm:$0xff]
        %v1724 = vld [vmem:[%s1175 + $0x9f0] sm:$0xff]
        %v1725 = vld [vmem:[%s1175 + $0x9f8] sm:$0xff]
        %v1726 = vld [vmem:[%s1175 + $0xa00] sm:$0xff]
        %v1727 = vld [vmem:[%s1175 + $0xa08] sm:$0xff]
        %v1728 = vld [vmem:[%s1175 + $0xa10] sm:$0xff]
        %v1729 = vld [vmem:[%s1175 + $0xa18] sm:$0xff]
        %v1730 = vld [vmem:[%s1175 + $0xa20] sm:$0xff]
        %v1731 = vld [vmem:[%s1175 + $0xa28] sm:$0xff]
        %v1732 = vld [vmem:[%s1175 + $0xa30] sm:$0xff]
        %v1733 = vld [vmem:[%s1175 + $0xa38] sm:$0xff]
        %v1734 = vld [vmem:[%s1175 + $0xa40] sm:$0xff]
        %v1735 = vld [vmem:[%s1175 + $0xa48] sm:$0xff]
        %v1736 = vld [vmem:[%s1175 + $0xa50] sm:$0xff]
        %v1737 = vld [vmem:[%s1175 + $0xa58] sm:$0xff]
        %v1738 = vld [vmem:[%s1175 + $0xa60] sm:$0xff]
        %v1739 = vld [vmem:[%s1175 + $0xa68] sm:$0xff]
        %v1740 = vld [vmem:[%s1175 + $0xa70] sm:$0xff]
        %v1741 = vld [vmem:[%s1175 + $0xa78] sm:$0xff]
        %v1742 = vld [vmem:[%s1175 + $0xa80] sm:$0xff]
        %v1743 = vld [vmem:[%s1175 + $0xa88] sm:$0xff]
        %v1744 = vld [vmem:[%s1175 + $0xa90] sm:$0xff]
        %v1745 = vld [vmem:[%s1175 + $0xa98] sm:$0xff]
        %v1746 = vld [vmem:[%s1175 + $0xaa0] sm:$0xff]
        %v1747 = vld [vmem:[%s1175 + $0xaa8] sm:$0xff]
        %v1748 = vld [vmem:[%s1175 + $0xab0] sm:$0xff]
        %v1749 = vld [vmem:[%s1175 + $0xab8] sm:$0xff]
        %v1750 = vld [vmem:[%s1175 + $0xac0] sm:$0xff]
        %v1751 = vld [vmem:[%s1175 + $0xac8] sm:$0xff]
        %v1752 = vld [vmem:[%s1175 + $0xad0] sm:$0xff]
        %v1753 = vld [vmem:[%s1175 + $0xad8] sm:$0xff]
        %v1754 = vld [vmem:[%s1175 + $0xae0] sm:$0xff]
        %v1755 = vld [vmem:[%s1175 + $0xae8] sm:$0xff]
        %v1756 = vld [vmem:[%s1175 + $0xaf0] sm:$0xff]
        %v1757 = vld [vmem:[%s1175 + $0xaf8] sm:$0xff]
        %v1758 = vld [vmem:[%s1175 + $0xb00] sm:$0xff]
        %v1759 = vld [vmem:[%s1175 + $0xb08] sm:$0xff]
        %v1760 = vld [vmem:[%s1175 + $0xb10] sm:$0xff]
        %v1761 = vld [vmem:[%s1175 + $0xb18] sm:$0xff]
        %v1762 = vld [vmem:[%s1175 + $0xb20] sm:$0xff]
        %v1763 = vld [vmem:[%s1175 + $0xb28] sm:$0xff]
        %v1764 = vld [vmem:[%s1175 + $0xb30] sm:$0xff]
        %v1765 = vld [vmem:[%s1175 + $0xb38] sm:$0xff]
        %v1766 = vld [vmem:[%s1175 + $0xb40] sm:$0xff]
        %v1767 = vld [vmem:[%s1175 + $0xb48] sm:$0xff]
        %v1768 = vld [vmem:[%s1175 + $0xb50] sm:$0xff]
        %v1769 = vld [vmem:[%s1175 + $0xb58] sm:$0xff]
        %v1770 = vld [vmem:[%s1175 + $0xb60] sm:$0xff]
        %v1771 = vld [vmem:[%s1175 + $0xb68] sm:$0xff]
        %v1772 = vld [vmem:[%s1175 + $0xb70] sm:$0xff]
        %v1773 = vld [vmem:[%s1175 + $0xb78] sm:$0xff]
        %v1774 = vld [vmem:[%s1175 + $0xb80] sm:$0xff]
        %v1775 = vld [vmem:[%s1175 + $0xb88] sm:$0xff]
        %v1776 = vld [vmem:[%s1175 + $0xb90] sm:$0xff]
        %v1777 = vld [vmem:[%s1175 + $0xb98] sm:$0xff]
        %v1778 = vld [vmem:[%s1175 + $0xba0] sm:$0xff]
        %v1779 = vld [vmem:[%s1175 + $0xba8] sm:$0xff]
        %v1780 = vld [vmem:[%s1175 + $0xbb0] sm:$0xff]
        %v1781 = vld [vmem:[%s1175 + $0xbb8] sm:$0xff]
        %v1782 = vld [vmem:[%s1175 + $0xbc0] sm:$0xff]
        %v1783 = vld [vmem:[%s1175 + $0xbc8] sm:$0xff]
        %v1784 = vld [vmem:[%s1175 + $0xbd0] sm:$0xff]
        %v1785 = vld [vmem:[%s1175 + $0xbd8] sm:$0xff]
        %v1786 = vld [vmem:[%s1175 + $0xbe0] sm:$0xff]
        %v1787 = vld [vmem:[%s1175 + $0xbe8] sm:$0xff]
        %v1788 = vld [vmem:[%s1175 + $0xbf0] sm:$0xff]
        %v1789 = vld [vmem:[%s1175 + $0xbf8] sm:$0xff]
        %v1790 = vld [vmem:[%s1175 + $0xc00] sm:$0xff]
        %v1791 = vld [vmem:[%s1175 + $0xc08] sm:$0xff]
        %v1792 = vld [vmem:[%s1175 + $0xc10] sm:$0xff]
        %v1793 = vld [vmem:[%s1175 + $0xc18] sm:$0xff]
        %v1794 = vld [vmem:[%s1175 + $0xc20] sm:$0xff]
        %v1795 = vld [vmem:[%s1175 + $0xc28] sm:$0xff]
        %v1796 = vld [vmem:[%s1175 + $0xc30] sm:$0xff]
        %v1797 = vld [vmem:[%s1175 + $0xc38] sm:$0xff]
        %v1798 = vld [vmem:[%s1175 + $0xc40] sm:$0xff]
        %v1799 = vld [vmem:[%s1175 + $0xc48] sm:$0xff]
        %v1800 = vld [vmem:[%s1175 + $0xc50] sm:$0xff]
        %v1801 = vld [vmem:[%s1175 + $0xc58] sm:$0xff]
        %v1802 = vld [vmem:[%s1175 + $0xc60] sm:$0xff]
        %v1803 = vld [vmem:[%s1175 + $0xc68] sm:$0xff]
        %v1804 = vld [vmem:[%s1175 + $0xc70] sm:$0xff]
        %v1805 = vld [vmem:[%s1175 + $0xc78] sm:$0xff]
        %v1806 = vld [vmem:[%s1175 + $0xc80] sm:$0xff]
        %v1807 = vld [vmem:[%s1175 + $0xc88] sm:$0xff]
        %v1808 = vld [vmem:[%s1175 + $0xc90] sm:$0xff]
        %v1809 = vld [vmem:[%s1175 + $0xc98] sm:$0xff]
        %v1810 = vld [vmem:[%s1175 + $0xca0] sm:$0xff]
        %v1811 = vld [vmem:[%s1175 + $0xca8] sm:$0xff]
        %v1812 = vld [vmem:[%s1175 + $0xcb0] sm:$0xff]
        %v1813 = vld [vmem:[%s1175 + $0xcb8] sm:$0xff]
        %v1814 = vld [vmem:[%s1175 + $0xcc0] sm:$0xff]
        %v1815 = vld [vmem:[%s1175 + $0xcc8] sm:$0xff]
        %v1816 = vld [vmem:[%s1175 + $0xcd0] sm:$0xff]
        %v1817 = vld [vmem:[%s1175 + $0xcd8] sm:$0xff]
        %v1818 = vld [vmem:[%s1175 + $0xce0] sm:$0xff]
        %v1819 = vld [vmem:[%s1175 + $0xce8] sm:$0xff]
        %v1820 = vld [vmem:[%s1175 + $0xcf0] sm:$0xff]
        %v1821 = vld [vmem:[%s1175 + $0xcf8] sm:$0xff]
        %v1822 = vld [vmem:[%s1175 + $0xd00] sm:$0xff]
        %v1823 = vld [vmem:[%s1175 + $0xd08] sm:$0xff]
        %v1824 = vld [vmem:[%s1175 + $0xd10] sm:$0xff]
        %v1825 = vld [vmem:[%s1175 + $0xd18] sm:$0xff]
        %v1826 = vld [vmem:[%s1175 + $0xd20] sm:$0xff]
        %v1827 = vld [vmem:[%s1175 + $0xd28] sm:$0xff]
        %v1828 = vld [vmem:[%s1175 + $0xd30] sm:$0xff]
        %v1829 = vld [vmem:[%s1175 + $0xd38] sm:$0xff]
        %v1830 = vld [vmem:[%s1175 + $0xd40] sm:$0xff]
        %v1831 = vld [vmem:[%s1175 + $0xd48] sm:$0xff]
        %v1832 = vld [vmem:[%s1175 + $0xd50] sm:$0xff]
        %v1833 = vld [vmem:[%s1175 + $0xd58] sm:$0xff]
        %v1834 = vld [vmem:[%s1175 + $0xd60] sm:$0xff]
        %v1835 = vld [vmem:[%s1175 + $0xd68] sm:$0xff]
        %v1836 = vld [vmem:[%s1175 + $0xd70] sm:$0xff]
        %v1837 = vld [vmem:[%s1175 + $0xd78] sm:$0xff]
        %v1838 = vld [vmem:[%s1175 + $0xd80] sm:$0xff]
        %v1839 = vld [vmem:[%s1175 + $0xd88] sm:$0xff]
        %v1840 = vld [vmem:[%s1175 + $0xd90] sm:$0xff]
        %v1841 = vld [vmem:[%s1175 + $0xd98] sm:$0xff]
        %v1842 = vld [vmem:[%s1175 + $0xda0] sm:$0xff]
        %v1843 = vld [vmem:[%s1175 + $0xda8] sm:$0xff]
        %v1844 = vld [vmem:[%s1175 + $0xdb0] sm:$0xff]
        %v1845 = vld [vmem:[%s1175 + $0xdb8] sm:$0xff]
        %v1846 = vld [vmem:[%s1175 + $0xdc0] sm:$0xff]
        %v1847 = vld [vmem:[%s1175 + $0xdc8] sm:$0xff]
        %v1848 = vld [vmem:[%s1175 + $0xdd0] sm:$0xff]
        %v1849 = vld [vmem:[%s1175 + $0xdd8] sm:$0xff]
        %v1850 = vld [vmem:[%s1175 + $0xde0] sm:$0xff]
        %v1851 = vld [vmem:[%s1175 + $0xde8] sm:$0xff]
        %v1852 = vld [vmem:[%s1175 + $0xdf0] sm:$0xff]
        %v1853 = vld [vmem:[%s1175 + $0xdf8] sm:$0xff]
        %v1854 = vld [vmem:[%s1175 + $0xe00] sm:$0xff]
        %v1855 = vld [vmem:[%s1175 + $0xe08] sm:$0xff]
        %v1856 = vld [vmem:[%s1175 + $0xe10] sm:$0xff]
        %v1857 = vld [vmem:[%s1175 + $0xe18] sm:$0xff]
        %v1858 = vld [vmem:[%s1175 + $0xe20] sm:$0xff]
        %v1859 = vld [vmem:[%s1175 + $0xe28] sm:$0xff]
        %v1860 = vld [vmem:[%s1175 + $0xe30] sm:$0xff]
        %v1861 = vld [vmem:[%s1175 + $0xe38] sm:$0xff]
        %v1862 = vld [vmem:[%s1175 + $0xe40] sm:$0xff]
        %v1863 = vld [vmem:[%s1175 + $0xe48] sm:$0xff]
        %v1864 = vld [vmem:[%s1175 + $0xe50] sm:$0xff]
        %v1865 = vld [vmem:[%s1175 + $0xe58] sm:$0xff]
        %v1866 = vld [vmem:[%s1175 + $0xe60] sm:$0xff]
        %v1867 = vld [vmem:[%s1175 + $0xe68] sm:$0xff]
        %v1868 = vld [vmem:[%s1175 + $0xe70] sm:$0xff]
        %v1869 = vld [vmem:[%s1175 + $0xe78] sm:$0xff]
        %v1870 = vld [vmem:[%s1175 + $0xe80] sm:$0xff]
        %v1871 = vld [vmem:[%s1175 + $0xe88] sm:$0xff]
        %v1872 = vld [vmem:[%s1175 + $0xe90] sm:$0xff]
        %v1873 = vld [vmem:[%s1175 + $0xe98] sm:$0xff]
        %v1874 = vld [vmem:[%s1175 + $0xea0] sm:$0xff]
        %v1875 = vld [vmem:[%s1175 + $0xea8] sm:$0xff]
        %v1876 = vld [vmem:[%s1175 + $0xeb0] sm:$0xff]
        %v1877 = vld [vmem:[%s1175 + $0xeb8] sm:$0xff]
        %v1878 = vld [vmem:[%s1175 + $0xec0] sm:$0xff]
        %v1879 = vld [vmem:[%s1175 + $0xec8] sm:$0xff]
        %v1880 = vld [vmem:[%s1175 + $0xed0] sm:$0xff]
        %v1881 = vld [vmem:[%s1175 + $0xed8] sm:$0xff]
        %v1882 = vld [vmem:[%s1175 + $0xee0] sm:$0xff]
        %v1883 = vld [vmem:[%s1175 + $0xee8] sm:$0xff]
        %v1884 = vld [vmem:[%s1175 + $0xef0] sm:$0xff]
        %v1885 = vld [vmem:[%s1175 + $0xef8] sm:$0xff]
        %v1886 = vld [vmem:[%s1175 + $0xf00] sm:$0xff]
        %v1887 = vld [vmem:[%s1175 + $0xf08] sm:$0xff]
        %v1888 = vld [vmem:[%s1175 + $0xf10] sm:$0xff]
        %v1889 = vld [vmem:[%s1175 + $0xf18] sm:$0xff]
        %v1890 = vld [vmem:[%s1175 + $0xf20] sm:$0xff]
        %v1891 = vld [vmem:[%s1175 + $0xf28] sm:$0xff]
        %v1892 = vld [vmem:[%s1175 + $0xf30] sm:$0xff]
        %v1893 = vld [vmem:[%s1175 + $0xf38] sm:$0xff]
        %v1894 = vld [vmem:[%s1175 + $0xf40] sm:$0xff]
        %v1895 = vld [vmem:[%s1175 + $0xf48] sm:$0xff]
        %v1896 = vld [vmem:[%s1175 + $0xf50] sm:$0xff]
        %v1897 = vld [vmem:[%s1175 + $0xf58] sm:$0xff]
        %v1898 = vld [vmem:[%s1175 + $0xf60] sm:$0xff]
        %v1899 = vld [vmem:[%s1175 + $0xf68] sm:$0xff]
        %v1900 = vld [vmem:[%s1175 + $0xf70] sm:$0xff]
        %v1901 = vld [vmem:[%s1175 + $0xf78] sm:$0xff]
        %v1902 = vld [vmem:[%s1175 + $0xf80] sm:$0xff]
        %v1903 = vld [vmem:[%s1175 + $0xf88] sm:$0xff]
        %v1904 = vld [vmem:[%s1175 + $0xf90] sm:$0xff]
        %v1905 = vld [vmem:[%s1175 + $0xf98] sm:$0xff]
        %v1906 = vld [vmem:[%s1175 + $0xfa0] sm:$0xff]
        %v1907 = vld [vmem:[%s1175 + $0xfa8] sm:$0xff]
        %v1908 = vld [vmem:[%s1175 + $0xfb0] sm:$0xff]
        %v1909 = vld [vmem:[%s1175 + $0xfb8] sm:$0xff]
        %v1910 = vld [vmem:[%s1175 + $0xfc0] sm:$0xff]
        %v1911 = vld [vmem:[%s1175 + $0xfc8] sm:$0xff]
        %v1912 = vld [vmem:[%s1175 + $0xfd0] sm:$0xff]
        %v1913 = vld [vmem:[%s1175 + $0xfd8] sm:$0xff]
        %v1914 = vld [vmem:[%s1175 + $0xfe0] sm:$0xff]
        %v1915 = vld [vmem:[%s1175 + $0xfe8] sm:$0xff]
        %v1916 = vld [vmem:[%s1175 + $0xff0] sm:$0xff]
        %v1917 = vld [vmem:[%s1175 + $0xff8] sm:$0xff]
        %v1918 = vld [vmem:[%s1175 + $0x1000] sm:$0xff]
        %v1919 = vld [vmem:[%s1175 + $0x1008] sm:$0xff]
        %v1920 = vld [vmem:[%s1175 + $0x1010] sm:$0xff]
        %v1921 = vld [vmem:[%s1175 + $0x1018] sm:$0xff]
        %v1922 = vld [vmem:[%s1175 + $0x1020] sm:$0xff]
        %v1923 = vld [vmem:[%s1175 + $0x1028] sm:$0xff]
        %v1924 = vld [vmem:[%s1175 + $0x1030] sm:$0xff]
        %v1925 = vld [vmem:[%s1175 + $0x1038] sm:$0xff]
        %v1926 = vld [vmem:[%s1175 + $0x1040] sm:$0xff]
        %v1927 = vld [vmem:[%s1175 + $0x1048] sm:$0xff]
        %v1928 = vld [vmem:[%s1175 + $0x1050] sm:$0xff]
        %v1929 = vld [vmem:[%s1175 + $0x1058] sm:$0xff]
        %v1930 = vld [vmem:[%s1175 + $0x1060] sm:$0xff]
        %v1931 = vld [vmem:[%s1175 + $0x1068] sm:$0xff]
        %v1932 = vld [vmem:[%s1175 + $0x1070] sm:$0xff]
        %v1933 = vld [vmem:[%s1175 + $0x1078] sm:$0xff]
        %v1934 = vld [vmem:[%s1175 + $0x1080] sm:$0xff]
        %v1935 = vld [vmem:[%s1175 + $0x1088] sm:$0xff]
        %v1936 = vld [vmem:[%s1175 + $0x1090] sm:$0xff]
        %v1937 = vld [vmem:[%s1175 + $0x1098] sm:$0xff]
        %v1938 = vld [vmem:[%s1175 + $0x10a0] sm:$0xff]
        %v1939 = vld [vmem:[%s1175 + $0x10a8] sm:$0xff]
        %v1940 = vld [vmem:[%s1175 + $0x10b0] sm:$0xff]
        %v1941 = vld [vmem:[%s1175 + $0x10b8] sm:$0xff]
        %v1942 = vld [vmem:[%s1175 + $0x10c0] sm:$0xff]
        %v1943 = vld [vmem:[%s1175 + $0x10c8] sm:$0xff]
        %v1944 = vld [vmem:[%s1175 + $0x10d0] sm:$0xff]
        %v1945 = vld [vmem:[%s1175 + $0x10d8] sm:$0xff]
        %v1946 = vld [vmem:[%s1175 + $0x10e0] sm:$0xff]
        %v1947 = vld [vmem:[%s1175 + $0x10e8] sm:$0xff]
        %v1948 = vld [vmem:[%s1175 + $0x10f0] sm:$0xff]
        %v1949 = vld [vmem:[%s1175 + $0x10f8] sm:$0xff]
        %v1950 = vld [vmem:[%s1175 + $0x1100] sm:$0xff]
        %v1951 = vld [vmem:[%s1175 + $0x1108] sm:$0xff]
        %v1952 = vld [vmem:[%s1175 + $0x1110] sm:$0xff]
        %v1953 = vld [vmem:[%s1175 + $0x1118] sm:$0xff]
        %v1954 = vld [vmem:[%s1175 + $0x1120] sm:$0xff]
        %v1955 = vld [vmem:[%s1175 + $0x1128] sm:$0xff]
        %v1956 = vld [vmem:[%s1175 + $0x1130] sm:$0xff]
        %v1957 = vld [vmem:[%s1175 + $0x1138] sm:$0xff]
        %v1958 = vld [vmem:[%s1175 + $0x1140] sm:$0xff]
        %v1959 = vld [vmem:[%s1175 + $0x1148] sm:$0xff]
        %v1960 = vld [vmem:[%s1175 + $0x1150] sm:$0xff]
        %v1961 = vld [vmem:[%s1175 + $0x1158] sm:$0xff]
        %v1962 = vld [vmem:[%s1175 + $0x1160] sm:$0xff]
        %v1963 = vld [vmem:[%s1175 + $0x1168] sm:$0xff]
        %v1964 = vld [vmem:[%s1175 + $0x1170] sm:$0xff]
        %v1965 = vld [vmem:[%s1175 + $0x1178] sm:$0xff]
        %v1966 = vld [vmem:[%s1175 + $0x1180] sm:$0xff]
        %v1967 = vld [vmem:[%s1175 + $0x1188] sm:$0xff]
        %v1968 = vld [vmem:[%s1175 + $0x1190] sm:$0xff]
        %v1969 = vld [vmem:[%s1175 + $0x1198] sm:$0xff]
        %v1970 = vld [vmem:[%s1175 + $0x11a0] sm:$0xff]
        %v1971 = vld [vmem:[%s1175 + $0x11a8] sm:$0xff]
        %v1972 = vld [vmem:[%s1175 + $0x11b0] sm:$0xff]
        %v1973 = vld [vmem:[%s1175 + $0x11b8] sm:$0xff]
        %v1974 = vld [vmem:[%s1175 + $0x11c0] sm:$0xff]
        %v1975 = vld [vmem:[%s1175 + $0x11c8] sm:$0xff]
        %v1976 = vld [vmem:[%s1175 + $0x11d0] sm:$0xff]
        %v1977 = vld [vmem:[%s1175 + $0x11d8] sm:$0xff]
        %v1978 = vld [vmem:[%s1175 + $0x11e0] sm:$0xff]
        %v1979 = vld [vmem:[%s1175 + $0x11e8] sm:$0xff]
        %v1980 = vld [vmem:[%s1175 + $0x11f0] sm:$0xff]
        %v1981 = vld [vmem:[%s1175 + $0x11f8] sm:$0xff]
        %v1982 = vld [vmem:[%s1175 + $0x1200] sm:$0xff]
        %v1983 = vld [vmem:[%s1175 + $0x1208] sm:$0xff]
        %v1984 = vld [vmem:[%s1175 + $0x1210] sm:$0xff]
        %v1985 = vld [vmem:[%s1175 + $0x1218] sm:$0xff]
        %v1986 = vld [vmem:[%s1175 + $0x1220] sm:$0xff]
        %v1987 = vld [vmem:[%s1175 + $0x1228] sm:$0xff]
        %v1988 = vld [vmem:[%s1175 + $0x1230] sm:$0xff]
        %v1989 = vld [vmem:[%s1175 + $0x1238] sm:$0xff]
        %v1990 = vld [vmem:[%s1175 + $0x1240] sm:$0xff]
        %v1991 = vld [vmem:[%s1175 + $0x1248] sm:$0xff]
        %v1992 = vld [vmem:[%s1175 + $0x1250] sm:$0xff]
        %v1993 = vld [vmem:[%s1175 + $0x1258] sm:$0xff]
        %v1994 = vld [vmem:[%s1175 + $0x1260] sm:$0xff]
        %v1995 = vld [vmem:[%s1175 + $0x1268] sm:$0xff]
        %v1996 = vld [vmem:[%s1175 + $0x1270] sm:$0xff]
        %v1997 = vld [vmem:[%s1175 + $0x1278] sm:$0xff]
        %v1998 = vld [vmem:[%s1175 + $0x1280] sm:$0xff]
        %v1999 = vld [vmem:[%s1175 + $0x1288] sm:$0xff]
        %v2000 = vld [vmem:[%s1175 + $0x1290] sm:$0xff]
        %v2001 = vld [vmem:[%s1175 + $0x1298] sm:$0xff]
        %v2002 = vld [vmem:[%s1175 + $0x12a0] sm:$0xff]
        %v2003 = vld [vmem:[%s1175 + $0x12a8] sm:$0xff]
        %v2004 = vld [vmem:[%s1175 + $0x12b0] sm:$0xff]
        %v2005 = vld [vmem:[%s1175 + $0x12b8] sm:$0xff]
        %v2006 = vld [vmem:[%s1175 + $0x12c0] sm:$0xff]
        %v2007 = vld [vmem:[%s1175 + $0x12c8] sm:$0xff]
        %v2008 = vld [vmem:[%s1175 + $0x12d0] sm:$0xff]
        %v2009 = vld [vmem:[%s1175 + $0x12d8] sm:$0xff]
        %v2010 = vld [vmem:[%s1175 + $0x12e0] sm:$0xff]
        %v2011 = vld [vmem:[%s1175 + $0x12e8] sm:$0xff]
        %v2012 = vld [vmem:[%s1175 + $0x12f0] sm:$0xff]
        %v2013 = vld [vmem:[%s1175 + $0x12f8] sm:$0xff]
        %v2014 = vld [vmem:[%s1175 + $0x1300] sm:$0xff]
        %v2015 = vld [vmem:[%s1175 + $0x1308] sm:$0xff]
        %v2016 = vld [vmem:[%s1175 + $0x1310] sm:$0xff]
        %v2017 = vld [vmem:[%s1175 + $0x1318] sm:$0xff]
        %v2018 = vld [vmem:[%s1175 + $0x1320] sm:$0xff]
        %v2019 = vld [vmem:[%s1175 + $0x1328] sm:$0xff]
        %v2020 = vld [vmem:[%s1175 + $0x1330] sm:$0xff]
        %v2021 = vld [vmem:[%s1175 + $0x1338] sm:$0xff]
        %v2022 = vld [vmem:[%s1175 + $0x1340] sm:$0xff]
        %v2023 = vld [vmem:[%s1175 + $0x1348] sm:$0xff]
        %v2024 = vld [vmem:[%s1175 + $0x1350] sm:$0xff]
        %v2025 = vld [vmem:[%s1175 + $0x1358] sm:$0xff]
        %v2026 = vld [vmem:[%s1175 + $0x1360] sm:$0xff]
        %v2027 = vld [vmem:[%s1175 + $0x1368] sm:$0xff]
        %v2028 = vld [vmem:[%s1175 + $0x1370] sm:$0xff]
        %v2029 = vld [vmem:[%s1175 + $0x1378] sm:$0xff]
        %v2030 = vld [vmem:[%s1175 + $0x1380] sm:$0xff]
        %v2031 = vld [vmem:[%s1175 + $0x1388] sm:$0xff]
        %v2032 = vld [vmem:[%s1175 + $0x1390] sm:$0xff]
        %v2033 = vld [vmem:[%s1175 + $0x1398] sm:$0xff]
        %v2034 = vld [vmem:[%s1175 + $0x13a0] sm:$0xff]
        %v2035 = vld [vmem:[%s1175 + $0x13a8] sm:$0xff]
        %v2036 = vld [vmem:[%s1175 + $0x13b0] sm:$0xff]
        %v2037 = vld [vmem:[%s1175 + $0x13b8] sm:$0xff]
        %v2038 = vld [vmem:[%s1175 + $0x13c0] sm:$0xff]
        %v2039 = vld [vmem:[%s1175 + $0x13c8] sm:$0xff]
        %v2040 = vld [vmem:[%s1175 + $0x13d0] sm:$0xff]
        %v2041 = vld [vmem:[%s1175 + $0x13d8] sm:$0xff]
        %v2042 = vld [vmem:[%s1175 + $0x13e0] sm:$0xff]
        %v2043 = vld [vmem:[%s1175 + $0x13e8] sm:$0xff]
        %v2044 = vld [vmem:[%s1175 + $0x13f0] sm:$0xff]
        %v2045 = vld [vmem:[%s1175 + $0x13f8] sm:$0xff]
        %v2046 = vunpack.c.l.s8.bf16 %v1406
        %v2047 = vunpack.c.l.s8.bf16 %v1407
        %v2048 = vunpack.c.l.s8.bf16 %v1408
        %v2049 = vunpack.c.l.s8.bf16 %v1409
        %v2050 = vunpack.c.l.s8.bf16 %v1410
        %v2051 = vunpack.c.l.s8.bf16 %v1411
        %v2052 = vunpack.c.l.s8.bf16 %v1412
        %v2053 = vunpack.c.l.s8.bf16 %v1413
        %v2054 = vunpack.c.l.s8.bf16 %v1414
        %v2055 = vunpack.c.l.s8.bf16 %v1415
        %v2056 = vunpack.c.l.s8.bf16 %v1416
        %v2057 = vunpack.c.l.s8.bf16 %v1417
        %v2058 = vunpack.c.l.s8.bf16 %v1418
        %v2059 = vunpack.c.l.s8.bf16 %v1419
        %v2060 = vunpack.c.l.s8.bf16 %v1420
        %v2061 = vunpack.c.l.s8.bf16 %v1421
        %v2062 = vunpack.c.h.s8.bf16 %v1406
        %v2063 = vunpack.c.h.s8.bf16 %v1407
        %v2064 = vunpack.c.h.s8.bf16 %v1408
        %v2065 = vunpack.c.h.s8.bf16 %v1409
        %v2066 = vunpack.c.h.s8.bf16 %v1410
        %v2067 = vunpack.c.h.s8.bf16 %v1411
        %v2068 = vunpack.c.h.s8.bf16 %v1412
        %v2069 = vunpack.c.h.s8.bf16 %v1413
        %v2070 = vunpack.c.h.s8.bf16 %v1414
        %v2071 = vunpack.c.h.s8.bf16 %v1415
        %v2072 = vunpack.c.h.s8.bf16 %v1416
        %v2073 = vunpack.c.h.s8.bf16 %v1417
        %v2074 = vunpack.c.h.s8.bf16 %v1418
        %v2075 = vunpack.c.h.s8.bf16 %v1419
        %v2076 = vunpack.c.h.s8.bf16 %v1420
        %v2077 = vunpack.c.h.s8.bf16 %v1421
        %v2078 = vunpack.c.l.s8.bf16 %v1422
        %v2079 = vunpack.c.l.s8.bf16 %v1423
        %v2080 = vunpack.c.l.s8.bf16 %v1424
        %v2081 = vunpack.c.l.s8.bf16 %v1425
        %v2082 = vunpack.c.l.s8.bf16 %v1426
        %v2083 = vunpack.c.l.s8.bf16 %v1427
        %v2084 = vunpack.c.l.s8.bf16 %v1428
        %v2085 = vunpack.c.l.s8.bf16 %v1429
        %v2086 = vunpack.c.l.s8.bf16 %v1430
        %v2087 = vunpack.c.l.s8.bf16 %v1431
        %v2088 = vunpack.c.l.s8.bf16 %v1432
        %v2089 = vunpack.c.l.s8.bf16 %v1433
        %v2090 = vunpack.c.l.s8.bf16 %v1434
        %v2091 = vunpack.c.l.s8.bf16 %v1435
        %v2092 = vunpack.c.l.s8.bf16 %v1436
        %v2093 = vunpack.c.l.s8.bf16 %v1437
        %v2094 = vunpack.c.h.s8.bf16 %v1422
        %v2095 = vunpack.c.h.s8.bf16 %v1423
        %v2096 = vunpack.c.h.s8.bf16 %v1424
        %v2097 = vunpack.c.h.s8.bf16 %v1425
        %v2098 = vunpack.c.h.s8.bf16 %v1426
        %v2099 = vunpack.c.h.s8.bf16 %v1427
        %v2100 = vunpack.c.h.s8.bf16 %v1428
        %v2101 = vunpack.c.h.s8.bf16 %v1429
        %v2102 = vunpack.c.h.s8.bf16 %v1430
        %v2103 = vunpack.c.h.s8.bf16 %v1431
        %v2104 = vunpack.c.h.s8.bf16 %v1432
        %v2105 = vunpack.c.h.s8.bf16 %v1433
        %v2106 = vunpack.c.h.s8.bf16 %v1434
        %v2107 = vunpack.c.h.s8.bf16 %v1435
        %v2108 = vunpack.c.h.s8.bf16 %v1436
        %v2109 = vunpack.c.h.s8.bf16 %v1437
        %v2110 = vunpack.c.l.s8.bf16 %v1438
        %v2111 = vunpack.c.l.s8.bf16 %v1439
        %v2112 = vunpack.c.l.s8.bf16 %v1440
        %v2113 = vunpack.c.l.s8.bf16 %v1441
        %v2114 = vunpack.c.l.s8.bf16 %v1442
        %v2115 = vunpack.c.l.s8.bf16 %v1443
        %v2116 = vunpack.c.l.s8.bf16 %v1444
        %v2117 = vunpack.c.l.s8.bf16 %v1445
        %v2118 = vunpack.c.l.s8.bf16 %v1446
        %v2119 = vunpack.c.l.s8.bf16 %v1447
        %v2120 = vunpack.c.l.s8.bf16 %v1448
        %v2121 = vunpack.c.l.s8.bf16 %v1449
        %v2122 = vunpack.c.l.s8.bf16 %v1450
        %v2123 = vunpack.c.l.s8.bf16 %v1451
        %v2124 = vunpack.c.l.s8.bf16 %v1452
        %v2125 = vunpack.c.l.s8.bf16 %v1453
        %v2126 = vunpack.c.h.s8.bf16 %v1438
        %v2127 = vunpack.c.h.s8.bf16 %v1439
        %v2128 = vunpack.c.h.s8.bf16 %v1440
        %v2129 = vunpack.c.h.s8.bf16 %v1441
        %v2130 = vunpack.c.h.s8.bf16 %v1442
        %v2131 = vunpack.c.h.s8.bf16 %v1443
        %v2132 = vunpack.c.h.s8.bf16 %v1444
        %v2133 = vunpack.c.h.s8.bf16 %v1445
        %v2134 = vunpack.c.h.s8.bf16 %v1446
        %v2135 = vunpack.c.h.s8.bf16 %v1447
        %v2136 = vunpack.c.h.s8.bf16 %v1448
        %v2137 = vunpack.c.h.s8.bf16 %v1449
        %v2138 = vunpack.c.h.s8.bf16 %v1450
        %v2139 = vunpack.c.h.s8.bf16 %v1451
        %v2140 = vunpack.c.h.s8.bf16 %v1452
        %v2141 = vunpack.c.h.s8.bf16 %v1453
        %v2142 = vunpack.c.l.s8.bf16 %v1454
        %v2143 = vunpack.c.l.s8.bf16 %v1455
        %v2144 = vunpack.c.l.s8.bf16 %v1456
        %v2145 = vunpack.c.l.s8.bf16 %v1457
        %v2146 = vunpack.c.l.s8.bf16 %v1458
        %v2147 = vunpack.c.l.s8.bf16 %v1459
        %v2148 = vunpack.c.l.s8.bf16 %v1460
        %v2149 = vunpack.c.l.s8.bf16 %v1461
        %v2150 = vunpack.c.l.s8.bf16 %v1462
        %v2151 = vunpack.c.l.s8.bf16 %v1463
        %v2152 = vunpack.c.l.s8.bf16 %v1464
        %v2153 = vunpack.c.l.s8.bf16 %v1465
        %v2154 = vunpack.c.l.s8.bf16 %v1466
        %v2155 = vunpack.c.l.s8.bf16 %v1467
        %v2156 = vunpack.c.l.s8.bf16 %v1468
        %v2157 = vunpack.c.l.s8.bf16 %v1469
        %v2158 = vunpack.c.h.s8.bf16 %v1454
        %v2159 = vunpack.c.h.s8.bf16 %v1455
        %v2160 = vunpack.c.h.s8.bf16 %v1456
        %v2161 = vunpack.c.h.s8.bf16 %v1457
        %v2162 = vunpack.c.h.s8.bf16 %v1458
        %v2163 = vunpack.c.h.s8.bf16 %v1459
        %v2164 = vunpack.c.h.s8.bf16 %v1460
        %v2165 = vunpack.c.h.s8.bf16 %v1461
        %v2166 = vunpack.c.h.s8.bf16 %v1462
        %v2167 = vunpack.c.h.s8.bf16 %v1463
        %v2168 = vunpack.c.h.s8.bf16 %v1464
        %v2169 = vunpack.c.h.s8.bf16 %v1465
        %v2170 = vunpack.c.h.s8.bf16 %v1466
        %v2171 = vunpack.c.h.s8.bf16 %v1467
        %v2172 = vunpack.c.h.s8.bf16 %v1468
        %v2173 = vunpack.c.h.s8.bf16 %v1469
        %v2174 = vunpack.c.l.s8.bf16 %v1470
        %v2175 = vunpack.c.l.s8.bf16 %v1471
        %v2176 = vunpack.c.l.s8.bf16 %v1472
        %v2177 = vunpack.c.l.s8.bf16 %v1473
        %v2178 = vunpack.c.l.s8.bf16 %v1474
        %v2179 = vunpack.c.l.s8.bf16 %v1475
        %v2180 = vunpack.c.l.s8.bf16 %v1476
        %v2181 = vunpack.c.l.s8.bf16 %v1477
        %v2182 = vunpack.c.l.s8.bf16 %v1478
        %v2183 = vunpack.c.l.s8.bf16 %v1479
        %v2184 = vunpack.c.l.s8.bf16 %v1480
        %v2185 = vunpack.c.l.s8.bf16 %v1481
        %v2186 = vunpack.c.l.s8.bf16 %v1482
        %v2187 = vunpack.c.l.s8.bf16 %v1483
        %v2188 = vunpack.c.l.s8.bf16 %v1484
        %v2189 = vunpack.c.l.s8.bf16 %v1485
        %v2190 = vunpack.c.h.s8.bf16 %v1470
        %v2191 = vunpack.c.h.s8.bf16 %v1471
        %v2192 = vunpack.c.h.s8.bf16 %v1472
        %v2193 = vunpack.c.h.s8.bf16 %v1473
        %v2194 = vunpack.c.h.s8.bf16 %v1474
        %v2195 = vunpack.c.h.s8.bf16 %v1475
        %v2196 = vunpack.c.h.s8.bf16 %v1476
        %v2197 = vunpack.c.h.s8.bf16 %v1477
        %v2198 = vunpack.c.h.s8.bf16 %v1478
        %v2199 = vunpack.c.h.s8.bf16 %v1479
        %v2200 = vunpack.c.h.s8.bf16 %v1480
        %v2201 = vunpack.c.h.s8.bf16 %v1481
        %v2202 = vunpack.c.h.s8.bf16 %v1482
        %v2203 = vunpack.c.h.s8.bf16 %v1483
        %v2204 = vunpack.c.h.s8.bf16 %v1484
        %v2205 = vunpack.c.h.s8.bf16 %v1485
        %v2206 = vunpack.c.l.s8.bf16 %v1486
        %v2207 = vunpack.c.l.s8.bf16 %v1487
        %v2208 = vunpack.c.l.s8.bf16 %v1488
        %v2209 = vunpack.c.l.s8.bf16 %v1489
        %v2210 = vunpack.c.l.s8.bf16 %v1490
        %v2211 = vunpack.c.l.s8.bf16 %v1491
        %v2212 = vunpack.c.l.s8.bf16 %v1492
        %v2213 = vunpack.c.l.s8.bf16 %v1493
        %v2214 = vunpack.c.l.s8.bf16 %v1494
        %v2215 = vunpack.c.l.s8.bf16 %v1495
        %v2216 = vunpack.c.l.s8.bf16 %v1496
        %v2217 = vunpack.c.l.s8.bf16 %v1497
        %v2218 = vunpack.c.l.s8.bf16 %v1498
        %v2219 = vunpack.c.l.s8.bf16 %v1499
        %v2220 = vunpack.c.l.s8.bf16 %v1500
        %v2221 = vunpack.c.l.s8.bf16 %v1501
        %v2222 = vunpack.c.h.s8.bf16 %v1486
        %v2223 = vunpack.c.h.s8.bf16 %v1487
        %v2224 = vunpack.c.h.s8.bf16 %v1488
        %v2225 = vunpack.c.h.s8.bf16 %v1489
        %v2226 = vunpack.c.h.s8.bf16 %v1490
        %v2227 = vunpack.c.h.s8.bf16 %v1491
        %v2228 = vunpack.c.h.s8.bf16 %v1492
        %v2229 = vunpack.c.h.s8.bf16 %v1493
        %v2230 = vunpack.c.h.s8.bf16 %v1494
        %v2231 = vunpack.c.h.s8.bf16 %v1495
        %v2232 = vunpack.c.h.s8.bf16 %v1496
        %v2233 = vunpack.c.h.s8.bf16 %v1497
        %v2234 = vunpack.c.h.s8.bf16 %v1498
        %v2235 = vunpack.c.h.s8.bf16 %v1499
        %v2236 = vunpack.c.h.s8.bf16 %v1500
        %v2237 = vunpack.c.h.s8.bf16 %v1501
        %v2238 = vunpack.c.l.s8.bf16 %v1502
        %v2239 = vunpack.c.l.s8.bf16 %v1503
        %v2240 = vunpack.c.l.s8.bf16 %v1504
        %v2241 = vunpack.c.l.s8.bf16 %v1505
        %v2242 = vunpack.c.l.s8.bf16 %v1506
        %v2243 = vunpack.c.l.s8.bf16 %v1507
        %v2244 = vunpack.c.l.s8.bf16 %v1508
        %v2245 = vunpack.c.l.s8.bf16 %v1509
        %v2246 = vunpack.c.l.s8.bf16 %v1510
        %v2247 = vunpack.c.l.s8.bf16 %v1511
        %v2248 = vunpack.c.l.s8.bf16 %v1512
        %v2249 = vunpack.c.l.s8.bf16 %v1513
        %v2250 = vunpack.c.l.s8.bf16 %v1514
        %v2251 = vunpack.c.l.s8.bf16 %v1515
        %v2252 = vunpack.c.l.s8.bf16 %v1516
        %v2253 = vunpack.c.l.s8.bf16 %v1517
        %v2254 = vunpack.c.h.s8.bf16 %v1502
        %v2255 = vunpack.c.h.s8.bf16 %v1503
        %v2256 = vunpack.c.h.s8.bf16 %v1504
        %v2257 = vunpack.c.h.s8.bf16 %v1505
        %v2258 = vunpack.c.h.s8.bf16 %v1506
        %v2259 = vunpack.c.h.s8.bf16 %v1507
        %v2260 = vunpack.c.h.s8.bf16 %v1508
        %v2261 = vunpack.c.h.s8.bf16 %v1509
        %v2262 = vunpack.c.h.s8.bf16 %v1510
        %v2263 = vunpack.c.h.s8.bf16 %v1511
        %v2264 = vunpack.c.h.s8.bf16 %v1512
        %v2265 = vunpack.c.h.s8.bf16 %v1513
        %v2266 = vunpack.c.h.s8.bf16 %v1514
        %v2267 = vunpack.c.h.s8.bf16 %v1515
        %v2268 = vunpack.c.h.s8.bf16 %v1516
        %v2269 = vunpack.c.h.s8.bf16 %v1517
        %v2270 = vunpack.c.l.s8.bf16 %v1518
        %v2271 = vunpack.c.l.s8.bf16 %v1519
        %v2272 = vunpack.c.l.s8.bf16 %v1520
        %v2273 = vunpack.c.l.s8.bf16 %v1521
        %v2274 = vunpack.c.l.s8.bf16 %v1522
        %v2275 = vunpack.c.l.s8.bf16 %v1523
        %v2276 = vunpack.c.l.s8.bf16 %v1524
        %v2277 = vunpack.c.l.s8.bf16 %v1525
        %v2278 = vunpack.c.l.s8.bf16 %v1526
        %v2279 = vunpack.c.l.s8.bf16 %v1527
        %v2280 = vunpack.c.l.s8.bf16 %v1528
        %v2281 = vunpack.c.l.s8.bf16 %v1529
        %v2282 = vunpack.c.l.s8.bf16 %v1530
        %v2283 = vunpack.c.l.s8.bf16 %v1531
        %v2284 = vunpack.c.l.s8.bf16 %v1532
        %v2285 = vunpack.c.l.s8.bf16 %v1533
        %v2286 = vunpack.c.h.s8.bf16 %v1518
        %v2287 = vunpack.c.h.s8.bf16 %v1519
        %v2288 = vunpack.c.h.s8.bf16 %v1520
        %v2289 = vunpack.c.h.s8.bf16 %v1521
        %v2290 = vunpack.c.h.s8.bf16 %v1522
        %v2291 = vunpack.c.h.s8.bf16 %v1523
        %v2292 = vunpack.c.h.s8.bf16 %v1524
        %v2293 = vunpack.c.h.s8.bf16 %v1525
        %v2294 = vunpack.c.h.s8.bf16 %v1526
        %v2295 = vunpack.c.h.s8.bf16 %v1527
        %v2296 = vunpack.c.h.s8.bf16 %v1528
        %v2297 = vunpack.c.h.s8.bf16 %v1529
        %v2298 = vunpack.c.h.s8.bf16 %v1530
        %v2299 = vunpack.c.h.s8.bf16 %v1531
        %v2300 = vunpack.c.h.s8.bf16 %v1532
        %v2301 = vunpack.c.h.s8.bf16 %v1533
        %v2302 = vunpack.c.l.s8.bf16 %v1534
        %v2303 = vunpack.c.l.s8.bf16 %v1535
        %v2304 = vunpack.c.l.s8.bf16 %v1536
        %v2305 = vunpack.c.l.s8.bf16 %v1537
        %v2306 = vunpack.c.l.s8.bf16 %v1538
        %v2307 = vunpack.c.l.s8.bf16 %v1539
        %v2308 = vunpack.c.l.s8.bf16 %v1540
        %v2309 = vunpack.c.l.s8.bf16 %v1541
        %v2310 = vunpack.c.l.s8.bf16 %v1542
        %v2311 = vunpack.c.l.s8.bf16 %v1543
        %v2312 = vunpack.c.l.s8.bf16 %v1544
        %v2313 = vunpack.c.l.s8.bf16 %v1545
        %v2314 = vunpack.c.l.s8.bf16 %v1546
        %v2315 = vunpack.c.l.s8.bf16 %v1547
        %v2316 = vunpack.c.l.s8.bf16 %v1548
        %v2317 = vunpack.c.l.s8.bf16 %v1549
        %v2318 = vunpack.c.h.s8.bf16 %v1534
        %v2319 = vunpack.c.h.s8.bf16 %v1535
        %v2320 = vunpack.c.h.s8.bf16 %v1536
        %v2321 = vunpack.c.h.s8.bf16 %v1537
        %v2322 = vunpack.c.h.s8.bf16 %v1538
        %v2323 = vunpack.c.h.s8.bf16 %v1539
        %v2324 = vunpack.c.h.s8.bf16 %v1540
        %v2325 = vunpack.c.h.s8.bf16 %v1541
        %v2326 = vunpack.c.h.s8.bf16 %v1542
        %v2327 = vunpack.c.h.s8.bf16 %v1543
        %v2328 = vunpack.c.h.s8.bf16 %v1544
        %v2329 = vunpack.c.h.s8.bf16 %v1545
        %v2330 = vunpack.c.h.s8.bf16 %v1546
        %v2331 = vunpack.c.h.s8.bf16 %v1547
        %v2332 = vunpack.c.h.s8.bf16 %v1548
        %v2333 = vunpack.c.h.s8.bf16 %v1549
        %v2334 = vunpack.c.l.s8.bf16 %v1550
        %v2335 = vunpack.c.l.s8.bf16 %v1551
        %v2336 = vunpack.c.l.s8.bf16 %v1552
        %v2337 = vunpack.c.l.s8.bf16 %v1553
        %v2338 = vunpack.c.l.s8.bf16 %v1554
        %v2339 = vunpack.c.l.s8.bf16 %v1555
        %v2340 = vunpack.c.l.s8.bf16 %v1556
        %v2341 = vunpack.c.l.s8.bf16 %v1557
        %v2342 = vunpack.c.l.s8.bf16 %v1558
        %v2343 = vunpack.c.l.s8.bf16 %v1559
        %v2344 = vunpack.c.l.s8.bf16 %v1560
        %v2345 = vunpack.c.l.s8.bf16 %v1561
        %v2346 = vunpack.c.l.s8.bf16 %v1562
        %v2347 = vunpack.c.l.s8.bf16 %v1563
        %v2348 = vunpack.c.l.s8.bf16 %v1564
        %v2349 = vunpack.c.l.s8.bf16 %v1565
        %v2350 = vunpack.c.h.s8.bf16 %v1550
        %v2351 = vunpack.c.h.s8.bf16 %v1551
        %v2352 = vunpack.c.h.s8.bf16 %v1552
        %v2353 = vunpack.c.h.s8.bf16 %v1553
        %v2354 = vunpack.c.h.s8.bf16 %v1554
        %v2355 = vunpack.c.h.s8.bf16 %v1555
        %v2356 = vunpack.c.h.s8.bf16 %v1556
        %v2357 = vunpack.c.h.s8.bf16 %v1557
        %v2358 = vunpack.c.h.s8.bf16 %v1558
        %v2359 = vunpack.c.h.s8.bf16 %v1559
        %v2360 = vunpack.c.h.s8.bf16 %v1560
        %v2361 = vunpack.c.h.s8.bf16 %v1561
        %v2362 = vunpack.c.h.s8.bf16 %v1562
        %v2363 = vunpack.c.h.s8.bf16 %v1563
        %v2364 = vunpack.c.h.s8.bf16 %v1564
        %v2365 = vunpack.c.h.s8.bf16 %v1565
        %v2366 = vunpack.c.l.s8.bf16 %v1566
        %v2367 = vunpack.c.l.s8.bf16 %v1567
        %v2368 = vunpack.c.l.s8.bf16 %v1568
        %v2369 = vunpack.c.l.s8.bf16 %v1569
        %v2370 = vunpack.c.l.s8.bf16 %v1570
        %v2371 = vunpack.c.l.s8.bf16 %v1571
        %v2372 = vunpack.c.l.s8.bf16 %v1572
        %v2373 = vunpack.c.l.s8.bf16 %v1573
        %v2374 = vunpack.c.l.s8.bf16 %v1574
        %v2375 = vunpack.c.l.s8.bf16 %v1575
        %v2376 = vunpack.c.l.s8.bf16 %v1576
        %v2377 = vunpack.c.l.s8.bf16 %v1577
        %v2378 = vunpack.c.l.s8.bf16 %v1578
        %v2379 = vunpack.c.l.s8.bf16 %v1579
        %v2380 = vunpack.c.l.s8.bf16 %v1580
        %v2381 = vunpack.c.l.s8.bf16 %v1581
        %v2382 = vunpack.c.h.s8.bf16 %v1566
        %v2383 = vunpack.c.h.s8.bf16 %v1567
        %v2384 = vunpack.c.h.s8.bf16 %v1568
        %v2385 = vunpack.c.h.s8.bf16 %v1569
        %v2386 = vunpack.c.h.s8.bf16 %v1570
        %v2387 = vunpack.c.h.s8.bf16 %v1571
        %v2388 = vunpack.c.h.s8.bf16 %v1572
        %v2389 = vunpack.c.h.s8.bf16 %v1573
        %v2390 = vunpack.c.h.s8.bf16 %v1574
        %v2391 = vunpack.c.h.s8.bf16 %v1575
        %v2392 = vunpack.c.h.s8.bf16 %v1576
        %v2393 = vunpack.c.h.s8.bf16 %v1577
        %v2394 = vunpack.c.h.s8.bf16 %v1578
        %v2395 = vunpack.c.h.s8.bf16 %v1579
        %v2396 = vunpack.c.h.s8.bf16 %v1580
        %v2397 = vunpack.c.h.s8.bf16 %v1581
        %v2398 = vunpack.c.l.s8.bf16 %v1582
        %v2399 = vunpack.c.l.s8.bf16 %v1583
        %v2400 = vunpack.c.l.s8.bf16 %v1584
        %v2401 = vunpack.c.l.s8.bf16 %v1585
        %v2402 = vunpack.c.l.s8.bf16 %v1586
        %v2403 = vunpack.c.l.s8.bf16 %v1587
        %v2404 = vunpack.c.l.s8.bf16 %v1588
        %v2405 = vunpack.c.l.s8.bf16 %v1589
        %v2406 = vunpack.c.l.s8.bf16 %v1590
        %v2407 = vunpack.c.l.s8.bf16 %v1591
        %v2408 = vunpack.c.l.s8.bf16 %v1592
        %v2409 = vunpack.c.l.s8.bf16 %v1593
        %v2410 = vunpack.c.l.s8.bf16 %v1594
        %v2411 = vunpack.c.l.s8.bf16 %v1595
        %v2412 = vunpack.c.l.s8.bf16 %v1596
        %v2413 = vunpack.c.l.s8.bf16 %v1597
        %v2414 = vunpack.c.h.s8.bf16 %v1582
        %v2415 = vunpack.c.h.s8.bf16 %v1583
        %v2416 = vunpack.c.h.s8.bf16 %v1584
        %v2417 = vunpack.c.h.s8.bf16 %v1585
        %v2418 = vunpack.c.h.s8.bf16 %v1586
        %v2419 = vunpack.c.h.s8.bf16 %v1587
        %v2420 = vunpack.c.h.s8.bf16 %v1588
        %v2421 = vunpack.c.h.s8.bf16 %v1589
        %v2422 = vunpack.c.h.s8.bf16 %v1590
        %v2423 = vunpack.c.h.s8.bf16 %v1591
        %v2424 = vunpack.c.h.s8.bf16 %v1592
        %v2425 = vunpack.c.h.s8.bf16 %v1593
        %v2426 = vunpack.c.h.s8.bf16 %v1594
        %v2427 = vunpack.c.h.s8.bf16 %v1595
        %v2428 = vunpack.c.h.s8.bf16 %v1596
        %v2429 = vunpack.c.h.s8.bf16 %v1597
        %v2430 = vunpack.c.l.s8.bf16 %v1598
        %v2431 = vunpack.c.l.s8.bf16 %v1599
        %v2432 = vunpack.c.l.s8.bf16 %v1600
        %v2433 = vunpack.c.l.s8.bf16 %v1601
        %v2434 = vunpack.c.l.s8.bf16 %v1602
        %v2435 = vunpack.c.l.s8.bf16 %v1603
        %v2436 = vunpack.c.l.s8.bf16 %v1604
        %v2437 = vunpack.c.l.s8.bf16 %v1605
        %v2438 = vunpack.c.l.s8.bf16 %v1606
        %v2439 = vunpack.c.l.s8.bf16 %v1607
        %v2440 = vunpack.c.l.s8.bf16 %v1608
        %v2441 = vunpack.c.l.s8.bf16 %v1609
        %v2442 = vunpack.c.l.s8.bf16 %v1610
        %v2443 = vunpack.c.l.s8.bf16 %v1611
        %v2444 = vunpack.c.l.s8.bf16 %v1612
        %v2445 = vunpack.c.l.s8.bf16 %v1613
        %v2446 = vunpack.c.h.s8.bf16 %v1598
        %v2447 = vunpack.c.h.s8.bf16 %v1599
        %v2448 = vunpack.c.h.s8.bf16 %v1600
        %v2449 = vunpack.c.h.s8.bf16 %v1601
        %v2450 = vunpack.c.h.s8.bf16 %v1602
        %v2451 = vunpack.c.h.s8.bf16 %v1603
        %v2452 = vunpack.c.h.s8.bf16 %v1604
        %v2453 = vunpack.c.h.s8.bf16 %v1605
        %v2454 = vunpack.c.h.s8.bf16 %v1606
        %v2455 = vunpack.c.h.s8.bf16 %v1607
        %v2456 = vunpack.c.h.s8.bf16 %v1608
        %v2457 = vunpack.c.h.s8.bf16 %v1609
        %v2458 = vunpack.c.h.s8.bf16 %v1610
        %v2459 = vunpack.c.h.s8.bf16 %v1611
        %v2460 = vunpack.c.h.s8.bf16 %v1612
        %v2461 = vunpack.c.h.s8.bf16 %v1613
        %v2462 = vunpack.c.l.s8.bf16 %v1614
        %v2463 = vunpack.c.l.s8.bf16 %v1615
        %v2464 = vunpack.c.l.s8.bf16 %v1616
        %v2465 = vunpack.c.l.s8.bf16 %v1617
        %v2466 = vunpack.c.l.s8.bf16 %v1618
        %v2467 = vunpack.c.l.s8.bf16 %v1619
        %v2468 = vunpack.c.l.s8.bf16 %v1620
        %v2469 = vunpack.c.l.s8.bf16 %v1621
        %v2470 = vunpack.c.l.s8.bf16 %v1622
        %v2471 = vunpack.c.l.s8.bf16 %v1623
        %v2472 = vunpack.c.l.s8.bf16 %v1624
        %v2473 = vunpack.c.l.s8.bf16 %v1625
        %v2474 = vunpack.c.l.s8.bf16 %v1626
        %v2475 = vunpack.c.l.s8.bf16 %v1627
        %v2476 = vunpack.c.l.s8.bf16 %v1628
        %v2477 = vunpack.c.l.s8.bf16 %v1629
        %v2478 = vunpack.c.h.s8.bf16 %v1614
        %v2479 = vunpack.c.h.s8.bf16 %v1615
        %v2480 = vunpack.c.h.s8.bf16 %v1616
        %v2481 = vunpack.c.h.s8.bf16 %v1617
        %v2482 = vunpack.c.h.s8.bf16 %v1618
        %v2483 = vunpack.c.h.s8.bf16 %v1619
        %v2484 = vunpack.c.h.s8.bf16 %v1620
        %v2485 = vunpack.c.h.s8.bf16 %v1621
        %v2486 = vunpack.c.h.s8.bf16 %v1622
        %v2487 = vunpack.c.h.s8.bf16 %v1623
        %v2488 = vunpack.c.h.s8.bf16 %v1624
        %v2489 = vunpack.c.h.s8.bf16 %v1625
        %v2490 = vunpack.c.h.s8.bf16 %v1626
        %v2491 = vunpack.c.h.s8.bf16 %v1627
        %v2492 = vunpack.c.h.s8.bf16 %v1628
        %v2493 = vunpack.c.h.s8.bf16 %v1629
        %v2494 = vunpack.c.l.s8.bf16 %v1630
        %v2495 = vunpack.c.l.s8.bf16 %v1631
        %v2496 = vunpack.c.l.s8.bf16 %v1632
        %v2497 = vunpack.c.l.s8.bf16 %v1633
        %v2498 = vunpack.c.l.s8.bf16 %v1634
        %v2499 = vunpack.c.l.s8.bf16 %v1635
        %v2500 = vunpack.c.l.s8.bf16 %v1636
        %v2501 = vunpack.c.l.s8.bf16 %v1637
        %v2502 = vunpack.c.l.s8.bf16 %v1638
        %v2503 = vunpack.c.l.s8.bf16 %v1639
        %v2504 = vunpack.c.l.s8.bf16 %v1640
        %v2505 = vunpack.c.l.s8.bf16 %v1641
        %v2506 = vunpack.c.l.s8.bf16 %v1642
        %v2507 = vunpack.c.l.s8.bf16 %v1643
        %v2508 = vunpack.c.l.s8.bf16 %v1644
        %v2509 = vunpack.c.l.s8.bf16 %v1645
        %v2510 = vunpack.c.h.s8.bf16 %v1630
        %v2511 = vunpack.c.h.s8.bf16 %v1631
        %v2512 = vunpack.c.h.s8.bf16 %v1632
        %v2513 = vunpack.c.h.s8.bf16 %v1633
        %v2514 = vunpack.c.h.s8.bf16 %v1634
        %v2515 = vunpack.c.h.s8.bf16 %v1635
        %v2516 = vunpack.c.h.s8.bf16 %v1636
        %v2517 = vunpack.c.h.s8.bf16 %v1637
        %v2518 = vunpack.c.h.s8.bf16 %v1638
        %v2519 = vunpack.c.h.s8.bf16 %v1639
        %v2520 = vunpack.c.h.s8.bf16 %v1640
        %v2521 = vunpack.c.h.s8.bf16 %v1641
        %v2522 = vunpack.c.h.s8.bf16 %v1642
        %v2523 = vunpack.c.h.s8.bf16 %v1643
        %v2524 = vunpack.c.h.s8.bf16 %v1644
        %v2525 = vunpack.c.h.s8.bf16 %v1645
        %v2526 = vunpack.c.l.s8.bf16 %v1646
        %v2527 = vunpack.c.l.s8.bf16 %v1647
        %v2528 = vunpack.c.l.s8.bf16 %v1648
        %v2529 = vunpack.c.l.s8.bf16 %v1649
        %v2530 = vunpack.c.l.s8.bf16 %v1650
        %v2531 = vunpack.c.l.s8.bf16 %v1651
        %v2532 = vunpack.c.l.s8.bf16 %v1652
        %v2533 = vunpack.c.l.s8.bf16 %v1653
        %v2534 = vunpack.c.l.s8.bf16 %v1654
        %v2535 = vunpack.c.l.s8.bf16 %v1655
        %v2536 = vunpack.c.l.s8.bf16 %v1656
        %v2537 = vunpack.c.l.s8.bf16 %v1657
        %v2538 = vunpack.c.l.s8.bf16 %v1658
        %v2539 = vunpack.c.l.s8.bf16 %v1659
        %v2540 = vunpack.c.l.s8.bf16 %v1660
        %v2541 = vunpack.c.l.s8.bf16 %v1661
        %v2542 = vunpack.c.h.s8.bf16 %v1646
        %v2543 = vunpack.c.h.s8.bf16 %v1647
        %v2544 = vunpack.c.h.s8.bf16 %v1648
        %v2545 = vunpack.c.h.s8.bf16 %v1649
        %v2546 = vunpack.c.h.s8.bf16 %v1650
        %v2547 = vunpack.c.h.s8.bf16 %v1651
        %v2548 = vunpack.c.h.s8.bf16 %v1652
        %v2549 = vunpack.c.h.s8.bf16 %v1653
        %v2550 = vunpack.c.h.s8.bf16 %v1654
        %v2551 = vunpack.c.h.s8.bf16 %v1655
        %v2552 = vunpack.c.h.s8.bf16 %v1656
        %v2553 = vunpack.c.h.s8.bf16 %v1657
        %v2554 = vunpack.c.h.s8.bf16 %v1658
        %v2555 = vunpack.c.h.s8.bf16 %v1659
        %v2556 = vunpack.c.h.s8.bf16 %v1660
        %v2557 = vunpack.c.h.s8.bf16 %v1661
        %v2558 = vunpack.c.l.s8.bf16 %v1662
        %v2559 = vunpack.c.l.s8.bf16 %v1663
        %v2560 = vunpack.c.l.s8.bf16 %v1664
        %v2561 = vunpack.c.l.s8.bf16 %v1665
        %v2562 = vunpack.c.l.s8.bf16 %v1666
        %v2563 = vunpack.c.l.s8.bf16 %v1667
        %v2564 = vunpack.c.l.s8.bf16 %v1668
        %v2565 = vunpack.c.l.s8.bf16 %v1669
        %v2566 = vunpack.c.l.s8.bf16 %v1670
        %v2567 = vunpack.c.l.s8.bf16 %v1671
        %v2568 = vunpack.c.l.s8.bf16 %v1672
        %v2569 = vunpack.c.l.s8.bf16 %v1673
        %v2570 = vunpack.c.l.s8.bf16 %v1674
        %v2571 = vunpack.c.l.s8.bf16 %v1675
        %v2572 = vunpack.c.l.s8.bf16 %v1676
        %v2573 = vunpack.c.l.s8.bf16 %v1677
        %v2574 = vunpack.c.h.s8.bf16 %v1662
        %v2575 = vunpack.c.h.s8.bf16 %v1663
        %v2576 = vunpack.c.h.s8.bf16 %v1664
        %v2577 = vunpack.c.h.s8.bf16 %v1665
        %v2578 = vunpack.c.h.s8.bf16 %v1666
        %v2579 = vunpack.c.h.s8.bf16 %v1667
        %v2580 = vunpack.c.h.s8.bf16 %v1668
        %v2581 = vunpack.c.h.s8.bf16 %v1669
        %v2582 = vunpack.c.h.s8.bf16 %v1670
        %v2583 = vunpack.c.h.s8.bf16 %v1671
        %v2584 = vunpack.c.h.s8.bf16 %v1672
        %v2585 = vunpack.c.h.s8.bf16 %v1673
        %v2586 = vunpack.c.h.s8.bf16 %v1674
        %v2587 = vunpack.c.h.s8.bf16 %v1675
        %v2588 = vunpack.c.h.s8.bf16 %v1676
        %v2589 = vunpack.c.h.s8.bf16 %v1677
        %v2590 = vunpack.c.l.s8.bf16 %v1678
        %v2591 = vunpack.c.l.s8.bf16 %v1679
        %v2592 = vunpack.c.l.s8.bf16 %v1680
        %v2593 = vunpack.c.l.s8.bf16 %v1681
        %v2594 = vunpack.c.l.s8.bf16 %v1682
        %v2595 = vunpack.c.l.s8.bf16 %v1683
        %v2596 = vunpack.c.l.s8.bf16 %v1684
        %v2597 = vunpack.c.l.s8.bf16 %v1685
        %v2598 = vunpack.c.l.s8.bf16 %v1686
        %v2599 = vunpack.c.l.s8.bf16 %v1687
        %v2600 = vunpack.c.l.s8.bf16 %v1688
        %v2601 = vunpack.c.l.s8.bf16 %v1689
        %v2602 = vunpack.c.l.s8.bf16 %v1690
        %v2603 = vunpack.c.l.s8.bf16 %v1691
        %v2604 = vunpack.c.l.s8.bf16 %v1692
        %v2605 = vunpack.c.l.s8.bf16 %v1693
        %v2606 = vunpack.c.h.s8.bf16 %v1678
        %v2607 = vunpack.c.h.s8.bf16 %v1679
        %v2608 = vunpack.c.h.s8.bf16 %v1680
        %v2609 = vunpack.c.h.s8.bf16 %v1681
        %v2610 = vunpack.c.h.s8.bf16 %v1682
        %v2611 = vunpack.c.h.s8.bf16 %v1683
        %v2612 = vunpack.c.h.s8.bf16 %v1684
        %v2613 = vunpack.c.h.s8.bf16 %v1685
        %v2614 = vunpack.c.h.s8.bf16 %v1686
        %v2615 = vunpack.c.h.s8.bf16 %v1687
        %v2616 = vunpack.c.h.s8.bf16 %v1688
        %v2617 = vunpack.c.h.s8.bf16 %v1689
        %v2618 = vunpack.c.h.s8.bf16 %v1690
        %v2619 = vunpack.c.h.s8.bf16 %v1691
        %v2620 = vunpack.c.h.s8.bf16 %v1692
        %v2621 = vunpack.c.h.s8.bf16 %v1693
        %v2622 = vunpack.c.l.s8.bf16 %v1694
        %v2623 = vunpack.c.l.s8.bf16 %v1695
        %v2624 = vunpack.c.l.s8.bf16 %v1696
        %v2625 = vunpack.c.l.s8.bf16 %v1697
        %v2626 = vunpack.c.l.s8.bf16 %v1698
        %v2627 = vunpack.c.l.s8.bf16 %v1699
        %v2628 = vunpack.c.l.s8.bf16 %v1700
        %v2629 = vunpack.c.l.s8.bf16 %v1701
        %v2630 = vunpack.c.l.s8.bf16 %v1702
        %v2631 = vunpack.c.l.s8.bf16 %v1703
        %v2632 = vunpack.c.l.s8.bf16 %v1704
        %v2633 = vunpack.c.l.s8.bf16 %v1705
        %v2634 = vunpack.c.l.s8.bf16 %v1706
        %v2635 = vunpack.c.l.s8.bf16 %v1707
        %v2636 = vunpack.c.l.s8.bf16 %v1708
        %v2637 = vunpack.c.l.s8.bf16 %v1709
        %v2638 = vunpack.c.h.s8.bf16 %v1694
        %v2639 = vunpack.c.h.s8.bf16 %v1695
        %v2640 = vunpack.c.h.s8.bf16 %v1696
        %v2641 = vunpack.c.h.s8.bf16 %v1697
        %v2642 = vunpack.c.h.s8.bf16 %v1698
        %v2643 = vunpack.c.h.s8.bf16 %v1699
        %v2644 = vunpack.c.h.s8.bf16 %v1700
        %v2645 = vunpack.c.h.s8.bf16 %v1701
        %v2646 = vunpack.c.h.s8.bf16 %v1702
        %v2647 = vunpack.c.h.s8.bf16 %v1703
        %v2648 = vunpack.c.h.s8.bf16 %v1704
        %v2649 = vunpack.c.h.s8.bf16 %v1705
        %v2650 = vunpack.c.h.s8.bf16 %v1706
        %v2651 = vunpack.c.h.s8.bf16 %v1707
        %v2652 = vunpack.c.h.s8.bf16 %v1708
        %v2653 = vunpack.c.h.s8.bf16 %v1709
        %v2654 = vunpack.c.l.s8.bf16 %v1710
        %v2655 = vunpack.c.l.s8.bf16 %v1711
        %v2656 = vunpack.c.l.s8.bf16 %v1712
        %v2657 = vunpack.c.l.s8.bf16 %v1713
        %v2658 = vunpack.c.l.s8.bf16 %v1714
        %v2659 = vunpack.c.l.s8.bf16 %v1715
        %v2660 = vunpack.c.l.s8.bf16 %v1716
        %v2661 = vunpack.c.l.s8.bf16 %v1717
        %v2662 = vunpack.c.l.s8.bf16 %v1718
        %v2663 = vunpack.c.l.s8.bf16 %v1719
        %v2664 = vunpack.c.l.s8.bf16 %v1720
        %v2665 = vunpack.c.l.s8.bf16 %v1721
        %v2666 = vunpack.c.l.s8.bf16 %v1722
        %v2667 = vunpack.c.l.s8.bf16 %v1723
        %v2668 = vunpack.c.l.s8.bf16 %v1724
        %v2669 = vunpack.c.l.s8.bf16 %v1725
        %v2670 = vunpack.c.h.s8.bf16 %v1710
        %v2671 = vunpack.c.h.s8.bf16 %v1711
        %v2672 = vunpack.c.h.s8.bf16 %v1712
        %v2673 = vunpack.c.h.s8.bf16 %v1713
        %v2674 = vunpack.c.h.s8.bf16 %v1714
        %v2675 = vunpack.c.h.s8.bf16 %v1715
        %v2676 = vunpack.c.h.s8.bf16 %v1716
        %v2677 = vunpack.c.h.s8.bf16 %v1717
        %v2678 = vunpack.c.h.s8.bf16 %v1718
        %v2679 = vunpack.c.h.s8.bf16 %v1719
        %v2680 = vunpack.c.h.s8.bf16 %v1720
        %v2681 = vunpack.c.h.s8.bf16 %v1721
        %v2682 = vunpack.c.h.s8.bf16 %v1722
        %v2683 = vunpack.c.h.s8.bf16 %v1723
        %v2684 = vunpack.c.h.s8.bf16 %v1724
        %v2685 = vunpack.c.h.s8.bf16 %v1725
        %v2686 = vunpack.c.l.s8.bf16 %v1726
        %v2687 = vunpack.c.l.s8.bf16 %v1727
        %v2688 = vunpack.c.l.s8.bf16 %v1728
        %v2689 = vunpack.c.l.s8.bf16 %v1729
        %v2690 = vunpack.c.l.s8.bf16 %v1730
        %v2691 = vunpack.c.l.s8.bf16 %v1731
        %v2692 = vunpack.c.l.s8.bf16 %v1732
        %v2693 = vunpack.c.l.s8.bf16 %v1733
        %v2694 = vunpack.c.l.s8.bf16 %v1734
        %v2695 = vunpack.c.l.s8.bf16 %v1735
        %v2696 = vunpack.c.l.s8.bf16 %v1736
        %v2697 = vunpack.c.l.s8.bf16 %v1737
        %v2698 = vunpack.c.l.s8.bf16 %v1738
        %v2699 = vunpack.c.l.s8.bf16 %v1739
        %v2700 = vunpack.c.l.s8.bf16 %v1740
        %v2701 = vunpack.c.l.s8.bf16 %v1741
        %v2702 = vunpack.c.h.s8.bf16 %v1726
        %v2703 = vunpack.c.h.s8.bf16 %v1727
        %v2704 = vunpack.c.h.s8.bf16 %v1728
        %v2705 = vunpack.c.h.s8.bf16 %v1729
        %v2706 = vunpack.c.h.s8.bf16 %v1730
        %v2707 = vunpack.c.h.s8.bf16 %v1731
        %v2708 = vunpack.c.h.s8.bf16 %v1732
        %v2709 = vunpack.c.h.s8.bf16 %v1733
        %v2710 = vunpack.c.h.s8.bf16 %v1734
        %v2711 = vunpack.c.h.s8.bf16 %v1735
        %v2712 = vunpack.c.h.s8.bf16 %v1736
        %v2713 = vunpack.c.h.s8.bf16 %v1737
        %v2714 = vunpack.c.h.s8.bf16 %v1738
        %v2715 = vunpack.c.h.s8.bf16 %v1739
        %v2716 = vunpack.c.h.s8.bf16 %v1740
        %v2717 = vunpack.c.h.s8.bf16 %v1741
        %v2718 = vunpack.c.l.s8.bf16 %v1742
        %v2719 = vunpack.c.l.s8.bf16 %v1743
        %v2720 = vunpack.c.l.s8.bf16 %v1744
        %v2721 = vunpack.c.l.s8.bf16 %v1745
        %v2722 = vunpack.c.l.s8.bf16 %v1746
        %v2723 = vunpack.c.l.s8.bf16 %v1747
        %v2724 = vunpack.c.l.s8.bf16 %v1748
        %v2725 = vunpack.c.l.s8.bf16 %v1749
        %v2726 = vunpack.c.l.s8.bf16 %v1750
        %v2727 = vunpack.c.l.s8.bf16 %v1751
        %v2728 = vunpack.c.l.s8.bf16 %v1752
        %v2729 = vunpack.c.l.s8.bf16 %v1753
        %v2730 = vunpack.c.l.s8.bf16 %v1754
        %v2731 = vunpack.c.l.s8.bf16 %v1755
        %v2732 = vunpack.c.l.s8.bf16 %v1756
        %v2733 = vunpack.c.l.s8.bf16 %v1757
        %v2734 = vunpack.c.h.s8.bf16 %v1742
        %v2735 = vunpack.c.h.s8.bf16 %v1743
        %v2736 = vunpack.c.h.s8.bf16 %v1744
        %v2737 = vunpack.c.h.s8.bf16 %v1745
        %v2738 = vunpack.c.h.s8.bf16 %v1746
        %v2739 = vunpack.c.h.s8.bf16 %v1747
        %v2740 = vunpack.c.h.s8.bf16 %v1748
        %v2741 = vunpack.c.h.s8.bf16 %v1749
        %v2742 = vunpack.c.h.s8.bf16 %v1750
        %v2743 = vunpack.c.h.s8.bf16 %v1751
        %v2744 = vunpack.c.h.s8.bf16 %v1752
        %v2745 = vunpack.c.h.s8.bf16 %v1753
        %v2746 = vunpack.c.h.s8.bf16 %v1754
        %v2747 = vunpack.c.h.s8.bf16 %v1755
        %v2748 = vunpack.c.h.s8.bf16 %v1756
        %v2749 = vunpack.c.h.s8.bf16 %v1757
        %v2750 = vunpack.c.l.s8.bf16 %v1758
        %v2751 = vunpack.c.l.s8.bf16 %v1759
        %v2752 = vunpack.c.l.s8.bf16 %v1760
        %v2753 = vunpack.c.l.s8.bf16 %v1761
        %v2754 = vunpack.c.l.s8.bf16 %v1762
        %v2755 = vunpack.c.l.s8.bf16 %v1763
        %v2756 = vunpack.c.l.s8.bf16 %v1764
        %v2757 = vunpack.c.l.s8.bf16 %v1765
        %v2758 = vunpack.c.l.s8.bf16 %v1766
        %v2759 = vunpack.c.l.s8.bf16 %v1767
        %v2760 = vunpack.c.l.s8.bf16 %v1768
        %v2761 = vunpack.c.l.s8.bf16 %v1769
        %v2762 = vunpack.c.l.s8.bf16 %v1770
        %v2763 = vunpack.c.l.s8.bf16 %v1771
        %v2764 = vunpack.c.l.s8.bf16 %v1772
        %v2765 = vunpack.c.l.s8.bf16 %v1773
        %v2766 = vunpack.c.h.s8.bf16 %v1758
        %v2767 = vunpack.c.h.s8.bf16 %v1759
        %v2768 = vunpack.c.h.s8.bf16 %v1760
        %v2769 = vunpack.c.h.s8.bf16 %v1761
        %v2770 = vunpack.c.h.s8.bf16 %v1762
        %v2771 = vunpack.c.h.s8.bf16 %v1763
        %v2772 = vunpack.c.h.s8.bf16 %v1764
        %v2773 = vunpack.c.h.s8.bf16 %v1765
        %v2774 = vunpack.c.h.s8.bf16 %v1766
        %v2775 = vunpack.c.h.s8.bf16 %v1767
        %v2776 = vunpack.c.h.s8.bf16 %v1768
        %v2777 = vunpack.c.h.s8.bf16 %v1769
        %v2778 = vunpack.c.h.s8.bf16 %v1770
        %v2779 = vunpack.c.h.s8.bf16 %v1771
        %v2780 = vunpack.c.h.s8.bf16 %v1772
        %v2781 = vunpack.c.h.s8.bf16 %v1773
        %v2782 = vunpack.c.l.s8.bf16 %v1774
        %v2783 = vunpack.c.l.s8.bf16 %v1775
        %v2784 = vunpack.c.l.s8.bf16 %v1776
        %v2785 = vunpack.c.l.s8.bf16 %v1777
        %v2786 = vunpack.c.l.s8.bf16 %v1778
        %v2787 = vunpack.c.l.s8.bf16 %v1779
        %v2788 = vunpack.c.l.s8.bf16 %v1780
        %v2789 = vunpack.c.l.s8.bf16 %v1781
        %v2790 = vunpack.c.l.s8.bf16 %v1782
        %v2791 = vunpack.c.l.s8.bf16 %v1783
        %v2792 = vunpack.c.l.s8.bf16 %v1784
        %v2793 = vunpack.c.l.s8.bf16 %v1785
        %v2794 = vunpack.c.l.s8.bf16 %v1786
        %v2795 = vunpack.c.l.s8.bf16 %v1787
        %v2796 = vunpack.c.l.s8.bf16 %v1788
        %v2797 = vunpack.c.l.s8.bf16 %v1789
        %v2798 = vunpack.c.h.s8.bf16 %v1774
        %v2799 = vunpack.c.h.s8.bf16 %v1775
        %v2800 = vunpack.c.h.s8.bf16 %v1776
        %v2801 = vunpack.c.h.s8.bf16 %v1777
        %v2802 = vunpack.c.h.s8.bf16 %v1778
        %v2803 = vunpack.c.h.s8.bf16 %v1779
        %v2804 = vunpack.c.h.s8.bf16 %v1780
        %v2805 = vunpack.c.h.s8.bf16 %v1781
        %v2806 = vunpack.c.h.s8.bf16 %v1782
        %v2807 = vunpack.c.h.s8.bf16 %v1783
        %v2808 = vunpack.c.h.s8.bf16 %v1784
        %v2809 = vunpack.c.h.s8.bf16 %v1785
        %v2810 = vunpack.c.h.s8.bf16 %v1786
        %v2811 = vunpack.c.h.s8.bf16 %v1787
        %v2812 = vunpack.c.h.s8.bf16 %v1788
        %v2813 = vunpack.c.h.s8.bf16 %v1789
        %v2814 = vunpack.c.l.s8.bf16 %v1790
        %v2815 = vunpack.c.l.s8.bf16 %v1791
        %v2816 = vunpack.c.l.s8.bf16 %v1792
        %v2817 = vunpack.c.l.s8.bf16 %v1793
        %v2818 = vunpack.c.l.s8.bf16 %v1794
        %v2819 = vunpack.c.l.s8.bf16 %v1795
        %v2820 = vunpack.c.l.s8.bf16 %v1796
        %v2821 = vunpack.c.l.s8.bf16 %v1797
        %v2822 = vunpack.c.l.s8.bf16 %v1798
        %v2823 = vunpack.c.l.s8.bf16 %v1799
        %v2824 = vunpack.c.l.s8.bf16 %v1800
        %v2825 = vunpack.c.l.s8.bf16 %v1801
        %v2826 = vunpack.c.l.s8.bf16 %v1802
        %v2827 = vunpack.c.l.s8.bf16 %v1803
        %v2828 = vunpack.c.l.s8.bf16 %v1804
        %v2829 = vunpack.c.l.s8.bf16 %v1805
        %v2830 = vunpack.c.h.s8.bf16 %v1790
        %v2831 = vunpack.c.h.s8.bf16 %v1791
        %v2832 = vunpack.c.h.s8.bf16 %v1792
        %v2833 = vunpack.c.h.s8.bf16 %v1793
        %v2834 = vunpack.c.h.s8.bf16 %v1794
        %v2835 = vunpack.c.h.s8.bf16 %v1795
        %v2836 = vunpack.c.h.s8.bf16 %v1796
        %v2837 = vunpack.c.h.s8.bf16 %v1797
        %v2838 = vunpack.c.h.s8.bf16 %v1798
        %v2839 = vunpack.c.h.s8.bf16 %v1799
        %v2840 = vunpack.c.h.s8.bf16 %v1800
        %v2841 = vunpack.c.h.s8.bf16 %v1801
        %v2842 = vunpack.c.h.s8.bf16 %v1802
        %v2843 = vunpack.c.h.s8.bf16 %v1803
        %v2844 = vunpack.c.h.s8.bf16 %v1804
        %v2845 = vunpack.c.h.s8.bf16 %v1805
        %v2846 = vunpack.c.l.s8.bf16 %v1806
        %v2847 = vunpack.c.l.s8.bf16 %v1807
        %v2848 = vunpack.c.l.s8.bf16 %v1808
        %v2849 = vunpack.c.l.s8.bf16 %v1809
        %v2850 = vunpack.c.l.s8.bf16 %v1810
        %v2851 = vunpack.c.l.s8.bf16 %v1811
        %v2852 = vunpack.c.l.s8.bf16 %v1812
        %v2853 = vunpack.c.l.s8.bf16 %v1813
        %v2854 = vunpack.c.l.s8.bf16 %v1814
        %v2855 = vunpack.c.l.s8.bf16 %v1815
        %v2856 = vunpack.c.l.s8.bf16 %v1816
        %v2857 = vunpack.c.l.s8.bf16 %v1817
        %v2858 = vunpack.c.l.s8.bf16 %v1818
        %v2859 = vunpack.c.l.s8.bf16 %v1819
        %v2860 = vunpack.c.l.s8.bf16 %v1820
        %v2861 = vunpack.c.l.s8.bf16 %v1821
        %v2862 = vunpack.c.h.s8.bf16 %v1806
        %v2863 = vunpack.c.h.s8.bf16 %v1807
        %v2864 = vunpack.c.h.s8.bf16 %v1808
        %v2865 = vunpack.c.h.s8.bf16 %v1809
        %v2866 = vunpack.c.h.s8.bf16 %v1810
        %v2867 = vunpack.c.h.s8.bf16 %v1811
        %v2868 = vunpack.c.h.s8.bf16 %v1812
        %v2869 = vunpack.c.h.s8.bf16 %v1813
        %v2870 = vunpack.c.h.s8.bf16 %v1814
        %v2871 = vunpack.c.h.s8.bf16 %v1815
        %v2872 = vunpack.c.h.s8.bf16 %v1816
        %v2873 = vunpack.c.h.s8.bf16 %v1817
        %v2874 = vunpack.c.h.s8.bf16 %v1818
        %v2875 = vunpack.c.h.s8.bf16 %v1819
        %v2876 = vunpack.c.h.s8.bf16 %v1820
        %v2877 = vunpack.c.h.s8.bf16 %v1821
        %v2878 = vunpack.c.l.s8.bf16 %v1822
        %v2879 = vunpack.c.l.s8.bf16 %v1823
        %v2880 = vunpack.c.l.s8.bf16 %v1824
        %v2881 = vunpack.c.l.s8.bf16 %v1825
        %v2882 = vunpack.c.l.s8.bf16 %v1826
        %v2883 = vunpack.c.l.s8.bf16 %v1827
        %v2884 = vunpack.c.l.s8.bf16 %v1828
        %v2885 = vunpack.c.l.s8.bf16 %v1829
        %v2886 = vunpack.c.l.s8.bf16 %v1830
        %v2887 = vunpack.c.l.s8.bf16 %v1831
        %v2888 = vunpack.c.l.s8.bf16 %v1832
        %v2889 = vunpack.c.l.s8.bf16 %v1833
        %v2890 = vunpack.c.l.s8.bf16 %v1834
        %v2891 = vunpack.c.l.s8.bf16 %v1835
        %v2892 = vunpack.c.l.s8.bf16 %v1836
        %v2893 = vunpack.c.l.s8.bf16 %v1837
        %v2894 = vunpack.c.h.s8.bf16 %v1822
        %v2895 = vunpack.c.h.s8.bf16 %v1823
        %v2896 = vunpack.c.h.s8.bf16 %v1824
        %v2897 = vunpack.c.h.s8.bf16 %v1825
        %v2898 = vunpack.c.h.s8.bf16 %v1826
        %v2899 = vunpack.c.h.s8.bf16 %v1827
        %v2900 = vunpack.c.h.s8.bf16 %v1828
        %v2901 = vunpack.c.h.s8.bf16 %v1829
        %v2902 = vunpack.c.h.s8.bf16 %v1830
        %v2903 = vunpack.c.h.s8.bf16 %v1831
        %v2904 = vunpack.c.h.s8.bf16 %v1832
        %v2905 = vunpack.c.h.s8.bf16 %v1833
        %v2906 = vunpack.c.h.s8.bf16 %v1834
        %v2907 = vunpack.c.h.s8.bf16 %v1835
        %v2908 = vunpack.c.h.s8.bf16 %v1836
        %v2909 = vunpack.c.h.s8.bf16 %v1837
        %v2910 = vunpack.c.l.s8.bf16 %v1838
        %v2911 = vunpack.c.l.s8.bf16 %v1839
        %v2912 = vunpack.c.l.s8.bf16 %v1840
        %v2913 = vunpack.c.l.s8.bf16 %v1841
        %v2914 = vunpack.c.l.s8.bf16 %v1842
        %v2915 = vunpack.c.l.s8.bf16 %v1843
        %v2916 = vunpack.c.l.s8.bf16 %v1844
        %v2917 = vunpack.c.l.s8.bf16 %v1845
        %v2918 = vunpack.c.l.s8.bf16 %v1846
        %v2919 = vunpack.c.l.s8.bf16 %v1847
        %v2920 = vunpack.c.l.s8.bf16 %v1848
        %v2921 = vunpack.c.l.s8.bf16 %v1849
        %v2922 = vunpack.c.l.s8.bf16 %v1850
        %v2923 = vunpack.c.l.s8.bf16 %v1851
        %v2924 = vunpack.c.l.s8.bf16 %v1852
        %v2925 = vunpack.c.l.s8.bf16 %v1853
        %v2926 = vunpack.c.h.s8.bf16 %v1838
        %v2927 = vunpack.c.h.s8.bf16 %v1839
        %v2928 = vunpack.c.h.s8.bf16 %v1840
        %v2929 = vunpack.c.h.s8.bf16 %v1841
        %v2930 = vunpack.c.h.s8.bf16 %v1842
        %v2931 = vunpack.c.h.s8.bf16 %v1843
        %v2932 = vunpack.c.h.s8.bf16 %v1844
        %v2933 = vunpack.c.h.s8.bf16 %v1845
        %v2934 = vunpack.c.h.s8.bf16 %v1846
        %v2935 = vunpack.c.h.s8.bf16 %v1847
        %v2936 = vunpack.c.h.s8.bf16 %v1848
        %v2937 = vunpack.c.h.s8.bf16 %v1849
        %v2938 = vunpack.c.h.s8.bf16 %v1850
        %v2939 = vunpack.c.h.s8.bf16 %v1851
        %v2940 = vunpack.c.h.s8.bf16 %v1852
        %v2941 = vunpack.c.h.s8.bf16 %v1853
        %v2942 = vunpack.c.l.s8.bf16 %v1854
        %v2943 = vunpack.c.l.s8.bf16 %v1855
        %v2944 = vunpack.c.l.s8.bf16 %v1856
        %v2945 = vunpack.c.l.s8.bf16 %v1857
        %v2946 = vunpack.c.l.s8.bf16 %v1858
        %v2947 = vunpack.c.l.s8.bf16 %v1859
        %v2948 = vunpack.c.l.s8.bf16 %v1860
        %v2949 = vunpack.c.l.s8.bf16 %v1861
        %v2950 = vunpack.c.l.s8.bf16 %v1862
        %v2951 = vunpack.c.l.s8.bf16 %v1863
        %v2952 = vunpack.c.l.s8.bf16 %v1864
        %v2953 = vunpack.c.l.s8.bf16 %v1865
        %v2954 = vunpack.c.l.s8.bf16 %v1866
        %v2955 = vunpack.c.l.s8.bf16 %v1867
        %v2956 = vunpack.c.l.s8.bf16 %v1868
        %v2957 = vunpack.c.l.s8.bf16 %v1869
        %v2958 = vunpack.c.h.s8.bf16 %v1854
        %v2959 = vunpack.c.h.s8.bf16 %v1855
        %v2960 = vunpack.c.h.s8.bf16 %v1856
        %v2961 = vunpack.c.h.s8.bf16 %v1857
        %v2962 = vunpack.c.h.s8.bf16 %v1858
        %v2963 = vunpack.c.h.s8.bf16 %v1859
        %v2964 = vunpack.c.h.s8.bf16 %v1860
        %v2965 = vunpack.c.h.s8.bf16 %v1861
        %v2966 = vunpack.c.h.s8.bf16 %v1862
        %v2967 = vunpack.c.h.s8.bf16 %v1863
        %v2968 = vunpack.c.h.s8.bf16 %v1864
        %v2969 = vunpack.c.h.s8.bf16 %v1865
        %v2970 = vunpack.c.h.s8.bf16 %v1866
        %v2971 = vunpack.c.h.s8.bf16 %v1867
        %v2972 = vunpack.c.h.s8.bf16 %v1868
        %v2973 = vunpack.c.h.s8.bf16 %v1869
        %v2974 = vunpack.c.l.s8.bf16 %v1870
        %v2975 = vunpack.c.l.s8.bf16 %v1871
        %v2976 = vunpack.c.l.s8.bf16 %v1872
        %v2977 = vunpack.c.l.s8.bf16 %v1873
        %v2978 = vunpack.c.l.s8.bf16 %v1874
        %v2979 = vunpack.c.l.s8.bf16 %v1875
        %v2980 = vunpack.c.l.s8.bf16 %v1876
        %v2981 = vunpack.c.l.s8.bf16 %v1877
        %v2982 = vunpack.c.l.s8.bf16 %v1878
        %v2983 = vunpack.c.l.s8.bf16 %v1879
        %v2984 = vunpack.c.l.s8.bf16 %v1880
        %v2985 = vunpack.c.l.s8.bf16 %v1881
        %v2986 = vunpack.c.l.s8.bf16 %v1882
        %v2987 = vunpack.c.l.s8.bf16 %v1883
        %v2988 = vunpack.c.l.s8.bf16 %v1884
        %v2989 = vunpack.c.l.s8.bf16 %v1885
        %v2990 = vunpack.c.h.s8.bf16 %v1870
        %v2991 = vunpack.c.h.s8.bf16 %v1871
        %v2992 = vunpack.c.h.s8.bf16 %v1872
        %v2993 = vunpack.c.h.s8.bf16 %v1873
        %v2994 = vunpack.c.h.s8.bf16 %v1874
        %v2995 = vunpack.c.h.s8.bf16 %v1875
        %v2996 = vunpack.c.h.s8.bf16 %v1876
        %v2997 = vunpack.c.h.s8.bf16 %v1877
        %v2998 = vunpack.c.h.s8.bf16 %v1878
        %v2999 = vunpack.c.h.s8.bf16 %v1879
        %v3000 = vunpack.c.h.s8.bf16 %v1880
        %v3001 = vunpack.c.h.s8.bf16 %v1881
        %v3002 = vunpack.c.h.s8.bf16 %v1882
        %v3003 = vunpack.c.h.s8.bf16 %v1883
        %v3004 = vunpack.c.h.s8.bf16 %v1884
        %v3005 = vunpack.c.h.s8.bf16 %v1885
        %v3006 = vunpack.c.l.s8.bf16 %v1886
        %v3007 = vunpack.c.l.s8.bf16 %v1887
        %v3008 = vunpack.c.l.s8.bf16 %v1888
        %v3009 = vunpack.c.l.s8.bf16 %v1889
        %v3010 = vunpack.c.l.s8.bf16 %v1890
        %v3011 = vunpack.c.l.s8.bf16 %v1891
        %v3012 = vunpack.c.l.s8.bf16 %v1892
        %v3013 = vunpack.c.l.s8.bf16 %v1893
        %v3014 = vunpack.c.l.s8.bf16 %v1894
        %v3015 = vunpack.c.l.s8.bf16 %v1895
        %v3016 = vunpack.c.l.s8.bf16 %v1896
        %v3017 = vunpack.c.l.s8.bf16 %v1897
        %v3018 = vunpack.c.l.s8.bf16 %v1898
        %v3019 = vunpack.c.l.s8.bf16 %v1899
        %v3020 = vunpack.c.l.s8.bf16 %v1900
        %v3021 = vunpack.c.l.s8.bf16 %v1901
        %v3022 = vunpack.c.h.s8.bf16 %v1886
        %v3023 = vunpack.c.h.s8.bf16 %v1887
        %v3024 = vunpack.c.h.s8.bf16 %v1888
        %v3025 = vunpack.c.h.s8.bf16 %v1889
        %v3026 = vunpack.c.h.s8.bf16 %v1890
        %v3027 = vunpack.c.h.s8.bf16 %v1891
        %v3028 = vunpack.c.h.s8.bf16 %v1892
        %v3029 = vunpack.c.h.s8.bf16 %v1893
        %v3030 = vunpack.c.h.s8.bf16 %v1894
        %v3031 = vunpack.c.h.s8.bf16 %v1895
        %v3032 = vunpack.c.h.s8.bf16 %v1896
        %v3033 = vunpack.c.h.s8.bf16 %v1897
        %v3034 = vunpack.c.h.s8.bf16 %v1898
        %v3035 = vunpack.c.h.s8.bf16 %v1899
        %v3036 = vunpack.c.h.s8.bf16 %v1900
        %v3037 = vunpack.c.h.s8.bf16 %v1901
        %v3038 = vunpack.c.l.s8.bf16 %v1902
        %v3039 = vunpack.c.l.s8.bf16 %v1903
        %v3040 = vunpack.c.l.s8.bf16 %v1904
        %v3041 = vunpack.c.l.s8.bf16 %v1905
        %v3042 = vunpack.c.l.s8.bf16 %v1906
        %v3043 = vunpack.c.l.s8.bf16 %v1907
        %v3044 = vunpack.c.l.s8.bf16 %v1908
        %v3045 = vunpack.c.l.s8.bf16 %v1909
        %v3046 = vunpack.c.l.s8.bf16 %v1910
        %v3047 = vunpack.c.l.s8.bf16 %v1911
        %v3048 = vunpack.c.l.s8.bf16 %v1912
        %v3049 = vunpack.c.l.s8.bf16 %v1913
        %v3050 = vunpack.c.l.s8.bf16 %v1914
        %v3051 = vunpack.c.l.s8.bf16 %v1915
        %v3052 = vunpack.c.l.s8.bf16 %v1916
        %v3053 = vunpack.c.l.s8.bf16 %v1917
        %v3054 = vunpack.c.h.s8.bf16 %v1902
        %v3055 = vunpack.c.h.s8.bf16 %v1903
        %v3056 = vunpack.c.h.s8.bf16 %v1904
        %v3057 = vunpack.c.h.s8.bf16 %v1905
        %v3058 = vunpack.c.h.s8.bf16 %v1906
        %v3059 = vunpack.c.h.s8.bf16 %v1907
        %v3060 = vunpack.c.h.s8.bf16 %v1908
        %v3061 = vunpack.c.h.s8.bf16 %v1909
        %v3062 = vunpack.c.h.s8.bf16 %v1910
        %v3063 = vunpack.c.h.s8.bf16 %v1911
        %v3064 = vunpack.c.h.s8.bf16 %v1912
        %v3065 = vunpack.c.h.s8.bf16 %v1913
        %v3066 = vunpack.c.h.s8.bf16 %v1914
        %v3067 = vunpack.c.h.s8.bf16 %v1915
        %v3068 = vunpack.c.h.s8.bf16 %v1916
        %v3069 = vunpack.c.h.s8.bf16 %v1917
        %v3070 = vunpack.c.l.s8.bf16 %v1918
        %v3071 = vunpack.c.l.s8.bf16 %v1919
        %v3072 = vunpack.c.l.s8.bf16 %v1920
        %v3073 = vunpack.c.l.s8.bf16 %v1921
        %v3074 = vunpack.c.l.s8.bf16 %v1922
        %v3075 = vunpack.c.l.s8.bf16 %v1923
        %v3076 = vunpack.c.l.s8.bf16 %v1924
        %v3077 = vunpack.c.l.s8.bf16 %v1925
        %v3078 = vunpack.c.l.s8.bf16 %v1926
        %v3079 = vunpack.c.l.s8.bf16 %v1927
        %v3080 = vunpack.c.l.s8.bf16 %v1928
        %v3081 = vunpack.c.l.s8.bf16 %v1929
        %v3082 = vunpack.c.l.s8.bf16 %v1930
        %v3083 = vunpack.c.l.s8.bf16 %v1931
        %v3084 = vunpack.c.l.s8.bf16 %v1932
        %v3085 = vunpack.c.l.s8.bf16 %v1933
        %v3086 = vunpack.c.h.s8.bf16 %v1918
        %v3087 = vunpack.c.h.s8.bf16 %v1919
        %v3088 = vunpack.c.h.s8.bf16 %v1920
        %v3089 = vunpack.c.h.s8.bf16 %v1921
        %v3090 = vunpack.c.h.s8.bf16 %v1922
        %v3091 = vunpack.c.h.s8.bf16 %v1923
        %v3092 = vunpack.c.h.s8.bf16 %v1924
        %v3093 = vunpack.c.h.s8.bf16 %v1925
        %v3094 = vunpack.c.h.s8.bf16 %v1926
        %v3095 = vunpack.c.h.s8.bf16 %v1927
        %v3096 = vunpack.c.h.s8.bf16 %v1928
        %v3097 = vunpack.c.h.s8.bf16 %v1929
        %v3098 = vunpack.c.h.s8.bf16 %v1930
        %v3099 = vunpack.c.h.s8.bf16 %v1931
        %v3100 = vunpack.c.h.s8.bf16 %v1932
        %v3101 = vunpack.c.h.s8.bf16 %v1933
        %v3102 = vunpack.c.l.s8.bf16 %v1934
        %v3103 = vunpack.c.l.s8.bf16 %v1935
        %v3104 = vunpack.c.l.s8.bf16 %v1936
        %v3105 = vunpack.c.l.s8.bf16 %v1937
        %v3106 = vunpack.c.l.s8.bf16 %v1938
        %v3107 = vunpack.c.l.s8.bf16 %v1939
        %v3108 = vunpack.c.l.s8.bf16 %v1940
        %v3109 = vunpack.c.l.s8.bf16 %v1941
        %v3110 = vunpack.c.l.s8.bf16 %v1942
        %v3111 = vunpack.c.l.s8.bf16 %v1943
        %v3112 = vunpack.c.l.s8.bf16 %v1944
        %v3113 = vunpack.c.l.s8.bf16 %v1945
        %v3114 = vunpack.c.l.s8.bf16 %v1946
        %v3115 = vunpack.c.l.s8.bf16 %v1947
        %v3116 = vunpack.c.l.s8.bf16 %v1948
        %v3117 = vunpack.c.l.s8.bf16 %v1949
        %v3118 = vunpack.c.h.s8.bf16 %v1934
        %v3119 = vunpack.c.h.s8.bf16 %v1935
        %v3120 = vunpack.c.h.s8.bf16 %v1936
        %v3121 = vunpack.c.h.s8.bf16 %v1937
        %v3122 = vunpack.c.h.s8.bf16 %v1938
        %v3123 = vunpack.c.h.s8.bf16 %v1939
        %v3124 = vunpack.c.h.s8.bf16 %v1940
        %v3125 = vunpack.c.h.s8.bf16 %v1941
        %v3126 = vunpack.c.h.s8.bf16 %v1942
        %v3127 = vunpack.c.h.s8.bf16 %v1943
        %v3128 = vunpack.c.h.s8.bf16 %v1944
        %v3129 = vunpack.c.h.s8.bf16 %v1945
        %v3130 = vunpack.c.h.s8.bf16 %v1946
        %v3131 = vunpack.c.h.s8.bf16 %v1947
        %v3132 = vunpack.c.h.s8.bf16 %v1948
        %v3133 = vunpack.c.h.s8.bf16 %v1949
        %v3134 = vunpack.c.l.s8.bf16 %v1950
        %v3135 = vunpack.c.l.s8.bf16 %v1951
        %v3136 = vunpack.c.l.s8.bf16 %v1952
        %v3137 = vunpack.c.l.s8.bf16 %v1953
        %v3138 = vunpack.c.l.s8.bf16 %v1954
        %v3139 = vunpack.c.l.s8.bf16 %v1955
        %v3140 = vunpack.c.l.s8.bf16 %v1956
        %v3141 = vunpack.c.l.s8.bf16 %v1957
        %v3142 = vunpack.c.l.s8.bf16 %v1958
        %v3143 = vunpack.c.l.s8.bf16 %v1959
        %v3144 = vunpack.c.l.s8.bf16 %v1960
        %v3145 = vunpack.c.l.s8.bf16 %v1961
        %v3146 = vunpack.c.l.s8.bf16 %v1962
        %v3147 = vunpack.c.l.s8.bf16 %v1963
        %v3148 = vunpack.c.l.s8.bf16 %v1964
        %v3149 = vunpack.c.l.s8.bf16 %v1965
        %v3150 = vunpack.c.h.s8.bf16 %v1950
        %v3151 = vunpack.c.h.s8.bf16 %v1951
        %v3152 = vunpack.c.h.s8.bf16 %v1952
        %v3153 = vunpack.c.h.s8.bf16 %v1953
        %v3154 = vunpack.c.h.s8.bf16 %v1954
        %v3155 = vunpack.c.h.s8.bf16 %v1955
        %v3156 = vunpack.c.h.s8.bf16 %v1956
        %v3157 = vunpack.c.h.s8.bf16 %v1957
        %v3158 = vunpack.c.h.s8.bf16 %v1958
        %v3159 = vunpack.c.h.s8.bf16 %v1959
        %v3160 = vunpack.c.h.s8.bf16 %v1960
        %v3161 = vunpack.c.h.s8.bf16 %v1961
        %v3162 = vunpack.c.h.s8.bf16 %v1962
        %v3163 = vunpack.c.h.s8.bf16 %v1963
        %v3164 = vunpack.c.h.s8.bf16 %v1964
        %v3165 = vunpack.c.h.s8.bf16 %v1965
        %v3166 = vunpack.c.l.s8.bf16 %v1966
        %v3167 = vunpack.c.l.s8.bf16 %v1967
        %v3168 = vunpack.c.l.s8.bf16 %v1968
        %v3169 = vunpack.c.l.s8.bf16 %v1969
        %v3170 = vunpack.c.l.s8.bf16 %v1970
        %v3171 = vunpack.c.l.s8.bf16 %v1971
        %v3172 = vunpack.c.l.s8.bf16 %v1972
        %v3173 = vunpack.c.l.s8.bf16 %v1973
        %v3174 = vunpack.c.l.s8.bf16 %v1974
        %v3175 = vunpack.c.l.s8.bf16 %v1975
        %v3176 = vunpack.c.l.s8.bf16 %v1976
        %v3177 = vunpack.c.l.s8.bf16 %v1977
        %v3178 = vunpack.c.l.s8.bf16 %v1978
        %v3179 = vunpack.c.l.s8.bf16 %v1979
        %v3180 = vunpack.c.l.s8.bf16 %v1980
        %v3181 = vunpack.c.l.s8.bf16 %v1981
        %v3182 = vunpack.c.h.s8.bf16 %v1966
        %v3183 = vunpack.c.h.s8.bf16 %v1967
        %v3184 = vunpack.c.h.s8.bf16 %v1968
        %v3185 = vunpack.c.h.s8.bf16 %v1969
        %v3186 = vunpack.c.h.s8.bf16 %v1970
        %v3187 = vunpack.c.h.s8.bf16 %v1971
        %v3188 = vunpack.c.h.s8.bf16 %v1972
        %v3189 = vunpack.c.h.s8.bf16 %v1973
        %v3190 = vunpack.c.h.s8.bf16 %v1974
        %v3191 = vunpack.c.h.s8.bf16 %v1975
        %v3192 = vunpack.c.h.s8.bf16 %v1976
        %v3193 = vunpack.c.h.s8.bf16 %v1977
        %v3194 = vunpack.c.h.s8.bf16 %v1978
        %v3195 = vunpack.c.h.s8.bf16 %v1979
        %v3196 = vunpack.c.h.s8.bf16 %v1980
        %v3197 = vunpack.c.h.s8.bf16 %v1981
        %v3198 = vunpack.c.l.s8.bf16 %v1982
        %v3199 = vunpack.c.l.s8.bf16 %v1983
        %v3200 = vunpack.c.l.s8.bf16 %v1984
        %v3201 = vunpack.c.l.s8.bf16 %v1985
        %v3202 = vunpack.c.l.s8.bf16 %v1986
        %v3203 = vunpack.c.l.s8.bf16 %v1987
        %v3204 = vunpack.c.l.s8.bf16 %v1988
        %v3205 = vunpack.c.l.s8.bf16 %v1989
        %v3206 = vunpack.c.l.s8.bf16 %v1990
        %v3207 = vunpack.c.l.s8.bf16 %v1991
        %v3208 = vunpack.c.l.s8.bf16 %v1992
        %v3209 = vunpack.c.l.s8.bf16 %v1993
        %v3210 = vunpack.c.l.s8.bf16 %v1994
        %v3211 = vunpack.c.l.s8.bf16 %v1995
        %v3212 = vunpack.c.l.s8.bf16 %v1996
        %v3213 = vunpack.c.l.s8.bf16 %v1997
        %v3214 = vunpack.c.h.s8.bf16 %v1982
        %v3215 = vunpack.c.h.s8.bf16 %v1983
        %v3216 = vunpack.c.h.s8.bf16 %v1984
        %v3217 = vunpack.c.h.s8.bf16 %v1985
        %v3218 = vunpack.c.h.s8.bf16 %v1986
        %v3219 = vunpack.c.h.s8.bf16 %v1987
        %v3220 = vunpack.c.h.s8.bf16 %v1988
        %v3221 = vunpack.c.h.s8.bf16 %v1989
        %v3222 = vunpack.c.h.s8.bf16 %v1990
        %v3223 = vunpack.c.h.s8.bf16 %v1991
        %v3224 = vunpack.c.h.s8.bf16 %v1992
        %v3225 = vunpack.c.h.s8.bf16 %v1993
        %v3226 = vunpack.c.h.s8.bf16 %v1994
        %v3227 = vunpack.c.h.s8.bf16 %v1995
        %v3228 = vunpack.c.h.s8.bf16 %v1996
        %v3229 = vunpack.c.h.s8.bf16 %v1997
        %v3230 = vunpack.c.l.s8.bf16 %v1998
        %v3231 = vunpack.c.l.s8.bf16 %v1999
        %v3232 = vunpack.c.l.s8.bf16 %v2000
        %v3233 = vunpack.c.l.s8.bf16 %v2001
        %v3234 = vunpack.c.l.s8.bf16 %v2002
        %v3235 = vunpack.c.l.s8.bf16 %v2003
        %v3236 = vunpack.c.l.s8.bf16 %v2004
        %v3237 = vunpack.c.l.s8.bf16 %v2005
        %v3238 = vunpack.c.l.s8.bf16 %v2006
        %v3239 = vunpack.c.l.s8.bf16 %v2007
        %v3240 = vunpack.c.l.s8.bf16 %v2008
        %v3241 = vunpack.c.l.s8.bf16 %v2009
        %v3242 = vunpack.c.l.s8.bf16 %v2010
        %v3243 = vunpack.c.l.s8.bf16 %v2011
        %v3244 = vunpack.c.l.s8.bf16 %v2012
        %v3245 = vunpack.c.l.s8.bf16 %v2013
        %v3246 = vunpack.c.h.s8.bf16 %v1998
        %v3247 = vunpack.c.h.s8.bf16 %v1999
        %v3248 = vunpack.c.h.s8.bf16 %v2000
        %v3249 = vunpack.c.h.s8.bf16 %v2001
        %v3250 = vunpack.c.h.s8.bf16 %v2002
        %v3251 = vunpack.c.h.s8.bf16 %v2003
        %v3252 = vunpack.c.h.s8.bf16 %v2004
        %v3253 = vunpack.c.h.s8.bf16 %v2005
        %v3254 = vunpack.c.h.s8.bf16 %v2006
        %v3255 = vunpack.c.h.s8.bf16 %v2007
        %v3256 = vunpack.c.h.s8.bf16 %v2008
        %v3257 = vunpack.c.h.s8.bf16 %v2009
        %v3258 = vunpack.c.h.s8.bf16 %v2010
        %v3259 = vunpack.c.h.s8.bf16 %v2011
        %v3260 = vunpack.c.h.s8.bf16 %v2012
        %v3261 = vunpack.c.h.s8.bf16 %v2013
        %v3262 = vunpack.c.l.s8.bf16 %v2014
        %v3263 = vunpack.c.l.s8.bf16 %v2015
        %v3264 = vunpack.c.l.s8.bf16 %v2016
        %v3265 = vunpack.c.l.s8.bf16 %v2017
        %v3266 = vunpack.c.l.s8.bf16 %v2018
        %v3267 = vunpack.c.l.s8.bf16 %v2019
        %v3268 = vunpack.c.l.s8.bf16 %v2020
        %v3269 = vunpack.c.l.s8.bf16 %v2021
        %v3270 = vunpack.c.l.s8.bf16 %v2022
        %v3271 = vunpack.c.l.s8.bf16 %v2023
        %v3272 = vunpack.c.l.s8.bf16 %v2024
        %v3273 = vunpack.c.l.s8.bf16 %v2025
        %v3274 = vunpack.c.l.s8.bf16 %v2026
        %v3275 = vunpack.c.l.s8.bf16 %v2027
        %v3276 = vunpack.c.l.s8.bf16 %v2028
        %v3277 = vunpack.c.l.s8.bf16 %v2029
        %v3278 = vunpack.c.h.s8.bf16 %v2014
        %v3279 = vunpack.c.h.s8.bf16 %v2015
        %v3280 = vunpack.c.h.s8.bf16 %v2016
        %v3281 = vunpack.c.h.s8.bf16 %v2017
        %v3282 = vunpack.c.h.s8.bf16 %v2018
        %v3283 = vunpack.c.h.s8.bf16 %v2019
        %v3284 = vunpack.c.h.s8.bf16 %v2020
        %v3285 = vunpack.c.h.s8.bf16 %v2021
        %v3286 = vunpack.c.h.s8.bf16 %v2022
        %v3287 = vunpack.c.h.s8.bf16 %v2023
        %v3288 = vunpack.c.h.s8.bf16 %v2024
        %v3289 = vunpack.c.h.s8.bf16 %v2025
        %v3290 = vunpack.c.h.s8.bf16 %v2026
        %v3291 = vunpack.c.h.s8.bf16 %v2027
        %v3292 = vunpack.c.h.s8.bf16 %v2028
        %v3293 = vunpack.c.h.s8.bf16 %v2029
        %v3294 = vunpack.c.l.s8.bf16 %v2030
        %v3295 = vunpack.c.l.s8.bf16 %v2031
        %v3296 = vunpack.c.l.s8.bf16 %v2032
        %v3297 = vunpack.c.l.s8.bf16 %v2033
        %v3298 = vunpack.c.l.s8.bf16 %v2034
        %v3299 = vunpack.c.l.s8.bf16 %v2035
        %v3300 = vunpack.c.l.s8.bf16 %v2036
        %v3301 = vunpack.c.l.s8.bf16 %v2037
        %v3302 = vunpack.c.l.s8.bf16 %v2038
        %v3303 = vunpack.c.l.s8.bf16 %v2039
        %v3304 = vunpack.c.l.s8.bf16 %v2040
        %v3305 = vunpack.c.l.s8.bf16 %v2041
        %v3306 = vunpack.c.l.s8.bf16 %v2042
        %v3307 = vunpack.c.l.s8.bf16 %v2043
        %v3308 = vunpack.c.l.s8.bf16 %v2044
        %v3309 = vunpack.c.l.s8.bf16 %v2045
        %v3310 = vunpack.c.h.s8.bf16 %v2030
        %v3311 = vunpack.c.h.s8.bf16 %v2031
        %v3312 = vunpack.c.h.s8.bf16 %v2032
        %v3313 = vunpack.c.h.s8.bf16 %v2033
        %v3314 = vunpack.c.h.s8.bf16 %v2034
        %v3315 = vunpack.c.h.s8.bf16 %v2035
        %v3316 = vunpack.c.h.s8.bf16 %v2036
        %v3317 = vunpack.c.h.s8.bf16 %v2037
        %v3318 = vunpack.c.h.s8.bf16 %v2038
        %v3319 = vunpack.c.h.s8.bf16 %v2039
        %v3320 = vunpack.c.h.s8.bf16 %v2040
        %v3321 = vunpack.c.h.s8.bf16 %v2041
        %v3322 = vunpack.c.h.s8.bf16 %v2042
        %v3323 = vunpack.c.h.s8.bf16 %v2043
        %v3324 = vunpack.c.h.s8.bf16 %v2044
        %v3325 = vunpack.c.h.s8.bf16 %v2045
        %v3331 = vunpack.c.l.b16 %v1401
        %v3332 = vunpack.c.h.b16 %v1401
        %v3333 = vunpack.c.l.b16 %v1402
        %v3334 = vunpack.c.h.b16 %v1402
        %v3335 = vunpack.c.l.b16 %v1403
        %v3336 = vunpack.c.h.b16 %v1403
        %v3337 = vunpack.c.l.b16 %v1404
        %v3338 = vunpack.c.h.b16 %v1404
        %v3339 = vunpack.c.l.b16 %v1405
        %v3340 = vunpack.c.h.b16 %v1405
        %v3341 = vpack.c.b16 %v3331, %v3331
        %v3342 = vpack.c.b16 %v3332, %v3332
        %v3343 = vpack.c.b16 %v3333, %v3333
        %v3344 = vpack.c.b16 %v3334, %v3334
        %v3345 = vpack.c.b16 %v3335, %v3335
        %v3346 = vpack.c.b16 %v3336, %v3336
        %v3347 = vpack.c.b16 %v3337, %v3337
        %v3348 = vpack.c.b16 %v3338, %v3338
        %v3349 = vpack.c.b16 %v3339, %v3339
        %v3350 = vpack.c.b16 %v3340, %v3340
        %3361 = vmatprep.subr.bf16.mxu0 %v2047
        %3362 = vmatpush1.bf16.msra.mxu0 %v2046
        %3363 = vmatprep.subr.bf16.mxu0 %v2063
        %3364 = vmatpush1.bf16.msra.mxu0 %v2062
        %3365 = vmatprep.subr.bf16.mxu0 %v2079
        %3366 = vmatpush1.bf16.msra.mxu0 %v2078
        %3367 = vmatprep.subr.bf16.mxu0 %v2095
        %3368 = vmatpush1.bf16.msra.mxu0 %v2094
        %3369 = vmatprep.subr.bf16.mxu0 %v2111
        %3370 = vmatpush1.bf16.msra.mxu0 %v2110
        %3371 = vmatprep.subr.bf16.mxu0 %v2127
        %3372 = vmatpush1.bf16.msra.mxu0 %v2126
        %3373 = vmatprep.subr.bf16.mxu0 %v2143
        %3374 = vmatpush1.bf16.msra.mxu0 %v2142
        %3375 = vmatprep.subr.bf16.mxu0 %v2159
        %3376 = vmatpush1.bf16.msra.mxu0 %v2158
        %3377 = vmatprep.subr.bf16.mxu0 %v2175
        %3378 = vmatpush1.bf16.msra.mxu0 %v2174
        %3379 = vmatprep.subr.bf16.mxu0 %v2191
        %3380 = vmatpush1.bf16.msra.mxu0 %v2190
        %3381 = vmatprep.subr.bf16.mxu0 %v2207
        %3382 = vmatpush1.bf16.msra.mxu0 %v2206
        %3383 = vmatprep.subr.bf16.mxu0 %v2223
        %3384 = vmatpush1.bf16.msra.mxu0 %v2222
        %3385 = vmatprep.subr.bf16.mxu0 %v2239
        %3386 = vmatpush1.bf16.msra.mxu0 %v2238
        %3387 = vmatprep.subr.bf16.mxu0 %v2255
        %3388 = vmatpush1.bf16.msra.mxu0 %v2254
        %3389 = vmatprep.subr.bf16.mxu0 %v2271
        %3390 = vmatpush1.bf16.msra.mxu0 %v2270
        %3391 = vmatprep.subr.bf16.mxu0 %v2287
        %3392 = vmatpush1.bf16.msra.mxu0 %v2286
        %3393 = vmatprep.mubr.bf16.mxu0 %v3342
        %3394 = vmatmul.mubr.bf16.gmra.mrb[0].mxu0 %v3341
        %v3395 = vpop.f32.mrb[0].mxu0
        %v3396 = vadd.f32 0.0, %v3395
        %v3397 = vpop.f32.mrb[0].mxu0
        %v3398 = vadd.f32 0.0, %v3397
        %v3399 = vpop.f32.mrb[0].mxu0
        %v3400 = vpop.f32.mrb[0].mxu0
        %3401 = vdwg.mxu0
        %3402 = vmatprep.subr.bf16.mxu0 %v2303
        %3403 = vmatpush1.bf16.msra.mxu0 %v2302
        %3404 = vmatprep.subr.bf16.mxu0 %v2319
        %3405 = vmatpush1.bf16.msra.mxu0 %v2318
        %3406 = vmatprep.subr.bf16.mxu0 %v2335
        %3407 = vmatpush1.bf16.msra.mxu0 %v2334
        %3408 = vmatprep.subr.bf16.mxu0 %v2351
        %3409 = vmatpush1.bf16.msra.mxu0 %v2350
        %3410 = vmatprep.subr.bf16.mxu0 %v2367
        %3411 = vmatpush1.bf16.msra.mxu0 %v2366
        %3412 = vmatprep.subr.bf16.mxu0 %v2383
        %3413 = vmatpush1.bf16.msra.mxu0 %v2382
        %3414 = vmatprep.subr.bf16.mxu0 %v2399
        %3415 = vmatpush1.bf16.msra.mxu0 %v2398
        %3416 = vmatprep.subr.bf16.mxu0 %v2415
        %3417 = vmatpush1.bf16.msra.mxu0 %v2414
        %3418 = vmatprep.subr.bf16.mxu0 %v2431
        %3419 = vmatpush1.bf16.msra.mxu0 %v2430
        %3420 = vmatprep.subr.bf16.mxu0 %v2447
        %3421 = vmatpush1.bf16.msra.mxu0 %v2446
        %3422 = vmatprep.subr.bf16.mxu0 %v2463
        %3423 = vmatpush1.bf16.msra.mxu0 %v2462
        %3424 = vmatprep.subr.bf16.mxu0 %v2479
        %3425 = vmatpush1.bf16.msra.mxu0 %v2478
        %3426 = vmatprep.subr.bf16.mxu0 %v2495
        %3427 = vmatpush1.bf16.msra.mxu0 %v2494
        %3428 = vmatprep.subr.bf16.mxu0 %v2511
        %3429 = vmatpush1.bf16.msra.mxu0 %v2510
        %3430 = vmatprep.subr.bf16.mxu0 %v2527
        %3431 = vmatpush1.bf16.msra.mxu0 %v2526
        %3432 = vmatprep.subr.bf16.mxu0 %v2543
        %3433 = vmatpush1.bf16.msra.mxu0 %v2542
        %3434 = vmatprep.mubr.bf16.mxu0 %v3344
        %3435 = vmatmul.mubr.bf16.gmra.mrb[0].mxu0 %v3343
        %v3436 = vpop.f32.mrb[0].mxu0
        %v3437 = vadd.f32 %v3396, %v3436
        %v3438 = vpop.f32.mrb[0].mxu0
        %v3439 = vadd.f32 %v3398, %v3438
        %v3440 = vpop.f32.mrb[0].mxu0
        %v3441 = vpop.f32.mrb[0].mxu0
        %3442 = vdwg.mxu0
        %3443 = vmatprep.subr.bf16.mxu0 %v2559
        %3444 = vmatpush1.bf16.msra.mxu0 %v2558
        %3445 = vmatprep.subr.bf16.mxu0 %v2575
        %3446 = vmatpush1.bf16.msra.mxu0 %v2574
        %3447 = vmatprep.subr.bf16.mxu0 %v2591
        %3448 = vmatpush1.bf16.msra.mxu0 %v2590
        %3449 = vmatprep.subr.bf16.mxu0 %v2607
        %3450 = vmatpush1.bf16.msra.mxu0 %v2606
        %3451 = vmatprep.subr.bf16.mxu0 %v2623
        %3452 = vmatpush1.bf16.msra.mxu0 %v2622
        %3453 = vmatprep.subr.bf16.mxu0 %v2639
        %3454 = vmatpush1.bf16.msra.mxu0 %v2638
        %3455 = vmatprep.subr.bf16.mxu0 %v2655
        %3456 = vmatpush1.bf16.msra.mxu0 %v2654
        %3457 = vmatprep.subr.bf16.mxu0 %v2671
        %3458 = vmatpush1.bf16.msra.mxu0 %v2670
        %3459 = vmatprep.subr.bf16.mxu0 %v2687
        %3460 = vmatpush1.bf16.msra.mxu0 %v2686
        %3461 = vmatprep.subr.bf16.mxu0 %v2703
        %3462 = vmatpush1.bf16.msra.mxu0 %v2702
        %3463 = vmatprep.subr.bf16.mxu0 %v2719
        %3464 = vmatpush1.bf16.msra.mxu0 %v2718
        %3465 = vmatprep.subr.bf16.mxu0 %v2735
        %3466 = vmatpush1.bf16.msra.mxu0 %v2734
        %3467 = vmatprep.subr.bf16.mxu0 %v2751
        %3468 = vmatpush1.bf16.msra.mxu0 %v2750
        %3469 = vmatprep.subr.bf16.mxu0 %v2767
        %3470 = vmatpush1.bf16.msra.mxu0 %v2766
        %3471 = vmatprep.subr.bf16.mxu0 %v2783
        %3472 = vmatpush1.bf16.msra.mxu0 %v2782
        %3473 = vmatprep.subr.bf16.mxu0 %v2799
        %3474 = vmatpush1.bf16.msra.mxu0 %v2798
        %3475 = vmatprep.mubr.bf16.mxu0 %v3346
        %3476 = vmatmul.mubr.bf16.gmra.mrb[0].mxu0 %v3345
        %v3477 = vpop.f32.mrb[0].mxu0
        %v3478 = vadd.f32 %v3437, %v3477
        %v3479 = vpop.f32.mrb[0].mxu0
        %v3480 = vadd.f32 %v3439, %v3479
        %v3481 = vpop.f32.mrb[0].mxu0
        %v3482 = vpop.f32.mrb[0].mxu0
        %3483 = vdwg.mxu0
        %3484 = vmatprep.subr.bf16.mxu0 %v2815
        %3485 = vmatpush1.bf16.msra.mxu0 %v2814
        %3486 = vmatprep.subr.bf16.mxu0 %v2831
        %3487 = vmatpush1.bf16.msra.mxu0 %v2830
        %3488 = vmatprep.subr.bf16.mxu0 %v2847
        %3489 = vmatpush1.bf16.msra.mxu0 %v2846
        %3490 = vmatprep.subr.bf16.mxu0 %v2863
        %3491 = vmatpush1.bf16.msra.mxu0 %v2862
        %3492 = vmatprep.subr.bf16.mxu0 %v2879
        %3493 = vmatpush1.bf16.msra.mxu0 %v2878
        %3494 = vmatprep.subr.bf16.mxu0 %v2895
        %3495 = vmatpush1.bf16.msra.mxu0 %v2894
        %3496 = vmatprep.subr.bf16.mxu0 %v2911
        %3497 = vmatpush1.bf16.msra.mxu0 %v2910
        %3498 = vmatprep.subr.bf16.mxu0 %v2927
        %3499 = vmatpush1.bf16.msra.mxu0 %v2926
        %3500 = vmatprep.subr.bf16.mxu0 %v2943
        %3501 = vmatpush1.bf16.msra.mxu0 %v2942
        %3502 = vmatprep.subr.bf16.mxu0 %v2959
        %3503 = vmatpush1.bf16.msra.mxu0 %v2958
        %3504 = vmatprep.subr.bf16.mxu0 %v2975
        %3505 = vmatpush1.bf16.msra.mxu0 %v2974
        %3506 = vmatprep.subr.bf16.mxu0 %v2991
        %3507 = vmatpush1.bf16.msra.mxu0 %v2990
        %3508 = vmatprep.subr.bf16.mxu0 %v3007
        %3509 = vmatpush1.bf16.msra.mxu0 %v3006
        %3510 = vmatprep.subr.bf16.mxu0 %v3023
        %3511 = vmatpush1.bf16.msra.mxu0 %v3022
        %3512 = vmatprep.subr.bf16.mxu0 %v3039
        %3513 = vmatpush1.bf16.msra.mxu0 %v3038
        %3514 = vmatprep.subr.bf16.mxu0 %v3055
        %3515 = vmatpush1.bf16.msra.mxu0 %v3054
        %3516 = vmatprep.mubr.bf16.mxu0 %v3348
        %3517 = vmatmul.mubr.bf16.gmra.mrb[0].mxu0 %v3347
        %v3518 = vpop.f32.mrb[0].mxu0
        %v3519 = vadd.f32 %v3478, %v3518
        %v3520 = vpop.f32.mrb[0].mxu0
        %v3521 = vadd.f32 %v3480, %v3520
        %v3522 = vpop.f32.mrb[0].mxu0
        %v3523 = vpop.f32.mrb[0].mxu0
        %3524 = vdwg.mxu0
        %3525 = vmatprep.subr.bf16.mxu0 %v3071
        %3526 = vmatpush1.bf16.msra.mxu0 %v3070
        %3527 = vmatprep.subr.bf16.mxu0 %v3087
        %3528 = vmatpush1.bf16.msra.mxu0 %v3086
        %3529 = vmatprep.subr.bf16.mxu0 %v3103
        %3530 = vmatpush1.bf16.msra.mxu0 %v3102
        %3531 = vmatprep.subr.bf16.mxu0 %v3119
        %3532 = vmatpush1.bf16.msra.mxu0 %v3118
        %3533 = vmatprep.subr.bf16.mxu0 %v3135
        %3534 = vmatpush1.bf16.msra.mxu0 %v3134
        %3535 = vmatprep.subr.bf16.mxu0 %v3151
        %3536 = vmatpush1.bf16.msra.mxu0 %v3150
        %3537 = vmatprep.subr.bf16.mxu0 %v3167
        %3538 = vmatpush1.bf16.msra.mxu0 %v3166
        %3539 = vmatprep.subr.bf16.mxu0 %v3183
        %3540 = vmatpush1.bf16.msra.mxu0 %v3182
        %3541 = vmatprep.subr.bf16.mxu0 %v3199
        %3542 = vmatpush1.bf16.msra.mxu0 %v3198
        %3543 = vmatprep.subr.bf16.mxu0 %v3215
        %3544 = vmatpush1.bf16.msra.mxu0 %v3214
        %3545 = vmatprep.subr.bf16.mxu0 %v3231
        %3546 = vmatpush1.bf16.msra.mxu0 %v3230
        %3547 = vmatprep.subr.bf16.mxu0 %v3247
        %3548 = vmatpush1.bf16.msra.mxu0 %v3246
        %3549 = vmatprep.subr.bf16.mxu0 %v3263
        %3550 = vmatpush1.bf16.msra.mxu0 %v3262
        %3551 = vmatprep.subr.bf16.mxu0 %v3279
        %3552 = vmatpush1.bf16.msra.mxu0 %v3278
        %3553 = vmatprep.subr.bf16.mxu0 %v3295
        %3554 = vmatpush1.bf16.msra.mxu0 %v3294
        %3555 = vmatprep.subr.bf16.mxu0 %v3311
        %3556 = vmatpush1.bf16.msra.mxu0 %v3310
        %3557 = vmatprep.mubr.bf16.mxu0 %v3350
        %3558 = vmatmul.mubr.bf16.gmra.mrb[0].mxu0 %v3349
        %v3559 = vpop.f32.mrb[0].mxu0
        %v3560 = vadd.f32 %v3519, %v3559
        %v3561 = vpop.f32.mrb[0].mxu0
        %v3562 = vadd.f32 %v3521, %v3561
        %v3563 = vpop.f32.mrb[0].mxu0
        %v3564 = vpop.f32.mrb[0].mxu0
        %3565 = vdwg.mxu0
        %3566 = vmatprep.subr.bf16.mxu0 %v2049
        %3567 = vmatpush1.bf16.msra.mxu0 %v2048
        %3568 = vmatprep.subr.bf16.mxu0 %v2065
        %3569 = vmatpush1.bf16.msra.mxu0 %v2064
        %3570 = vmatprep.subr.bf16.mxu0 %v2081
        %3571 = vmatpush1.bf16.msra.mxu0 %v2080
        %3572 = vmatprep.subr.bf16.mxu0 %v2097
        %3573 = vmatpush1.bf16.msra.mxu0 %v2096
        %3574 = vmatprep.subr.bf16.mxu0 %v2113
        %3575 = vmatpush1.bf16.msra.mxu0 %v2112
        %3576 = vmatprep.subr.bf16.mxu0 %v2129
        %3577 = vmatpush1.bf16.msra.mxu0 %v2128
        %3578 = vmatprep.subr.bf16.mxu0 %v2145
        %3579 = vmatpush1.bf16.msra.mxu0 %v2144
        %3580 = vmatprep.subr.bf16.mxu0 %v2161
        %3581 = vmatpush1.bf16.msra.mxu0 %v2160
        %3582 = vmatprep.subr.bf16.mxu0 %v2177
        %3583 = vmatpush1.bf16.msra.mxu0 %v2176
        %3584 = vmatprep.subr.bf16.mxu0 %v2193
        %3585 = vmatpush1.bf16.msra.mxu0 %v2192
        %3586 = vmatprep.subr.bf16.mxu0 %v2209
        %3587 = vmatpush1.bf16.msra.mxu0 %v2208
        %3588 = vmatprep.subr.bf16.mxu0 %v2225
        %3589 = vmatpush1.bf16.msra.mxu0 %v2224
        %3590 = vmatprep.subr.bf16.mxu0 %v2241
        %3591 = vmatpush1.bf16.msra.mxu0 %v2240
        %3592 = vmatprep.subr.bf16.mxu0 %v2257
        %3593 = vmatpush1.bf16.msra.mxu0 %v2256
        %3594 = vmatprep.subr.bf16.mxu0 %v2273
        %3595 = vmatpush1.bf16.msra.mxu0 %v2272
        %3596 = vmatprep.subr.bf16.mxu0 %v2289
        %3597 = vmatpush1.bf16.msra.mxu0 %v2288
        %3598 = vmatprep.mubr.bf16.mxu0 %v3342
        %3599 = vmatmul.mubr.bf16.gmra.mrb[0].mxu0 %v3341
        %v3600 = vpop.f32.mrb[0].mxu0
        %v3601 = vadd.f32 0.0, %v3600
        %v3602 = vpop.f32.mrb[0].mxu0
        %v3603 = vadd.f32 0.0, %v3602
        %v3604 = vpop.f32.mrb[0].mxu0
        %v3605 = vpop.f32.mrb[0].mxu0
        %3606 = vdwg.mxu0
        %3607 = vmatprep.subr.bf16.mxu0 %v2305
        %3608 = vmatpush1.bf16.msra.mxu0 %v2304
        %3609 = vmatprep.subr.bf16.mxu0 %v2321
        %3610 = vmatpush1.bf16.msra.mxu0 %v2320
        %3611 = vmatprep.subr.bf16.mxu0 %v2337
        %3612 = vmatpush1.bf16.msra.mxu0 %v2336
        %3613 = vmatprep.subr.bf16.mxu0 %v2353
        %3614 = vmatpush1.bf16.msra.mxu0 %v2352
        %3615 = vmatprep.subr.bf16.mxu0 %v2369
        %3616 = vmatpush1.bf16.msra.mxu0 %v2368
        %3617 = vmatprep.subr.bf16.mxu0 %v2385
        %3618 = vmatpush1.bf16.msra.mxu0 %v2384
        %3619 = vmatprep.subr.bf16.mxu0 %v2401
        %3620 = vmatpush1.bf16.msra.mxu0 %v2400
        %3621 = vmatprep.subr.bf16.mxu0 %v2417
        %3622 = vmatpush1.bf16.msra.mxu0 %v2416
        %3623 = vmatprep.subr.bf16.mxu0 %v2433
        %3624 = vmatpush1.bf16.msra.mxu0 %v2432
        %3625 = vmatprep.subr.bf16.mxu0 %v2449
        %3626 = vmatpush1.bf16.msra.mxu0 %v2448
        %3627 = vmatprep.subr.bf16.mxu0 %v2465
        %3628 = vmatpush1.bf16.msra.mxu0 %v2464
        %3629 = vmatprep.subr.bf16.mxu0 %v2481
        %3630 = vmatpush1.bf16.msra.mxu0 %v2480
        %3631 = vmatprep.subr.bf16.mxu0 %v2497
        %3632 = vmatpush1.bf16.msra.mxu0 %v2496
        %3633 = vmatprep.subr.bf16.mxu0 %v2513
        %3634 = vmatpush1.bf16.msra.mxu0 %v2512
        %3635 = vmatprep.subr.bf16.mxu0 %v2529
        %3636 = vmatpush1.bf16.msra.mxu0 %v2528
        %3637 = vmatprep.subr.bf16.mxu0 %v2545
        %3638 = vmatpush1.bf16.msra.mxu0 %v2544
        %3639 = vmatprep.mubr.bf16.mxu0 %v3344
        %3640 = vmatmul.mubr.bf16.gmra.mrb[0].mxu0 %v3343
        %v3641 = vpop.f32.mrb[0].mxu0
        %v3642 = vadd.f32 %v3601, %v3641
        %v3643 = vpop.f32.mrb[0].mxu0
        %v3644 = vadd.f32 %v3603, %v3643
        %v3645 = vpop.f32.mrb[0].mxu0
        %v3646 = vpop.f32.mrb[0].mxu0
        %3647 = vdwg.mxu0
        %3648 = vmatprep.subr.bf16.mxu0 %v2561
        %3649 = vmatpush1.bf16.msra.mxu0 %v2560
        %3650 = vmatprep.subr.bf16.mxu0 %v2577
        %3651 = vmatpush1.bf16.msra.mxu0 %v2576
        %3652 = vmatprep.subr.bf16.mxu0 %v2593
        %3653 = vmatpush1.bf16.msra.mxu0 %v2592
        %3654 = vmatprep.subr.bf16.mxu0 %v2609
        %3655 = vmatpush1.bf16.msra.mxu0 %v2608
        %3656 = vmatprep.subr.bf16.mxu0 %v2625
        %3657 = vmatpush1.bf16.msra.mxu0 %v2624
        %3658 = vmatprep.subr.bf16.mxu0 %v2641
        %3659 = vmatpush1.bf16.msra.mxu0 %v2640
        %3660 = vmatprep.subr.bf16.mxu0 %v2657
        %3661 = vmatpush1.bf16.msra.mxu0 %v2656
        %3662 = vmatprep.subr.bf16.mxu0 %v2673
        %3663 = vmatpush1.bf16.msra.mxu0 %v2672
        %3664 = vmatprep.subr.bf16.mxu0 %v2689
        %3665 = vmatpush1.bf16.msra.mxu0 %v2688
        %3666 = vmatprep.subr.bf16.mxu0 %v2705
        %3667 = vmatpush1.bf16.msra.mxu0 %v2704
        %3668 = vmatprep.subr.bf16.mxu0 %v2721
        %3669 = vmatpush1.bf16.msra.mxu0 %v2720
        %3670 = vmatprep.subr.bf16.mxu0 %v2737
        %3671 = vmatpush1.bf16.msra.mxu0 %v2736
        %3672 = vmatprep.subr.bf16.mxu0 %v2753
        %3673 = vmatpush1.bf16.msra.mxu0 %v2752
        %3674 = vmatprep.subr.bf16.mxu0 %v2769
        %3675 = vmatpush1.bf16.msra.mxu0 %v2768
        %3676 = vmatprep.subr.bf16.mxu0 %v2785
        %3677 = vmatpush1.bf16.msra.mxu0 %v2784
        %3678 = vmatprep.subr.bf16.mxu0 %v2801
        %3679 = vmatpush1.bf16.msra.mxu0 %v2800
        %3680 = vmatprep.mubr.bf16.mxu0 %v3346
        %3681 = vmatmul.mubr.bf16.gmra.mrb[0].mxu0 %v3345
        %v3682 = vpop.f32.mrb[0].mxu0
        %v3683 = vadd.f32 %v3642, %v3682
        %v3684 = vpop.f32.mrb[0].mxu0
        %v3685 = vadd.f32 %v3644, %v3684
        %v3686 = vpop.f32.mrb[0].mxu0
        %v3687 = vpop.f32.mrb[0].mxu0
        %3688 = vdwg.mxu0
        %3689 = vmatprep.subr.bf16.mxu0 %v2817
        %3690 = vmatpush1.bf16.msra.mxu0 %v2816
        %3691 = vmatprep.subr.bf16.mxu0 %v2833
        %3692 = vmatpush1.bf16.msra.mxu0 %v2832
        %3693 = vmatprep.subr.bf16.mxu0 %v2849
        %3694 = vmatpush1.bf16.msra.mxu0 %v2848
        %3695 = vmatprep.subr.bf16.mxu0 %v2865
        %3696 = vmatpush1.bf16.msra.mxu0 %v2864
        %3697 = vmatprep.subr.bf16.mxu0 %v2881
        %3698 = vmatpush1.bf16.msra.mxu0 %v2880
        %3699 = vmatprep.subr.bf16.mxu0 %v2897
        %3700 = vmatpush1.bf16.msra.mxu0 %v2896
        %3701 = vmatprep.subr.bf16.mxu0 %v2913
        %3702 = vmatpush1.bf16.msra.mxu0 %v2912
        %3703 = vmatprep.subr.bf16.mxu0 %v2929
        %3704 = vmatpush1.bf16.msra.mxu0 %v2928
        %3705 = vmatprep.subr.bf16.mxu0 %v2945
        %3706 = vmatpush1.bf16.msra.mxu0 %v2944
        %3707 = vmatprep.subr.bf16.mxu0 %v2961
        %3708 = vmatpush1.bf16.msra.mxu0 %v2960
        %3709 = vmatprep.subr.bf16.mxu0 %v2977
        %3710 = vmatpush1.bf16.msra.mxu0 %v2976
        %3711 = vmatprep.subr.bf16.mxu0 %v2993
        %3712 = vmatpush1.bf16.msra.mxu0 %v2992
        %3713 = vmatprep.subr.bf16.mxu0 %v3009
        %3714 = vmatpush1.bf16.msra.mxu0 %v3008
        %3715 = vmatprep.subr.bf16.mxu0 %v3025
        %3716 = vmatpush1.bf16.msra.mxu0 %v3024
        %3717 = vmatprep.subr.bf16.mxu0 %v3041
        %3718 = vmatpush1.bf16.msra.mxu0 %v3040
        %3719 = vmatprep.subr.bf16.mxu0 %v3057
        %3720 = vmatpush1.bf16.msra.mxu0 %v3056
        %3721 = vmatprep.mubr.bf16.mxu0 %v3348
        %3722 = vmatmul.mubr.bf16.gmra.mrb[0].mxu0 %v3347
        %v3723 = vpop.f32.mrb[0].mxu0
        %v3724 = vadd.f32 %v3683, %v3723
        %v3725 = vpop.f32.mrb[0].mxu0
        %v3726 = vadd.f32 %v3685, %v3725
        %v3727 = vpop.f32.mrb[0].mxu0
        %v3728 = vpop.f32.mrb[0].mxu0
        %3729 = vdwg.mxu0
        %3730 = vmatprep.subr.bf16.mxu0 %v3073
        %3731 = vmatpush1.bf16.msra.mxu0 %v3072
        %3732 = vmatprep.subr.bf16.mxu0 %v3089
        %3733 = vmatpush1.bf16.msra.mxu0 %v3088
        %3734 = vmatprep.subr.bf16.mxu0 %v3105
        %3735 = vmatpush1.bf16.msra.mxu0 %v3104
        %3736 = vmatprep.subr.bf16.mxu0 %v3121
        %3737 = vmatpush1.bf16.msra.mxu0 %v3120
        %3738 = vmatprep.subr.bf16.mxu0 %v3137
        %3739 = vmatpush1.bf16.msra.mxu0 %v3136
        %3740 = vmatprep.subr.bf16.mxu0 %v3153
        %3741 = vmatpush1.bf16.msra.mxu0 %v3152
        %3742 = vmatprep.subr.bf16.mxu0 %v3169
        %3743 = vmatpush1.bf16.msra.mxu0 %v3168
        %3744 = vmatprep.subr.bf16.mxu0 %v3185
        %3745 = vmatpush1.bf16.msra.mxu0 %v3184
        %3746 = vmatprep.subr.bf16.mxu0 %v3201
        %3747 = vmatpush1.bf16.msra.mxu0 %v3200
        %3748 = vmatprep.subr.bf16.mxu0 %v3217
        %3749 = vmatpush1.bf16.msra.mxu0 %v3216
        %3750 = vmatprep.subr.bf16.mxu0 %v3233
        %3751 = vmatpush1.bf16.msra.mxu0 %v3232
        %3752 = vmatprep.subr.bf16.mxu0 %v3249
        %3753 = vmatpush1.bf16.msra.mxu0 %v3248
        %3754 = vmatprep.subr.bf16.mxu0 %v3265
        %3755 = vmatpush1.bf16.msra.mxu0 %v3264
        %3756 = vmatprep.subr.bf16.mxu0 %v3281
        %3757 = vmatpush1.bf16.msra.mxu0 %v3280
        %3758 = vmatprep.subr.bf16.mxu0 %v3297
        %3759 = vmatpush1.bf16.msra.mxu0 %v3296
        %3760 = vmatprep.subr.bf16.mxu0 %v3313
        %3761 = vmatpush1.bf16.msra.mxu0 %v3312
        %3762 = vmatprep.mubr.bf16.mxu0 %v3350
        %3763 = vmatmul.mubr.bf16.gmra.mrb[0].mxu0 %v3349
        %v3764 = vpop.f32.mrb[0].mxu0
        %v3765 = vadd.f32 %v3724, %v3764
        %v3766 = vpop.f32.mrb[0].mxu0
        %v3767 = vadd.f32 %v3726, %v3766
        %v3768 = vpop.f32.mrb[0].mxu0
        %v3769 = vpop.f32.mrb[0].mxu0
        %3770 = vdwg.mxu0
        %3771 = vmatprep.subr.bf16.mxu0 %v2051
        %3772 = vmatpush1.bf16.msra.mxu0 %v2050
        %3773 = vmatprep.subr.bf16.mxu0 %v2067
        %3774 = vmatpush1.bf16.msra.mxu0 %v2066
        %3775 = vmatprep.subr.bf16.mxu0 %v2083
        %3776 = vmatpush1.bf16.msra.mxu0 %v2082
        %3777 = vmatprep.subr.bf16.mxu0 %v2099
        %3778 = vmatpush1.bf16.msra.mxu0 %v2098
        %3779 = vmatprep.subr.bf16.mxu0 %v2115
        %3780 = vmatpush1.bf16.msra.mxu0 %v2114
        %3781 = vmatprep.subr.bf16.mxu0 %v2131
        %3782 = vmatpush1.bf16.msra.mxu0 %v2130
        %3783 = vmatprep.subr.bf16.mxu0 %v2147
        %3784 = vmatpush1.bf16.msra.mxu0 %v2146
        %3785 = vmatprep.subr.bf16.mxu0 %v2163
        %3786 = vmatpush1.bf16.msra.mxu0 %v2162
        %3787 = vmatprep.subr.bf16.mxu0 %v2179
        %3788 = vmatpush1.bf16.msra.mxu0 %v2178
        %3789 = vmatprep.subr.bf16.mxu0 %v2195
        %3790 = vmatpush1.bf16.msra.mxu0 %v2194
        %3791 = vmatprep.subr.bf16.mxu0 %v2211
        %3792 = vmatpush1.bf16.msra.mxu0 %v2210
        %3793 = vmatprep.subr.bf16.mxu0 %v2227
        %3794 = vmatpush1.bf16.msra.mxu0 %v2226
        %3795 = vmatprep.subr.bf16.mxu0 %v2243
        %3796 = vmatpush1.bf16.msra.mxu0 %v2242
        %3797 = vmatprep.subr.bf16.mxu0 %v2259
        %3798 = vmatpush1.bf16.msra.mxu0 %v2258
        %3799 = vmatprep.subr.bf16.mxu0 %v2275
        %3800 = vmatpush1.bf16.msra.mxu0 %v2274
        %3801 = vmatprep.subr.bf16.mxu0 %v2291
        %3802 = vmatpush1.bf16.msra.mxu0 %v2290
        %3803 = vmatprep.mubr.bf16.mxu0 %v3342
        %3804 = vmatmul.mubr.bf16.gmra.mrb[0].mxu0 %v3341
        %v3805 = vpop.f32.mrb[0].mxu0
        %v3806 = vadd.f32 0.0, %v3805
        %v3807 = vpop.f32.mrb[0].mxu0
        %v3808 = vadd.f32 0.0, %v3807
        %v3809 = vpop.f32.mrb[0].mxu0
        %v3810 = vpop.f32.mrb[0].mxu0
        %3811 = vdwg.mxu0
        %3812 = vmatprep.subr.bf16.mxu0 %v2307
        %3813 = vmatpush1.bf16.msra.mxu0 %v2306
        %3814 = vmatprep.subr.bf16.mxu0 %v2323
        %3815 = vmatpush1.bf16.msra.mxu0 %v2322
        %3816 = vmatprep.subr.bf16.mxu0 %v2339
        %3817 = vmatpush1.bf16.msra.mxu0 %v2338
        %3818 = vmatprep.subr.bf16.mxu0 %v2355
        %3819 = vmatpush1.bf16.msra.mxu0 %v2354
        %3820 = vmatprep.subr.bf16.mxu0 %v2371
        %3821 = vmatpush1.bf16.msra.mxu0 %v2370
        %3822 = vmatprep.subr.bf16.mxu0 %v2387
        %3823 = vmatpush1.bf16.msra.mxu0 %v2386
        %3824 = vmatprep.subr.bf16.mxu0 %v2403
        %3825 = vmatpush1.bf16.msra.mxu0 %v2402
        %3826 = vmatprep.subr.bf16.mxu0 %v2419
        %3827 = vmatpush1.bf16.msra.mxu0 %v2418
        %3828 = vmatprep.subr.bf16.mxu0 %v2435
        %3829 = vmatpush1.bf16.msra.mxu0 %v2434
        %3830 = vmatprep.subr.bf16.mxu0 %v2451
        %3831 = vmatpush1.bf16.msra.mxu0 %v2450
        %3832 = vmatprep.subr.bf16.mxu0 %v2467
        %3833 = vmatpush1.bf16.msra.mxu0 %v2466
        %3834 = vmatprep.subr.bf16.mxu0 %v2483
        %3835 = vmatpush1.bf16.msra.mxu0 %v2482
        %3836 = vmatprep.subr.bf16.mxu0 %v2499
        %3837 = vmatpush1.bf16.msra.mxu0 %v2498
        %3838 = vmatprep.subr.bf16.mxu0 %v2515
        %3839 = vmatpush1.bf16.msra.mxu0 %v2514
        %3840 = vmatprep.subr.bf16.mxu0 %v2531
        %3841 = vmatpush1.bf16.msra.mxu0 %v2530
        %3842 = vmatprep.subr.bf16.mxu0 %v2547
        %3843 = vmatpush1.bf16.msra.mxu0 %v2546
        %3844 = vmatprep.mubr.bf16.mxu0 %v3344
        %3845 = vmatmul.mubr.bf16.gmra.mrb[0].mxu0 %v3343
        %v3846 = vpop.f32.mrb[0].mxu0
        %v3847 = vadd.f32 %v3806, %v3846
        %v3848 = vpop.f32.mrb[0].mxu0
        %v3849 = vadd.f32 %v3808, %v3848
        %v3850 = vpop.f32.mrb[0].mxu0
        %v3851 = vpop.f32.mrb[0].mxu0
        %3852 = vdwg.mxu0
        %3853 = vmatprep.subr.bf16.mxu0 %v2563
        %3854 = vmatpush1.bf16.msra.mxu0 %v2562
        %3855 = vmatprep.subr.bf16.mxu0 %v2579
        %3856 = vmatpush1.bf16.msra.mxu0 %v2578
        %3857 = vmatprep.subr.bf16.mxu0 %v2595
        %3858 = vmatpush1.bf16.msra.mxu0 %v2594
        %3859 = vmatprep.subr.bf16.mxu0 %v2611
        %3860 = vmatpush1.bf16.msra.mxu0 %v2610
        %3861 = vmatprep.subr.bf16.mxu0 %v2627
        %3862 = vmatpush1.bf16.msra.mxu0 %v2626
        %3863 = vmatprep.subr.bf16.mxu0 %v2643
        %3864 = vmatpush1.bf16.msra.mxu0 %v2642
        %3865 = vmatprep.subr.bf16.mxu0 %v2659
        %3866 = vmatpush1.bf16.msra.mxu0 %v2658
        %3867 = vmatprep.subr.bf16.mxu0 %v2675
        %3868 = vmatpush1.bf16.msra.mxu0 %v2674
        %3869 = vmatprep.subr.bf16.mxu0 %v2691
        %3870 = vmatpush1.bf16.msra.mxu0 %v2690
        %3871 = vmatprep.subr.bf16.mxu0 %v2707
        %3872 = vmatpush1.bf16.msra.mxu0 %v2706
        %3873 = vmatprep.subr.bf16.mxu0 %v2723
        %3874 = vmatpush1.bf16.msra.mxu0 %v2722
        %3875 = vmatprep.subr.bf16.mxu0 %v2739
        %3876 = vmatpush1.bf16.msra.mxu0 %v2738
        %3877 = vmatprep.subr.bf16.mxu0 %v2755
        %3878 = vmatpush1.bf16.msra.mxu0 %v2754
        %3879 = vmatprep.subr.bf16.mxu0 %v2771
        %3880 = vmatpush1.bf16.msra.mxu0 %v2770
        %3881 = vmatprep.subr.bf16.mxu0 %v2787
        %3882 = vmatpush1.bf16.msra.mxu0 %v2786
        %3883 = vmatprep.subr.bf16.mxu0 %v2803
        %3884 = vmatpush1.bf16.msra.mxu0 %v2802
        %3885 = vmatprep.mubr.bf16.mxu0 %v3346
        %3886 = vmatmul.mubr.bf16.gmra.mrb[0].mxu0 %v3345
        %v3887 = vpop.f32.mrb[0].mxu0
        %v3888 = vadd.f32 %v3847, %v3887
        %v3889 = vpop.f32.mrb[0].mxu0
        %v3890 = vadd.f32 %v3849, %v3889
        %v3891 = vpop.f32.mrb[0].mxu0
        %v3892 = vpop.f32.mrb[0].mxu0
        %3893 = vdwg.mxu0
        %3894 = vmatprep.subr.bf16.mxu0 %v2819
        %3895 = vmatpush1.bf16.msra.mxu0 %v2818
        %3896 = vmatprep.subr.bf16.mxu0 %v2835
        %3897 = vmatpush1.bf16.msra.mxu0 %v2834
        %3898 = vmatprep.subr.bf16.mxu0 %v2851
        %3899 = vmatpush1.bf16.msra.mxu0 %v2850
        %3900 = vmatprep.subr.bf16.mxu0 %v2867
        %3901 = vmatpush1.bf16.msra.mxu0 %v2866
        %3902 = vmatprep.subr.bf16.mxu0 %v2883
        %3903 = vmatpush1.bf16.msra.mxu0 %v2882
        %3904 = vmatprep.subr.bf16.mxu0 %v2899
        %3905 = vmatpush1.bf16.msra.mxu0 %v2898
        %3906 = vmatprep.subr.bf16.mxu0 %v2915
        %3907 = vmatpush1.bf16.msra.mxu0 %v2914
        %3908 = vmatprep.subr.bf16.mxu0 %v2931
        %3909 = vmatpush1.bf16.msra.mxu0 %v2930
        %3910 = vmatprep.subr.bf16.mxu0 %v2947
        %3911 = vmatpush1.bf16.msra.mxu0 %v2946
        %3912 = vmatprep.subr.bf16.mxu0 %v2963
        %3913 = vmatpush1.bf16.msra.mxu0 %v2962
        %3914 = vmatprep.subr.bf16.mxu0 %v2979
        %3915 = vmatpush1.bf16.msra.mxu0 %v2978
        %3916 = vmatprep.subr.bf16.mxu0 %v2995
        %3917 = vmatpush1.bf16.msra.mxu0 %v2994
        %3918 = vmatprep.subr.bf16.mxu0 %v3011
        %3919 = vmatpush1.bf16.msra.mxu0 %v3010
        %3920 = vmatprep.subr.bf16.mxu0 %v3027
        %3921 = vmatpush1.bf16.msra.mxu0 %v3026
        %3922 = vmatprep.subr.bf16.mxu0 %v3043
        %3923 = vmatpush1.bf16.msra.mxu0 %v3042
        %3924 = vmatprep.subr.bf16.mxu0 %v3059
        %3925 = vmatpush1.bf16.msra.mxu0 %v3058
        %3926 = vmatprep.mubr.bf16.mxu0 %v3348
        %3927 = vmatmul.mubr.bf16.gmra.mrb[0].mxu0 %v3347
        %v3928 = vpop.f32.mrb[0].mxu0
        %v3929 = vadd.f32 %v3888, %v3928
        %v3930 = vpop.f32.mrb[0].mxu0
        %v3931 = vadd.f32 %v3890, %v3930
        %v3932 = vpop.f32.mrb[0].mxu0
        %v3933 = vpop.f32.mrb[0].mxu0
        %3934 = vdwg.mxu0
        %3935 = vmatprep.subr.bf16.mxu0 %v3075
        %3936 = vmatpush1.bf16.msra.mxu0 %v3074
        %3937 = vmatprep.subr.bf16.mxu0 %v3091
        %3938 = vmatpush1.bf16.msra.mxu0 %v3090
        %3939 = vmatprep.subr.bf16.mxu0 %v3107
        %3940 = vmatpush1.bf16.msra.mxu0 %v3106
        %3941 = vmatprep.subr.bf16.mxu0 %v3123
        %3942 = vmatpush1.bf16.msra.mxu0 %v3122
        %3943 = vmatprep.subr.bf16.mxu0 %v3139
        %3944 = vmatpush1.bf16.msra.mxu0 %v3138
        %3945 = vmatprep.subr.bf16.mxu0 %v3155
        %3946 = vmatpush1.bf16.msra.mxu0 %v3154
        %3947 = vmatprep.subr.bf16.mxu0 %v3171
        %3948 = vmatpush1.bf16.msra.mxu0 %v3170
        %3949 = vmatprep.subr.bf16.mxu0 %v3187
        %3950 = vmatpush1.bf16.msra.mxu0 %v3186
        %3951 = vmatprep.subr.bf16.mxu0 %v3203
        %3952 = vmatpush1.bf16.msra.mxu0 %v3202
        %3953 = vmatprep.subr.bf16.mxu0 %v3219
        %3954 = vmatpush1.bf16.msra.mxu0 %v3218
        %3955 = vmatprep.subr.bf16.mxu0 %v3235
        %3956 = vmatpush1.bf16.msra.mxu0 %v3234
        %3957 = vmatprep.subr.bf16.mxu0 %v3251
        %3958 = vmatpush1.bf16.msra.mxu0 %v3250
        %3959 = vmatprep.subr.bf16.mxu0 %v3267
        %3960 = vmatpush1.bf16.msra.mxu0 %v3266
        %3961 = vmatprep.subr.bf16.mxu0 %v3283
        %3962 = vmatpush1.bf16.msra.mxu0 %v3282
        %3963 = vmatprep.subr.bf16.mxu0 %v3299
        %3964 = vmatpush1.bf16.msra.mxu0 %v3298
        %3965 = vmatprep.subr.bf16.mxu0 %v3315
        %3966 = vmatpush1.bf16.msra.mxu0 %v3314
        %3967 = vmatprep.mubr.bf16.mxu0 %v3350
        %3968 = vmatmul.mubr.bf16.gmra.mrb[0].mxu0 %v3349
        %v3969 = vpop.f32.mrb[0].mxu0
        %v3970 = vadd.f32 %v3929, %v3969
        %v3971 = vpop.f32.mrb[0].mxu0
        %v3972 = vadd.f32 %v3931, %v3971
        %v3973 = vpop.f32.mrb[0].mxu0
        %v3974 = vpop.f32.mrb[0].mxu0
        %3975 = vdwg.mxu0
        %3976 = vmatprep.subr.bf16.mxu0 %v2053
        %3977 = vmatpush1.bf16.msra.mxu0 %v2052
        %3978 = vmatprep.subr.bf16.mxu0 %v2069
        %3979 = vmatpush1.bf16.msra.mxu0 %v2068
        %3980 = vmatprep.subr.bf16.mxu0 %v2085
        %3981 = vmatpush1.bf16.msra.mxu0 %v2084
        %3982 = vmatprep.subr.bf16.mxu0 %v2101
        %3983 = vmatpush1.bf16.msra.mxu0 %v2100
        %3984 = vmatprep.subr.bf16.mxu0 %v2117
        %3985 = vmatpush1.bf16.msra.mxu0 %v2116
        %3986 = vmatprep.subr.bf16.mxu0 %v2133
        %3987 = vmatpush1.bf16.msra.mxu0 %v2132
        %3988 = vmatprep.subr.bf16.mxu0 %v2149
        %3989 = vmatpush1.bf16.msra.mxu0 %v2148
        %3990 = vmatprep.subr.bf16.mxu0 %v2165
        %3991 = vmatpush1.bf16.msra.mxu0 %v2164
        %3992 = vmatprep.subr.bf16.mxu0 %v2181
        %3993 = vmatpush1.bf16.msra.mxu0 %v2180
        %3994 = vmatprep.subr.bf16.mxu0 %v2197
        %3995 = vmatpush1.bf16.msra.mxu0 %v2196
        %3996 = vmatprep.subr.bf16.mxu0 %v2213
        %3997 = vmatpush1.bf16.msra.mxu0 %v2212
        %3998 = vmatprep.subr.bf16.mxu0 %v2229
        %3999 = vmatpush1.bf16.msra.mxu0 %v2228
        %4000 = vmatprep.subr.bf16.mxu0 %v2245
        %4001 = vmatpush1.bf16.msra.mxu0 %v2244
        %4002 = vmatprep.subr.bf16.mxu0 %v2261
        %4003 = vmatpush1.bf16.msra.mxu0 %v2260
        %4004 = vmatprep.subr.bf16.mxu0 %v2277
        %4005 = vmatpush1.bf16.msra.mxu0 %v2276
        %4006 = vmatprep.subr.bf16.mxu0 %v2293
        %4007 = vmatpush1.bf16.msra.mxu0 %v2292
        %4008 = vmatprep.mubr.bf16.mxu0 %v3342
        %4009 = vmatmul.mubr.bf16.gmra.mrb[0].mxu0 %v3341
        %v4010 = vpop.f32.mrb[0].mxu0
        %v4011 = vadd.f32 0.0, %v4010
        %v4012 = vpop.f32.mrb[0].mxu0
        %v4013 = vadd.f32 0.0, %v4012
        %v4014 = vpop.f32.mrb[0].mxu0
        %v4015 = vpop.f32.mrb[0].mxu0
        %4016 = vdwg.mxu0
        %4017 = vmatprep.subr.bf16.mxu0 %v2309
        %4018 = vmatpush1.bf16.msra.mxu0 %v2308
        %4019 = vmatprep.subr.bf16.mxu0 %v2325
        %4020 = vmatpush1.bf16.msra.mxu0 %v2324
        %4021 = vmatprep.subr.bf16.mxu0 %v2341
        %4022 = vmatpush1.bf16.msra.mxu0 %v2340
        %4023 = vmatprep.subr.bf16.mxu0 %v2357
        %4024 = vmatpush1.bf16.msra.mxu0 %v2356
        %4025 = vmatprep.subr.bf16.mxu0 %v2373
        %4026 = vmatpush1.bf16.msra.mxu0 %v2372
        %4027 = vmatprep.subr.bf16.mxu0 %v2389
        %4028 = vmatpush1.bf16.msra.mxu0 %v2388
        %4029 = vmatprep.subr.bf16.mxu0 %v2405
        %4030 = vmatpush1.bf16.msra.mxu0 %v2404
        %4031 = vmatprep.subr.bf16.mxu0 %v2421
        %4032 = vmatpush1.bf16.msra.mxu0 %v2420
        %4033 = vmatprep.subr.bf16.mxu0 %v2437
        %4034 = vmatpush1.bf16.msra.mxu0 %v2436
        %4035 = vmatprep.subr.bf16.mxu0 %v2453
        %4036 = vmatpush1.bf16.msra.mxu0 %v2452
        %4037 = vmatprep.subr.bf16.mxu0 %v2469
        %4038 = vmatpush1.bf16.msra.mxu0 %v2468
        %4039 = vmatprep.subr.bf16.mxu0 %v2485
        %4040 = vmatpush1.bf16.msra.mxu0 %v2484
        %4041 = vmatprep.subr.bf16.mxu0 %v2501
        %4042 = vmatpush1.bf16.msra.mxu0 %v2500
        %4043 = vmatprep.subr.bf16.mxu0 %v2517
        %4044 = vmatpush1.bf16.msra.mxu0 %v2516
        %4045 = vmatprep.subr.bf16.mxu0 %v2533
        %4046 = vmatpush1.bf16.msra.mxu0 %v2532
        %4047 = vmatprep.subr.bf16.mxu0 %v2549
        %4048 = vmatpush1.bf16.msra.mxu0 %v2548
        %4049 = vmatprep.mubr.bf16.mxu0 %v3344
        %4050 = vmatmul.mubr.bf16.gmra.mrb[0].mxu0 %v3343
        %v4051 = vpop.f32.mrb[0].mxu0
        %v4052 = vadd.f32 %v4011, %v4051
        %v4053 = vpop.f32.mrb[0].mxu0
        %v4054 = vadd.f32 %v4013, %v4053
        %v4055 = vpop.f32.mrb[0].mxu0
        %v4056 = vpop.f32.mrb[0].mxu0
        %4057 = vdwg.mxu0
        %4058 = vmatprep.subr.bf16.mxu0 %v2565
        %4059 = vmatpush1.bf16.msra.mxu0 %v2564
        %4060 = vmatprep.subr.bf16.mxu0 %v2581
        %4061 = vmatpush1.bf16.msra.mxu0 %v2580
        %4062 = vmatprep.subr.bf16.mxu0 %v2597
        %4063 = vmatpush1.bf16.msra.mxu0 %v2596
        %4064 = vmatprep.subr.bf16.mxu0 %v2613
        %4065 = vmatpush1.bf16.msra.mxu0 %v2612
        %4066 = vmatprep.subr.bf16.mxu0 %v2629
        %4067 = vmatpush1.bf16.msra.mxu0 %v2628
        %4068 = vmatprep.subr.bf16.mxu0 %v2645
        %4069 = vmatpush1.bf16.msra.mxu0 %v2644
        %4070 = vmatprep.subr.bf16.mxu0 %v2661
        %4071 = vmatpush1.bf16.msra.mxu0 %v2660
        %4072 = vmatprep.subr.bf16.mxu0 %v2677
        %4073 = vmatpush1.bf16.msra.mxu0 %v2676
        %4074 = vmatprep.subr.bf16.mxu0 %v2693
        %4075 = vmatpush1.bf16.msra.mxu0 %v2692
        %4076 = vmatprep.subr.bf16.mxu0 %v2709
        %4077 = vmatpush1.bf16.msra.mxu0 %v2708
        %4078 = vmatprep.subr.bf16.mxu0 %v2725
        %4079 = vmatpush1.bf16.msra.mxu0 %v2724
        %4080 = vmatprep.subr.bf16.mxu0 %v2741
        %4081 = vmatpush1.bf16.msra.mxu0 %v2740
        %4082 = vmatprep.subr.bf16.mxu0 %v2757
        %4083 = vmatpush1.bf16.msra.mxu0 %v2756
        %4084 = vmatprep.subr.bf16.mxu0 %v2773
        %4085 = vmatpush1.bf16.msra.mxu0 %v2772
        %4086 = vmatprep.subr.bf16.mxu0 %v2789
        %4087 = vmatpush1.bf16.msra.mxu0 %v2788
        %4088 = vmatprep.subr.bf16.mxu0 %v2805
        %4089 = vmatpush1.bf16.msra.mxu0 %v2804
        %4090 = vmatprep.mubr.bf16.mxu0 %v3346
        %4091 = vmatmul.mubr.bf16.gmra.mrb[0].mxu0 %v3345
        %v4092 = vpop.f32.mrb[0].mxu0
        %v4093 = vadd.f32 %v4052, %v4092
        %v4094 = vpop.f32.mrb[0].mxu0
        %v4095 = vadd.f32 %v4054, %v4094
        %v4096 = vpop.f32.mrb[0].mxu0
        %v4097 = vpop.f32.mrb[0].mxu0
        %4098 = vdwg.mxu0
        %4099 = vmatprep.subr.bf16.mxu0 %v2821
        %4100 = vmatpush1.bf16.msra.mxu0 %v2820
        %4101 = vmatprep.subr.bf16.mxu0 %v2837
        %4102 = vmatpush1.bf16.msra.mxu0 %v2836
        %4103 = vmatprep.subr.bf16.mxu0 %v2853
        %4104 = vmatpush1.bf16.msra.mxu0 %v2852
        %4105 = vmatprep.subr.bf16.mxu0 %v2869
        %4106 = vmatpush1.bf16.msra.mxu0 %v2868
        %4107 = vmatprep.subr.bf16.mxu0 %v2885
        %4108 = vmatpush1.bf16.msra.mxu0 %v2884
        %4109 = vmatprep.subr.bf16.mxu0 %v2901
        %4110 = vmatpush1.bf16.msra.mxu0 %v2900
        %4111 = vmatprep.subr.bf16.mxu0 %v2917
        %4112 = vmatpush1.bf16.msra.mxu0 %v2916
        %4113 = vmatprep.subr.bf16.mxu0 %v2933
        %4114 = vmatpush1.bf16.msra.mxu0 %v2932
        %4115 = vmatprep.subr.bf16.mxu0 %v2949
        %4116 = vmatpush1.bf16.msra.mxu0 %v2948
        %4117 = vmatprep.subr.bf16.mxu0 %v2965
        %4118 = vmatpush1.bf16.msra.mxu0 %v2964
        %4119 = vmatprep.subr.bf16.mxu0 %v2981
        %4120 = vmatpush1.bf16.msra.mxu0 %v2980
        %4121 = vmatprep.subr.bf16.mxu0 %v2997
        %4122 = vmatpush1.bf16.msra.mxu0 %v2996
        %4123 = vmatprep.subr.bf16.mxu0 %v3013
        %4124 = vmatpush1.bf16.msra.mxu0 %v3012
        %4125 = vmatprep.subr.bf16.mxu0 %v3029
        %4126 = vmatpush1.bf16.msra.mxu0 %v3028
        %4127 = vmatprep.subr.bf16.mxu0 %v3045
        %4128 = vmatpush1.bf16.msra.mxu0 %v3044
        %4129 = vmatprep.subr.bf16.mxu0 %v3061
        %4130 = vmatpush1.bf16.msra.mxu0 %v3060
        %4131 = vmatprep.mubr.bf16.mxu0 %v3348
        %4132 = vmatmul.mubr.bf16.gmra.mrb[0].mxu0 %v3347
        %v4133 = vpop.f32.mrb[0].mxu0
        %v4134 = vadd.f32 %v4093, %v4133
        %v4135 = vpop.f32.mrb[0].mxu0
        %v4136 = vadd.f32 %v4095, %v4135
        %v4137 = vpop.f32.mrb[0].mxu0
        %v4138 = vpop.f32.mrb[0].mxu0
        %4139 = vdwg.mxu0
        %4140 = vmatprep.subr.bf16.mxu0 %v3077
        %4141 = vmatpush1.bf16.msra.mxu0 %v3076
        %4142 = vmatprep.subr.bf16.mxu0 %v3093
        %4143 = vmatpush1.bf16.msra.mxu0 %v3092
        %4144 = vmatprep.subr.bf16.mxu0 %v3109
        %4145 = vmatpush1.bf16.msra.mxu0 %v3108
        %4146 = vmatprep.subr.bf16.mxu0 %v3125
        %4147 = vmatpush1.bf16.msra.mxu0 %v3124
        %4148 = vmatprep.subr.bf16.mxu0 %v3141
        %4149 = vmatpush1.bf16.msra.mxu0 %v3140
        %4150 = vmatprep.subr.bf16.mxu0 %v3157
        %4151 = vmatpush1.bf16.msra.mxu0 %v3156
        %4152 = vmatprep.subr.bf16.mxu0 %v3173
        %4153 = vmatpush1.bf16.msra.mxu0 %v3172
        %4154 = vmatprep.subr.bf16.mxu0 %v3189
        %4155 = vmatpush1.bf16.msra.mxu0 %v3188
        %4156 = vmatprep.subr.bf16.mxu0 %v3205
        %4157 = vmatpush1.bf16.msra.mxu0 %v3204
        %4158 = vmatprep.subr.bf16.mxu0 %v3221
        %4159 = vmatpush1.bf16.msra.mxu0 %v3220
        %4160 = vmatprep.subr.bf16.mxu0 %v3237
        %4161 = vmatpush1.bf16.msra.mxu0 %v3236
        %4162 = vmatprep.subr.bf16.mxu0 %v3253
        %4163 = vmatpush1.bf16.msra.mxu0 %v3252
        %4164 = vmatprep.subr.bf16.mxu0 %v3269
        %4165 = vmatpush1.bf16.msra.mxu0 %v3268
        %4166 = vmatprep.subr.bf16.mxu0 %v3285
        %4167 = vmatpush1.bf16.msra.mxu0 %v3284
        %4168 = vmatprep.subr.bf16.mxu0 %v3301
        %4169 = vmatpush1.bf16.msra.mxu0 %v3300
        %4170 = vmatprep.subr.bf16.mxu0 %v3317
        %4171 = vmatpush1.bf16.msra.mxu0 %v3316
        %4172 = vmatprep.mubr.bf16.mxu0 %v3350
        %4173 = vmatmul.mubr.bf16.gmra.mrb[0].mxu0 %v3349
        %v4174 = vpop.f32.mrb[0].mxu0
        %v4175 = vadd.f32 %v4134, %v4174
        %v4176 = vpop.f32.mrb[0].mxu0
        %v4177 = vadd.f32 %v4136, %v4176
        %v4178 = vpop.f32.mrb[0].mxu0
        %v4179 = vpop.f32.mrb[0].mxu0
        %4180 = vdwg.mxu0
        %4181 = vmatprep.subr.bf16.mxu0 %v2055
        %4182 = vmatpush1.bf16.msra.mxu0 %v2054
        %4183 = vmatprep.subr.bf16.mxu0 %v2071
        %4184 = vmatpush1.bf16.msra.mxu0 %v2070
        %4185 = vmatprep.subr.bf16.mxu0 %v2087
        %4186 = vmatpush1.bf16.msra.mxu0 %v2086
        %4187 = vmatprep.subr.bf16.mxu0 %v2103
        %4188 = vmatpush1.bf16.msra.mxu0 %v2102
        %4189 = vmatprep.subr.bf16.mxu0 %v2119
        %4190 = vmatpush1.bf16.msra.mxu0 %v2118
        %4191 = vmatprep.subr.bf16.mxu0 %v2135
        %4192 = vmatpush1.bf16.msra.mxu0 %v2134
        %4193 = vmatprep.subr.bf16.mxu0 %v2151
        %4194 = vmatpush1.bf16.msra.mxu0 %v2150
        %4195 = vmatprep.subr.bf16.mxu0 %v2167
        %4196 = vmatpush1.bf16.msra.mxu0 %v2166
        %4197 = vmatprep.subr.bf16.mxu0 %v2183
        %4198 = vmatpush1.bf16.msra.mxu0 %v2182
        %4199 = vmatprep.subr.bf16.mxu0 %v2199
        %4200 = vmatpush1.bf16.msra.mxu0 %v2198
        %4201 = vmatprep.subr.bf16.mxu0 %v2215
        %4202 = vmatpush1.bf16.msra.mxu0 %v2214
        %4203 = vmatprep.subr.bf16.mxu0 %v2231
        %4204 = vmatpush1.bf16.msra.mxu0 %v2230
        %4205 = vmatprep.subr.bf16.mxu0 %v2247
        %4206 = vmatpush1.bf16.msra.mxu0 %v2246
        %4207 = vmatprep.subr.bf16.mxu0 %v2263
        %4208 = vmatpush1.bf16.msra.mxu0 %v2262
        %4209 = vmatprep.subr.bf16.mxu0 %v2279
        %4210 = vmatpush1.bf16.msra.mxu0 %v2278
        %4211 = vmatprep.subr.bf16.mxu0 %v2295
        %4212 = vmatpush1.bf16.msra.mxu0 %v2294
        %4213 = vmatprep.mubr.bf16.mxu0 %v3342
        %4214 = vmatmul.mubr.bf16.gmra.mrb[0].mxu0 %v3341
        %v4215 = vpop.f32.mrb[0].mxu0
        %v4216 = vadd.f32 0.0, %v4215
        %v4217 = vpop.f32.mrb[0].mxu0
        %v4218 = vadd.f32 0.0, %v4217
        %v4219 = vpop.f32.mrb[0].mxu0
        %v4220 = vpop.f32.mrb[0].mxu0
        %4221 = vdwg.mxu0
        %4222 = vmatprep.subr.bf16.mxu0 %v2311
        %4223 = vmatpush1.bf16.msra.mxu0 %v2310
        %4224 = vmatprep.subr.bf16.mxu0 %v2327
        %4225 = vmatpush1.bf16.msra.mxu0 %v2326
        %4226 = vmatprep.subr.bf16.mxu0 %v2343
        %4227 = vmatpush1.bf16.msra.mxu0 %v2342
        %4228 = vmatprep.subr.bf16.mxu0 %v2359
        %4229 = vmatpush1.bf16.msra.mxu0 %v2358
        %4230 = vmatprep.subr.bf16.mxu0 %v2375
        %4231 = vmatpush1.bf16.msra.mxu0 %v2374
        %4232 = vmatprep.subr.bf16.mxu0 %v2391
        %4233 = vmatpush1.bf16.msra.mxu0 %v2390
        %4234 = vmatprep.subr.bf16.mxu0 %v2407
        %4235 = vmatpush1.bf16.msra.mxu0 %v2406
        %4236 = vmatprep.subr.bf16.mxu0 %v2423
        %4237 = vmatpush1.bf16.msra.mxu0 %v2422
        %4238 = vmatprep.subr.bf16.mxu0 %v2439
        %4239 = vmatpush1.bf16.msra.mxu0 %v2438
        %4240 = vmatprep.subr.bf16.mxu0 %v2455
        %4241 = vmatpush1.bf16.msra.mxu0 %v2454
        %4242 = vmatprep.subr.bf16.mxu0 %v2471
        %4243 = vmatpush1.bf16.msra.mxu0 %v2470
        %4244 = vmatprep.subr.bf16.mxu0 %v2487
        %4245 = vmatpush1.bf16.msra.mxu0 %v2486
        %4246 = vmatprep.subr.bf16.mxu0 %v2503
        %4247 = vmatpush1.bf16.msra.mxu0 %v2502
        %4248 = vmatprep.subr.bf16.mxu0 %v2519
        %4249 = vmatpush1.bf16.msra.mxu0 %v2518
        %4250 = vmatprep.subr.bf16.mxu0 %v2535
        %4251 = vmatpush1.bf16.msra.mxu0 %v2534
        %4252 = vmatprep.subr.bf16.mxu0 %v2551
        %4253 = vmatpush1.bf16.msra.mxu0 %v2550
        %4254 = vmatprep.mubr.bf16.mxu0 %v3344
        %4255 = vmatmul.mubr.bf16.gmra.mrb[0].mxu0 %v3343
        %v4256 = vpop.f32.mrb[0].mxu0
        %v4257 = vadd.f32 %v4216, %v4256
        %v4258 = vpop.f32.mrb[0].mxu0
        %v4259 = vadd.f32 %v4218, %v4258
        %v4260 = vpop.f32.mrb[0].mxu0
        %v4261 = vpop.f32.mrb[0].mxu0
        %4262 = vdwg.mxu0
        %4263 = vmatprep.subr.bf16.mxu0 %v2567
        %4264 = vmatpush1.bf16.msra.mxu0 %v2566
        %4265 = vmatprep.subr.bf16.mxu0 %v2583
        %4266 = vmatpush1.bf16.msra.mxu0 %v2582
        %4267 = vmatprep.subr.bf16.mxu0 %v2599
        %4268 = vmatpush1.bf16.msra.mxu0 %v2598
        %4269 = vmatprep.subr.bf16.mxu0 %v2615
        %4270 = vmatpush1.bf16.msra.mxu0 %v2614
        %4271 = vmatprep.subr.bf16.mxu0 %v2631
        %4272 = vmatpush1.bf16.msra.mxu0 %v2630
        %4273 = vmatprep.subr.bf16.mxu0 %v2647
        %4274 = vmatpush1.bf16.msra.mxu0 %v2646
        %4275 = vmatprep.subr.bf16.mxu0 %v2663
        %4276 = vmatpush1.bf16.msra.mxu0 %v2662
        %4277 = vmatprep.subr.bf16.mxu0 %v2679
        %4278 = vmatpush1.bf16.msra.mxu0 %v2678
        %4279 = vmatprep.subr.bf16.mxu0 %v2695
        %4280 = vmatpush1.bf16.msra.mxu0 %v2694
        %4281 = vmatprep.subr.bf16.mxu0 %v2711
        %4282 = vmatpush1.bf16.msra.mxu0 %v2710
        %4283 = vmatprep.subr.bf16.mxu0 %v2727
        %4284 = vmatpush1.bf16.msra.mxu0 %v2726
        %4285 = vmatprep.subr.bf16.mxu0 %v2743
        %4286 = vmatpush1.bf16.msra.mxu0 %v2742
        %4287 = vmatprep.subr.bf16.mxu0 %v2759
        %4288 = vmatpush1.bf16.msra.mxu0 %v2758
        %4289 = vmatprep.subr.bf16.mxu0 %v2775
        %4290 = vmatpush1.bf16.msra.mxu0 %v2774
        %4291 = vmatprep.subr.bf16.mxu0 %v2791
        %4292 = vmatpush1.bf16.msra.mxu0 %v2790
        %4293 = vmatprep.subr.bf16.mxu0 %v2807
        %4294 = vmatpush1.bf16.msra.mxu0 %v2806
        %4295 = vmatprep.mubr.bf16.mxu0 %v3346
        %4296 = vmatmul.mubr.bf16.gmra.mrb[0].mxu0 %v3345
        %v4297 = vpop.f32.mrb[0].mxu0
        %v4298 = vadd.f32 %v4257, %v4297
        %v4299 = vpop.f32.mrb[0].mxu0
        %v4300 = vadd.f32 %v4259, %v4299
        %v4301 = vpop.f32.mrb[0].mxu0
        %v4302 = vpop.f32.mrb[0].mxu0
        %4303 = vdwg.mxu0
        %4304 = vmatprep.subr.bf16.mxu0 %v2823
        %4305 = vmatpush1.bf16.msra.mxu0 %v2822
        %4306 = vmatprep.subr.bf16.mxu0 %v2839
        %4307 = vmatpush1.bf16.msra.mxu0 %v2838
        %4308 = vmatprep.subr.bf16.mxu0 %v2855
        %4309 = vmatpush1.bf16.msra.mxu0 %v2854
        %4310 = vmatprep.subr.bf16.mxu0 %v2871
        %4311 = vmatpush1.bf16.msra.mxu0 %v2870
        %4312 = vmatprep.subr.bf16.mxu0 %v2887
        %4313 = vmatpush1.bf16.msra.mxu0 %v2886
        %4314 = vmatprep.subr.bf16.mxu0 %v2903
        %4315 = vmatpush1.bf16.msra.mxu0 %v2902
        %4316 = vmatprep.subr.bf16.mxu0 %v2919
        %4317 = vmatpush1.bf16.msra.mxu0 %v2918
        %4318 = vmatprep.subr.bf16.mxu0 %v2935
        %4319 = vmatpush1.bf16.msra.mxu0 %v2934
        %4320 = vmatprep.subr.bf16.mxu0 %v2951
        %4321 = vmatpush1.bf16.msra.mxu0 %v2950
        %4322 = vmatprep.subr.bf16.mxu0 %v2967
        %4323 = vmatpush1.bf16.msra.mxu0 %v2966
        %4324 = vmatprep.subr.bf16.mxu0 %v2983
        %4325 = vmatpush1.bf16.msra.mxu0 %v2982
        %4326 = vmatprep.subr.bf16.mxu0 %v2999
        %4327 = vmatpush1.bf16.msra.mxu0 %v2998
        %4328 = vmatprep.subr.bf16.mxu0 %v3015
        %4329 = vmatpush1.bf16.msra.mxu0 %v3014
        %4330 = vmatprep.subr.bf16.mxu0 %v3031
        %4331 = vmatpush1.bf16.msra.mxu0 %v3030
        %4332 = vmatprep.subr.bf16.mxu0 %v3047
        %4333 = vmatpush1.bf16.msra.mxu0 %v3046
        %4334 = vmatprep.subr.bf16.mxu0 %v3063
        %4335 = vmatpush1.bf16.msra.mxu0 %v3062
        %4336 = vmatprep.mubr.bf16.mxu0 %v3348
        %4337 = vmatmul.mubr.bf16.gmra.mrb[0].mxu0 %v3347
        %v4338 = vpop.f32.mrb[0].mxu0
        %v4339 = vadd.f32 %v4298, %v4338
        %v4340 = vpop.f32.mrb[0].mxu0
        %v4341 = vadd.f32 %v4300, %v4340
        %v4342 = vpop.f32.mrb[0].mxu0
        %v4343 = vpop.f32.mrb[0].mxu0
        %4344 = vdwg.mxu0
        %4345 = vmatprep.subr.bf16.mxu0 %v3079
        %4346 = vmatpush1.bf16.msra.mxu0 %v3078
        %4347 = vmatprep.subr.bf16.mxu0 %v3095
        %4348 = vmatpush1.bf16.msra.mxu0 %v3094
        %4349 = vmatprep.subr.bf16.mxu0 %v3111
        %4350 = vmatpush1.bf16.msra.mxu0 %v3110
        %4351 = vmatprep.subr.bf16.mxu0 %v3127
        %4352 = vmatpush1.bf16.msra.mxu0 %v3126
        %4353 = vmatprep.subr.bf16.mxu0 %v3143
        %4354 = vmatpush1.bf16.msra.mxu0 %v3142
        %4355 = vmatprep.subr.bf16.mxu0 %v3159
        %4356 = vmatpush1.bf16.msra.mxu0 %v3158
        %4357 = vmatprep.subr.bf16.mxu0 %v3175
        %4358 = vmatpush1.bf16.msra.mxu0 %v3174
        %4359 = vmatprep.subr.bf16.mxu0 %v3191
        %4360 = vmatpush1.bf16.msra.mxu0 %v3190
        %4361 = vmatprep.subr.bf16.mxu0 %v3207
        %4362 = vmatpush1.bf16.msra.mxu0 %v3206
        %4363 = vmatprep.subr.bf16.mxu0 %v3223
        %4364 = vmatpush1.bf16.msra.mxu0 %v3222
        %4365 = vmatprep.subr.bf16.mxu0 %v3239
        %4366 = vmatpush1.bf16.msra.mxu0 %v3238
        %4367 = vmatprep.subr.bf16.mxu0 %v3255
        %4368 = vmatpush1.bf16.msra.mxu0 %v3254
        %4369 = vmatprep.subr.bf16.mxu0 %v3271
        %4370 = vmatpush1.bf16.msra.mxu0 %v3270
        %4371 = vmatprep.subr.bf16.mxu0 %v3287
        %4372 = vmatpush1.bf16.msra.mxu0 %v3286
        %4373 = vmatprep.subr.bf16.mxu0 %v3303
        %4374 = vmatpush1.bf16.msra.mxu0 %v3302
        %4375 = vmatprep.subr.bf16.mxu0 %v3319
        %4376 = vmatpush1.bf16.msra.mxu0 %v3318
        %4377 = vmatprep.mubr.bf16.mxu0 %v3350
        %4378 = vmatmul.mubr.bf16.gmra.mrb[0].mxu0 %v3349
        %v4379 = vpop.f32.mrb[0].mxu0
        %v4380 = vadd.f32 %v4339, %v4379
        %v4381 = vpop.f32.mrb[0].mxu0
        %v4382 = vadd.f32 %v4341, %v4381
        %v4383 = vpop.f32.mrb[0].mxu0
        %v4384 = vpop.f32.mrb[0].mxu0
        %4385 = vdwg.mxu0
        %4386 = vmatprep.subr.bf16.mxu0 %v2057
        %4387 = vmatpush1.bf16.msra.mxu0 %v2056
        %4388 = vmatprep.subr.bf16.mxu0 %v2073
        %4389 = vmatpush1.bf16.msra.mxu0 %v2072
        %4390 = vmatprep.subr.bf16.mxu0 %v2089
        %4391 = vmatpush1.bf16.msra.mxu0 %v2088
        %4392 = vmatprep.subr.bf16.mxu0 %v2105
        %4393 = vmatpush1.bf16.msra.mxu0 %v2104
        %4394 = vmatprep.subr.bf16.mxu0 %v2121
        %4395 = vmatpush1.bf16.msra.mxu0 %v2120
        %4396 = vmatprep.subr.bf16.mxu0 %v2137
        %4397 = vmatpush1.bf16.msra.mxu0 %v2136
        %4398 = vmatprep.subr.bf16.mxu0 %v2153
        %4399 = vmatpush1.bf16.msra.mxu0 %v2152
        %4400 = vmatprep.subr.bf16.mxu0 %v2169
        %4401 = vmatpush1.bf16.msra.mxu0 %v2168
        %4402 = vmatprep.subr.bf16.mxu0 %v2185
        %4403 = vmatpush1.bf16.msra.mxu0 %v2184
        %4404 = vmatprep.subr.bf16.mxu0 %v2201
        %4405 = vmatpush1.bf16.msra.mxu0 %v2200
        %4406 = vmatprep.subr.bf16.mxu0 %v2217
        %4407 = vmatpush1.bf16.msra.mxu0 %v2216
        %4408 = vmatprep.subr.bf16.mxu0 %v2233
        %4409 = vmatpush1.bf16.msra.mxu0 %v2232
        %4410 = vmatprep.subr.bf16.mxu0 %v2249
        %4411 = vmatpush1.bf16.msra.mxu0 %v2248
        %4412 = vmatprep.subr.bf16.mxu0 %v2265
        %4413 = vmatpush1.bf16.msra.mxu0 %v2264
        %4414 = vmatprep.subr.bf16.mxu0 %v2281
        %4415 = vmatpush1.bf16.msra.mxu0 %v2280
        %4416 = vmatprep.subr.bf16.mxu0 %v2297
        %4417 = vmatpush1.bf16.msra.mxu0 %v2296
        %4418 = vmatprep.mubr.bf16.mxu0 %v3342
        %4419 = vmatmul.mubr.bf16.gmra.mrb[0].mxu0 %v3341
        %v4420 = vpop.f32.mrb[0].mxu0
        %v4421 = vadd.f32 0.0, %v4420
        %v4422 = vpop.f32.mrb[0].mxu0
        %v4423 = vadd.f32 0.0, %v4422
        %v4424 = vpop.f32.mrb[0].mxu0
        %v4425 = vpop.f32.mrb[0].mxu0
        %4426 = vdwg.mxu0
        %4427 = vmatprep.subr.bf16.mxu0 %v2313
        %4428 = vmatpush1.bf16.msra.mxu0 %v2312
        %4429 = vmatprep.subr.bf16.mxu0 %v2329
        %4430 = vmatpush1.bf16.msra.mxu0 %v2328
        %4431 = vmatprep.subr.bf16.mxu0 %v2345
        %4432 = vmatpush1.bf16.msra.mxu0 %v2344
        %4433 = vmatprep.subr.bf16.mxu0 %v2361
        %4434 = vmatpush1.bf16.msra.mxu0 %v2360
        %4435 = vmatprep.subr.bf16.mxu0 %v2377
        %4436 = vmatpush1.bf16.msra.mxu0 %v2376
        %4437 = vmatprep.subr.bf16.mxu0 %v2393
        %4438 = vmatpush1.bf16.msra.mxu0 %v2392
        %4439 = vmatprep.subr.bf16.mxu0 %v2409
        %4440 = vmatpush1.bf16.msra.mxu0 %v2408
        %4441 = vmatprep.subr.bf16.mxu0 %v2425
        %4442 = vmatpush1.bf16.msra.mxu0 %v2424
        %4443 = vmatprep.subr.bf16.mxu0 %v2441
        %4444 = vmatpush1.bf16.msra.mxu0 %v2440
        %4445 = vmatprep.subr.bf16.mxu0 %v2457
        %4446 = vmatpush1.bf16.msra.mxu0 %v2456
        %4447 = vmatprep.subr.bf16.mxu0 %v2473
        %4448 = vmatpush1.bf16.msra.mxu0 %v2472
        %4449 = vmatprep.subr.bf16.mxu0 %v2489
        %4450 = vmatpush1.bf16.msra.mxu0 %v2488
        %4451 = vmatprep.subr.bf16.mxu0 %v2505
        %4452 = vmatpush1.bf16.msra.mxu0 %v2504
        %4453 = vmatprep.subr.bf16.mxu0 %v2521
        %4454 = vmatpush1.bf16.msra.mxu0 %v2520
        %4455 = vmatprep.subr.bf16.mxu0 %v2537
        %4456 = vmatpush1.bf16.msra.mxu0 %v2536
        %4457 = vmatprep.subr.bf16.mxu0 %v2553
        %4458 = vmatpush1.bf16.msra.mxu0 %v2552
        %4459 = vmatprep.mubr.bf16.mxu0 %v3344
        %4460 = vmatmul.mubr.bf16.gmra.mrb[0].mxu0 %v3343
        %v4461 = vpop.f32.mrb[0].mxu0
        %v4462 = vadd.f32 %v4421, %v4461
        %v4463 = vpop.f32.mrb[0].mxu0
        %v4464 = vadd.f32 %v4423, %v4463
        %v4465 = vpop.f32.mrb[0].mxu0
        %v4466 = vpop.f32.mrb[0].mxu0
        %4467 = vdwg.mxu0
        %4468 = vmatprep.subr.bf16.mxu0 %v2569
        %4469 = vmatpush1.bf16.msra.mxu0 %v2568
        %4470 = vmatprep.subr.bf16.mxu0 %v2585
        %4471 = vmatpush1.bf16.msra.mxu0 %v2584
        %4472 = vmatprep.subr.bf16.mxu0 %v2601
        %4473 = vmatpush1.bf16.msra.mxu0 %v2600
        %4474 = vmatprep.subr.bf16.mxu0 %v2617
        %4475 = vmatpush1.bf16.msra.mxu0 %v2616
        %4476 = vmatprep.subr.bf16.mxu0 %v2633
        %4477 = vmatpush1.bf16.msra.mxu0 %v2632
        %4478 = vmatprep.subr.bf16.mxu0 %v2649
        %4479 = vmatpush1.bf16.msra.mxu0 %v2648
        %4480 = vmatprep.subr.bf16.mxu0 %v2665
        %4481 = vmatpush1.bf16.msra.mxu0 %v2664
        %4482 = vmatprep.subr.bf16.mxu0 %v2681
        %4483 = vmatpush1.bf16.msra.mxu0 %v2680
        %4484 = vmatprep.subr.bf16.mxu0 %v2697
        %4485 = vmatpush1.bf16.msra.mxu0 %v2696
        %4486 = vmatprep.subr.bf16.mxu0 %v2713
        %4487 = vmatpush1.bf16.msra.mxu0 %v2712
        %4488 = vmatprep.subr.bf16.mxu0 %v2729
        %4489 = vmatpush1.bf16.msra.mxu0 %v2728
        %4490 = vmatprep.subr.bf16.mxu0 %v2745
        %4491 = vmatpush1.bf16.msra.mxu0 %v2744
        %4492 = vmatprep.subr.bf16.mxu0 %v2761
        %4493 = vmatpush1.bf16.msra.mxu0 %v2760
        %4494 = vmatprep.subr.bf16.mxu0 %v2777
        %4495 = vmatpush1.bf16.msra.mxu0 %v2776
        %4496 = vmatprep.subr.bf16.mxu0 %v2793
        %4497 = vmatpush1.bf16.msra.mxu0 %v2792
        %4498 = vmatprep.subr.bf16.mxu0 %v2809
        %4499 = vmatpush1.bf16.msra.mxu0 %v2808
        %4500 = vmatprep.mubr.bf16.mxu0 %v3346
        %4501 = vmatmul.mubr.bf16.gmra.mrb[0].mxu0 %v3345
        %v4502 = vpop.f32.mrb[0].mxu0
        %v4503 = vadd.f32 %v4462, %v4502
        %v4504 = vpop.f32.mrb[0].mxu0
        %v4505 = vadd.f32 %v4464, %v4504
        %v4506 = vpop.f32.mrb[0].mxu0
        %v4507 = vpop.f32.mrb[0].mxu0
        %4508 = vdwg.mxu0
        %4509 = vmatprep.subr.bf16.mxu0 %v2825
        %4510 = vmatpush1.bf16.msra.mxu0 %v2824
        %4511 = vmatprep.subr.bf16.mxu0 %v2841
        %4512 = vmatpush1.bf16.msra.mxu0 %v2840
        %4513 = vmatprep.subr.bf16.mxu0 %v2857
        %4514 = vmatpush1.bf16.msra.mxu0 %v2856
        %4515 = vmatprep.subr.bf16.mxu0 %v2873
        %4516 = vmatpush1.bf16.msra.mxu0 %v2872
        %4517 = vmatprep.subr.bf16.mxu0 %v2889
        %4518 = vmatpush1.bf16.msra.mxu0 %v2888
        %4519 = vmatprep.subr.bf16.mxu0 %v2905
        %4520 = vmatpush1.bf16.msra.mxu0 %v2904
        %4521 = vmatprep.subr.bf16.mxu0 %v2921
        %4522 = vmatpush1.bf16.msra.mxu0 %v2920
        %4523 = vmatprep.subr.bf16.mxu0 %v2937
        %4524 = vmatpush1.bf16.msra.mxu0 %v2936
        %4525 = vmatprep.subr.bf16.mxu0 %v2953
        %4526 = vmatpush1.bf16.msra.mxu0 %v2952
        %4527 = vmatprep.subr.bf16.mxu0 %v2969
        %4528 = vmatpush1.bf16.msra.mxu0 %v2968
        %4529 = vmatprep.subr.bf16.mxu0 %v2985
        %4530 = vmatpush1.bf16.msra.mxu0 %v2984
        %4531 = vmatprep.subr.bf16.mxu0 %v3001
        %4532 = vmatpush1.bf16.msra.mxu0 %v3000
        %4533 = vmatprep.subr.bf16.mxu0 %v3017
        %4534 = vmatpush1.bf16.msra.mxu0 %v3016
        %4535 = vmatprep.subr.bf16.mxu0 %v3033
        %4536 = vmatpush1.bf16.msra.mxu0 %v3032
        %4537 = vmatprep.subr.bf16.mxu0 %v3049
        %4538 = vmatpush1.bf16.msra.mxu0 %v3048
        %4539 = vmatprep.subr.bf16.mxu0 %v3065
        %4540 = vmatpush1.bf16.msra.mxu0 %v3064
        %4541 = vmatprep.mubr.bf16.mxu0 %v3348
        %4542 = vmatmul.mubr.bf16.gmra.mrb[0].mxu0 %v3347
        %v4543 = vpop.f32.mrb[0].mxu0
        %v4544 = vadd.f32 %v4503, %v4543
        %v4545 = vpop.f32.mrb[0].mxu0
        %v4546 = vadd.f32 %v4505, %v4545
        %v4547 = vpop.f32.mrb[0].mxu0
        %v4548 = vpop.f32.mrb[0].mxu0
        %4549 = vdwg.mxu0
        %4550 = vmatprep.subr.bf16.mxu0 %v3081
        %4551 = vmatpush1.bf16.msra.mxu0 %v3080
        %4552 = vmatprep.subr.bf16.mxu0 %v3097
        %4553 = vmatpush1.bf16.msra.mxu0 %v3096
        %4554 = vmatprep.subr.bf16.mxu0 %v3113
        %4555 = vmatpush1.bf16.msra.mxu0 %v3112
        %4556 = vmatprep.subr.bf16.mxu0 %v3129
        %4557 = vmatpush1.bf16.msra.mxu0 %v3128
        %4558 = vmatprep.subr.bf16.mxu0 %v3145
        %4559 = vmatpush1.bf16.msra.mxu0 %v3144
        %4560 = vmatprep.subr.bf16.mxu0 %v3161
        %4561 = vmatpush1.bf16.msra.mxu0 %v3160
        %4562 = vmatprep.subr.bf16.mxu0 %v3177
        %4563 = vmatpush1.bf16.msra.mxu0 %v3176
        %4564 = vmatprep.subr.bf16.mxu0 %v3193
        %4565 = vmatpush1.bf16.msra.mxu0 %v3192
        %4566 = vmatprep.subr.bf16.mxu0 %v3209
        %4567 = vmatpush1.bf16.msra.mxu0 %v3208
        %4568 = vmatprep.subr.bf16.mxu0 %v3225
        %4569 = vmatpush1.bf16.msra.mxu0 %v3224
        %4570 = vmatprep.subr.bf16.mxu0 %v3241
        %4571 = vmatpush1.bf16.msra.mxu0 %v3240
        %4572 = vmatprep.subr.bf16.mxu0 %v3257
        %4573 = vmatpush1.bf16.msra.mxu0 %v3256
        %4574 = vmatprep.subr.bf16.mxu0 %v3273
        %4575 = vmatpush1.bf16.msra.mxu0 %v3272
        %4576 = vmatprep.subr.bf16.mxu0 %v3289
        %4577 = vmatpush1.bf16.msra.mxu0 %v3288
        %4578 = vmatprep.subr.bf16.mxu0 %v3305
        %4579 = vmatpush1.bf16.msra.mxu0 %v3304
        %4580 = vmatprep.subr.bf16.mxu0 %v3321
        %4581 = vmatpush1.bf16.msra.mxu0 %v3320
        %4582 = vmatprep.mubr.bf16.mxu0 %v3350
        %4583 = vmatmul.mubr.bf16.gmra.mrb[0].mxu0 %v3349
        %v4584 = vpop.f32.mrb[0].mxu0
        %v4585 = vadd.f32 %v4544, %v4584
        %v4586 = vpop.f32.mrb[0].mxu0
        %v4587 = vadd.f32 %v4546, %v4586
        %v4588 = vpop.f32.mrb[0].mxu0
        %v4589 = vpop.f32.mrb[0].mxu0
        %4590 = vdwg.mxu0
        %4591 = vmatprep.subr.bf16.mxu0 %v2059
        %4592 = vmatpush1.bf16.msra.mxu0 %v2058
        %4593 = vmatprep.subr.bf16.mxu0 %v2075
        %4594 = vmatpush1.bf16.msra.mxu0 %v2074
        %4595 = vmatprep.subr.bf16.mxu0 %v2091
        %4596 = vmatpush1.bf16.msra.mxu0 %v2090
        %4597 = vmatprep.subr.bf16.mxu0 %v2107
        %4598 = vmatpush1.bf16.msra.mxu0 %v2106
        %4599 = vmatprep.subr.bf16.mxu0 %v2123
        %4600 = vmatpush1.bf16.msra.mxu0 %v2122
        %4601 = vmatprep.subr.bf16.mxu0 %v2139
        %4602 = vmatpush1.bf16.msra.mxu0 %v2138
        %4603 = vmatprep.subr.bf16.mxu0 %v2155
        %4604 = vmatpush1.bf16.msra.mxu0 %v2154
        %4605 = vmatprep.subr.bf16.mxu0 %v2171
        %4606 = vmatpush1.bf16.msra.mxu0 %v2170
        %4607 = vmatprep.subr.bf16.mxu0 %v2187
        %4608 = vmatpush1.bf16.msra.mxu0 %v2186
        %4609 = vmatprep.subr.bf16.mxu0 %v2203
        %4610 = vmatpush1.bf16.msra.mxu0 %v2202
        %4611 = vmatprep.subr.bf16.mxu0 %v2219
        %4612 = vmatpush1.bf16.msra.mxu0 %v2218
        %4613 = vmatprep.subr.bf16.mxu0 %v2235
        %4614 = vmatpush1.bf16.msra.mxu0 %v2234
        %4615 = vmatprep.subr.bf16.mxu0 %v2251
        %4616 = vmatpush1.bf16.msra.mxu0 %v2250
        %4617 = vmatprep.subr.bf16.mxu0 %v2267
        %4618 = vmatpush1.bf16.msra.mxu0 %v2266
        %4619 = vmatprep.subr.bf16.mxu0 %v2283
        %4620 = vmatpush1.bf16.msra.mxu0 %v2282
        %4621 = vmatprep.subr.bf16.mxu0 %v2299
        %4622 = vmatpush1.bf16.msra.mxu0 %v2298
        %4623 = vmatprep.mubr.bf16.mxu0 %v3342
        %4624 = vmatmul.mubr.bf16.gmra.mrb[0].mxu0 %v3341
        %v4625 = vpop.f32.mrb[0].mxu0
        %v4626 = vadd.f32 0.0, %v4625
        %v4627 = vpop.f32.mrb[0].mxu0
        %v4628 = vadd.f32 0.0, %v4627
        %v4629 = vpop.f32.mrb[0].mxu0
        %v4630 = vpop.f32.mrb[0].mxu0
        %4631 = vdwg.mxu0
        %4632 = vmatprep.subr.bf16.mxu0 %v2315
        %4633 = vmatpush1.bf16.msra.mxu0 %v2314
        %4634 = vmatprep.subr.bf16.mxu0 %v2331
        %4635 = vmatpush1.bf16.msra.mxu0 %v2330
        %4636 = vmatprep.subr.bf16.mxu0 %v2347
        %4637 = vmatpush1.bf16.msra.mxu0 %v2346
        %4638 = vmatprep.subr.bf16.mxu0 %v2363
        %4639 = vmatpush1.bf16.msra.mxu0 %v2362
        %4640 = vmatprep.subr.bf16.mxu0 %v2379
        %4641 = vmatpush1.bf16.msra.mxu0 %v2378
        %4642 = vmatprep.subr.bf16.mxu0 %v2395
        %4643 = vmatpush1.bf16.msra.mxu0 %v2394
        %4644 = vmatprep.subr.bf16.mxu0 %v2411
        %4645 = vmatpush1.bf16.msra.mxu0 %v2410
        %4646 = vmatprep.subr.bf16.mxu0 %v2427
        %4647 = vmatpush1.bf16.msra.mxu0 %v2426
        %4648 = vmatprep.subr.bf16.mxu0 %v2443
        %4649 = vmatpush1.bf16.msra.mxu0 %v2442
        %4650 = vmatprep.subr.bf16.mxu0 %v2459
        %4651 = vmatpush1.bf16.msra.mxu0 %v2458
        %4652 = vmatprep.subr.bf16.mxu0 %v2475
        %4653 = vmatpush1.bf16.msra.mxu0 %v2474
        %4654 = vmatprep.subr.bf16.mxu0 %v2491
        %4655 = vmatpush1.bf16.msra.mxu0 %v2490
        %4656 = vmatprep.subr.bf16.mxu0 %v2507
        %4657 = vmatpush1.bf16.msra.mxu0 %v2506
        %4658 = vmatprep.subr.bf16.mxu0 %v2523
        %4659 = vmatpush1.bf16.msra.mxu0 %v2522
        %4660 = vmatprep.subr.bf16.mxu0 %v2539
        %4661 = vmatpush1.bf16.msra.mxu0 %v2538
        %4662 = vmatprep.subr.bf16.mxu0 %v2555
        %4663 = vmatpush1.bf16.msra.mxu0 %v2554
        %4664 = vmatprep.mubr.bf16.mxu0 %v3344
        %4665 = vmatmul.mubr.bf16.gmra.mrb[0].mxu0 %v3343
        %v4666 = vpop.f32.mrb[0].mxu0
        %v4667 = vadd.f32 %v4626, %v4666
        %v4668 = vpop.f32.mrb[0].mxu0
        %v4669 = vadd.f32 %v4628, %v4668
        %v4670 = vpop.f32.mrb[0].mxu0
        %v4671 = vpop.f32.mrb[0].mxu0
        %4672 = vdwg.mxu0
        %4673 = vmatprep.subr.bf16.mxu0 %v2571
        %4674 = vmatpush1.bf16.msra.mxu0 %v2570
        %4675 = vmatprep.subr.bf16.mxu0 %v2587
        %4676 = vmatpush1.bf16.msra.mxu0 %v2586
        %4677 = vmatprep.subr.bf16.mxu0 %v2603
        %4678 = vmatpush1.bf16.msra.mxu0 %v2602
        %4679 = vmatprep.subr.bf16.mxu0 %v2619
        %4680 = vmatpush1.bf16.msra.mxu0 %v2618
        %4681 = vmatprep.subr.bf16.mxu0 %v2635
        %4682 = vmatpush1.bf16.msra.mxu0 %v2634
        %4683 = vmatprep.subr.bf16.mxu0 %v2651
        %4684 = vmatpush1.bf16.msra.mxu0 %v2650
        %4685 = vmatprep.subr.bf16.mxu0 %v2667
        %4686 = vmatpush1.bf16.msra.mxu0 %v2666
        %4687 = vmatprep.subr.bf16.mxu0 %v2683
        %4688 = vmatpush1.bf16.msra.mxu0 %v2682
        %4689 = vmatprep.subr.bf16.mxu0 %v2699
        %4690 = vmatpush1.bf16.msra.mxu0 %v2698
        %4691 = vmatprep.subr.bf16.mxu0 %v2715
        %4692 = vmatpush1.bf16.msra.mxu0 %v2714
        %4693 = vmatprep.subr.bf16.mxu0 %v2731
        %4694 = vmatpush1.bf16.msra.mxu0 %v2730
        %4695 = vmatprep.subr.bf16.mxu0 %v2747
        %4696 = vmatpush1.bf16.msra.mxu0 %v2746
        %4697 = vmatprep.subr.bf16.mxu0 %v2763
        %4698 = vmatpush1.bf16.msra.mxu0 %v2762
        %4699 = vmatprep.subr.bf16.mxu0 %v2779
        %4700 = vmatpush1.bf16.msra.mxu0 %v2778
        %4701 = vmatprep.subr.bf16.mxu0 %v2795
        %4702 = vmatpush1.bf16.msra.mxu0 %v2794
        %4703 = vmatprep.subr.bf16.mxu0 %v2811
        %4704 = vmatpush1.bf16.msra.mxu0 %v2810
        %4705 = vmatprep.mubr.bf16.mxu0 %v3346
        %4706 = vmatmul.mubr.bf16.gmra.mrb[0].mxu0 %v3345
        %v4707 = vpop.f32.mrb[0].mxu0
        %v4708 = vadd.f32 %v4667, %v4707
        %v4709 = vpop.f32.mrb[0].mxu0
        %v4710 = vadd.f32 %v4669, %v4709
        %v4711 = vpop.f32.mrb[0].mxu0
        %v4712 = vpop.f32.mrb[0].mxu0
        %4713 = vdwg.mxu0
        %4714 = vmatprep.subr.bf16.mxu0 %v2827
        %4715 = vmatpush1.bf16.msra.mxu0 %v2826
        %4716 = vmatprep.subr.bf16.mxu0 %v2843
        %4717 = vmatpush1.bf16.msra.mxu0 %v2842
        %4718 = vmatprep.subr.bf16.mxu0 %v2859
        %4719 = vmatpush1.bf16.msra.mxu0 %v2858
        %4720 = vmatprep.subr.bf16.mxu0 %v2875
        %4721 = vmatpush1.bf16.msra.mxu0 %v2874
        %4722 = vmatprep.subr.bf16.mxu0 %v2891
        %4723 = vmatpush1.bf16.msra.mxu0 %v2890
        %4724 = vmatprep.subr.bf16.mxu0 %v2907
        %4725 = vmatpush1.bf16.msra.mxu0 %v2906
        %4726 = vmatprep.subr.bf16.mxu0 %v2923
        %4727 = vmatpush1.bf16.msra.mxu0 %v2922
        %4728 = vmatprep.subr.bf16.mxu0 %v2939
        %4729 = vmatpush1.bf16.msra.mxu0 %v2938
        %4730 = vmatprep.subr.bf16.mxu0 %v2955
        %4731 = vmatpush1.bf16.msra.mxu0 %v2954
        %4732 = vmatprep.subr.bf16.mxu0 %v2971
        %4733 = vmatpush1.bf16.msra.mxu0 %v2970
        %4734 = vmatprep.subr.bf16.mxu0 %v2987
        %4735 = vmatpush1.bf16.msra.mxu0 %v2986
        %4736 = vmatprep.subr.bf16.mxu0 %v3003
        %4737 = vmatpush1.bf16.msra.mxu0 %v3002
        %4738 = vmatprep.subr.bf16.mxu0 %v3019
        %4739 = vmatpush1.bf16.msra.mxu0 %v3018
        %4740 = vmatprep.subr.bf16.mxu0 %v3035
        %4741 = vmatpush1.bf16.msra.mxu0 %v3034
        %4742 = vmatprep.subr.bf16.mxu0 %v3051
        %4743 = vmatpush1.bf16.msra.mxu0 %v3050
        %4744 = vmatprep.subr.bf16.mxu0 %v3067
        %4745 = vmatpush1.bf16.msra.mxu0 %v3066
        %4746 = vmatprep.mubr.bf16.mxu0 %v3348
        %4747 = vmatmul.mubr.bf16.gmra.mrb[0].mxu0 %v3347
        %v4748 = vpop.f32.mrb[0].mxu0
        %v4749 = vadd.f32 %v4708, %v4748
        %v4750 = vpop.f32.mrb[0].mxu0
        %v4751 = vadd.f32 %v4710, %v4750
        %v4752 = vpop.f32.mrb[0].mxu0
        %v4753 = vpop.f32.mrb[0].mxu0
        %4754 = vdwg.mxu0
        %4755 = vmatprep.subr.bf16.mxu0 %v3083
        %4756 = vmatpush1.bf16.msra.mxu0 %v3082
        %4757 = vmatprep.subr.bf16.mxu0 %v3099
        %4758 = vmatpush1.bf16.msra.mxu0 %v3098
        %4759 = vmatprep.subr.bf16.mxu0 %v3115
        %4760 = vmatpush1.bf16.msra.mxu0 %v3114
        %4761 = vmatprep.subr.bf16.mxu0 %v3131
        %4762 = vmatpush1.bf16.msra.mxu0 %v3130
        %4763 = vmatprep.subr.bf16.mxu0 %v3147
        %4764 = vmatpush1.bf16.msra.mxu0 %v3146
        %4765 = vmatprep.subr.bf16.mxu0 %v3163
        %4766 = vmatpush1.bf16.msra.mxu0 %v3162
        %4767 = vmatprep.subr.bf16.mxu0 %v3179
        %4768 = vmatpush1.bf16.msra.mxu0 %v3178
        %4769 = vmatprep.subr.bf16.mxu0 %v3195
        %4770 = vmatpush1.bf16.msra.mxu0 %v3194
        %4771 = vmatprep.subr.bf16.mxu0 %v3211
        %4772 = vmatpush1.bf16.msra.mxu0 %v3210
        %4773 = vmatprep.subr.bf16.mxu0 %v3227
        %4774 = vmatpush1.bf16.msra.mxu0 %v3226
        %4775 = vmatprep.subr.bf16.mxu0 %v3243
        %4776 = vmatpush1.bf16.msra.mxu0 %v3242
        %4777 = vmatprep.subr.bf16.mxu0 %v3259
        %4778 = vmatpush1.bf16.msra.mxu0 %v3258
        %4779 = vmatprep.subr.bf16.mxu0 %v3275
        %4780 = vmatpush1.bf16.msra.mxu0 %v3274
        %4781 = vmatprep.subr.bf16.mxu0 %v3291
        %4782 = vmatpush1.bf16.msra.mxu0 %v3290
        %4783 = vmatprep.subr.bf16.mxu0 %v3307
        %4784 = vmatpush1.bf16.msra.mxu0 %v3306
        %4785 = vmatprep.subr.bf16.mxu0 %v3323
        %4786 = vmatpush1.bf16.msra.mxu0 %v3322
        %4787 = vmatprep.mubr.bf16.mxu0 %v3350
        %4788 = vmatmul.mubr.bf16.gmra.mrb[0].mxu0 %v3349
        %v4789 = vpop.f32.mrb[0].mxu0
        %v4790 = vadd.f32 %v4749, %v4789
        %v4791 = vpop.f32.mrb[0].mxu0
        %v4792 = vadd.f32 %v4751, %v4791
        %v4793 = vpop.f32.mrb[0].mxu0
        %v4794 = vpop.f32.mrb[0].mxu0
        %4795 = vdwg.mxu0
        %4796 = vmatprep.subr.bf16.mxu0 %v2061
        %4797 = vmatpush1.bf16.msra.mxu0 %v2060
        %4798 = vmatprep.subr.bf16.mxu0 %v2077
        %4799 = vmatpush1.bf16.msra.mxu0 %v2076
        %4800 = vmatprep.subr.bf16.mxu0 %v2093
        %4801 = vmatpush1.bf16.msra.mxu0 %v2092
        %4802 = vmatprep.subr.bf16.mxu0 %v2109
        %4803 = vmatpush1.bf16.msra.mxu0 %v2108
        %4804 = vmatprep.subr.bf16.mxu0 %v2125
        %4805 = vmatpush1.bf16.msra.mxu0 %v2124
        %4806 = vmatprep.subr.bf16.mxu0 %v2141
        %4807 = vmatpush1.bf16.msra.mxu0 %v2140
        %4808 = vmatprep.subr.bf16.mxu0 %v2157
        %4809 = vmatpush1.bf16.msra.mxu0 %v2156
        %4810 = vmatprep.subr.bf16.mxu0 %v2173
        %4811 = vmatpush1.bf16.msra.mxu0 %v2172
        %4812 = vmatprep.subr.bf16.mxu0 %v2189
        %4813 = vmatpush1.bf16.msra.mxu0 %v2188
        %4814 = vmatprep.subr.bf16.mxu0 %v2205
        %4815 = vmatpush1.bf16.msra.mxu0 %v2204
        %4816 = vmatprep.subr.bf16.mxu0 %v2221
        %4817 = vmatpush1.bf16.msra.mxu0 %v2220
        %4818 = vmatprep.subr.bf16.mxu0 %v2237
        %4819 = vmatpush1.bf16.msra.mxu0 %v2236
        %4820 = vmatprep.subr.bf16.mxu0 %v2253
        %4821 = vmatpush1.bf16.msra.mxu0 %v2252
        %4822 = vmatprep.subr.bf16.mxu0 %v2269
        %4823 = vmatpush1.bf16.msra.mxu0 %v2268
        %4824 = vmatprep.subr.bf16.mxu0 %v2285
        %4825 = vmatpush1.bf16.msra.mxu0 %v2284
        %4826 = vmatprep.subr.bf16.mxu0 %v2301
        %4827 = vmatpush1.bf16.msra.mxu0 %v2300
        %4828 = vmatprep.mubr.bf16.mxu0 %v3342
        %4829 = vmatmul.mubr.bf16.gmra.mrb[0].mxu0 %v3341
        %v4830 = vpop.f32.mrb[0].mxu0
        %v4831 = vadd.f32 0.0, %v4830
        %v4832 = vpop.f32.mrb[0].mxu0
        %v4833 = vadd.f32 0.0, %v4832
        %v4834 = vpop.f32.mrb[0].mxu0
        %v4835 = vpop.f32.mrb[0].mxu0
        %4836 = vdwg.mxu0
        %4837 = vmatprep.subr.bf16.mxu0 %v2317
        %4838 = vmatpush1.bf16.msra.mxu0 %v2316
        %4839 = vmatprep.subr.bf16.mxu0 %v2333
        %4840 = vmatpush1.bf16.msra.mxu0 %v2332
        %4841 = vmatprep.subr.bf16.mxu0 %v2349
        %4842 = vmatpush1.bf16.msra.mxu0 %v2348
        %4843 = vmatprep.subr.bf16.mxu0 %v2365
        %4844 = vmatpush1.bf16.msra.mxu0 %v2364
        %4845 = vmatprep.subr.bf16.mxu0 %v2381
        %4846 = vmatpush1.bf16.msra.mxu0 %v2380
        %4847 = vmatprep.subr.bf16.mxu0 %v2397
        %4848 = vmatpush1.bf16.msra.mxu0 %v2396
        %4849 = vmatprep.subr.bf16.mxu0 %v2413
        %4850 = vmatpush1.bf16.msra.mxu0 %v2412
        %4851 = vmatprep.subr.bf16.mxu0 %v2429
        %4852 = vmatpush1.bf16.msra.mxu0 %v2428
        %4853 = vmatprep.subr.bf16.mxu0 %v2445
        %4854 = vmatpush1.bf16.msra.mxu0 %v2444
        %4855 = vmatprep.subr.bf16.mxu0 %v2461
        %4856 = vmatpush1.bf16.msra.mxu0 %v2460
        %4857 = vmatprep.subr.bf16.mxu0 %v2477
        %4858 = vmatpush1.bf16.msra.mxu0 %v2476
        %4859 = vmatprep.subr.bf16.mxu0 %v2493
        %4860 = vmatpush1.bf16.msra.mxu0 %v2492
        %4861 = vmatprep.subr.bf16.mxu0 %v2509
        %4862 = vmatpush1.bf16.msra.mxu0 %v2508
        %4863 = vmatprep.subr.bf16.mxu0 %v2525
        %4864 = vmatpush1.bf16.msra.mxu0 %v2524
        %4865 = vmatprep.subr.bf16.mxu0 %v2541
        %4866 = vmatpush1.bf16.msra.mxu0 %v2540
        %4867 = vmatprep.subr.bf16.mxu0 %v2557
        %4868 = vmatpush1.bf16.msra.mxu0 %v2556
        %4869 = vmatprep.mubr.bf16.mxu0 %v3344
        %4870 = vmatmul.mubr.bf16.gmra.mrb[0].mxu0 %v3343
        %v4871 = vpop.f32.mrb[0].mxu0
        %v4872 = vadd.f32 %v4831, %v4871
        %v4873 = vpop.f32.mrb[0].mxu0
        %v4874 = vadd.f32 %v4833, %v4873
        %v4875 = vpop.f32.mrb[0].mxu0
        %v4876 = vpop.f32.mrb[0].mxu0
        %4877 = vdwg.mxu0
        %4878 = vmatprep.subr.bf16.mxu0 %v2573
        %4879 = vmatpush1.bf16.msra.mxu0 %v2572
        %4880 = vmatprep.subr.bf16.mxu0 %v2589
        %4881 = vmatpush1.bf16.msra.mxu0 %v2588
        %4882 = vmatprep.subr.bf16.mxu0 %v2605
        %4883 = vmatpush1.bf16.msra.mxu0 %v2604
        %4884 = vmatprep.subr.bf16.mxu0 %v2621
        %4885 = vmatpush1.bf16.msra.mxu0 %v2620
        %4886 = vmatprep.subr.bf16.mxu0 %v2637
        %4887 = vmatpush1.bf16.msra.mxu0 %v2636
        %4888 = vmatprep.subr.bf16.mxu0 %v2653
        %4889 = vmatpush1.bf16.msra.mxu0 %v2652
        %4890 = vmatprep.subr.bf16.mxu0 %v2669
        %4891 = vmatpush1.bf16.msra.mxu0 %v2668
        %4892 = vmatprep.subr.bf16.mxu0 %v2685
        %4893 = vmatpush1.bf16.msra.mxu0 %v2684
        %4894 = vmatprep.subr.bf16.mxu0 %v2701
        %4895 = vmatpush1.bf16.msra.mxu0 %v2700
        %4896 = vmatprep.subr.bf16.mxu0 %v2717
        %4897 = vmatpush1.bf16.msra.mxu0 %v2716
        %4898 = vmatprep.subr.bf16.mxu0 %v2733
        %4899 = vmatpush1.bf16.msra.mxu0 %v2732
        %4900 = vmatprep.subr.bf16.mxu0 %v2749
        %4901 = vmatpush1.bf16.msra.mxu0 %v2748
        %4902 = vmatprep.subr.bf16.mxu0 %v2765
        %4903 = vmatpush1.bf16.msra.mxu0 %v2764
        %4904 = vmatprep.subr.bf16.mxu0 %v2781
        %4905 = vmatpush1.bf16.msra.mxu0 %v2780
        %4906 = vmatprep.subr.bf16.mxu0 %v2797
        %4907 = vmatpush1.bf16.msra.mxu0 %v2796
        %4908 = vmatprep.subr.bf16.mxu0 %v2813
        %4909 = vmatpush1.bf16.msra.mxu0 %v2812
        %4910 = vmatprep.mubr.bf16.mxu0 %v3346
        %4911 = vmatmul.mubr.bf16.gmra.mrb[0].mxu0 %v3345
        %v4912 = vpop.f32.mrb[0].mxu0
        %v4913 = vadd.f32 %v4872, %v4912
        %v4914 = vpop.f32.mrb[0].mxu0
        %v4915 = vadd.f32 %v4874, %v4914
        %v4916 = vpop.f32.mrb[0].mxu0
        %v4917 = vpop.f32.mrb[0].mxu0
        %4918 = vdwg.mxu0
        %4919 = vmatprep.subr.bf16.mxu0 %v2829
        %4920 = vmatpush1.bf16.msra.mxu0 %v2828
        %4921 = vmatprep.subr.bf16.mxu0 %v2845
        %4922 = vmatpush1.bf16.msra.mxu0 %v2844
        %4923 = vmatprep.subr.bf16.mxu0 %v2861
        %4924 = vmatpush1.bf16.msra.mxu0 %v2860
        %4925 = vmatprep.subr.bf16.mxu0 %v2877
        %4926 = vmatpush1.bf16.msra.mxu0 %v2876
        %4927 = vmatprep.subr.bf16.mxu0 %v2893
        %4928 = vmatpush1.bf16.msra.mxu0 %v2892
        %4929 = vmatprep.subr.bf16.mxu0 %v2909
        %4930 = vmatpush1.bf16.msra.mxu0 %v2908
        %4931 = vmatprep.subr.bf16.mxu0 %v2925
        %4932 = vmatpush1.bf16.msra.mxu0 %v2924
        %4933 = vmatprep.subr.bf16.mxu0 %v2941
        %4934 = vmatpush1.bf16.msra.mxu0 %v2940
        %4935 = vmatprep.subr.bf16.mxu0 %v2957
        %4936 = vmatpush1.bf16.msra.mxu0 %v2956
        %4937 = vmatprep.subr.bf16.mxu0 %v2973
        %4938 = vmatpush1.bf16.msra.mxu0 %v2972
        %4939 = vmatprep.subr.bf16.mxu0 %v2989
        %4940 = vmatpush1.bf16.msra.mxu0 %v2988
        %4941 = vmatprep.subr.bf16.mxu0 %v3005
        %4942 = vmatpush1.bf16.msra.mxu0 %v3004
        %4943 = vmatprep.subr.bf16.mxu0 %v3021
        %4944 = vmatpush1.bf16.msra.mxu0 %v3020
        %4945 = vmatprep.subr.bf16.mxu0 %v3037
        %4946 = vmatpush1.bf16.msra.mxu0 %v3036
        %4947 = vmatprep.subr.bf16.mxu0 %v3053
        %4948 = vmatpush1.bf16.msra.mxu0 %v3052
        %4949 = vmatprep.subr.bf16.mxu0 %v3069
        %4950 = vmatpush1.bf16.msra.mxu0 %v3068
        %4951 = vmatprep.mubr.bf16.mxu0 %v3348
        %4952 = vmatmul.mubr.bf16.gmra.mrb[0].mxu0 %v3347
        %v4953 = vpop.f32.mrb[0].mxu0
        %v4954 = vadd.f32 %v4913, %v4953
        %v4955 = vpop.f32.mrb[0].mxu0
        %v4956 = vadd.f32 %v4915, %v4955
        %v4957 = vpop.f32.mrb[0].mxu0
        %v4958 = vpop.f32.mrb[0].mxu0
        %4959 = vdwg.mxu0
        %4960 = vmatprep.subr.bf16.mxu0 %v3085
        %4961 = vmatpush1.bf16.msra.mxu0 %v3084
        %4962 = vmatprep.subr.bf16.mxu0 %v3101
        %4963 = vmatpush1.bf16.msra.mxu0 %v3100
        %4964 = vmatprep.subr.bf16.mxu0 %v3117
        %4965 = vmatpush1.bf16.msra.mxu0 %v3116
        %4966 = vmatprep.subr.bf16.mxu0 %v3133
        %4967 = vmatpush1.bf16.msra.mxu0 %v3132
        %4968 = vmatprep.subr.bf16.mxu0 %v3149
        %4969 = vmatpush1.bf16.msra.mxu0 %v3148
        %4970 = vmatprep.subr.bf16.mxu0 %v3165
        %4971 = vmatpush1.bf16.msra.mxu0 %v3164
        %4972 = vmatprep.subr.bf16.mxu0 %v3181
        %4973 = vmatpush1.bf16.msra.mxu0 %v3180
        %4974 = vmatprep.subr.bf16.mxu0 %v3197
        %4975 = vmatpush1.bf16.msra.mxu0 %v3196
        %4976 = vmatprep.subr.bf16.mxu0 %v3213
        %4977 = vmatpush1.bf16.msra.mxu0 %v3212
        %4978 = vmatprep.subr.bf16.mxu0 %v3229
        %4979 = vmatpush1.bf16.msra.mxu0 %v3228
        %4980 = vmatprep.subr.bf16.mxu0 %v3245
        %4981 = vmatpush1.bf16.msra.mxu0 %v3244
        %4982 = vmatprep.subr.bf16.mxu0 %v3261
        %4983 = vmatpush1.bf16.msra.mxu0 %v3260
        %4984 = vmatprep.subr.bf16.mxu0 %v3277
        %4985 = vmatpush1.bf16.msra.mxu0 %v3276
        %4986 = vmatprep.subr.bf16.mxu0 %v3293
        %4987 = vmatpush1.bf16.msra.mxu0 %v3292
        %4988 = vmatprep.subr.bf16.mxu0 %v3309
        %4989 = vmatpush1.bf16.msra.mxu0 %v3308
        %4990 = vmatprep.subr.bf16.mxu0 %v3325
        %4991 = vmatpush1.bf16.msra.mxu0 %v3324
        %4992 = vmatprep.mubr.bf16.mxu0 %v3350
        %4993 = vmatmul.mubr.bf16.gmra.mrb[0].mxu0 %v3349
        %v4994 = vpop.f32.mrb[0].mxu0
        %v4995 = vadd.f32 %v4954, %v4994
        %v4996 = vpop.f32.mrb[0].mxu0
        %v4997 = vadd.f32 %v4956, %v4996
        %v4998 = vpop.f32.mrb[0].mxu0
        %v4999 = vpop.f32.mrb[0].mxu0
        %5000 = vdwg.mxu0
        %v5001 = vadd.f32 %v1385, %v3560
        %v5002 = vadd.f32 %v1386, %v3562
        %v5003 = vadd.f32 %v1387, %v3765
        %v5004 = vadd.f32 %v1388, %v3767
        %v5005 = vadd.f32 %v1389, %v3970
        %v5006 = vadd.f32 %v1390, %v3972
        %v5007 = vadd.f32 %v1391, %v4175
        %v5008 = vadd.f32 %v1392, %v4177
        %v5009 = vadd.f32 %v1393, %v4380
        %v5010 = vadd.f32 %v1394, %v4382
        %v5011 = vadd.f32 %v1395, %v4585
        %v5012 = vadd.f32 %v1396, %v4587
        %v5013 = vadd.f32 %v1397, %v4790
        %v5014 = vadd.f32 %v1398, %v4792
        %v5015 = vadd.f32 %v1399, %v4995
        %v5016 = vadd.f32 %v1400, %v4997
        %5017 = vst [vmem:[#allocation2] sm:$0xff] %v5001
        %5018 = vst [vmem:[#allocation2 + $0x8] sm:$0xff] %v5002
        %5019 = vst [vmem:[#allocation2 + $0x10] sm:$0xff] %v5003
        %5020 = vst [vmem:[#allocation2 + $0x18] sm:$0xff] %v5004
        %5021 = vst [vmem:[#allocation2 + $0x20] sm:$0xff] %v5005
        %5022 = vst [vmem:[#allocation2 + $0x28] sm:$0xff] %v5006
        %5023 = vst [vmem:[#allocation2 + $0x30] sm:$0xff] %v5007
        %5024 = vst [vmem:[#allocation2 + $0x38] sm:$0xff] %v5008
        %5025 = vst [vmem:[#allocation2 + $0x40] sm:$0xff] %v5009
        %5026 = vst [vmem:[#allocation2 + $0x48] sm:$0xff] %v5010
        %5027 = vst [vmem:[#allocation2 + $0x50] sm:$0xff] %v5011
        %5028 = vst [vmem:[#allocation2 + $0x58] sm:$0xff] %v5012
        %5029 = vst [vmem:[#allocation2 + $0x60] sm:$0xff] %v5013
        %5030 = vst [vmem:[#allocation2 + $0x68] sm:$0xff] %v5014
        %5031 = vst [vmem:[#allocation2 + $0x70] sm:$0xff] %v5015
        %5032 = vst [vmem:[#allocation2 + $0x78] sm:$0xff] %v5016
        %p5033 = scmp.eq.s32.totalorder %s101, 1
        // Predicated region
        $region257: #{tpu_custom_call.1} parent=143 // pred_check
          %p5034 = pneg %p5033
        $region258: #{tpu_custom_call.1} parent=143 // pred_check_branch
          %5036 = sbr.rel (%p5034) target = $region260
        $region259: #{tpu_custom_call.1} parent=143 // pred_region
          %v5037 = vld [vmem:[#allocation2] sm:$0xff]
          %v5038 = vld [vmem:[#allocation2 + $0x8] sm:$0xff]
          %v5039 = vld [vmem:[#allocation2 + $0x10] sm:$0xff]
          %v5040 = vld [vmem:[#allocation2 + $0x18] sm:$0xff]
          %v5041 = vld [vmem:[#allocation2 + $0x20] sm:$0xff]
          %v5042 = vld [vmem:[#allocation2 + $0x28] sm:$0xff]
          %v5043 = vld [vmem:[#allocation2 + $0x30] sm:$0xff]
          %v5044 = vld [vmem:[#allocation2 + $0x38] sm:$0xff]
          %v5045 = vld [vmem:[#allocation2 + $0x40] sm:$0xff]
          %v5046 = vld [vmem:[#allocation2 + $0x48] sm:$0xff]
          %v5047 = vld [vmem:[#allocation2 + $0x50] sm:$0xff]
          %v5048 = vld [vmem:[#allocation2 + $0x58] sm:$0xff]
          %v5049 = vld [vmem:[#allocation2 + $0x60] sm:$0xff]
          %v5050 = vld [vmem:[#allocation2 + $0x68] sm:$0xff]
          %v5051 = vld [vmem:[#allocation2 + $0x70] sm:$0xff]
          %v5052 = vld [vmem:[#allocation2 + $0x78] sm:$0xff]
          %v5053 = vld [vmem:[#allocation9] sm:$0xff]
          %v5054 = vld [vmem:[#allocation9 + $0x8] sm:$0xff]
          %v5057 = vlaneseq
          %v5058 = vshrl.u32 %v5057, 7
          %v5059 = vsub.s32 0, %v5058
          %v5060 = vrot.slane %v5053, %v5059
          %v5061 = vlaneseq
          %v5062 = vshrl.u32 %v5061, 7
          %v5063 = vsub.s32 1, %v5062
          %v5064 = vrot.slane %v5053, %v5063
          %v5065 = vlaneseq
          %v5066 = vshrl.u32 %v5065, 7
          %v5067 = vsub.s32 2, %v5066
          %v5068 = vrot.slane %v5053, %v5067
          %v5069 = vlaneseq
          %v5070 = vshrl.u32 %v5069, 7
          %v5071 = vsub.s32 3, %v5070
          %v5072 = vrot.slane %v5053, %v5071
          %v5073 = vlaneseq
          %v5074 = vshrl.u32 %v5073, 7
          %v5075 = vsub.s32 4, %v5074
          %v5076 = vrot.slane %v5053, %v5075
          %v5077 = vlaneseq
          %v5078 = vshrl.u32 %v5077, 7
          %v5079 = vsub.s32 5, %v5078
          %v5080 = vrot.slane %v5053, %v5079
          %v5081 = vlaneseq
          %v5082 = vshrl.u32 %v5081, 7
          %v5083 = vsub.s32 6, %v5082
          %v5084 = vrot.slane %v5053, %v5083
          %v5085 = vlaneseq
          %v5086 = vshrl.u32 %v5085, 7
          %v5087 = vsub.s32 7, %v5086
          %v5088 = vrot.slane %v5053, %v5087
          %v5089 = vlaneseq
          %v5090 = vshrl.u32 %v5089, 7
          %v5091 = vsub.s32 0, %v5090
          %v5092 = vrot.slane %v5054, %v5091
          %v5093 = vlaneseq
          %v5094 = vshrl.u32 %v5093, 7
          %v5095 = vsub.s32 1, %v5094
          %v5096 = vrot.slane %v5054, %v5095
          %v5097 = vlaneseq
          %v5098 = vshrl.u32 %v5097, 7
          %v5099 = vsub.s32 2, %v5098
          %v5100 = vrot.slane %v5054, %v5099
          %v5101 = vlaneseq
          %v5102 = vshrl.u32 %v5101, 7
          %v5103 = vsub.s32 3, %v5102
          %v5104 = vrot.slane %v5054, %v5103
          %v5105 = vlaneseq
          %v5106 = vshrl.u32 %v5105, 7
          %v5107 = vsub.s32 4, %v5106
          %v5108 = vrot.slane %v5054, %v5107
          %v5109 = vlaneseq
          %v5110 = vshrl.u32 %v5109, 7
          %v5111 = vsub.s32 5, %v5110
          %v5112 = vrot.slane %v5054, %v5111
          %v5113 = vlaneseq
          %v5114 = vshrl.u32 %v5113, 7
          %v5115 = vsub.s32 6, %v5114
          %v5116 = vrot.slane %v5054, %v5115
          %v5117 = vlaneseq
          %v5118 = vshrl.u32 %v5117, 7
          %v5119 = vsub.s32 7, %v5118
          %v5120 = vrot.slane %v5054, %v5119
          %v5137 = vmul.f32 %v5037, %v5060
          %v5138 = vmul.f32 %v5038, %v5064
          %v5139 = vmul.f32 %v5039, %v5068
          %v5140 = vmul.f32 %v5040, %v5072
          %v5141 = vmul.f32 %v5041, %v5076
          %v5142 = vmul.f32 %v5042, %v5080
          %v5143 = vmul.f32 %v5043, %v5084
          %v5144 = vmul.f32 %v5044, %v5088
          %v5145 = vmul.f32 %v5045, %v5092
          %v5146 = vmul.f32 %v5046, %v5096
          %v5147 = vmul.f32 %v5047, %v5100
          %v5148 = vmul.f32 %v5048, %v5104
          %v5149 = vmul.f32 %v5049, %v5108
          %v5150 = vmul.f32 %v5050, %v5112
          %v5151 = vmul.f32 %v5051, %v5116
          %v5152 = vmul.f32 %v5052, %v5120
          %v5153 = vld [vmem:[#allocation10] sm:$0xff]
          %v5154 = vld [vmem:[#allocation10 + $0x8] sm:$0xff]
          %v5157 = vlaneseq
          %v5158 = vshrl.u32 %v5157, 7
          %v5159 = vsub.s32 0, %v5158
          %v5160 = vrot.slane %v5153, %v5159
          %v5161 = vlaneseq
          %v5162 = vshrl.u32 %v5161, 7
          %v5163 = vsub.s32 1, %v5162
          %v5164 = vrot.slane %v5153, %v5163
          %v5165 = vlaneseq
          %v5166 = vshrl.u32 %v5165, 7
          %v5167 = vsub.s32 2, %v5166
          %v5168 = vrot.slane %v5153, %v5167
          %v5169 = vlaneseq
          %v5170 = vshrl.u32 %v5169, 7
          %v5171 = vsub.s32 3, %v5170
          %v5172 = vrot.slane %v5153, %v5171
          %v5173 = vlaneseq
          %v5174 = vshrl.u32 %v5173, 7
          %v5175 = vsub.s32 4, %v5174
          %v5176 = vrot.slane %v5153, %v5175
          %v5177 = vlaneseq
          %v5178 = vshrl.u32 %v5177, 7
          %v5179 = vsub.s32 5, %v5178
          %v5180 = vrot.slane %v5153, %v5179
          %v5181 = vlaneseq
          %v5182 = vshrl.u32 %v5181, 7
          %v5183 = vsub.s32 6, %v5182
          %v5184 = vrot.slane %v5153, %v5183
          %v5185 = vlaneseq
          %v5186 = vshrl.u32 %v5185, 7
          %v5187 = vsub.s32 7, %v5186
          %v5188 = vrot.slane %v5153, %v5187
          %v5189 = vlaneseq
          %v5190 = vshrl.u32 %v5189, 7
          %v5191 = vsub.s32 0, %v5190
          %v5192 = vrot.slane %v5154, %v5191
          %v5193 = vlaneseq
          %v5194 = vshrl.u32 %v5193, 7
          %v5195 = vsub.s32 1, %v5194
          %v5196 = vrot.slane %v5154, %v5195
          %v5197 = vlaneseq
          %v5198 = vshrl.u32 %v5197, 7
          %v5199 = vsub.s32 2, %v5198
          %v5200 = vrot.slane %v5154, %v5199
          %v5201 = vlaneseq
          %v5202 = vshrl.u32 %v5201, 7
          %v5203 = vsub.s32 3, %v5202
          %v5204 = vrot.slane %v5154, %v5203
          %v5205 = vlaneseq
          %v5206 = vshrl.u32 %v5205, 7
          %v5207 = vsub.s32 4, %v5206
          %v5208 = vrot.slane %v5154, %v5207
          %v5209 = vlaneseq
          %v5210 = vshrl.u32 %v5209, 7
          %v5211 = vsub.s32 5, %v5210
          %v5212 = vrot.slane %v5154, %v5211
          %v5213 = vlaneseq
          %v5214 = vshrl.u32 %v5213, 7
          %v5215 = vsub.s32 6, %v5214
          %v5216 = vrot.slane %v5154, %v5215
          %v5217 = vlaneseq
          %v5218 = vshrl.u32 %v5217, 7
          %v5219 = vsub.s32 7, %v5218
          %v5220 = vrot.slane %v5154, %v5219
          %v5237 = vadd.f32 %v5137, %v5160
          %v5238 = vadd.f32 %v5138, %v5164
          %v5239 = vadd.f32 %v5139, %v5168
          %v5240 = vadd.f32 %v5140, %v5172
          %v5241 = vadd.f32 %v5141, %v5176
          %v5242 = vadd.f32 %v5142, %v5180
          %v5243 = vadd.f32 %v5143, %v5184
          %v5244 = vadd.f32 %v5144, %v5188
          %v5245 = vadd.f32 %v5145, %v5192
          %v5246 = vadd.f32 %v5146, %v5196
          %v5247 = vadd.f32 %v5147, %v5200
          %v5248 = vadd.f32 %v5148, %v5204
          %v5249 = vadd.f32 %v5149, %v5208
          %v5250 = vadd.f32 %v5150, %v5212
          %v5251 = vadd.f32 %v5151, %v5216
          %v5252 = vadd.f32 %v5152, %v5220
          %v5253 = vmax.f32 %v5237, 0.0
          %v5254 = vmax.f32 %v5238, 0.0
          %v5255 = vmax.f32 %v5239, 0.0
          %v5256 = vmax.f32 %v5240, 0.0
          %v5257 = vmax.f32 %v5241, 0.0
          %v5258 = vmax.f32 %v5242, 0.0
          %v5259 = vmax.f32 %v5243, 0.0
          %v5260 = vmax.f32 %v5244, 0.0
          %v5261 = vmax.f32 %v5245, 0.0
          %v5262 = vmax.f32 %v5246, 0.0
          %v5263 = vmax.f32 %v5247, 0.0
          %v5264 = vmax.f32 %v5248, 0.0
          %v5265 = vmax.f32 %v5249, 0.0
          %v5266 = vmax.f32 %v5250, 0.0
          %v5267 = vmax.f32 %v5251, 0.0
          %v5268 = vmax.f32 %v5252, 0.0
          %v5269 = vpack.c.bf16 %v5253, %v5253
          %v5270 = vpack.c.bf16 %v5254, %v5254
          %v5271 = vpack.c.bf16 %v5255, %v5255
          %v5272 = vpack.c.bf16 %v5256, %v5256
          %v5273 = vpack.c.bf16 %v5257, %v5257
          %v5274 = vpack.c.bf16 %v5258, %v5258
          %v5275 = vpack.c.bf16 %v5259, %v5259
          %v5276 = vpack.c.bf16 %v5260, %v5260
          %v5277 = vpack.c.bf16 %v5261, %v5261
          %v5278 = vpack.c.bf16 %v5262, %v5262
          %v5279 = vpack.c.bf16 %v5263, %v5263
          %v5280 = vpack.c.bf16 %v5264, %v5264
          %v5281 = vpack.c.bf16 %v5265, %v5265
          %v5282 = vpack.c.bf16 %v5266, %v5266
          %v5283 = vpack.c.bf16 %v5267, %v5267
          %v5284 = vpack.c.bf16 %v5268, %v5268
          %v5285 = vld [vmem:[#allocation12] sm:$0xff]
          %v5286 = vld [vmem:[#allocation12 + $0x8] sm:$0xff]
          %v5287 = vld [vmem:[#allocation12 + $0x10] sm:$0xff]
          %v5288 = vld [vmem:[#allocation12 + $0x18] sm:$0xff]
          %v5289 = vld [vmem:[#allocation12 + $0x20] sm:$0xff]
          %v5290 = vld [vmem:[#allocation12 + $0x28] sm:$0xff]
          %v5291 = vld [vmem:[#allocation12 + $0x30] sm:$0xff]
          %v5292 = vld [vmem:[#allocation12 + $0x38] sm:$0xff]
          %v5293 = vld [vmem:[#allocation12 + $0x40] sm:$0xff]
          %v5294 = vld [vmem:[#allocation12 + $0x48] sm:$0xff]
          %v5295 = vld [vmem:[#allocation12 + $0x50] sm:$0xff]
          %v5296 = vld [vmem:[#allocation12 + $0x58] sm:$0xff]
          %v5297 = vld [vmem:[#allocation12 + $0x60] sm:$0xff]
          %v5298 = vld [vmem:[#allocation12 + $0x68] sm:$0xff]
          %v5299 = vld [vmem:[#allocation12 + $0x70] sm:$0xff]
          %v5300 = vld [vmem:[#allocation12 + $0x78] sm:$0xff]
          %v5301 = vld [vmem:[#allocation12 + $0x80] sm:$0xff]
          %v5302 = vld [vmem:[#allocation12 + $0x88] sm:$0xff]
          %v5303 = vld [vmem:[#allocation12 + $0x90] sm:$0xff]
          %v5304 = vld [vmem:[#allocation12 + $0x98] sm:$0xff]
          %v5305 = vld [vmem:[#allocation12 + $0xa0] sm:$0xff]
          %v5306 = vld [vmem:[#allocation12 + $0xa8] sm:$0xff]
          %v5307 = vld [vmem:[#allocation12 + $0xb0] sm:$0xff]
          %v5308 = vld [vmem:[#allocation12 + $0xb8] sm:$0xff]
          %v5309 = vld [vmem:[#allocation12 + $0xc0] sm:$0xff]
          %v5310 = vld [vmem:[#allocation12 + $0xc8] sm:$0xff]
          %v5311 = vld [vmem:[#allocation12 + $0xd0] sm:$0xff]
          %v5312 = vld [vmem:[#allocation12 + $0xd8] sm:$0xff]
          %v5313 = vld [vmem:[#allocation12 + $0xe0] sm:$0xff]
          %v5314 = vld [vmem:[#allocation12 + $0xe8] sm:$0xff]
          %v5315 = vld [vmem:[#allocation12 + $0xf0] sm:$0xff]
          %v5316 = vld [vmem:[#allocation12 + $0xf8] sm:$0xff]
          %v5317 = vld [vmem:[#allocation12 + $0x100] sm:$0xff]
          %v5318 = vld [vmem:[#allocation12 + $0x108] sm:$0xff]
          %v5319 = vld [vmem:[#allocation12 + $0x110] sm:$0xff]
          %v5320 = vld [vmem:[#allocation12 + $0x118] sm:$0xff]
          %v5321 = vld [vmem:[#allocation12 + $0x120] sm:$0xff]
          %v5322 = vld [vmem:[#allocation12 + $0x128] sm:$0xff]
          %v5323 = vld [vmem:[#allocation12 + $0x130] sm:$0xff]
          %v5324 = vld [vmem:[#allocation12 + $0x138] sm:$0xff]
          %v5325 = vld [vmem:[#allocation12 + $0x140] sm:$0xff]
          %v5326 = vld [vmem:[#allocation12 + $0x148] sm:$0xff]
          %v5327 = vld [vmem:[#allocation12 + $0x150] sm:$0xff]
          %v5328 = vld [vmem:[#allocation12 + $0x158] sm:$0xff]
          %v5329 = vld [vmem:[#allocation12 + $0x160] sm:$0xff]
          %v5330 = vld [vmem:[#allocation12 + $0x168] sm:$0xff]
          %v5331 = vld [vmem:[#allocation12 + $0x170] sm:$0xff]
          %v5332 = vld [vmem:[#allocation12 + $0x178] sm:$0xff]
          %v5333 = vld [vmem:[#allocation12 + $0x180] sm:$0xff]
          %v5334 = vld [vmem:[#allocation12 + $0x188] sm:$0xff]
          %v5335 = vld [vmem:[#allocation12 + $0x190] sm:$0xff]
          %v5336 = vld [vmem:[#allocation12 + $0x198] sm:$0xff]
          %v5337 = vld [vmem:[#allocation12 + $0x1a0] sm:$0xff]
          %v5338 = vld [vmem:[#allocation12 + $0x1a8] sm:$0xff]
          %v5339 = vld [vmem:[#allocation12 + $0x1b0] sm:$0xff]
          %v5340 = vld [vmem:[#allocation12 + $0x1b8] sm:$0xff]
          %v5341 = vld [vmem:[#allocation12 + $0x1c0] sm:$0xff]
          %v5342 = vld [vmem:[#allocation12 + $0x1c8] sm:$0xff]
          %v5343 = vld [vmem:[#allocation12 + $0x1d0] sm:$0xff]
          %v5344 = vld [vmem:[#allocation12 + $0x1d8] sm:$0xff]
          %v5345 = vld [vmem:[#allocation12 + $0x1e0] sm:$0xff]
          %v5346 = vld [vmem:[#allocation12 + $0x1e8] sm:$0xff]
          %v5347 = vld [vmem:[#allocation12 + $0x1f0] sm:$0xff]
          %v5348 = vld [vmem:[#allocation12 + $0x1f8] sm:$0xff]
          %v5349 = vld [vmem:[#allocation12 + $0x200] sm:$0xff]
          %v5350 = vld [vmem:[#allocation12 + $0x208] sm:$0xff]
          %v5351 = vld [vmem:[#allocation12 + $0x210] sm:$0xff]
          %v5352 = vld [vmem:[#allocation12 + $0x218] sm:$0xff]
          %v5353 = vld [vmem:[#allocation12 + $0x220] sm:$0xff]
          %v5354 = vld [vmem:[#allocation12 + $0x228] sm:$0xff]
          %v5355 = vld [vmem:[#allocation12 + $0x230] sm:$0xff]
          %v5356 = vld [vmem:[#allocation12 + $0x238] sm:$0xff]
          %v5357 = vld [vmem:[#allocation12 + $0x240] sm:$0xff]
          %v5358 = vld [vmem:[#allocation12 + $0x248] sm:$0xff]
          %v5359 = vld [vmem:[#allocation12 + $0x250] sm:$0xff]
          %v5360 = vld [vmem:[#allocation12 + $0x258] sm:$0xff]
          %v5361 = vld [vmem:[#allocation12 + $0x260] sm:$0xff]
          %v5362 = vld [vmem:[#allocation12 + $0x268] sm:$0xff]
          %v5363 = vld [vmem:[#allocation12 + $0x270] sm:$0xff]
          %v5364 = vld [vmem:[#allocation12 + $0x278] sm:$0xff]
          %v5365 = vld [vmem:[#allocation12 + $0x280] sm:$0xff]
          %v5366 = vld [vmem:[#allocation12 + $0x288] sm:$0xff]
          %v5367 = vld [vmem:[#allocation12 + $0x290] sm:$0xff]
          %v5368 = vld [vmem:[#allocation12 + $0x298] sm:$0xff]
          %v5369 = vld [vmem:[#allocation12 + $0x2a0] sm:$0xff]
          %v5370 = vld [vmem:[#allocation12 + $0x2a8] sm:$0xff]
          %v5371 = vld [vmem:[#allocation12 + $0x2b0] sm:$0xff]
          %v5372 = vld [vmem:[#allocation12 + $0x2b8] sm:$0xff]
          %v5373 = vld [vmem:[#allocation12 + $0x2c0] sm:$0xff]
          %v5374 = vld [vmem:[#allocation12 + $0x2c8] sm:$0xff]
          %v5375 = vld [vmem:[#allocation12 + $0x2d0] sm:$0xff]
          %v5376 = vld [vmem:[#allocation12 + $0x2d8] sm:$0xff]
          %v5377 = vld [vmem:[#allocation12 + $0x2e0] sm:$0xff]
          %v5378 = vld [vmem:[#allocation12 + $0x2e8] sm:$0xff]
          %v5379 = vld [vmem:[#allocation12 + $0x2f0] sm:$0xff]
          %v5380 = vld [vmem:[#allocation12 + $0x2f8] sm:$0xff]
          %v5381 = vld [vmem:[#allocation12 + $0x300] sm:$0xff]
          %v5382 = vld [vmem:[#allocation12 + $0x308] sm:$0xff]
          %v5383 = vld [vmem:[#allocation12 + $0x310] sm:$0xff]
          %v5384 = vld [vmem:[#allocation12 + $0x318] sm:$0xff]
          %v5385 = vld [vmem:[#allocation12 + $0x320] sm:$0xff]
          %v5386 = vld [vmem:[#allocation12 + $0x328] sm:$0xff]
          %v5387 = vld [vmem:[#allocation12 + $0x330] sm:$0xff]
          %v5388 = vld [vmem:[#allocation12 + $0x338] sm:$0xff]
          %v5389 = vld [vmem:[#allocation12 + $0x340] sm:$0xff]
          %v5390 = vld [vmem:[#allocation12 + $0x348] sm:$0xff]
          %v5391 = vld [vmem:[#allocation12 + $0x350] sm:$0xff]
          %v5392 = vld [vmem:[#allocation12 + $0x358] sm:$0xff]
          %v5393 = vld [vmem:[#allocation12 + $0x360] sm:$0xff]
          %v5394 = vld [vmem:[#allocation12 + $0x368] sm:$0xff]
          %v5395 = vld [vmem:[#allocation12 + $0x370] sm:$0xff]
          %v5396 = vld [vmem:[#allocation12 + $0x378] sm:$0xff]
          %v5397 = vld [vmem:[#allocation12 + $0x380] sm:$0xff]
          %v5398 = vld [vmem:[#allocation12 + $0x388] sm:$0xff]
          %v5399 = vld [vmem:[#allocation12 + $0x390] sm:$0xff]
          %v5400 = vld [vmem:[#allocation12 + $0x398] sm:$0xff]
          %v5401 = vld [vmem:[#allocation12 + $0x3a0] sm:$0xff]
          %v5402 = vld [vmem:[#allocation12 + $0x3a8] sm:$0xff]
          %v5403 = vld [vmem:[#allocation12 + $0x3b0] sm:$0xff]
          %v5404 = vld [vmem:[#allocation12 + $0x3b8] sm:$0xff]
          %v5405 = vld [vmem:[#allocation12 + $0x3c0] sm:$0xff]
          %v5406 = vld [vmem:[#allocation12 + $0x3c8] sm:$0xff]
          %v5407 = vld [vmem:[#allocation12 + $0x3d0] sm:$0xff]
          %v5408 = vld [vmem:[#allocation12 + $0x3d8] sm:$0xff]
          %v5409 = vld [vmem:[#allocation12 + $0x3e0] sm:$0xff]
          %v5410 = vld [vmem:[#allocation12 + $0x3e8] sm:$0xff]
          %v5411 = vld [vmem:[#allocation12 + $0x3f0] sm:$0xff]
          %v5412 = vld [vmem:[#allocation12 + $0x3f8] sm:$0xff]
          %v5413 = vld [vmem:[#allocation12 + $0x400] sm:$0xff]
          %v5414 = vld [vmem:[#allocation12 + $0x408] sm:$0xff]
          %v5415 = vld [vmem:[#allocation12 + $0x410] sm:$0xff]
          %v5416 = vld [vmem:[#allocation12 + $0x418] sm:$0xff]
          %v5417 = vld [vmem:[#allocation12 + $0x420] sm:$0xff]
          %v5418 = vld [vmem:[#allocation12 + $0x428] sm:$0xff]
          %v5419 = vld [vmem:[#allocation12 + $0x430] sm:$0xff]
          %v5420 = vld [vmem:[#allocation12 + $0x438] sm:$0xff]
          %v5421 = vld [vmem:[#allocation12 + $0x440] sm:$0xff]
          %v5422 = vld [vmem:[#allocation12 + $0x448] sm:$0xff]
          %v5423 = vld [vmem:[#allocation12 + $0x450] sm:$0xff]
          %v5424 = vld [vmem:[#allocation12 + $0x458] sm:$0xff]
          %v5425 = vld [vmem:[#allocation12 + $0x460] sm:$0xff]
          %v5426 = vld [vmem:[#allocation12 + $0x468] sm:$0xff]
          %v5427 = vld [vmem:[#allocation12 + $0x470] sm:$0xff]
          %v5428 = vld [vmem:[#allocation12 + $0x478] sm:$0xff]
          %v5429 = vld [vmem:[#allocation12 + $0x480] sm:$0xff]
          %v5430 = vld [vmem:[#allocation12 + $0x488] sm:$0xff]
          %v5431 = vld [vmem:[#allocation12 + $0x490] sm:$0xff]
          %v5432 = vld [vmem:[#allocation12 + $0x498] sm:$0xff]
          %v5433 = vld [vmem:[#allocation12 + $0x4a0] sm:$0xff]
          %v5434 = vld [vmem:[#allocation12 + $0x4a8] sm:$0xff]
          %v5435 = vld [vmem:[#allocation12 + $0x4b0] sm:$0xff]
          %v5436 = vld [vmem:[#allocation12 + $0x4b8] sm:$0xff]
          %v5437 = vld [vmem:[#allocation12 + $0x4c0] sm:$0xff]
          %v5438 = vld [vmem:[#allocation12 + $0x4c8] sm:$0xff]
          %v5439 = vld [vmem:[#allocation12 + $0x4d0] sm:$0xff]
          %v5440 = vld [vmem:[#allocation12 + $0x4d8] sm:$0xff]
          %v5441 = vld [vmem:[#allocation12 + $0x4e0] sm:$0xff]
          %v5442 = vld [vmem:[#allocation12 + $0x4e8] sm:$0xff]
          %v5443 = vld [vmem:[#allocation12 + $0x4f0] sm:$0xff]
          %v5444 = vld [vmem:[#allocation12 + $0x4f8] sm:$0xff]
          %v5445 = vld [vmem:[#allocation12 + $0x500] sm:$0xff]
          %v5446 = vld [vmem:[#allocation12 + $0x508] sm:$0xff]
          %v5447 = vld [vmem:[#allocation12 + $0x510] sm:$0xff]
          %v5448 = vld [vmem:[#allocation12 + $0x518] sm:$0xff]
          %v5449 = vld [vmem:[#allocation12 + $0x520] sm:$0xff]
          %v5450 = vld [vmem:[#allocation12 + $0x528] sm:$0xff]
          %v5451 = vld [vmem:[#allocation12 + $0x530] sm:$0xff]
          %v5452 = vld [vmem:[#allocation12 + $0x538] sm:$0xff]
          %v5453 = vld [vmem:[#allocation12 + $0x540] sm:$0xff]
          %v5454 = vld [vmem:[#allocation12 + $0x548] sm:$0xff]
          %v5455 = vld [vmem:[#allocation12 + $0x550] sm:$0xff]
          %v5456 = vld [vmem:[#allocation12 + $0x558] sm:$0xff]
          %v5457 = vld [vmem:[#allocation12 + $0x560] sm:$0xff]
          %v5458 = vld [vmem:[#allocation12 + $0x568] sm:$0xff]
          %v5459 = vld [vmem:[#allocation12 + $0x570] sm:$0xff]
          %v5460 = vld [vmem:[#allocation12 + $0x578] sm:$0xff]
          %v5461 = vld [vmem:[#allocation12 + $0x580] sm:$0xff]
          %v5462 = vld [vmem:[#allocation12 + $0x588] sm:$0xff]
          %v5463 = vld [vmem:[#allocation12 + $0x590] sm:$0xff]
          %v5464 = vld [vmem:[#allocation12 + $0x598] sm:$0xff]
          %v5465 = vld [vmem:[#allocation12 + $0x5a0] sm:$0xff]
          %v5466 = vld [vmem:[#allocation12 + $0x5a8] sm:$0xff]
          %v5467 = vld [vmem:[#allocation12 + $0x5b0] sm:$0xff]
          %v5468 = vld [vmem:[#allocation12 + $0x5b8] sm:$0xff]
          %v5469 = vld [vmem:[#allocation12 + $0x5c0] sm:$0xff]
          %v5470 = vld [vmem:[#allocation12 + $0x5c8] sm:$0xff]
          %v5471 = vld [vmem:[#allocation12 + $0x5d0] sm:$0xff]
          %v5472 = vld [vmem:[#allocation12 + $0x5d8] sm:$0xff]
          %v5473 = vld [vmem:[#allocation12 + $0x5e0] sm:$0xff]
          %v5474 = vld [vmem:[#allocation12 + $0x5e8] sm:$0xff]
          %v5475 = vld [vmem:[#allocation12 + $0x5f0] sm:$0xff]
          %v5476 = vld [vmem:[#allocation12 + $0x5f8] sm:$0xff]
          %v5477 = vld [vmem:[#allocation12 + $0x600] sm:$0xff]
          %v5478 = vld [vmem:[#allocation12 + $0x608] sm:$0xff]
          %v5479 = vld [vmem:[#allocation12 + $0x610] sm:$0xff]
          %v5480 = vld [vmem:[#allocation12 + $0x618] sm:$0xff]
          %v5481 = vld [vmem:[#allocation12 + $0x620] sm:$0xff]
          %v5482 = vld [vmem:[#allocation12 + $0x628] sm:$0xff]
          %v5483 = vld [vmem:[#allocation12 + $0x630] sm:$0xff]
          %v5484 = vld [vmem:[#allocation12 + $0x638] sm:$0xff]
          %v5485 = vld [vmem:[#allocation12 + $0x640] sm:$0xff]
          %v5486 = vld [vmem:[#allocation12 + $0x648] sm:$0xff]
          %v5487 = vld [vmem:[#allocation12 + $0x650] sm:$0xff]
          %v5488 = vld [vmem:[#allocation12 + $0x658] sm:$0xff]
          %v5489 = vld [vmem:[#allocation12 + $0x660] sm:$0xff]
          %v5490 = vld [vmem:[#allocation12 + $0x668] sm:$0xff]
          %v5491 = vld [vmem:[#allocation12 + $0x670] sm:$0xff]
          %v5492 = vld [vmem:[#allocation12 + $0x678] sm:$0xff]
          %v5493 = vld [vmem:[#allocation12 + $0x680] sm:$0xff]
          %v5494 = vld [vmem:[#allocation12 + $0x688] sm:$0xff]
          %v5495 = vld [vmem:[#allocation12 + $0x690] sm:$0xff]
          %v5496 = vld [vmem:[#allocation12 + $0x698] sm:$0xff]
          %v5497 = vld [vmem:[#allocation12 + $0x6a0] sm:$0xff]
          %v5498 = vld [vmem:[#allocation12 + $0x6a8] sm:$0xff]
          %v5499 = vld [vmem:[#allocation12 + $0x6b0] sm:$0xff]
          %v5500 = vld [vmem:[#allocation12 + $0x6b8] sm:$0xff]
          %v5501 = vld [vmem:[#allocation12 + $0x6c0] sm:$0xff]
          %v5502 = vld [vmem:[#allocation12 + $0x6c8] sm:$0xff]
          %v5503 = vld [vmem:[#allocation12 + $0x6d0] sm:$0xff]
          %v5504 = vld [vmem:[#allocation12 + $0x6d8] sm:$0xff]
          %v5505 = vld [vmem:[#allocation12 + $0x6e0] sm:$0xff]
          %v5506 = vld [vmem:[#allocation12 + $0x6e8] sm:$0xff]
          %v5507 = vld [vmem:[#allocation12 + $0x6f0] sm:$0xff]
          %v5508 = vld [vmem:[#allocation12 + $0x6f8] sm:$0xff]
          %v5509 = vld [vmem:[#allocation12 + $0x700] sm:$0xff]
          %v5510 = vld [vmem:[#allocation12 + $0x708] sm:$0xff]
          %v5511 = vld [vmem:[#allocation12 + $0x710] sm:$0xff]
          %v5512 = vld [vmem:[#allocation12 + $0x718] sm:$0xff]
          %v5513 = vld [vmem:[#allocation12 + $0x720] sm:$0xff]
          %v5514 = vld [vmem:[#allocation12 + $0x728] sm:$0xff]
          %v5515 = vld [vmem:[#allocation12 + $0x730] sm:$0xff]
          %v5516 = vld [vmem:[#allocation12 + $0x738] sm:$0xff]
          %v5517 = vld [vmem:[#allocation12 + $0x740] sm:$0xff]
          %v5518 = vld [vmem:[#allocation12 + $0x748] sm:$0xff]
          %v5519 = vld [vmem:[#allocation12 + $0x750] sm:$0xff]
          %v5520 = vld [vmem:[#allocation12 + $0x758] sm:$0xff]
          %v5521 = vld [vmem:[#allocation12 + $0x760] sm:$0xff]
          %v5522 = vld [vmem:[#allocation12 + $0x768] sm:$0xff]
          %v5523 = vld [vmem:[#allocation12 + $0x770] sm:$0xff]
          %v5524 = vld [vmem:[#allocation12 + $0x778] sm:$0xff]
          %v5525 = vld [vmem:[#allocation12 + $0x780] sm:$0xff]
          %v5526 = vld [vmem:[#allocation12 + $0x788] sm:$0xff]
          %v5527 = vld [vmem:[#allocation12 + $0x790] sm:$0xff]
          %v5528 = vld [vmem:[#allocation12 + $0x798] sm:$0xff]
          %v5529 = vld [vmem:[#allocation12 + $0x7a0] sm:$0xff]
          %v5530 = vld [vmem:[#allocation12 + $0x7a8] sm:$0xff]
          %v5531 = vld [vmem:[#allocation12 + $0x7b0] sm:$0xff]
          %v5532 = vld [vmem:[#allocation12 + $0x7b8] sm:$0xff]
          %v5533 = vld [vmem:[#allocation12 + $0x7c0] sm:$0xff]
          %v5534 = vld [vmem:[#allocation12 + $0x7c8] sm:$0xff]
          %v5535 = vld [vmem:[#allocation12 + $0x7d0] sm:$0xff]
          %v5536 = vld [vmem:[#allocation12 + $0x7d8] sm:$0xff]
          %v5537 = vld [vmem:[#allocation12 + $0x7e0] sm:$0xff]
          %v5538 = vld [vmem:[#allocation12 + $0x7e8] sm:$0xff]
          %v5539 = vld [vmem:[#allocation12 + $0x7f0] sm:$0xff]
          %v5540 = vld [vmem:[#allocation12 + $0x7f8] sm:$0xff]
          %v5541 = vunpack.c.l.s8.bf16 %v5285
          %v5542 = vunpack.c.l.s8.bf16 %v5286
          %v5543 = vunpack.c.l.s8.bf16 %v5287
          %v5544 = vunpack.c.l.s8.bf16 %v5288
          %v5545 = vunpack.c.h.s8.bf16 %v5285
          %v5546 = vunpack.c.h.s8.bf16 %v5286
          %v5547 = vunpack.c.h.s8.bf16 %v5287
          %v5548 = vunpack.c.h.s8.bf16 %v5288
          %v5549 = vunpack.c.l.s8.bf16 %v5289
          %v5550 = vunpack.c.l.s8.bf16 %v5290
          %v5551 = vunpack.c.l.s8.bf16 %v5291
          %v5552 = vunpack.c.l.s8.bf16 %v5292
          %v5553 = vunpack.c.h.s8.bf16 %v5289
          %v5554 = vunpack.c.h.s8.bf16 %v5290
          %v5555 = vunpack.c.h.s8.bf16 %v5291
          %v5556 = vunpack.c.h.s8.bf16 %v5292
          %v5557 = vunpack.c.l.s8.bf16 %v5293
          %v5558 = vunpack.c.l.s8.bf16 %v5294
          %v5559 = vunpack.c.l.s8.bf16 %v5295
          %v5560 = vunpack.c.l.s8.bf16 %v5296
          %v5561 = vunpack.c.h.s8.bf16 %v5293
          %v5562 = vunpack.c.h.s8.bf16 %v5294
          %v5563 = vunpack.c.h.s8.bf16 %v5295
          %v5564 = vunpack.c.h.s8.bf16 %v5296
          %v5565 = vunpack.c.l.s8.bf16 %v5297
          %v5566 = vunpack.c.l.s8.bf16 %v5298
          %v5567 = vunpack.c.l.s8.bf16 %v5299
          %v5568 = vunpack.c.l.s8.bf16 %v5300
          %v5569 = vunpack.c.h.s8.bf16 %v5297
          %v5570 = vunpack.c.h.s8.bf16 %v5298
          %v5571 = vunpack.c.h.s8.bf16 %v5299
          %v5572 = vunpack.c.h.s8.bf16 %v5300
          %v5573 = vunpack.c.l.s8.bf16 %v5301
          %v5574 = vunpack.c.l.s8.bf16 %v5302
          %v5575 = vunpack.c.l.s8.bf16 %v5303
          %v5576 = vunpack.c.l.s8.bf16 %v5304
          %v5577 = vunpack.c.h.s8.bf16 %v5301
          %v5578 = vunpack.c.h.s8.bf16 %v5302
          %v5579 = vunpack.c.h.s8.bf16 %v5303
          %v5580 = vunpack.c.h.s8.bf16 %v5304
          %v5581 = vunpack.c.l.s8.bf16 %v5305
          %v5582 = vunpack.c.l.s8.bf16 %v5306
          %v5583 = vunpack.c.l.s8.bf16 %v5307
          %v5584 = vunpack.c.l.s8.bf16 %v5308
          %v5585 = vunpack.c.h.s8.bf16 %v5305
          %v5586 = vunpack.c.h.s8.bf16 %v5306
          %v5587 = vunpack.c.h.s8.bf16 %v5307
          %v5588 = vunpack.c.h.s8.bf16 %v5308
          %v5589 = vunpack.c.l.s8.bf16 %v5309
          %v5590 = vunpack.c.l.s8.bf16 %v5310
          %v5591 = vunpack.c.l.s8.bf16 %v5311
          %v5592 = vunpack.c.l.s8.bf16 %v5312
          %v5593 = vunpack.c.h.s8.bf16 %v5309
          %v5594 = vunpack.c.h.s8.bf16 %v5310
          %v5595 = vunpack.c.h.s8.bf16 %v5311
          %v5596 = vunpack.c.h.s8.bf16 %v5312
          %v5597 = vunpack.c.l.s8.bf16 %v5313
          %v5598 = vunpack.c.l.s8.bf16 %v5314
          %v5599 = vunpack.c.l.s8.bf16 %v5315
          %v5600 = vunpack.c.l.s8.bf16 %v5316
          %v5601 = vunpack.c.h.s8.bf16 %v5313
          %v5602 = vunpack.c.h.s8.bf16 %v5314
          %v5603 = vunpack.c.h.s8.bf16 %v5315
          %v5604 = vunpack.c.h.s8.bf16 %v5316
          %v5605 = vunpack.c.l.s8.bf16 %v5317
          %v5606 = vunpack.c.l.s8.bf16 %v5318
          %v5607 = vunpack.c.l.s8.bf16 %v5319
          %v5608 = vunpack.c.l.s8.bf16 %v5320
          %v5609 = vunpack.c.h.s8.bf16 %v5317
          %v5610 = vunpack.c.h.s8.bf16 %v5318
          %v5611 = vunpack.c.h.s8.bf16 %v5319
          %v5612 = vunpack.c.h.s8.bf16 %v5320
          %v5613 = vunpack.c.l.s8.bf16 %v5321
          %v5614 = vunpack.c.l.s8.bf16 %v5322
          %v5615 = vunpack.c.l.s8.bf16 %v5323
          %v5616 = vunpack.c.l.s8.bf16 %v5324
          %v5617 = vunpack.c.h.s8.bf16 %v5321
          %v5618 = vunpack.c.h.s8.bf16 %v5322
          %v5619 = vunpack.c.h.s8.bf16 %v5323
          %v5620 = vunpack.c.h.s8.bf16 %v5324
          %v5621 = vunpack.c.l.s8.bf16 %v5325
          %v5622 = vunpack.c.l.s8.bf16 %v5326
          %v5623 = vunpack.c.l.s8.bf16 %v5327
          %v5624 = vunpack.c.l.s8.bf16 %v5328
          %v5625 = vunpack.c.h.s8.bf16 %v5325
          %v5626 = vunpack.c.h.s8.bf16 %v5326
          %v5627 = vunpack.c.h.s8.bf16 %v5327
          %v5628 = vunpack.c.h.s8.bf16 %v5328
          %v5629 = vunpack.c.l.s8.bf16 %v5329
          %v5630 = vunpack.c.l.s8.bf16 %v5330
          %v5631 = vunpack.c.l.s8.bf16 %v5331
          %v5632 = vunpack.c.l.s8.bf16 %v5332
          %v5633 = vunpack.c.h.s8.bf16 %v5329
          %v5634 = vunpack.c.h.s8.bf16 %v5330
          %v5635 = vunpack.c.h.s8.bf16 %v5331
          %v5636 = vunpack.c.h.s8.bf16 %v5332
          %v5637 = vunpack.c.l.s8.bf16 %v5333
          %v5638 = vunpack.c.l.s8.bf16 %v5334
          %v5639 = vunpack.c.l.s8.bf16 %v5335
          %v5640 = vunpack.c.l.s8.bf16 %v5336
          %v5641 = vunpack.c.h.s8.bf16 %v5333
          %v5642 = vunpack.c.h.s8.bf16 %v5334
          %v5643 = vunpack.c.h.s8.bf16 %v5335
          %v5644 = vunpack.c.h.s8.bf16 %v5336
          %v5645 = vunpack.c.l.s8.bf16 %v5337
          %v5646 = vunpack.c.l.s8.bf16 %v5338
          %v5647 = vunpack.c.l.s8.bf16 %v5339
          %v5648 = vunpack.c.l.s8.bf16 %v5340
          %v5649 = vunpack.c.h.s8.bf16 %v5337
          %v5650 = vunpack.c.h.s8.bf16 %v5338
          %v5651 = vunpack.c.h.s8.bf16 %v5339
          %v5652 = vunpack.c.h.s8.bf16 %v5340
          %v5653 = vunpack.c.l.s8.bf16 %v5341
          %v5654 = vunpack.c.l.s8.bf16 %v5342
          %v5655 = vunpack.c.l.s8.bf16 %v5343
          %v5656 = vunpack.c.l.s8.bf16 %v5344
          %v5657 = vunpack.c.h.s8.bf16 %v5341
          %v5658 = vunpack.c.h.s8.bf16 %v5342
          %v5659 = vunpack.c.h.s8.bf16 %v5343
          %v5660 = vunpack.c.h.s8.bf16 %v5344
          %v5661 = vunpack.c.l.s8.bf16 %v5345
          %v5662 = vunpack.c.l.s8.bf16 %v5346
          %v5663 = vunpack.c.l.s8.bf16 %v5347
          %v5664 = vunpack.c.l.s8.bf16 %v5348
          %v5665 = vunpack.c.h.s8.bf16 %v5345
          %v5666 = vunpack.c.h.s8.bf16 %v5346
          %v5667 = vunpack.c.h.s8.bf16 %v5347
          %v5668 = vunpack.c.h.s8.bf16 %v5348
          %v5669 = vunpack.c.l.s8.bf16 %v5349
          %v5670 = vunpack.c.l.s8.bf16 %v5350
          %v5671 = vunpack.c.l.s8.bf16 %v5351
          %v5672 = vunpack.c.l.s8.bf16 %v5352
          %v5673 = vunpack.c.h.s8.bf16 %v5349
          %v5674 = vunpack.c.h.s8.bf16 %v5350
          %v5675 = vunpack.c.h.s8.bf16 %v5351
          %v5676 = vunpack.c.h.s8.bf16 %v5352
          %v5677 = vunpack.c.l.s8.bf16 %v5353
          %v5678 = vunpack.c.l.s8.bf16 %v5354
          %v5679 = vunpack.c.l.s8.bf16 %v5355
          %v5680 = vunpack.c.l.s8.bf16 %v5356
          %v5681 = vunpack.c.h.s8.bf16 %v5353
          %v5682 = vunpack.c.h.s8.bf16 %v5354
          %v5683 = vunpack.c.h.s8.bf16 %v5355
          %v5684 = vunpack.c.h.s8.bf16 %v5356
          %v5685 = vunpack.c.l.s8.bf16 %v5357
          %v5686 = vunpack.c.l.s8.bf16 %v5358
          %v5687 = vunpack.c.l.s8.bf16 %v5359
          %v5688 = vunpack.c.l.s8.bf16 %v5360
          %v5689 = vunpack.c.h.s8.bf16 %v5357
          %v5690 = vunpack.c.h.s8.bf16 %v5358
          %v5691 = vunpack.c.h.s8.bf16 %v5359
          %v5692 = vunpack.c.h.s8.bf16 %v5360
          %v5693 = vunpack.c.l.s8.bf16 %v5361
          %v5694 = vunpack.c.l.s8.bf16 %v5362
          %v5695 = vunpack.c.l.s8.bf16 %v5363
          %v5696 = vunpack.c.l.s8.bf16 %v5364
          %v5697 = vunpack.c.h.s8.bf16 %v5361
          %v5698 = vunpack.c.h.s8.bf16 %v5362
          %v5699 = vunpack.c.h.s8.bf16 %v5363
          %v5700 = vunpack.c.h.s8.bf16 %v5364
          %v5701 = vunpack.c.l.s8.bf16 %v5365
          %v5702 = vunpack.c.l.s8.bf16 %v5366
          %v5703 = vunpack.c.l.s8.bf16 %v5367
          %v5704 = vunpack.c.l.s8.bf16 %v5368
          %v5705 = vunpack.c.h.s8.bf16 %v5365
          %v5706 = vunpack.c.h.s8.bf16 %v5366
          %v5707 = vunpack.c.h.s8.bf16 %v5367
          %v5708 = vunpack.c.h.s8.bf16 %v5368
          %v5709 = vunpack.c.l.s8.bf16 %v5369
          %v5710 = vunpack.c.l.s8.bf16 %v5370
          %v5711 = vunpack.c.l.s8.bf16 %v5371
          %v5712 = vunpack.c.l.s8.bf16 %v5372
          %v5713 = vunpack.c.h.s8.bf16 %v5369
          %v5714 = vunpack.c.h.s8.bf16 %v5370
          %v5715 = vunpack.c.h.s8.bf16 %v5371
          %v5716 = vunpack.c.h.s8.bf16 %v5372
          %v5717 = vunpack.c.l.s8.bf16 %v5373
          %v5718 = vunpack.c.l.s8.bf16 %v5374
          %v5719 = vunpack.c.l.s8.bf16 %v5375
          %v5720 = vunpack.c.l.s8.bf16 %v5376
          %v5721 = vunpack.c.h.s8.bf16 %v5373
          %v5722 = vunpack.c.h.s8.bf16 %v5374
          %v5723 = vunpack.c.h.s8.bf16 %v5375
          %v5724 = vunpack.c.h.s8.bf16 %v5376
          %v5725 = vunpack.c.l.s8.bf16 %v5377
          %v5726 = vunpack.c.l.s8.bf16 %v5378
          %v5727 = vunpack.c.l.s8.bf16 %v5379
          %v5728 = vunpack.c.l.s8.bf16 %v5380
          %v5729 = vunpack.c.h.s8.bf16 %v5377
          %v5730 = vunpack.c.h.s8.bf16 %v5378
          %v5731 = vunpack.c.h.s8.bf16 %v5379
          %v5732 = vunpack.c.h.s8.bf16 %v5380
          %v5733 = vunpack.c.l.s8.bf16 %v5381
          %v5734 = vunpack.c.l.s8.bf16 %v5382
          %v5735 = vunpack.c.l.s8.bf16 %v5383
          %v5736 = vunpack.c.l.s8.bf16 %v5384
          %v5737 = vunpack.c.h.s8.bf16 %v5381
          %v5738 = vunpack.c.h.s8.bf16 %v5382
          %v5739 = vunpack.c.h.s8.bf16 %v5383
          %v5740 = vunpack.c.h.s8.bf16 %v5384
          %v5741 = vunpack.c.l.s8.bf16 %v5385
          %v5742 = vunpack.c.l.s8.bf16 %v5386
          %v5743 = vunpack.c.l.s8.bf16 %v5387
          %v5744 = vunpack.c.l.s8.bf16 %v5388
          %v5745 = vunpack.c.h.s8.bf16 %v5385
          %v5746 = vunpack.c.h.s8.bf16 %v5386
          %v5747 = vunpack.c.h.s8.bf16 %v5387
          %v5748 = vunpack.c.h.s8.bf16 %v5388
          %v5749 = vunpack.c.l.s8.bf16 %v5389
          %v5750 = vunpack.c.l.s8.bf16 %v5390
          %v5751 = vunpack.c.l.s8.bf16 %v5391
          %v5752 = vunpack.c.l.s8.bf16 %v5392
          %v5753 = vunpack.c.h.s8.bf16 %v5389
          %v5754 = vunpack.c.h.s8.bf16 %v5390
          %v5755 = vunpack.c.h.s8.bf16 %v5391
          %v5756 = vunpack.c.h.s8.bf16 %v5392
          %v5757 = vunpack.c.l.s8.bf16 %v5393
          %v5758 = vunpack.c.l.s8.bf16 %v5394
          %v5759 = vunpack.c.l.s8.bf16 %v5395
          %v5760 = vunpack.c.l.s8.bf16 %v5396
          %v5761 = vunpack.c.h.s8.bf16 %v5393
          %v5762 = vunpack.c.h.s8.bf16 %v5394
          %v5763 = vunpack.c.h.s8.bf16 %v5395
          %v5764 = vunpack.c.h.s8.bf16 %v5396
          %v5765 = vunpack.c.l.s8.bf16 %v5397
          %v5766 = vunpack.c.l.s8.bf16 %v5398
          %v5767 = vunpack.c.l.s8.bf16 %v5399
          %v5768 = vunpack.c.l.s8.bf16 %v5400
          %v5769 = vunpack.c.h.s8.bf16 %v5397
          %v5770 = vunpack.c.h.s8.bf16 %v5398
          %v5771 = vunpack.c.h.s8.bf16 %v5399
          %v5772 = vunpack.c.h.s8.bf16 %v5400
          %v5773 = vunpack.c.l.s8.bf16 %v5401
          %v5774 = vunpack.c.l.s8.bf16 %v5402
          %v5775 = vunpack.c.l.s8.bf16 %v5403
          %v5776 = vunpack.c.l.s8.bf16 %v5404
          %v5777 = vunpack.c.h.s8.bf16 %v5401
          %v5778 = vunpack.c.h.s8.bf16 %v5402
          %v5779 = vunpack.c.h.s8.bf16 %v5403
          %v5780 = vunpack.c.h.s8.bf16 %v5404
          %v5781 = vunpack.c.l.s8.bf16 %v5405
          %v5782 = vunpack.c.l.s8.bf16 %v5406
          %v5783 = vunpack.c.l.s8.bf16 %v5407
          %v5784 = vunpack.c.l.s8.bf16 %v5408
          %v5785 = vunpack.c.h.s8.bf16 %v5405
          %v5786 = vunpack.c.h.s8.bf16 %v5406
          %v5787 = vunpack.c.h.s8.bf16 %v5407
          %v5788 = vunpack.c.h.s8.bf16 %v5408
          %v5789 = vunpack.c.l.s8.bf16 %v5409
          %v5790 = vunpack.c.l.s8.bf16 %v5410
          %v5791 = vunpack.c.l.s8.bf16 %v5411
          %v5792 = vunpack.c.l.s8.bf16 %v5412
          %v5793 = vunpack.c.h.s8.bf16 %v5409
          %v5794 = vunpack.c.h.s8.bf16 %v5410
          %v5795 = vunpack.c.h.s8.bf16 %v5411
          %v5796 = vunpack.c.h.s8.bf16 %v5412
          %v5797 = vunpack.c.l.s8.bf16 %v5413
          %v5798 = vunpack.c.l.s8.bf16 %v5414
          %v5799 = vunpack.c.l.s8.bf16 %v5415
          %v5800 = vunpack.c.l.s8.bf16 %v5416
          %v5801 = vunpack.c.h.s8.bf16 %v5413
          %v5802 = vunpack.c.h.s8.bf16 %v5414
          %v5803 = vunpack.c.h.s8.bf16 %v5415
          %v5804 = vunpack.c.h.s8.bf16 %v5416
          %v5805 = vunpack.c.l.s8.bf16 %v5417
          %v5806 = vunpack.c.l.s8.bf16 %v5418
          %v5807 = vunpack.c.l.s8.bf16 %v5419
          %v5808 = vunpack.c.l.s8.bf16 %v5420
          %v5809 = vunpack.c.h.s8.bf16 %v5417
          %v5810 = vunpack.c.h.s8.bf16 %v5418
          %v5811 = vunpack.c.h.s8.bf16 %v5419
          %v5812 = vunpack.c.h.s8.bf16 %v5420
          %v5813 = vunpack.c.l.s8.bf16 %v5421
          %v5814 = vunpack.c.l.s8.bf16 %v5422
          %v5815 = vunpack.c.l.s8.bf16 %v5423
          %v5816 = vunpack.c.l.s8.bf16 %v5424
          %v5817 = vunpack.c.h.s8.bf16 %v5421
          %v5818 = vunpack.c.h.s8.bf16 %v5422
          %v5819 = vunpack.c.h.s8.bf16 %v5423
          %v5820 = vunpack.c.h.s8.bf16 %v5424
          %v5821 = vunpack.c.l.s8.bf16 %v5425
          %v5822 = vunpack.c.l.s8.bf16 %v5426
          %v5823 = vunpack.c.l.s8.bf16 %v5427
          %v5824 = vunpack.c.l.s8.bf16 %v5428
          %v5825 = vunpack.c.h.s8.bf16 %v5425
          %v5826 = vunpack.c.h.s8.bf16 %v5426
          %v5827 = vunpack.c.h.s8.bf16 %v5427
          %v5828 = vunpack.c.h.s8.bf16 %v5428
          %v5829 = vunpack.c.l.s8.bf16 %v5429
          %v5830 = vunpack.c.l.s8.bf16 %v5430
          %v5831 = vunpack.c.l.s8.bf16 %v5431
          %v5832 = vunpack.c.l.s8.bf16 %v5432
          %v5833 = vunpack.c.h.s8.bf16 %v5429
          %v5834 = vunpack.c.h.s8.bf16 %v5430
          %v5835 = vunpack.c.h.s8.bf16 %v5431
          %v5836 = vunpack.c.h.s8.bf16 %v5432
          %v5837 = vunpack.c.l.s8.bf16 %v5433
          %v5838 = vunpack.c.l.s8.bf16 %v5434
          %v5839 = vunpack.c.l.s8.bf16 %v5435
          %v5840 = vunpack.c.l.s8.bf16 %v5436
          %v5841 = vunpack.c.h.s8.bf16 %v5433
          %v5842 = vunpack.c.h.s8.bf16 %v5434
          %v5843 = vunpack.c.h.s8.bf16 %v5435
          %v5844 = vunpack.c.h.s8.bf16 %v5436
          %v5845 = vunpack.c.l.s8.bf16 %v5437
          %v5846 = vunpack.c.l.s8.bf16 %v5438
          %v5847 = vunpack.c.l.s8.bf16 %v5439
          %v5848 = vunpack.c.l.s8.bf16 %v5440
          %v5849 = vunpack.c.h.s8.bf16 %v5437
          %v5850 = vunpack.c.h.s8.bf16 %v5438
          %v5851 = vunpack.c.h.s8.bf16 %v5439
          %v5852 = vunpack.c.h.s8.bf16 %v5440
          %v5853 = vunpack.c.l.s8.bf16 %v5441
          %v5854 = vunpack.c.l.s8.bf16 %v5442
          %v5855 = vunpack.c.l.s8.bf16 %v5443
          %v5856 = vunpack.c.l.s8.bf16 %v5444
          %v5857 = vunpack.c.h.s8.bf16 %v5441
          %v5858 = vunpack.c.h.s8.bf16 %v5442
          %v5859 = vunpack.c.h.s8.bf16 %v5443
          %v5860 = vunpack.c.h.s8.bf16 %v5444
          %v5861 = vunpack.c.l.s8.bf16 %v5445
          %v5862 = vunpack.c.l.s8.bf16 %v5446
          %v5863 = vunpack.c.l.s8.bf16 %v5447
          %v5864 = vunpack.c.l.s8.bf16 %v5448
          %v5865 = vunpack.c.h.s8.bf16 %v5445
          %v5866 = vunpack.c.h.s8.bf16 %v5446
          %v5867 = vunpack.c.h.s8.bf16 %v5447
          %v5868 = vunpack.c.h.s8.bf16 %v5448
          %v5869 = vunpack.c.l.s8.bf16 %v5449
          %v5870 = vunpack.c.l.s8.bf16 %v5450
          %v5871 = vunpack.c.l.s8.bf16 %v5451
          %v5872 = vunpack.c.l.s8.bf16 %v5452
          %v5873 = vunpack.c.h.s8.bf16 %v5449
          %v5874 = vunpack.c.h.s8.bf16 %v5450
          %v5875 = vunpack.c.h.s8.bf16 %v5451
          %v5876 = vunpack.c.h.s8.bf16 %v5452
          %v5877 = vunpack.c.l.s8.bf16 %v5453
          %v5878 = vunpack.c.l.s8.bf16 %v5454
          %v5879 = vunpack.c.l.s8.bf16 %v5455
          %v5880 = vunpack.c.l.s8.bf16 %v5456
          %v5881 = vunpack.c.h.s8.bf16 %v5453
          %v5882 = vunpack.c.h.s8.bf16 %v5454
          %v5883 = vunpack.c.h.s8.bf16 %v5455
          %v5884 = vunpack.c.h.s8.bf16 %v5456
          %v5885 = vunpack.c.l.s8.bf16 %v5457
          %v5886 = vunpack.c.l.s8.bf16 %v5458
          %v5887 = vunpack.c.l.s8.bf16 %v5459
          %v5888 = vunpack.c.l.s8.bf16 %v5460
          %v5889 = vunpack.c.h.s8.bf16 %v5457
          %v5890 = vunpack.c.h.s8.bf16 %v5458
          %v5891 = vunpack.c.h.s8.bf16 %v5459
          %v5892 = vunpack.c.h.s8.bf16 %v5460
          %v5893 = vunpack.c.l.s8.bf16 %v5461
          %v5894 = vunpack.c.l.s8.bf16 %v5462
          %v5895 = vunpack.c.l.s8.bf16 %v5463
          %v5896 = vunpack.c.l.s8.bf16 %v5464
          %v5897 = vunpack.c.h.s8.bf16 %v5461
          %v5898 = vunpack.c.h.s8.bf16 %v5462
          %v5899 = vunpack.c.h.s8.bf16 %v5463
          %v5900 = vunpack.c.h.s8.bf16 %v5464
          %v5901 = vunpack.c.l.s8.bf16 %v5465
          %v5902 = vunpack.c.l.s8.bf16 %v5466
          %v5903 = vunpack.c.l.s8.bf16 %v5467
          %v5904 = vunpack.c.l.s8.bf16 %v5468
          %v5905 = vunpack.c.h.s8.bf16 %v5465
          %v5906 = vunpack.c.h.s8.bf16 %v5466
          %v5907 = vunpack.c.h.s8.bf16 %v5467
          %v5908 = vunpack.c.h.s8.bf16 %v5468
          %v5909 = vunpack.c.l.s8.bf16 %v5469
          %v5910 = vunpack.c.l.s8.bf16 %v5470
          %v5911 = vunpack.c.l.s8.bf16 %v5471
          %v5912 = vunpack.c.l.s8.bf16 %v5472
          %v5913 = vunpack.c.h.s8.bf16 %v5469
          %v5914 = vunpack.c.h.s8.bf16 %v5470
          %v5915 = vunpack.c.h.s8.bf16 %v5471
          %v5916 = vunpack.c.h.s8.bf16 %v5472
          %v5917 = vunpack.c.l.s8.bf16 %v5473
          %v5918 = vunpack.c.l.s8.bf16 %v5474
          %v5919 = vunpack.c.l.s8.bf16 %v5475
          %v5920 = vunpack.c.l.s8.bf16 %v5476
          %v5921 = vunpack.c.h.s8.bf16 %v5473
          %v5922 = vunpack.c.h.s8.bf16 %v5474
          %v5923 = vunpack.c.h.s8.bf16 %v5475
          %v5924 = vunpack.c.h.s8.bf16 %v5476
          %v5925 = vunpack.c.l.s8.bf16 %v5477
          %v5926 = vunpack.c.l.s8.bf16 %v5478
          %v5927 = vunpack.c.l.s8.bf16 %v5479
          %v5928 = vunpack.c.l.s8.bf16 %v5480
          %v5929 = vunpack.c.h.s8.bf16 %v5477
          %v5930 = vunpack.c.h.s8.bf16 %v5478
          %v5931 = vunpack.c.h.s8.bf16 %v5479
          %v5932 = vunpack.c.h.s8.bf16 %v5480
          %v5933 = vunpack.c.l.s8.bf16 %v5481
          %v5934 = vunpack.c.l.s8.bf16 %v5482
          %v5935 = vunpack.c.l.s8.bf16 %v5483
          %v5936 = vunpack.c.l.s8.bf16 %v5484
          %v5937 = vunpack.c.h.s8.bf16 %v5481
          %v5938 = vunpack.c.h.s8.bf16 %v5482
          %v5939 = vunpack.c.h.s8.bf16 %v5483
          %v5940 = vunpack.c.h.s8.bf16 %v5484
          %v5941 = vunpack.c.l.s8.bf16 %v5485
          %v5942 = vunpack.c.l.s8.bf16 %v5486
          %v5943 = vunpack.c.l.s8.bf16 %v5487
          %v5944 = vunpack.c.l.s8.bf16 %v5488
          %v5945 = vunpack.c.h.s8.bf16 %v5485
          %v5946 = vunpack.c.h.s8.bf16 %v5486
          %v5947 = vunpack.c.h.s8.bf16 %v5487
          %v5948 = vunpack.c.h.s8.bf16 %v5488
          %v5949 = vunpack.c.l.s8.bf16 %v5489
          %v5950 = vunpack.c.l.s8.bf16 %v5490
          %v5951 = vunpack.c.l.s8.bf16 %v5491
          %v5952 = vunpack.c.l.s8.bf16 %v5492
          %v5953 = vunpack.c.h.s8.bf16 %v5489
          %v5954 = vunpack.c.h.s8.bf16 %v5490
          %v5955 = vunpack.c.h.s8.bf16 %v5491
          %v5956 = vunpack.c.h.s8.bf16 %v5492
          %v5957 = vunpack.c.l.s8.bf16 %v5493
          %v5958 = vunpack.c.l.s8.bf16 %v5494
          %v5959 = vunpack.c.l.s8.bf16 %v5495
          %v5960 = vunpack.c.l.s8.bf16 %v5496
          %v5961 = vunpack.c.h.s8.bf16 %v5493
          %v5962 = vunpack.c.h.s8.bf16 %v5494
          %v5963 = vunpack.c.h.s8.bf16 %v5495
          %v5964 = vunpack.c.h.s8.bf16 %v5496
          %v5965 = vunpack.c.l.s8.bf16 %v5497
          %v5966 = vunpack.c.l.s8.bf16 %v5498
          %v5967 = vunpack.c.l.s8.bf16 %v5499
          %v5968 = vunpack.c.l.s8.bf16 %v5500
          %v5969 = vunpack.c.h.s8.bf16 %v5497
          %v5970 = vunpack.c.h.s8.bf16 %v5498
          %v5971 = vunpack.c.h.s8.bf16 %v5499
          %v5972 = vunpack.c.h.s8.bf16 %v5500
          %v5973 = vunpack.c.l.s8.bf16 %v5501
          %v5974 = vunpack.c.l.s8.bf16 %v5502
          %v5975 = vunpack.c.l.s8.bf16 %v5503
          %v5976 = vunpack.c.l.s8.bf16 %v5504
          %v5977 = vunpack.c.h.s8.bf16 %v5501
          %v5978 = vunpack.c.h.s8.bf16 %v5502
          %v5979 = vunpack.c.h.s8.bf16 %v5503
          %v5980 = vunpack.c.h.s8.bf16 %v5504
          %v5981 = vunpack.c.l.s8.bf16 %v5505
          %v5982 = vunpack.c.l.s8.bf16 %v5506
          %v5983 = vunpack.c.l.s8.bf16 %v5507
          %v5984 = vunpack.c.l.s8.bf16 %v5508
          %v5985 = vunpack.c.h.s8.bf16 %v5505
          %v5986 = vunpack.c.h.s8.bf16 %v5506
          %v5987 = vunpack.c.h.s8.bf16 %v5507
          %v5988 = vunpack.c.h.s8.bf16 %v5508
          %v5989 = vunpack.c.l.s8.bf16 %v5509
          %v5990 = vunpack.c.l.s8.bf16 %v5510
          %v5991 = vunpack.c.l.s8.bf16 %v5511
          %v5992 = vunpack.c.l.s8.bf16 %v5512
          %v5993 = vunpack.c.h.s8.bf16 %v5509
          %v5994 = vunpack.c.h.s8.bf16 %v5510
          %v5995 = vunpack.c.h.s8.bf16 %v5511
          %v5996 = vunpack.c.h.s8.bf16 %v5512
          %v5997 = vunpack.c.l.s8.bf16 %v5513
          %v5998 = vunpack.c.l.s8.bf16 %v5514
          %v5999 = vunpack.c.l.s8.bf16 %v5515
          %v6000 = vunpack.c.l.s8.bf16 %v5516
          %v6001 = vunpack.c.h.s8.bf16 %v5513
          %v6002 = vunpack.c.h.s8.bf16 %v5514
          %v6003 = vunpack.c.h.s8.bf16 %v5515
          %v6004 = vunpack.c.h.s8.bf16 %v5516
          %v6005 = vunpack.c.l.s8.bf16 %v5517
          %v6006 = vunpack.c.l.s8.bf16 %v5518
          %v6007 = vunpack.c.l.s8.bf16 %v5519
          %v6008 = vunpack.c.l.s8.bf16 %v5520
          %v6009 = vunpack.c.h.s8.bf16 %v5517
          %v6010 = vunpack.c.h.s8.bf16 %v5518
          %v6011 = vunpack.c.h.s8.bf16 %v5519
          %v6012 = vunpack.c.h.s8.bf16 %v5520
          %v6013 = vunpack.c.l.s8.bf16 %v5521
          %v6014 = vunpack.c.l.s8.bf16 %v5522
          %v6015 = vunpack.c.l.s8.bf16 %v5523
          %v6016 = vunpack.c.l.s8.bf16 %v5524
          %v6017 = vunpack.c.h.s8.bf16 %v5521
          %v6018 = vunpack.c.h.s8.bf16 %v5522
          %v6019 = vunpack.c.h.s8.bf16 %v5523
          %v6020 = vunpack.c.h.s8.bf16 %v5524
          %v6021 = vunpack.c.l.s8.bf16 %v5525
          %v6022 = vunpack.c.l.s8.bf16 %v5526
          %v6023 = vunpack.c.l.s8.bf16 %v5527
          %v6024 = vunpack.c.l.s8.bf16 %v5528
          %v6025 = vunpack.c.h.s8.bf16 %v5525
          %v6026 = vunpack.c.h.s8.bf16 %v5526
          %v6027 = vunpack.c.h.s8.bf16 %v5527
          %v6028 = vunpack.c.h.s8.bf16 %v5528
          %v6029 = vunpack.c.l.s8.bf16 %v5529
          %v6030 = vunpack.c.l.s8.bf16 %v5530
          %v6031 = vunpack.c.l.s8.bf16 %v5531
          %v6032 = vunpack.c.l.s8.bf16 %v5532
          %v6033 = vunpack.c.h.s8.bf16 %v5529
          %v6034 = vunpack.c.h.s8.bf16 %v5530
          %v6035 = vunpack.c.h.s8.bf16 %v5531
          %v6036 = vunpack.c.h.s8.bf16 %v5532
          %v6037 = vunpack.c.l.s8.bf16 %v5533
          %v6038 = vunpack.c.l.s8.bf16 %v5534
          %v6039 = vunpack.c.l.s8.bf16 %v5535
          %v6040 = vunpack.c.l.s8.bf16 %v5536
          %v6041 = vunpack.c.h.s8.bf16 %v5533
          %v6042 = vunpack.c.h.s8.bf16 %v5534
          %v6043 = vunpack.c.h.s8.bf16 %v5535
          %v6044 = vunpack.c.h.s8.bf16 %v5536
          %v6045 = vunpack.c.l.s8.bf16 %v5537
          %v6046 = vunpack.c.l.s8.bf16 %v5538
          %v6047 = vunpack.c.l.s8.bf16 %v5539
          %v6048 = vunpack.c.l.s8.bf16 %v5540
          %v6049 = vunpack.c.h.s8.bf16 %v5537
          %v6050 = vunpack.c.h.s8.bf16 %v5538
          %v6051 = vunpack.c.h.s8.bf16 %v5539
          %v6052 = vunpack.c.h.s8.bf16 %v5540
          %6053 = vmatprep.subr.bf16.mxu0 %v5542
          %6054 = vmatpush1.bf16.msra.mxu0 %v5541
          %6055 = vmatprep.subr.bf16.mxu0 %v5546
          %6056 = vmatpush1.bf16.msra.mxu0 %v5545
          %6057 = vmatprep.subr.bf16.mxu0 %v5550
          %6058 = vmatpush1.bf16.msra.mxu0 %v5549
          %6059 = vmatprep.subr.bf16.mxu0 %v5554
          %6060 = vmatpush1.bf16.msra.mxu0 %v5553
          %6061 = vmatprep.subr.bf16.mxu0 %v5558
          %6062 = vmatpush1.bf16.msra.mxu0 %v5557
          %6063 = vmatprep.subr.bf16.mxu0 %v5562
          %6064 = vmatpush1.bf16.msra.mxu0 %v5561
          %6065 = vmatprep.subr.bf16.mxu0 %v5566
          %6066 = vmatpush1.bf16.msra.mxu0 %v5565
          %6067 = vmatprep.subr.bf16.mxu0 %v5570
          %6068 = vmatpush1.bf16.msra.mxu0 %v5569
          %6069 = vmatprep.subr.bf16.mxu0 %v5574
          %6070 = vmatpush1.bf16.msra.mxu0 %v5573
          %6071 = vmatprep.subr.bf16.mxu0 %v5578
          %6072 = vmatpush1.bf16.msra.mxu0 %v5577
          %6073 = vmatprep.subr.bf16.mxu0 %v5582
          %6074 = vmatpush1.bf16.msra.mxu0 %v5581
          %6075 = vmatprep.subr.bf16.mxu0 %v5586
          %6076 = vmatpush1.bf16.msra.mxu0 %v5585
          %6077 = vmatprep.subr.bf16.mxu0 %v5590
          %6078 = vmatpush1.bf16.msra.mxu0 %v5589
          %6079 = vmatprep.subr.bf16.mxu0 %v5594
          %6080 = vmatpush1.bf16.msra.mxu0 %v5593
          %6081 = vmatprep.subr.bf16.mxu0 %v5598
          %6082 = vmatpush1.bf16.msra.mxu0 %v5597
          %6083 = vmatprep.subr.bf16.mxu0 %v5602
          %6084 = vmatpush1.bf16.msra.mxu0 %v5601
          %6085 = vmatprep.mubr.bf16.mxu0 %v5270
          %6086 = vmatmul.mubr.bf16.gmra.mrb[0].mxu0 %v5269
          %v6087 = vpop.f32.mrb[0].mxu0
          %v6088 = vadd.f32 0.0, %v6087
          %v6089 = vpop.f32.mrb[0].mxu0
          %v6090 = vadd.f32 0.0, %v6089
          %v6091 = vpop.f32.mrb[0].mxu0
          %v6092 = vpop.f32.mrb[0].mxu0
          %6093 = vdwg.mxu0
          %6094 = vmatprep.subr.bf16.mxu0 %v5606
          %6095 = vmatpush1.bf16.msra.mxu0 %v5605
          %6096 = vmatprep.subr.bf16.mxu0 %v5610
          %6097 = vmatpush1.bf16.msra.mxu0 %v5609
          %6098 = vmatprep.subr.bf16.mxu0 %v5614
          %6099 = vmatpush1.bf16.msra.mxu0 %v5613
          %6100 = vmatprep.subr.bf16.mxu0 %v5618
          %6101 = vmatpush1.bf16.msra.mxu0 %v5617
          %6102 = vmatprep.subr.bf16.mxu0 %v5622
          %6103 = vmatpush1.bf16.msra.mxu0 %v5621
          %6104 = vmatprep.subr.bf16.mxu0 %v5626
          %6105 = vmatpush1.bf16.msra.mxu0 %v5625
          %6106 = vmatprep.subr.bf16.mxu0 %v5630
          %6107 = vmatpush1.bf16.msra.mxu0 %v5629
          %6108 = vmatprep.subr.bf16.mxu0 %v5634
          %6109 = vmatpush1.bf16.msra.mxu0 %v5633
          %6110 = vmatprep.subr.bf16.mxu0 %v5638
          %6111 = vmatpush1.bf16.msra.mxu0 %v5637
          %6112 = vmatprep.subr.bf16.mxu0 %v5642
          %6113 = vmatpush1.bf16.msra.mxu0 %v5641
          %6114 = vmatprep.subr.bf16.mxu0 %v5646
          %6115 = vmatpush1.bf16.msra.mxu0 %v5645
          %6116 = vmatprep.subr.bf16.mxu0 %v5650
          %6117 = vmatpush1.bf16.msra.mxu0 %v5649
          %6118 = vmatprep.subr.bf16.mxu0 %v5654
          %6119 = vmatpush1.bf16.msra.mxu0 %v5653
          %6120 = vmatprep.subr.bf16.mxu0 %v5658
          %6121 = vmatpush1.bf16.msra.mxu0 %v5657
          %6122 = vmatprep.subr.bf16.mxu0 %v5662
          %6123 = vmatpush1.bf16.msra.mxu0 %v5661
          %6124 = vmatprep.subr.bf16.mxu0 %v5666
          %6125 = vmatpush1.bf16.msra.mxu0 %v5665
          %6126 = vmatprep.mubr.bf16.mxu0 %v5272
          %6127 = vmatmul.mubr.bf16.gmra.mrb[0].mxu0 %v5271
          %v6128 = vpop.f32.mrb[0].mxu0
          %v6129 = vadd.f32 %v6088, %v6128
          %v6130 = vpop.f32.mrb[0].mxu0
          %v6131 = vadd.f32 %v6090, %v6130
          %v6132 = vpop.f32.mrb[0].mxu0
          %v6133 = vpop.f32.mrb[0].mxu0
          %6134 = vdwg.mxu0
          %6135 = vmatprep.subr.bf16.mxu0 %v5670
          %6136 = vmatpush1.bf16.msra.mxu0 %v5669
          %6137 = vmatprep.subr.bf16.mxu0 %v5674
          %6138 = vmatpush1.bf16.msra.mxu0 %v5673
          %6139 = vmatprep.subr.bf16.mxu0 %v5678
          %6140 = vmatpush1.bf16.msra.mxu0 %v5677
          %6141 = vmatprep.subr.bf16.mxu0 %v5682
          %6142 = vmatpush1.bf16.msra.mxu0 %v5681
          %6143 = vmatprep.subr.bf16.mxu0 %v5686
          %6144 = vmatpush1.bf16.msra.mxu0 %v5685
          %6145 = vmatprep.subr.bf16.mxu0 %v5690
          %6146 = vmatpush1.bf16.msra.mxu0 %v5689
          %6147 = vmatprep.subr.bf16.mxu0 %v5694
          %6148 = vmatpush1.bf16.msra.mxu0 %v5693
          %6149 = vmatprep.subr.bf16.mxu0 %v5698
          %6150 = vmatpush1.bf16.msra.mxu0 %v5697
          %6151 = vmatprep.subr.bf16.mxu0 %v5702
          %6152 = vmatpush1.bf16.msra.mxu0 %v5701
          %6153 = vmatprep.subr.bf16.mxu0 %v5706
          %6154 = vmatpush1.bf16.msra.mxu0 %v5705
          %6155 = vmatprep.subr.bf16.mxu0 %v5710
          %6156 = vmatpush1.bf16.msra.mxu0 %v5709
          %6157 = vmatprep.subr.bf16.mxu0 %v5714
          %6158 = vmatpush1.bf16.msra.mxu0 %v5713
          %6159 = vmatprep.subr.bf16.mxu0 %v5718
          %6160 = vmatpush1.bf16.msra.mxu0 %v5717
          %6161 = vmatprep.subr.bf16.mxu0 %v5722
          %6162 = vmatpush1.bf16.msra.mxu0 %v5721
          %6163 = vmatprep.subr.bf16.mxu0 %v5726
          %6164 = vmatpush1.bf16.msra.mxu0 %v5725
          %6165 = vmatprep.subr.bf16.mxu0 %v5730
          %6166 = vmatpush1.bf16.msra.mxu0 %v5729
          %6167 = vmatprep.mubr.bf16.mxu0 %v5274
          %6168 = vmatmul.mubr.bf16.gmra.mrb[0].mxu0 %v5273
          %v6169 = vpop.f32.mrb[0].mxu0
          %v6170 = vadd.f32 %v6129, %v6169
          %v6171 = vpop.f32.mrb[0].mxu0
          %v6172 = vadd.f32 %v6131, %v6171
          %v6173 = vpop.f32.mrb[0].mxu0
          %v6174 = vpop.f32.mrb[0].mxu0
          %6175 = vdwg.mxu0
          %6176 = vmatprep.subr.bf16.mxu0 %v5734
          %6177 = vmatpush1.bf16.msra.mxu0 %v5733
          %6178 = vmatprep.subr.bf16.mxu0 %v5738
          %6179 = vmatpush1.bf16.msra.mxu0 %v5737
          %6180 = vmatprep.subr.bf16.mxu0 %v5742
          %6181 = vmatpush1.bf16.msra.mxu0 %v5741
          %6182 = vmatprep.subr.bf16.mxu0 %v5746
          %6183 = vmatpush1.bf16.msra.mxu0 %v5745
          %6184 = vmatprep.subr.bf16.mxu0 %v5750
          %6185 = vmatpush1.bf16.msra.mxu0 %v5749
          %6186 = vmatprep.subr.bf16.mxu0 %v5754
          %6187 = vmatpush1.bf16.msra.mxu0 %v5753
          %6188 = vmatprep.subr.bf16.mxu0 %v5758
          %6189 = vmatpush1.bf16.msra.mxu0 %v5757
          %6190 = vmatprep.subr.bf16.mxu0 %v5762
          %6191 = vmatpush1.bf16.msra.mxu0 %v5761
          %6192 = vmatprep.subr.bf16.mxu0 %v5766
          %6193 = vmatpush1.bf16.msra.mxu0 %v5765
          %6194 = vmatprep.subr.bf16.mxu0 %v5770
          %6195 = vmatpush1.bf16.msra.mxu0 %v5769
          %6196 = vmatprep.subr.bf16.mxu0 %v5774
          %6197 = vmatpush1.bf16.msra.mxu0 %v5773
          %6198 = vmatprep.subr.bf16.mxu0 %v5778
          %6199 = vmatpush1.bf16.msra.mxu0 %v5777
          %6200 = vmatprep.subr.bf16.mxu0 %v5782
          %6201 = vmatpush1.bf16.msra.mxu0 %v5781
          %6202 = vmatprep.subr.bf16.mxu0 %v5786
          %6203 = vmatpush1.bf16.msra.mxu0 %v5785
          %6204 = vmatprep.subr.bf16.mxu0 %v5790
          %6205 = vmatpush1.bf16.msra.mxu0 %v5789
          %6206 = vmatprep.subr.bf16.mxu0 %v5794
          %6207 = vmatpush1.bf16.msra.mxu0 %v5793
          %6208 = vmatprep.mubr.bf16.mxu0 %v5276
          %6209 = vmatmul.mubr.bf16.gmra.mrb[0].mxu0 %v5275
          %v6210 = vpop.f32.mrb[0].mxu0
          %v6211 = vadd.f32 %v6170, %v6210
          %v6212 = vpop.f32.mrb[0].mxu0
          %v6213 = vadd.f32 %v6172, %v6212
          %v6214 = vpop.f32.mrb[0].mxu0
          %v6215 = vpop.f32.mrb[0].mxu0
          %6216 = vdwg.mxu0
          %6217 = vmatprep.subr.bf16.mxu0 %v5798
          %6218 = vmatpush1.bf16.msra.mxu0 %v5797
          %6219 = vmatprep.subr.bf16.mxu0 %v5802
          %6220 = vmatpush1.bf16.msra.mxu0 %v5801
          %6221 = vmatprep.subr.bf16.mxu0 %v5806
          %6222 = vmatpush1.bf16.msra.mxu0 %v5805
          %6223 = vmatprep.subr.bf16.mxu0 %v5810
          %6224 = vmatpush1.bf16.msra.mxu0 %v5809
          %6225 = vmatprep.subr.bf16.mxu0 %v5814
          %6226 = vmatpush1.bf16.msra.mxu0 %v5813
          %6227 = vmatprep.subr.bf16.mxu0 %v5818
          %6228 = vmatpush1.bf16.msra.mxu0 %v5817
          %6229 = vmatprep.subr.bf16.mxu0 %v5822
          %6230 = vmatpush1.bf16.msra.mxu0 %v5821
          %6231 = vmatprep.subr.bf16.mxu0 %v5826
          %6232 = vmatpush1.bf16.msra.mxu0 %v5825
          %6233 = vmatprep.subr.bf16.mxu0 %v5830
          %6234 = vmatpush1.bf16.msra.mxu0 %v5829
          %6235 = vmatprep.subr.bf16.mxu0 %v5834
          %6236 = vmatpush1.bf16.msra.mxu0 %v5833
          %6237 = vmatprep.subr.bf16.mxu0 %v5838
          %6238 = vmatpush1.bf16.msra.mxu0 %v5837
          %6239 = vmatprep.subr.bf16.mxu0 %v5842
          %6240 = vmatpush1.bf16.msra.mxu0 %v5841
          %6241 = vmatprep.subr.bf16.mxu0 %v5846
          %6242 = vmatpush1.bf16.msra.mxu0 %v5845
          %6243 = vmatprep.subr.bf16.mxu0 %v5850
          %6244 = vmatpush1.bf16.msra.mxu0 %v5849
          %6245 = vmatprep.subr.bf16.mxu0 %v5854
          %6246 = vmatpush1.bf16.msra.mxu0 %v5853
          %6247 = vmatprep.subr.bf16.mxu0 %v5858
          %6248 = vmatpush1.bf16.msra.mxu0 %v5857
          %6249 = vmatprep.mubr.bf16.mxu0 %v5278
          %6250 = vmatmul.mubr.bf16.gmra.mrb[0].mxu0 %v5277
          %v6251 = vpop.f32.mrb[0].mxu0
          %v6252 = vadd.f32 %v6211, %v6251
          %v6253 = vpop.f32.mrb[0].mxu0
          %v6254 = vadd.f32 %v6213, %v6253
          %v6255 = vpop.f32.mrb[0].mxu0
          %v6256 = vpop.f32.mrb[0].mxu0
          %6257 = vdwg.mxu0
          %6258 = vmatprep.subr.bf16.mxu0 %v5862
          %6259 = vmatpush1.bf16.msra.mxu0 %v5861
          %6260 = vmatprep.subr.bf16.mxu0 %v5866
          %6261 = vmatpush1.bf16.msra.mxu0 %v5865
          %6262 = vmatprep.subr.bf16.mxu0 %v5870
          %6263 = vmatpush1.bf16.msra.mxu0 %v5869
          %6264 = vmatprep.subr.bf16.mxu0 %v5874
          %6265 = vmatpush1.bf16.msra.mxu0 %v5873
          %6266 = vmatprep.subr.bf16.mxu0 %v5878
          %6267 = vmatpush1.bf16.msra.mxu0 %v5877
          %6268 = vmatprep.subr.bf16.mxu0 %v5882
          %6269 = vmatpush1.bf16.msra.mxu0 %v5881
          %6270 = vmatprep.subr.bf16.mxu0 %v5886
          %6271 = vmatpush1.bf16.msra.mxu0 %v5885
          %6272 = vmatprep.subr.bf16.mxu0 %v5890
          %6273 = vmatpush1.bf16.msra.mxu0 %v5889
          %6274 = vmatprep.subr.bf16.mxu0 %v5894
          %6275 = vmatpush1.bf16.msra.mxu0 %v5893
          %6276 = vmatprep.subr.bf16.mxu0 %v5898
          %6277 = vmatpush1.bf16.msra.mxu0 %v5897
          %6278 = vmatprep.subr.bf16.mxu0 %v5902
          %6279 = vmatpush1.bf16.msra.mxu0 %v5901
          %6280 = vmatprep.subr.bf16.mxu0 %v5906
          %6281 = vmatpush1.bf16.msra.mxu0 %v5905
          %6282 = vmatprep.subr.bf16.mxu0 %v5910
          %6283 = vmatpush1.bf16.msra.mxu0 %v5909
          %6284 = vmatprep.subr.bf16.mxu0 %v5914
          %6285 = vmatpush1.bf16.msra.mxu0 %v5913
          %6286 = vmatprep.subr.bf16.mxu0 %v5918
          %6287 = vmatpush1.bf16.msra.mxu0 %v5917
          %6288 = vmatprep.subr.bf16.mxu0 %v5922
          %6289 = vmatpush1.bf16.msra.mxu0 %v5921
          %6290 = vmatprep.mubr.bf16.mxu0 %v5280
          %6291 = vmatmul.mubr.bf16.gmra.mrb[0].mxu0 %v5279
          %v6292 = vpop.f32.mrb[0].mxu0
          %v6293 = vadd.f32 %v6252, %v6292
          %v6294 = vpop.f32.mrb[0].mxu0
          %v6295 = vadd.f32 %v6254, %v6294
          %v6296 = vpop.f32.mrb[0].mxu0
          %v6297 = vpop.f32.mrb[0].mxu0
          %6298 = vdwg.mxu0
          %6299 = vmatprep.subr.bf16.mxu0 %v5926
          %6300 = vmatpush1.bf16.msra.mxu0 %v5925
          %6301 = vmatprep.subr.bf16.mxu0 %v5930
          %6302 = vmatpush1.bf16.msra.mxu0 %v5929
          %6303 = vmatprep.subr.bf16.mxu0 %v5934
          %6304 = vmatpush1.bf16.msra.mxu0 %v5933
          %6305 = vmatprep.subr.bf16.mxu0 %v5938
          %6306 = vmatpush1.bf16.msra.mxu0 %v5937
          %6307 = vmatprep.subr.bf16.mxu0 %v5942
          %6308 = vmatpush1.bf16.msra.mxu0 %v5941
          %6309 = vmatprep.subr.bf16.mxu0 %v5946
          %6310 = vmatpush1.bf16.msra.mxu0 %v5945
          %6311 = vmatprep.subr.bf16.mxu0 %v5950
          %6312 = vmatpush1.bf16.msra.mxu0 %v5949
          %6313 = vmatprep.subr.bf16.mxu0 %v5954
          %6314 = vmatpush1.bf16.msra.mxu0 %v5953
          %6315 = vmatprep.subr.bf16.mxu0 %v5958
          %6316 = vmatpush1.bf16.msra.mxu0 %v5957
          %6317 = vmatprep.subr.bf16.mxu0 %v5962
          %6318 = vmatpush1.bf16.msra.mxu0 %v5961
          %6319 = vmatprep.subr.bf16.mxu0 %v5966
          %6320 = vmatpush1.bf16.msra.mxu0 %v5965
          %6321 = vmatprep.subr.bf16.mxu0 %v5970
          %6322 = vmatpush1.bf16.msra.mxu0 %v5969
          %6323 = vmatprep.subr.bf16.mxu0 %v5974
          %6324 = vmatpush1.bf16.msra.mxu0 %v5973
          %6325 = vmatprep.subr.bf16.mxu0 %v5978
          %6326 = vmatpush1.bf16.msra.mxu0 %v5977
          %6327 = vmatprep.subr.bf16.mxu0 %v5982
          %6328 = vmatpush1.bf16.msra.mxu0 %v5981
          %6329 = vmatprep.subr.bf16.mxu0 %v5986
          %6330 = vmatpush1.bf16.msra.mxu0 %v5985
          %6331 = vmatprep.mubr.bf16.mxu0 %v5282
          %6332 = vmatmul.mubr.bf16.gmra.mrb[0].mxu0 %v5281
          %v6333 = vpop.f32.mrb[0].mxu0
          %v6334 = vadd.f32 %v6293, %v6333
          %v6335 = vpop.f32.mrb[0].mxu0
          %v6336 = vadd.f32 %v6295, %v6335
          %v6337 = vpop.f32.mrb[0].mxu0
          %v6338 = vpop.f32.mrb[0].mxu0
          %6339 = vdwg.mxu0
          %6340 = vmatprep.subr.bf16.mxu0 %v5990
          %6341 = vmatpush1.bf16.msra.mxu0 %v5989
          %6342 = vmatprep.subr.bf16.mxu0 %v5994
          %6343 = vmatpush1.bf16.msra.mxu0 %v5993
          %6344 = vmatprep.subr.bf16.mxu0 %v5998
          %6345 = vmatpush1.bf16.msra.mxu0 %v5997
          %6346 = vmatprep.subr.bf16.mxu0 %v6002
          %6347 = vmatpush1.bf16.msra.mxu0 %v6001
          %6348 = vmatprep.subr.bf16.mxu0 %v6006
          %6349 = vmatpush1.bf16.msra.mxu0 %v6005
          %6350 = vmatprep.subr.bf16.mxu0 %v6010
          %6351 = vmatpush1.bf16.msra.mxu0 %v6009
          %6352 = vmatprep.subr.bf16.mxu0 %v6014
          %6353 = vmatpush1.bf16.msra.mxu0 %v6013
          %6354 = vmatprep.subr.bf16.mxu0 %v6018
          %6355 = vmatpush1.bf16.msra.mxu0 %v6017
          %6356 = vmatprep.subr.bf16.mxu0 %v6022
          %6357 = vmatpush1.bf16.msra.mxu0 %v6021
          %6358 = vmatprep.subr.bf16.mxu0 %v6026
          %6359 = vmatpush1.bf16.msra.mxu0 %v6025
          %6360 = vmatprep.subr.bf16.mxu0 %v6030
          %6361 = vmatpush1.bf16.msra.mxu0 %v6029
          %6362 = vmatprep.subr.bf16.mxu0 %v6034
          %6363 = vmatpush1.bf16.msra.mxu0 %v6033
          %6364 = vmatprep.subr.bf16.mxu0 %v6038
          %6365 = vmatpush1.bf16.msra.mxu0 %v6037
          %6366 = vmatprep.subr.bf16.mxu0 %v6042
          %6367 = vmatpush1.bf16.msra.mxu0 %v6041
          %6368 = vmatprep.subr.bf16.mxu0 %v6046
          %6369 = vmatpush1.bf16.msra.mxu0 %v6045
          %6370 = vmatprep.subr.bf16.mxu0 %v6050
          %6371 = vmatpush1.bf16.msra.mxu0 %v6049
          %6372 = vmatprep.mubr.bf16.mxu0 %v5284
          %6373 = vmatmul.mubr.bf16.gmra.mrb[0].mxu0 %v5283
          %v6374 = vpop.f32.mrb[0].mxu0
          %v6375 = vadd.f32 %v6334, %v6374
          %v6376 = vpop.f32.mrb[0].mxu0
          %v6377 = vadd.f32 %v6336, %v6376
          %v6378 = vpop.f32.mrb[0].mxu0
          %v6379 = vpop.f32.mrb[0].mxu0
          %6380 = vdwg.mxu0
          %6381 = vmatprep.subr.bf16.mxu0 %v5544
          %6382 = vmatpush1.bf16.msra.mxu0 %v5543
          %6383 = vmatprep.subr.bf16.mxu0 %v5548
          %6384 = vmatpush1.bf16.msra.mxu0 %v5547
          %6385 = vmatprep.subr.bf16.mxu0 %v5552
          %6386 = vmatpush1.bf16.msra.mxu0 %v5551
          %6387 = vmatprep.subr.bf16.mxu0 %v5556
          %6388 = vmatpush1.bf16.msra.mxu0 %v5555
          %6389 = vmatprep.subr.bf16.mxu0 %v5560
          %6390 = vmatpush1.bf16.msra.mxu0 %v5559
          %6391 = vmatprep.subr.bf16.mxu0 %v5564
          %6392 = vmatpush1.bf16.msra.mxu0 %v5563
          %6393 = vmatprep.subr.bf16.mxu0 %v5568
          %6394 = vmatpush1.bf16.msra.mxu0 %v5567
          %6395 = vmatprep.subr.bf16.mxu0 %v5572
          %6396 = vmatpush1.bf16.msra.mxu0 %v5571
          %6397 = vmatprep.subr.bf16.mxu0 %v5576
          %6398 = vmatpush1.bf16.msra.mxu0 %v5575
          %6399 = vmatprep.subr.bf16.mxu0 %v5580
          %6400 = vmatpush1.bf16.msra.mxu0 %v5579
          %6401 = vmatprep.subr.bf16.mxu0 %v5584
          %6402 = vmatpush1.bf16.msra.mxu0 %v5583
          %6403 = vmatprep.subr.bf16.mxu0 %v5588
          %6404 = vmatpush1.bf16.msra.mxu0 %v5587
          %6405 = vmatprep.subr.bf16.mxu0 %v5592
          %6406 = vmatpush1.bf16.msra.mxu0 %v5591
          %6407 = vmatprep.subr.bf16.mxu0 %v5596
          %6408 = vmatpush1.bf16.msra.mxu0 %v5595
          %6409 = vmatprep.subr.bf16.mxu0 %v5600
          %6410 = vmatpush1.bf16.msra.mxu0 %v5599
          %6411 = vmatprep.subr.bf16.mxu0 %v5604
          %6412 = vmatpush1.bf16.msra.mxu0 %v5603
          %6413 = vmatprep.mubr.bf16.mxu0 %v5270
          %6414 = vmatmul.mubr.bf16.gmra.mrb[0].mxu0 %v5269
          %v6415 = vpop.f32.mrb[0].mxu0
          %v6416 = vadd.f32 0.0, %v6415
          %v6417 = vpop.f32.mrb[0].mxu0
          %v6418 = vadd.f32 0.0, %v6417
          %v6419 = vpop.f32.mrb[0].mxu0
          %v6420 = vpop.f32.mrb[0].mxu0
          %6421 = vdwg.mxu0
          %6422 = vmatprep.subr.bf16.mxu0 %v5608
          %6423 = vmatpush1.bf16.msra.mxu0 %v5607
          %6424 = vmatprep.subr.bf16.mxu0 %v5612
          %6425 = vmatpush1.bf16.msra.mxu0 %v5611
          %6426 = vmatprep.subr.bf16.mxu0 %v5616
          %6427 = vmatpush1.bf16.msra.mxu0 %v5615
          %6428 = vmatprep.subr.bf16.mxu0 %v5620
          %6429 = vmatpush1.bf16.msra.mxu0 %v5619
          %6430 = vmatprep.subr.bf16.mxu0 %v5624
          %6431 = vmatpush1.bf16.msra.mxu0 %v5623
          %6432 = vmatprep.subr.bf16.mxu0 %v5628
          %6433 = vmatpush1.bf16.msra.mxu0 %v5627
          %6434 = vmatprep.subr.bf16.mxu0 %v5632
          %6435 = vmatpush1.bf16.msra.mxu0 %v5631
          %6436 = vmatprep.subr.bf16.mxu0 %v5636
          %6437 = vmatpush1.bf16.msra.mxu0 %v5635
          %6438 = vmatprep.subr.bf16.mxu0 %v5640
          %6439 = vmatpush1.bf16.msra.mxu0 %v5639
          %6440 = vmatprep.subr.bf16.mxu0 %v5644
          %6441 = vmatpush1.bf16.msra.mxu0 %v5643
          %6442 = vmatprep.subr.bf16.mxu0 %v5648
          %6443 = vmatpush1.bf16.msra.mxu0 %v5647
          %6444 = vmatprep.subr.bf16.mxu0 %v5652
          %6445 = vmatpush1.bf16.msra.mxu0 %v5651
          %6446 = vmatprep.subr.bf16.mxu0 %v5656
          %6447 = vmatpush1.bf16.msra.mxu0 %v5655
          %6448 = vmatprep.subr.bf16.mxu0 %v5660
          %6449 = vmatpush1.bf16.msra.mxu0 %v5659
          %6450 = vmatprep.subr.bf16.mxu0 %v5664
          %6451 = vmatpush1.bf16.msra.mxu0 %v5663
          %6452 = vmatprep.subr.bf16.mxu0 %v5668
          %6453 = vmatpush1.bf16.msra.mxu0 %v5667
          %6454 = vmatprep.mubr.bf16.mxu0 %v5272
          %6455 = vmatmul.mubr.bf16.gmra.mrb[0].mxu0 %v5271
          %v6456 = vpop.f32.mrb[0].mxu0
          %v6457 = vadd.f32 %v6416, %v6456
          %v6458 = vpop.f32.mrb[0].mxu0
          %v6459 = vadd.f32 %v6418, %v6458
          %v6460 = vpop.f32.mrb[0].mxu0
          %v6461 = vpop.f32.mrb[0].mxu0
          %6462 = vdwg.mxu0
          %6463 = vmatprep.subr.bf16.mxu0 %v5672
          %6464 = vmatpush1.bf16.msra.mxu0 %v5671
          %6465 = vmatprep.subr.bf16.mxu0 %v5676
          %6466 = vmatpush1.bf16.msra.mxu0 %v5675
          %6467 = vmatprep.subr.bf16.mxu0 %v5680
          %6468 = vmatpush1.bf16.msra.mxu0 %v5679
          %6469 = vmatprep.subr.bf16.mxu0 %v5684
          %6470 = vmatpush1.bf16.msra.mxu0 %v5683
          %6471 = vmatprep.subr.bf16.mxu0 %v5688
          %6472 = vmatpush1.bf16.msra.mxu0 %v5687
          %6473 = vmatprep.subr.bf16.mxu0 %v5692
          %6474 = vmatpush1.bf16.msra.mxu0 %v5691
          %6475 = vmatprep.subr.bf16.mxu0 %v5696
          %6476 = vmatpush1.bf16.msra.mxu0 %v5695
          %6477 = vmatprep.subr.bf16.mxu0 %v5700
          %6478 = vmatpush1.bf16.msra.mxu0 %v5699
          %6479 = vmatprep.subr.bf16.mxu0 %v5704
          %6480 = vmatpush1.bf16.msra.mxu0 %v5703
          %6481 = vmatprep.subr.bf16.mxu0 %v5708
          %6482 = vmatpush1.bf16.msra.mxu0 %v5707
          %6483 = vmatprep.subr.bf16.mxu0 %v5712
          %6484 = vmatpush1.bf16.msra.mxu0 %v5711
          %6485 = vmatprep.subr.bf16.mxu0 %v5716
          %6486 = vmatpush1.bf16.msra.mxu0 %v5715
          %6487 = vmatprep.subr.bf16.mxu0 %v5720
          %6488 = vmatpush1.bf16.msra.mxu0 %v5719
          %6489 = vmatprep.subr.bf16.mxu0 %v5724
          %6490 = vmatpush1.bf16.msra.mxu0 %v5723
          %6491 = vmatprep.subr.bf16.mxu0 %v5728
          %6492 = vmatpush1.bf16.msra.mxu0 %v5727
          %6493 = vmatprep.subr.bf16.mxu0 %v5732
          %6494 = vmatpush1.bf16.msra.mxu0 %v5731
          %6495 = vmatprep.mubr.bf16.mxu0 %v5274
          %6496 = vmatmul.mubr.bf16.gmra.mrb[0].mxu0 %v5273
          %v6497 = vpop.f32.mrb[0].mxu0
          %v6498 = vadd.f32 %v6457, %v6497
          %v6499 = vpop.f32.mrb[0].mxu0
          %v6500 = vadd.f32 %v6459, %v6499
          %v6501 = vpop.f32.mrb[0].mxu0
          %v6502 = vpop.f32.mrb[0].mxu0
          %6503 = vdwg.mxu0
          %6504 = vmatprep.subr.bf16.mxu0 %v5736
          %6505 = vmatpush1.bf16.msra.mxu0 %v5735
          %6506 = vmatprep.subr.bf16.mxu0 %v5740
          %6507 = vmatpush1.bf16.msra.mxu0 %v5739
          %6508 = vmatprep.subr.bf16.mxu0 %v5744
          %6509 = vmatpush1.bf16.msra.mxu0 %v5743
          %6510 = vmatprep.subr.bf16.mxu0 %v5748
          %6511 = vmatpush1.bf16.msra.mxu0 %v5747
          %6512 = vmatprep.subr.bf16.mxu0 %v5752
          %6513 = vmatpush1.bf16.msra.mxu0 %v5751
          %6514 = vmatprep.subr.bf16.mxu0 %v5756
          %6515 = vmatpush1.bf16.msra.mxu0 %v5755
          %6516 = vmatprep.subr.bf16.mxu0 %v5760
          %6517 = vmatpush1.bf16.msra.mxu0 %v5759
          %6518 = vmatprep.subr.bf16.mxu0 %v5764
          %6519 = vmatpush1.bf16.msra.mxu0 %v5763
          %6520 = vmatprep.subr.bf16.mxu0 %v5768
          %6521 = vmatpush1.bf16.msra.mxu0 %v5767
          %6522 = vmatprep.subr.bf16.mxu0 %v5772
          %6523 = vmatpush1.bf16.msra.mxu0 %v5771
          %6524 = vmatprep.subr.bf16.mxu0 %v5776
          %6525 = vmatpush1.bf16.msra.mxu0 %v5775
          %6526 = vmatprep.subr.bf16.mxu0 %v5780
          %6527 = vmatpush1.bf16.msra.mxu0 %v5779
          %6528 = vmatprep.subr.bf16.mxu0 %v5784
          %6529 = vmatpush1.bf16.msra.mxu0 %v5783
          %6530 = vmatprep.subr.bf16.mxu0 %v5788
          %6531 = vmatpush1.bf16.msra.mxu0 %v5787
          %6532 = vmatprep.subr.bf16.mxu0 %v5792
          %6533 = vmatpush1.bf16.msra.mxu0 %v5791
          %6534 = vmatprep.subr.bf16.mxu0 %v5796
          %6535 = vmatpush1.bf16.msra.mxu0 %v5795
          %6536 = vmatprep.mubr.bf16.mxu0 %v5276
          %6537 = vmatmul.mubr.bf16.gmra.mrb[0].mxu0 %v5275
          %v6538 = vpop.f32.mrb[0].mxu0
          %v6539 = vadd.f32 %v6498, %v6538
          %v6540 = vpop.f32.mrb[0].mxu0
          %v6541 = vadd.f32 %v6500, %v6540
          %v6542 = vpop.f32.mrb[0].mxu0
          %v6543 = vpop.f32.mrb[0].mxu0
          %6544 = vdwg.mxu0
          %6545 = vmatprep.subr.bf16.mxu0 %v5800
          %6546 = vmatpush1.bf16.msra.mxu0 %v5799
          %6547 = vmatprep.subr.bf16.mxu0 %v5804
          %6548 = vmatpush1.bf16.msra.mxu0 %v5803
          %6549 = vmatprep.subr.bf16.mxu0 %v5808
          %6550 = vmatpush1.bf16.msra.mxu0 %v5807
          %6551 = vmatprep.subr.bf16.mxu0 %v5812
          %6552 = vmatpush1.bf16.msra.mxu0 %v5811
          %6553 = vmatprep.subr.bf16.mxu0 %v5816
          %6554 = vmatpush1.bf16.msra.mxu0 %v5815
          %6555 = vmatprep.subr.bf16.mxu0 %v5820
          %6556 = vmatpush1.bf16.msra.mxu0 %v5819
          %6557 = vmatprep.subr.bf16.mxu0 %v5824
          %6558 = vmatpush1.bf16.msra.mxu0 %v5823
          %6559 = vmatprep.subr.bf16.mxu0 %v5828
          %6560 = vmatpush1.bf16.msra.mxu0 %v5827
          %6561 = vmatprep.subr.bf16.mxu0 %v5832
          %6562 = vmatpush1.bf16.msra.mxu0 %v5831
          %6563 = vmatprep.subr.bf16.mxu0 %v5836
          %6564 = vmatpush1.bf16.msra.mxu0 %v5835
          %6565 = vmatprep.subr.bf16.mxu0 %v5840
          %6566 = vmatpush1.bf16.msra.mxu0 %v5839
          %6567 = vmatprep.subr.bf16.mxu0 %v5844
          %6568 = vmatpush1.bf16.msra.mxu0 %v5843
          %6569 = vmatprep.subr.bf16.mxu0 %v5848
          %6570 = vmatpush1.bf16.msra.mxu0 %v5847
          %6571 = vmatprep.subr.bf16.mxu0 %v5852
          %6572 = vmatpush1.bf16.msra.mxu0 %v5851
          %6573 = vmatprep.subr.bf16.mxu0 %v5856
          %6574 = vmatpush1.bf16.msra.mxu0 %v5855
          %6575 = vmatprep.subr.bf16.mxu0 %v5860
          %6576 = vmatpush1.bf16.msra.mxu0 %v5859
          %6577 = vmatprep.mubr.bf16.mxu0 %v5278
          %6578 = vmatmul.mubr.bf16.gmra.mrb[0].mxu0 %v5277
          %v6579 = vpop.f32.mrb[0].mxu0
          %v6580 = vadd.f32 %v6539, %v6579
          %v6581 = vpop.f32.mrb[0].mxu0
          %v6582 = vadd.f32 %v6541, %v6581
          %v6583 = vpop.f32.mrb[0].mxu0
          %v6584 = vpop.f32.mrb[0].mxu0
          %6585 = vdwg.mxu0
          %6586 = vmatprep.subr.bf16.mxu0 %v5864
          %6587 = vmatpush1.bf16.msra.mxu0 %v5863
          %6588 = vmatprep.subr.bf16.mxu0 %v5868
          %6589 = vmatpush1.bf16.msra.mxu0 %v5867
          %6590 = vmatprep.subr.bf16.mxu0 %v5872
          %6591 = vmatpush1.bf16.msra.mxu0 %v5871
          %6592 = vmatprep.subr.bf16.mxu0 %v5876
          %6593 = vmatpush1.bf16.msra.mxu0 %v5875
          %6594 = vmatprep.subr.bf16.mxu0 %v5880
          %6595 = vmatpush1.bf16.msra.mxu0 %v5879
          %6596 = vmatprep.subr.bf16.mxu0 %v5884
          %6597 = vmatpush1.bf16.msra.mxu0 %v5883
          %6598 = vmatprep.subr.bf16.mxu0 %v5888
          %6599 = vmatpush1.bf16.msra.mxu0 %v5887
          %6600 = vmatprep.subr.bf16.mxu0 %v5892
          %6601 = vmatpush1.bf16.msra.mxu0 %v5891
          %6602 = vmatprep.subr.bf16.mxu0 %v5896
          %6603 = vmatpush1.bf16.msra.mxu0 %v5895
          %6604 = vmatprep.subr.bf16.mxu0 %v5900
          %6605 = vmatpush1.bf16.msra.mxu0 %v5899
          %6606 = vmatprep.subr.bf16.mxu0 %v5904
          %6607 = vmatpush1.bf16.msra.mxu0 %v5903
          %6608 = vmatprep.subr.bf16.mxu0 %v5908
          %6609 = vmatpush1.bf16.msra.mxu0 %v5907
          %6610 = vmatprep.subr.bf16.mxu0 %v5912
          %6611 = vmatpush1.bf16.msra.mxu0 %v5911
          %6612 = vmatprep.subr.bf16.mxu0 %v5916
          %6613 = vmatpush1.bf16.msra.mxu0 %v5915
          %6614 = vmatprep.subr.bf16.mxu0 %v5920
          %6615 = vmatpush1.bf16.msra.mxu0 %v5919
          %6616 = vmatprep.subr.bf16.mxu0 %v5924
          %6617 = vmatpush1.bf16.msra.mxu0 %v5923
          %6618 = vmatprep.mubr.bf16.mxu0 %v5280
          %6619 = vmatmul.mubr.bf16.gmra.mrb[0].mxu0 %v5279
          %v6620 = vpop.f32.mrb[0].mxu0
          %v6621 = vadd.f32 %v6580, %v6620
          %v6622 = vpop.f32.mrb[0].mxu0
          %v6623 = vadd.f32 %v6582, %v6622
          %v6624 = vpop.f32.mrb[0].mxu0
          %v6625 = vpop.f32.mrb[0].mxu0
          %6626 = vdwg.mxu0
          %6627 = vmatprep.subr.bf16.mxu0 %v5928
          %6628 = vmatpush1.bf16.msra.mxu0 %v5927
          %6629 = vmatprep.subr.bf16.mxu0 %v5932
          %6630 = vmatpush1.bf16.msra.mxu0 %v5931
          %6631 = vmatprep.subr.bf16.mxu0 %v5936
          %6632 = vmatpush1.bf16.msra.mxu0 %v5935
          %6633 = vmatprep.subr.bf16.mxu0 %v5940
          %6634 = vmatpush1.bf16.msra.mxu0 %v5939
          %6635 = vmatprep.subr.bf16.mxu0 %v5944
          %6636 = vmatpush1.bf16.msra.mxu0 %v5943
          %6637 = vmatprep.subr.bf16.mxu0 %v5948
          %6638 = vmatpush1.bf16.msra.mxu0 %v5947
          %6639 = vmatprep.subr.bf16.mxu0 %v5952
          %6640 = vmatpush1.bf16.msra.mxu0 %v5951
          %6641 = vmatprep.subr.bf16.mxu0 %v5956
          %6642 = vmatpush1.bf16.msra.mxu0 %v5955
          %6643 = vmatprep.subr.bf16.mxu0 %v5960
          %6644 = vmatpush1.bf16.msra.mxu0 %v5959
          %6645 = vmatprep.subr.bf16.mxu0 %v5964
          %6646 = vmatpush1.bf16.msra.mxu0 %v5963
          %6647 = vmatprep.subr.bf16.mxu0 %v5968
          %6648 = vmatpush1.bf16.msra.mxu0 %v5967
          %6649 = vmatprep.subr.bf16.mxu0 %v5972
          %6650 = vmatpush1.bf16.msra.mxu0 %v5971
          %6651 = vmatprep.subr.bf16.mxu0 %v5976
          %6652 = vmatpush1.bf16.msra.mxu0 %v5975
          %6653 = vmatprep.subr.bf16.mxu0 %v5980
          %6654 = vmatpush1.bf16.msra.mxu0 %v5979
          %6655 = vmatprep.subr.bf16.mxu0 %v5984
          %6656 = vmatpush1.bf16.msra.mxu0 %v5983
          %6657 = vmatprep.subr.bf16.mxu0 %v5988
          %6658 = vmatpush1.bf16.msra.mxu0 %v5987
          %6659 = vmatprep.mubr.bf16.mxu0 %v5282
          %6660 = vmatmul.mubr.bf16.gmra.mrb[0].mxu0 %v5281
          %v6661 = vpop.f32.mrb[0].mxu0
          %v6662 = vadd.f32 %v6621, %v6661
          %v6663 = vpop.f32.mrb[0].mxu0
          %v6664 = vadd.f32 %v6623, %v6663
          %v6665 = vpop.f32.mrb[0].mxu0
          %v6666 = vpop.f32.mrb[0].mxu0
          %6667 = vdwg.mxu0
          %6668 = vmatprep.subr.bf16.mxu0 %v5992
          %6669 = vmatpush1.bf16.msra.mxu0 %v5991
          %6670 = vmatprep.subr.bf16.mxu0 %v5996
          %6671 = vmatpush1.bf16.msra.mxu0 %v5995
          %6672 = vmatprep.subr.bf16.mxu0 %v6000
          %6673 = vmatpush1.bf16.msra.mxu0 %v5999
          %6674 = vmatprep.subr.bf16.mxu0 %v6004
          %6675 = vmatpush1.bf16.msra.mxu0 %v6003
          %6676 = vmatprep.subr.bf16.mxu0 %v6008
          %6677 = vmatpush1.bf16.msra.mxu0 %v6007
          %6678 = vmatprep.subr.bf16.mxu0 %v6012
          %6679 = vmatpush1.bf16.msra.mxu0 %v6011
          %6680 = vmatprep.subr.bf16.mxu0 %v6016
          %6681 = vmatpush1.bf16.msra.mxu0 %v6015
          %6682 = vmatprep.subr.bf16.mxu0 %v6020
          %6683 = vmatpush1.bf16.msra.mxu0 %v6019
          %6684 = vmatprep.subr.bf16.mxu0 %v6024
          %6685 = vmatpush1.bf16.msra.mxu0 %v6023
          %6686 = vmatprep.subr.bf16.mxu0 %v6028
          %6687 = vmatpush1.bf16.msra.mxu0 %v6027
          %6688 = vmatprep.subr.bf16.mxu0 %v6032
          %6689 = vmatpush1.bf16.msra.mxu0 %v6031
          %6690 = vmatprep.subr.bf16.mxu0 %v6036
          %6691 = vmatpush1.bf16.msra.mxu0 %v6035
          %6692 = vmatprep.subr.bf16.mxu0 %v6040
          %6693 = vmatpush1.bf16.msra.mxu0 %v6039
          %6694 = vmatprep.subr.bf16.mxu0 %v6044
          %6695 = vmatpush1.bf16.msra.mxu0 %v6043
          %6696 = vmatprep.subr.bf16.mxu0 %v6048
          %6697 = vmatpush1.bf16.msra.mxu0 %v6047
          %6698 = vmatprep.subr.bf16.mxu0 %v6052
          %6699 = vmatpush1.bf16.msra.mxu0 %v6051
          %6700 = vmatprep.mubr.bf16.mxu0 %v5284
          %6701 = vmatmul.mubr.bf16.gmra.mrb[0].mxu0 %v5283
          %v6702 = vpop.f32.mrb[0].mxu0
          %v6703 = vadd.f32 %v6662, %v6702
          %v6704 = vpop.f32.mrb[0].mxu0
          %v6705 = vadd.f32 %v6664, %v6704
          %v6706 = vpop.f32.mrb[0].mxu0
          %v6707 = vpop.f32.mrb[0].mxu0
          %6708 = vdwg.mxu0
          %v6709 = vld [vmem:[#allocation13] sm:$0xf]
          %v6711 = vlaneseq
          %v6712 = vshrl.u32 %v6711, 7
          %v6713 = vsub.s32 0, %v6712
          %v6714 = vrot.slane %v6709, %v6713
          %v6715 = vlaneseq
          %v6716 = vshrl.u32 %v6715, 7
          %v6717 = vsub.s32 1, %v6716
          %v6718 = vrot.slane %v6709, %v6717
          %v6719 = vlaneseq
          %v6720 = vshrl.u32 %v6719, 7
          %v6721 = vsub.s32 2, %v6720
          %v6722 = vrot.slane %v6709, %v6721
          %v6723 = vlaneseq
          %v6724 = vshrl.u32 %v6723, 7
          %v6725 = vsub.s32 3, %v6724
          %v6726 = vrot.slane %v6709, %v6725
          %v6731 = vmul.f32 %v6375, %v6714
          %v6732 = vmul.f32 %v6377, %v6718
          %v6733 = vmul.f32 %v6703, %v6722
          %v6734 = vmul.f32 %v6705, %v6726
          %v6735 = vld [vmem:[#allocation15] sm:$0xf]
          %v6737 = vlaneseq
          %v6738 = vshrl.u32 %v6737, 7
          %v6739 = vsub.s32 0, %v6738
          %v6740 = vrot.slane %v6735, %v6739
          %v6741 = vlaneseq
          %v6742 = vshrl.u32 %v6741, 7
          %v6743 = vsub.s32 1, %v6742
          %v6744 = vrot.slane %v6735, %v6743
          %v6745 = vlaneseq
          %v6746 = vshrl.u32 %v6745, 7
          %v6747 = vsub.s32 2, %v6746
          %v6748 = vrot.slane %v6735, %v6747
          %v6749 = vlaneseq
          %v6750 = vshrl.u32 %v6749, 7
          %v6751 = vsub.s32 3, %v6750
          %v6752 = vrot.slane %v6735, %v6751
          %v6757 = vadd.f32 %v6731, %v6740
          %v6758 = vadd.f32 %v6732, %v6744
          %v6759 = vadd.f32 %v6733, %v6748
          %v6760 = vadd.f32 %v6734, %v6752
          %v6761 = vmax.f32 %v6757, 0.0
          %v6762 = vmax.f32 %v6758, 0.0
          %v6763 = vmax.f32 %v6759, 0.0
          %v6764 = vmax.f32 %v6760, 0.0
          %v6765 = vpack.c.bf16 %v6761, %v6761
          %v6766 = vpack.c.bf16 %v6762, %v6762
          %v6767 = vpack.c.bf16 %v6763, %v6763
          %v6768 = vpack.c.bf16 %v6764, %v6764
          %v6769 = vld [vmem:[#allocation16] sm:$0xff]
          %v6770 = vld [vmem:[#allocation16 + $0x8] sm:$0xff]
          %v6771 = vld [vmem:[#allocation16 + $0x10] sm:$0xff]
          %v6772 = vld [vmem:[#allocation16 + $0x18] sm:$0xff]
          %v6773 = vld [vmem:[#allocation16 + $0x20] sm:$0xff]
          %v6774 = vld [vmem:[#allocation16 + $0x28] sm:$0xff]
          %v6775 = vld [vmem:[#allocation16 + $0x30] sm:$0xff]
          %v6776 = vld [vmem:[#allocation16 + $0x38] sm:$0xff]
          %v6777 = vld [vmem:[#allocation16 + $0x40] sm:$0xff]
          %v6778 = vld [vmem:[#allocation16 + $0x48] sm:$0xff]
          %v6779 = vld [vmem:[#allocation16 + $0x50] sm:$0xff]
          %v6780 = vld [vmem:[#allocation16 + $0x58] sm:$0xff]
          %v6781 = vld [vmem:[#allocation16 + $0x60] sm:$0xff]
          %v6782 = vld [vmem:[#allocation16 + $0x68] sm:$0xff]
          %v6783 = vld [vmem:[#allocation16 + $0x70] sm:$0xff]
          %v6784 = vld [vmem:[#allocation16 + $0x78] sm:$0xff]
          %v6785 = vld [vmem:[#allocation16 + $0x80] sm:$0xff]
          %v6786 = vld [vmem:[#allocation16 + $0x88] sm:$0xff]
          %v6787 = vld [vmem:[#allocation16 + $0x90] sm:$0xff]
          %v6788 = vld [vmem:[#allocation16 + $0x98] sm:$0xff]
          %v6789 = vld [vmem:[#allocation16 + $0xa0] sm:$0xff]
          %v6790 = vld [vmem:[#allocation16 + $0xa8] sm:$0xff]
          %v6791 = vld [vmem:[#allocation16 + $0xb0] sm:$0xff]
          %v6792 = vld [vmem:[#allocation16 + $0xb8] sm:$0xff]
          %v6793 = vld [vmem:[#allocation16 + $0xc0] sm:$0xff]
          %v6794 = vld [vmem:[#allocation16 + $0xc8] sm:$0xff]
          %v6795 = vld [vmem:[#allocation16 + $0xd0] sm:$0xff]
          %v6796 = vld [vmem:[#allocation16 + $0xd8] sm:$0xff]
          %v6797 = vld [vmem:[#allocation16 + $0xe0] sm:$0xff]
          %v6798 = vld [vmem:[#allocation16 + $0xe8] sm:$0xff]
          %v6799 = vld [vmem:[#allocation16 + $0xf0] sm:$0xff]
          %v6800 = vld [vmem:[#allocation16 + $0xf8] sm:$0xff]
          %v6801 = vld [vmem:[#allocation16 + $0x100] sm:$0xff]
          %v6802 = vld [vmem:[#allocation16 + $0x108] sm:$0xff]
          %v6803 = vld [vmem:[#allocation16 + $0x110] sm:$0xff]
          %v6804 = vld [vmem:[#allocation16 + $0x118] sm:$0xff]
          %v6805 = vld [vmem:[#allocation16 + $0x120] sm:$0xff]
          %v6806 = vld [vmem:[#allocation16 + $0x128] sm:$0xff]
          %v6807 = vld [vmem:[#allocation16 + $0x130] sm:$0xff]
          %v6808 = vld [vmem:[#allocation16 + $0x138] sm:$0xff]
          %v6809 = vld [vmem:[#allocation16 + $0x140] sm:$0xff]
          %v6810 = vld [vmem:[#allocation16 + $0x148] sm:$0xff]
          %v6811 = vld [vmem:[#allocation16 + $0x150] sm:$0xff]
          %v6812 = vld [vmem:[#allocation16 + $0x158] sm:$0xff]
          %v6813 = vld [vmem:[#allocation16 + $0x160] sm:$0xff]
          %v6814 = vld [vmem:[#allocation16 + $0x168] sm:$0xff]
          %v6815 = vld [vmem:[#allocation16 + $0x170] sm:$0xff]
          %v6816 = vld [vmem:[#allocation16 + $0x178] sm:$0xff]
          %v6817 = vld [vmem:[#allocation16 + $0x180] sm:$0xff]
          %v6818 = vld [vmem:[#allocation16 + $0x188] sm:$0xff]
          %v6819 = vld [vmem:[#allocation16 + $0x190] sm:$0xff]
          %v6820 = vld [vmem:[#allocation16 + $0x198] sm:$0xff]
          %v6821 = vld [vmem:[#allocation16 + $0x1a0] sm:$0xff]
          %v6822 = vld [vmem:[#allocation16 + $0x1a8] sm:$0xff]
          %v6823 = vld [vmem:[#allocation16 + $0x1b0] sm:$0xff]
          %v6824 = vld [vmem:[#allocation16 + $0x1b8] sm:$0xff]
          %v6825 = vld [vmem:[#allocation16 + $0x1c0] sm:$0xff]
          %v6826 = vld [vmem:[#allocation16 + $0x1c8] sm:$0xff]
          %v6827 = vld [vmem:[#allocation16 + $0x1d0] sm:$0xff]
          %v6828 = vld [vmem:[#allocation16 + $0x1d8] sm:$0xff]
          %v6829 = vld [vmem:[#allocation16 + $0x1e0] sm:$0xff]
          %v6830 = vld [vmem:[#allocation16 + $0x1e8] sm:$0xff]
          %v6831 = vld [vmem:[#allocation16 + $0x1f0] sm:$0xff]
          %v6832 = vld [vmem:[#allocation16 + $0x1f8] sm:$0xff]
          %v6833 = vunpack.c.l.s8.bf16 %v6769
          %v6834 = vunpack.c.l.s8.bf16 %v6770
          %v6835 = vunpack.c.l.s8.bf16 %v6771
          %v6836 = vunpack.c.l.s8.bf16 %v6772
          %v6837 = vunpack.c.h.s8.bf16 %v6769
          %v6838 = vunpack.c.h.s8.bf16 %v6770
          %v6839 = vunpack.c.h.s8.bf16 %v6771
          %v6840 = vunpack.c.h.s8.bf16 %v6772
          %v6841 = vunpack.c.l.s8.bf16 %v6773
          %v6842 = vunpack.c.l.s8.bf16 %v6774
          %v6843 = vunpack.c.l.s8.bf16 %v6775
          %v6844 = vunpack.c.l.s8.bf16 %v6776
          %v6845 = vunpack.c.h.s8.bf16 %v6773
          %v6846 = vunpack.c.h.s8.bf16 %v6774
          %v6847 = vunpack.c.h.s8.bf16 %v6775
          %v6848 = vunpack.c.h.s8.bf16 %v6776
          %v6849 = vunpack.c.l.s8.bf16 %v6777
          %v6850 = vunpack.c.l.s8.bf16 %v6778
          %v6851 = vunpack.c.l.s8.bf16 %v6779
          %v6852 = vunpack.c.l.s8.bf16 %v6780
          %v6853 = vunpack.c.h.s8.bf16 %v6777
          %v6854 = vunpack.c.h.s8.bf16 %v6778
          %v6855 = vunpack.c.h.s8.bf16 %v6779
          %v6856 = vunpack.c.h.s8.bf16 %v6780
          %v6857 = vunpack.c.l.s8.bf16 %v6781
          %v6858 = vunpack.c.l.s8.bf16 %v6782
          %v6859 = vunpack.c.l.s8.bf16 %v6783
          %v6860 = vunpack.c.l.s8.bf16 %v6784
          %v6861 = vunpack.c.h.s8.bf16 %v6781
          %v6862 = vunpack.c.h.s8.bf16 %v6782
          %v6863 = vunpack.c.h.s8.bf16 %v6783
          %v6864 = vunpack.c.h.s8.bf16 %v6784
          %v6865 = vunpack.c.l.s8.bf16 %v6785
          %v6866 = vunpack.c.l.s8.bf16 %v6786
          %v6867 = vunpack.c.l.s8.bf16 %v6787
          %v6868 = vunpack.c.l.s8.bf16 %v6788
          %v6869 = vunpack.c.h.s8.bf16 %v6785
          %v6870 = vunpack.c.h.s8.bf16 %v6786
          %v6871 = vunpack.c.h.s8.bf16 %v6787
          %v6872 = vunpack.c.h.s8.bf16 %v6788
          %v6873 = vunpack.c.l.s8.bf16 %v6789
          %v6874 = vunpack.c.l.s8.bf16 %v6790
          %v6875 = vunpack.c.l.s8.bf16 %v6791
          %v6876 = vunpack.c.l.s8.bf16 %v6792
          %v6877 = vunpack.c.h.s8.bf16 %v6789
          %v6878 = vunpack.c.h.s8.bf16 %v6790
          %v6879 = vunpack.c.h.s8.bf16 %v6791
          %v6880 = vunpack.c.h.s8.bf16 %v6792
          %v6881 = vunpack.c.l.s8.bf16 %v6793
          %v6882 = vunpack.c.l.s8.bf16 %v6794
          %v6883 = vunpack.c.l.s8.bf16 %v6795
          %v6884 = vunpack.c.l.s8.bf16 %v6796
          %v6885 = vunpack.c.h.s8.bf16 %v6793
          %v6886 = vunpack.c.h.s8.bf16 %v6794
          %v6887 = vunpack.c.h.s8.bf16 %v6795
          %v6888 = vunpack.c.h.s8.bf16 %v6796
          %v6889 = vunpack.c.l.s8.bf16 %v6797
          %v6890 = vunpack.c.l.s8.bf16 %v6798
          %v6891 = vunpack.c.l.s8.bf16 %v6799
          %v6892 = vunpack.c.l.s8.bf16 %v6800
          %v6893 = vunpack.c.h.s8.bf16 %v6797
          %v6894 = vunpack.c.h.s8.bf16 %v6798
          %v6895 = vunpack.c.h.s8.bf16 %v6799
          %v6896 = vunpack.c.h.s8.bf16 %v6800
          %v6897 = vunpack.c.l.s8.bf16 %v6801
          %v6898 = vunpack.c.l.s8.bf16 %v6802
          %v6899 = vunpack.c.l.s8.bf16 %v6803
          %v6900 = vunpack.c.l.s8.bf16 %v6804
          %v6901 = vunpack.c.h.s8.bf16 %v6801
          %v6902 = vunpack.c.h.s8.bf16 %v6802
          %v6903 = vunpack.c.h.s8.bf16 %v6803
          %v6904 = vunpack.c.h.s8.bf16 %v6804
          %v6905 = vunpack.c.l.s8.bf16 %v6805
          %v6906 = vunpack.c.l.s8.bf16 %v6806
          %v6907 = vunpack.c.l.s8.bf16 %v6807
          %v6908 = vunpack.c.l.s8.bf16 %v6808
          %v6909 = vunpack.c.h.s8.bf16 %v6805
          %v6910 = vunpack.c.h.s8.bf16 %v6806
          %v6911 = vunpack.c.h.s8.bf16 %v6807
          %v6912 = vunpack.c.h.s8.bf16 %v6808
          %v6913 = vunpack.c.l.s8.bf16 %v6809
          %v6914 = vunpack.c.l.s8.bf16 %v6810
          %v6915 = vunpack.c.l.s8.bf16 %v6811
          %v6916 = vunpack.c.l.s8.bf16 %v6812
          %v6917 = vunpack.c.h.s8.bf16 %v6809
          %v6918 = vunpack.c.h.s8.bf16 %v6810
          %v6919 = vunpack.c.h.s8.bf16 %v6811
          %v6920 = vunpack.c.h.s8.bf16 %v6812
          %v6921 = vunpack.c.l.s8.bf16 %v6813
          %v6922 = vunpack.c.l.s8.bf16 %v6814
          %v6923 = vunpack.c.l.s8.bf16 %v6815
          %v6924 = vunpack.c.l.s8.bf16 %v6816
          %v6925 = vunpack.c.h.s8.bf16 %v6813
          %v6926 = vunpack.c.h.s8.bf16 %v6814
          %v6927 = vunpack.c.h.s8.bf16 %v6815
          %v6928 = vunpack.c.h.s8.bf16 %v6816
          %v6929 = vunpack.c.l.s8.bf16 %v6817
          %v6930 = vunpack.c.l.s8.bf16 %v6818
          %v6931 = vunpack.c.l.s8.bf16 %v6819
          %v6932 = vunpack.c.l.s8.bf16 %v6820
          %v6933 = vunpack.c.h.s8.bf16 %v6817
          %v6934 = vunpack.c.h.s8.bf16 %v6818
          %v6935 = vunpack.c.h.s8.bf16 %v6819
          %v6936 = vunpack.c.h.s8.bf16 %v6820
          %v6937 = vunpack.c.l.s8.bf16 %v6821
          %v6938 = vunpack.c.l.s8.bf16 %v6822
          %v6939 = vunpack.c.l.s8.bf16 %v6823
          %v6940 = vunpack.c.l.s8.bf16 %v6824
          %v6941 = vunpack.c.h.s8.bf16 %v6821
          %v6942 = vunpack.c.h.s8.bf16 %v6822
          %v6943 = vunpack.c.h.s8.bf16 %v6823
          %v6944 = vunpack.c.h.s8.bf16 %v6824
          %v6945 = vunpack.c.l.s8.bf16 %v6825
          %v6946 = vunpack.c.l.s8.bf16 %v6826
          %v6947 = vunpack.c.l.s8.bf16 %v6827
          %v6948 = vunpack.c.l.s8.bf16 %v6828
          %v6949 = vunpack.c.h.s8.bf16 %v6825
          %v6950 = vunpack.c.h.s8.bf16 %v6826
          %v6951 = vunpack.c.h.s8.bf16 %v6827
          %v6952 = vunpack.c.h.s8.bf16 %v6828
          %v6953 = vunpack.c.l.s8.bf16 %v6829
          %v6954 = vunpack.c.l.s8.bf16 %v6830
          %v6955 = vunpack.c.l.s8.bf16 %v6831
          %v6956 = vunpack.c.l.s8.bf16 %v6832
          %v6957 = vunpack.c.h.s8.bf16 %v6829
          %v6958 = vunpack.c.h.s8.bf16 %v6830
          %v6959 = vunpack.c.h.s8.bf16 %v6831
          %v6960 = vunpack.c.h.s8.bf16 %v6832
          %6961 = vmatprep.subr.bf16.mxu0 %v6834
          %6962 = vmatpush1.bf16.msra.mxu0 %v6833
          %6963 = vmatprep.subr.bf16.mxu0 %v6838
          %6964 = vmatpush1.bf16.msra.mxu0 %v6837
          %6965 = vmatprep.subr.bf16.mxu0 %v6842
          %6966 = vmatpush1.bf16.msra.mxu0 %v6841
          %6967 = vmatprep.subr.bf16.mxu0 %v6846
          %6968 = vmatpush1.bf16.msra.mxu0 %v6845
          %6969 = vmatprep.subr.bf16.mxu0 %v6850
          %6970 = vmatpush1.bf16.msra.mxu0 %v6849
          %6971 = vmatprep.subr.bf16.mxu0 %v6854
          %6972 = vmatpush1.bf16.msra.mxu0 %v6853
          %6973 = vmatprep.subr.bf16.mxu0 %v6858
          %6974 = vmatpush1.bf16.msra.mxu0 %v6857
          %6975 = vmatprep.subr.bf16.mxu0 %v6862
          %6976 = vmatpush1.bf16.msra.mxu0 %v6861
          %6977 = vmatprep.subr.bf16.mxu0 %v6866
          %6978 = vmatpush1.bf16.msra.mxu0 %v6865
          %6979 = vmatprep.subr.bf16.mxu0 %v6870
          %6980 = vmatpush1.bf16.msra.mxu0 %v6869
          %6981 = vmatprep.subr.bf16.mxu0 %v6874
          %6982 = vmatpush1.bf16.msra.mxu0 %v6873
          %6983 = vmatprep.subr.bf16.mxu0 %v6878
          %6984 = vmatpush1.bf16.msra.mxu0 %v6877
          %6985 = vmatprep.subr.bf16.mxu0 %v6882
          %6986 = vmatpush1.bf16.msra.mxu0 %v6881
          %6987 = vmatprep.subr.bf16.mxu0 %v6886
          %6988 = vmatpush1.bf16.msra.mxu0 %v6885
          %6989 = vmatprep.subr.bf16.mxu0 %v6890
          %6990 = vmatpush1.bf16.msra.mxu0 %v6889
          %6991 = vmatprep.subr.bf16.mxu0 %v6894
          %6992 = vmatpush1.bf16.msra.mxu0 %v6893
          %6993 = vmatprep.mubr.bf16.mxu0 %v6766
          %6994 = vmatmul.mubr.bf16.gmra.mrb[0].mxu0 %v6765
          %v6995 = vpop.f32.mrb[0].mxu0
          %v6996 = vadd.f32 0.0, %v6995
          %v6997 = vpop.f32.mrb[0].mxu0
          %v6998 = vadd.f32 0.0, %v6997
          %v6999 = vpop.f32.mrb[0].mxu0
          %v7000 = vpop.f32.mrb[0].mxu0
          %7001 = vdwg.mxu0
          %7002 = vmatprep.subr.bf16.mxu0 %v6898
          %7003 = vmatpush1.bf16.msra.mxu0 %v6897
          %7004 = vmatprep.subr.bf16.mxu0 %v6902
          %7005 = vmatpush1.bf16.msra.mxu0 %v6901
          %7006 = vmatprep.subr.bf16.mxu0 %v6906
          %7007 = vmatpush1.bf16.msra.mxu0 %v6905
          %7008 = vmatprep.subr.bf16.mxu0 %v6910
          %7009 = vmatpush1.bf16.msra.mxu0 %v6909
          %7010 = vmatprep.subr.bf16.mxu0 %v6914
          %7011 = vmatpush1.bf16.msra.mxu0 %v6913
          %7012 = vmatprep.subr.bf16.mxu0 %v6918
          %7013 = vmatpush1.bf16.msra.mxu0 %v6917
          %7014 = vmatprep.subr.bf16.mxu0 %v6922
          %7015 = vmatpush1.bf16.msra.mxu0 %v6921
          %7016 = vmatprep.subr.bf16.mxu0 %v6926
          %7017 = vmatpush1.bf16.msra.mxu0 %v6925
          %7018 = vmatprep.subr.bf16.mxu0 %v6930
          %7019 = vmatpush1.bf16.msra.mxu0 %v6929
          %7020 = vmatprep.subr.bf16.mxu0 %v6934
          %7021 = vmatpush1.bf16.msra.mxu0 %v6933
          %7022 = vmatprep.subr.bf16.mxu0 %v6938
          %7023 = vmatpush1.bf16.msra.mxu0 %v6937
          %7024 = vmatprep.subr.bf16.mxu0 %v6942
          %7025 = vmatpush1.bf16.msra.mxu0 %v6941
          %7026 = vmatprep.subr.bf16.mxu0 %v6946
          %7027 = vmatpush1.bf16.msra.mxu0 %v6945
          %7028 = vmatprep.subr.bf16.mxu0 %v6950
          %7029 = vmatpush1.bf16.msra.mxu0 %v6949
          %7030 = vmatprep.subr.bf16.mxu0 %v6954
          %7031 = vmatpush1.bf16.msra.mxu0 %v6953
          %7032 = vmatprep.subr.bf16.mxu0 %v6958
          %7033 = vmatpush1.bf16.msra.mxu0 %v6957
          %7034 = vmatprep.mubr.bf16.mxu0 %v6768
          %7035 = vmatmul.mubr.bf16.gmra.mrb[0].mxu0 %v6767
          %v7036 = vpop.f32.mrb[0].mxu0
          %v7037 = vadd.f32 %v6996, %v7036
          %v7038 = vpop.f32.mrb[0].mxu0
          %v7039 = vadd.f32 %v6998, %v7038
          %v7040 = vpop.f32.mrb[0].mxu0
          %v7041 = vpop.f32.mrb[0].mxu0
          %7042 = vdwg.mxu0
          %7043 = vmatprep.subr.bf16.mxu0 %v6836
          %7044 = vmatpush1.bf16.msra.mxu0 %v6835
          %7045 = vmatprep.subr.bf16.mxu0 %v6840
          %7046 = vmatpush1.bf16.msra.mxu0 %v6839
          %7047 = vmatprep.subr.bf16.mxu0 %v6844
          %7048 = vmatpush1.bf16.msra.mxu0 %v6843
          %7049 = vmatprep.subr.bf16.mxu0 %v6848
          %7050 = vmatpush1.bf16.msra.mxu0 %v6847
          %7051 = vmatprep.subr.bf16.mxu0 %v6852
          %7052 = vmatpush1.bf16.msra.mxu0 %v6851
          %7053 = vmatprep.subr.bf16.mxu0 %v6856
          %7054 = vmatpush1.bf16.msra.mxu0 %v6855
          %7055 = vmatprep.subr.bf16.mxu0 %v6860
          %7056 = vmatpush1.bf16.msra.mxu0 %v6859
          %7057 = vmatprep.subr.bf16.mxu0 %v6864
          %7058 = vmatpush1.bf16.msra.mxu0 %v6863
          %7059 = vmatprep.subr.bf16.mxu0 %v6868
          %7060 = vmatpush1.bf16.msra.mxu0 %v6867
          %7061 = vmatprep.subr.bf16.mxu0 %v6872
          %7062 = vmatpush1.bf16.msra.mxu0 %v6871
          %7063 = vmatprep.subr.bf16.mxu0 %v6876
          %7064 = vmatpush1.bf16.msra.mxu0 %v6875
          %7065 = vmatprep.subr.bf16.mxu0 %v6880
          %7066 = vmatpush1.bf16.msra.mxu0 %v6879
          %7067 = vmatprep.subr.bf16.mxu0 %v6884
          %7068 = vmatpush1.bf16.msra.mxu0 %v6883
          %7069 = vmatprep.subr.bf16.mxu0 %v6888
          %7070 = vmatpush1.bf16.msra.mxu0 %v6887
          %7071 = vmatprep.subr.bf16.mxu0 %v6892
          %7072 = vmatpush1.bf16.msra.mxu0 %v6891
          %7073 = vmatprep.subr.bf16.mxu0 %v6896
          %7074 = vmatpush1.bf16.msra.mxu0 %v6895
          %7075 = vmatprep.mubr.bf16.mxu0 %v6766
          %7076 = vmatmul.mubr.bf16.gmra.mrb[0].mxu0 %v6765
          %v7077 = vpop.f32.mrb[0].mxu0
          %v7078 = vadd.f32 0.0, %v7077
          %v7079 = vpop.f32.mrb[0].mxu0
          %v7080 = vadd.f32 0.0, %v7079
          %v7081 = vpop.f32.mrb[0].mxu0
          %v7082 = vpop.f32.mrb[0].mxu0
          %7083 = vdwg.mxu0
          %7084 = vmatprep.subr.bf16.mxu0 %v6900
          %7085 = vmatpush1.bf16.msra.mxu0 %v6899
          %7086 = vmatprep.subr.bf16.mxu0 %v6904
          %7087 = vmatpush1.bf16.msra.mxu0 %v6903
          %7088 = vmatprep.subr.bf16.mxu0 %v6908
          %7089 = vmatpush1.bf16.msra.mxu0 %v6907
          %7090 = vmatprep.subr.bf16.mxu0 %v6912
          %7091 = vmatpush1.bf16.msra.mxu0 %v6911
          %7092 = vmatprep.subr.bf16.mxu0 %v6916
          %7093 = vmatpush1.bf16.msra.mxu0 %v6915
          %7094 = vmatprep.subr.bf16.mxu0 %v6920
          %7095 = vmatpush1.bf16.msra.mxu0 %v6919
          %7096 = vmatprep.subr.bf16.mxu0 %v6924
          %7097 = vmatpush1.bf16.msra.mxu0 %v6923
          %7098 = vmatprep.subr.bf16.mxu0 %v6928
          %7099 = vmatpush1.bf16.msra.mxu0 %v6927
          %7100 = vmatprep.subr.bf16.mxu0 %v6932
          %7101 = vmatpush1.bf16.msra.mxu0 %v6931
          %7102 = vmatprep.subr.bf16.mxu0 %v6936
          %7103 = vmatpush1.bf16.msra.mxu0 %v6935
          %7104 = vmatprep.subr.bf16.mxu0 %v6940
          %7105 = vmatpush1.bf16.msra.mxu0 %v6939
          %7106 = vmatprep.subr.bf16.mxu0 %v6944
          %7107 = vmatpush1.bf16.msra.mxu0 %v6943
          %7108 = vmatprep.subr.bf16.mxu0 %v6948
          %7109 = vmatpush1.bf16.msra.mxu0 %v6947
          %7110 = vmatprep.subr.bf16.mxu0 %v6952
          %7111 = vmatpush1.bf16.msra.mxu0 %v6951
          %7112 = vmatprep.subr.bf16.mxu0 %v6956
          %7113 = vmatpush1.bf16.msra.mxu0 %v6955
          %7114 = vmatprep.subr.bf16.mxu0 %v6960
          %7115 = vmatpush1.bf16.msra.mxu0 %v6959
          %7116 = vmatprep.mubr.bf16.mxu0 %v6768
          %7117 = vmatmul.mubr.bf16.gmra.mrb[0].mxu0 %v6767
          %v7118 = vpop.f32.mrb[0].mxu0
          %v7119 = vadd.f32 %v7078, %v7118
          %v7120 = vpop.f32.mrb[0].mxu0
          %v7121 = vadd.f32 %v7080, %v7120
          %v7122 = vpop.f32.mrb[0].mxu0
          %v7123 = vpop.f32.mrb[0].mxu0
          %7124 = vdwg.mxu0
          %v7125 = vld [vmem:[#allocation18] sm:$0xf]
          %v7127 = vlaneseq
          %v7128 = vshrl.u32 %v7127, 7
          %v7129 = vsub.s32 0, %v7128
          %v7130 = vrot.slane %v7125, %v7129
          %v7131 = vlaneseq
          %v7132 = vshrl.u32 %v7131, 7
          %v7133 = vsub.s32 1, %v7132
          %v7134 = vrot.slane %v7125, %v7133
          %v7135 = vlaneseq
          %v7136 = vshrl.u32 %v7135, 7
          %v7137 = vsub.s32 2, %v7136
          %v7138 = vrot.slane %v7125, %v7137
          %v7139 = vlaneseq
          %v7140 = vshrl.u32 %v7139, 7
          %v7141 = vsub.s32 3, %v7140
          %v7142 = vrot.slane %v7125, %v7141
          %v7147 = vmul.f32 %v7037, %v7130
          %v7148 = vmul.f32 %v7039, %v7134
          %v7149 = vmul.f32 %v7119, %v7138
          %v7150 = vmul.f32 %v7121, %v7142
          %v7151 = vld [vmem:[#allocation19] sm:$0xf]
          %v7153 = vlaneseq
          %v7154 = vshrl.u32 %v7153, 7
          %v7155 = vsub.s32 0, %v7154
          %v7156 = vrot.slane %v7151, %v7155
          %v7157 = vlaneseq
          %v7158 = vshrl.u32 %v7157, 7
          %v7159 = vsub.s32 1, %v7158
          %v7160 = vrot.slane %v7151, %v7159
          %v7161 = vlaneseq
          %v7162 = vshrl.u32 %v7161, 7
          %v7163 = vsub.s32 2, %v7162
          %v7164 = vrot.slane %v7151, %v7163
          %v7165 = vlaneseq
          %v7166 = vshrl.u32 %v7165, 7
          %v7167 = vsub.s32 3, %v7166
          %v7168 = vrot.slane %v7151, %v7167
          %v7173 = vadd.f32 %v7147, %v7156
          %v7174 = vadd.f32 %v7148, %v7160
          %v7175 = vadd.f32 %v7149, %v7164
          %v7176 = vadd.f32 %v7150, %v7168
          %v7177 = vmax.f32 %v7173, 0.0
          %v7178 = vmax.f32 %v7174, 0.0
          %v7179 = vmax.f32 %v7175, 0.0
          %v7180 = vmax.f32 %v7176, 0.0
          %v7181 = vpack.c.bf16 %v7177, %v7177
          %v7182 = vpack.c.bf16 %v7178, %v7178
          %v7183 = vpack.c.bf16 %v7179, %v7179
          %v7184 = vpack.c.bf16 %v7180, %v7180
          %v7185 = vld [vmem:[#allocation21] sm:$0xff]
          %v7186 = vld [vmem:[#allocation21 + $0x8] sm:$0xff]
          %v7187 = vld [vmem:[#allocation21 + $0x10] sm:$0xff]
          %v7188 = vld [vmem:[#allocation21 + $0x18] sm:$0xff]
          %v7189 = vld [vmem:[#allocation21 + $0x20] sm:$0xff]
          %v7190 = vld [vmem:[#allocation21 + $0x28] sm:$0xff]
          %v7191 = vld [vmem:[#allocation21 + $0x30] sm:$0xff]
          %v7192 = vld [vmem:[#allocation21 + $0x38] sm:$0xff]
          %v7193 = vld [vmem:[#allocation21 + $0x40] sm:$0xff]
          %v7194 = vld [vmem:[#allocation21 + $0x48] sm:$0xff]
          %v7195 = vld [vmem:[#allocation21 + $0x50] sm:$0xff]
          %v7196 = vld [vmem:[#allocation21 + $0x58] sm:$0xff]
          %v7197 = vld [vmem:[#allocation21 + $0x60] sm:$0xff]
          %v7198 = vld [vmem:[#allocation21 + $0x68] sm:$0xff]
          %v7199 = vld [vmem:[#allocation21 + $0x70] sm:$0xff]
          %v7200 = vld [vmem:[#allocation21 + $0x78] sm:$0xff]
          %v7201 = vld [vmem:[#allocation21 + $0x80] sm:$0xff]
          %v7202 = vld [vmem:[#allocation21 + $0x88] sm:$0xff]
          %v7203 = vld [vmem:[#allocation21 + $0x90] sm:$0xff]
          %v7204 = vld [vmem:[#allocation21 + $0x98] sm:$0xff]
          %v7205 = vld [vmem:[#allocation21 + $0xa0] sm:$0xff]
          %v7206 = vld [vmem:[#allocation21 + $0xa8] sm:$0xff]
          %v7207 = vld [vmem:[#allocation21 + $0xb0] sm:$0xff]
          %v7208 = vld [vmem:[#allocation21 + $0xb8] sm:$0xff]
          %v7209 = vld [vmem:[#allocation21 + $0xc0] sm:$0xff]
          %v7210 = vld [vmem:[#allocation21 + $0xc8] sm:$0xff]
          %v7211 = vld [vmem:[#allocation21 + $0xd0] sm:$0xff]
          %v7212 = vld [vmem:[#allocation21 + $0xd8] sm:$0xff]
          %v7213 = vld [vmem:[#allocation21 + $0xe0] sm:$0xff]
          %v7214 = vld [vmem:[#allocation21 + $0xe8] sm:$0xff]
          %v7215 = vld [vmem:[#allocation21 + $0xf0] sm:$0xff]
          %v7216 = vld [vmem:[#allocation21 + $0xf8] sm:$0xff]
          %v7217 = vld [vmem:[#allocation21 + $0x100] sm:$0xff]
          %v7218 = vld [vmem:[#allocation21 + $0x108] sm:$0xff]
          %v7219 = vld [vmem:[#allocation21 + $0x110] sm:$0xff]
          %v7220 = vld [vmem:[#allocation21 + $0x118] sm:$0xff]
          %v7221 = vld [vmem:[#allocation21 + $0x120] sm:$0xff]
          %v7222 = vld [vmem:[#allocation21 + $0x128] sm:$0xff]
          %v7223 = vld [vmem:[#allocation21 + $0x130] sm:$0xff]
          %v7224 = vld [vmem:[#allocation21 + $0x138] sm:$0xff]
          %v7225 = vld [vmem:[#allocation21 + $0x140] sm:$0xff]
          %v7226 = vld [vmem:[#allocation21 + $0x148] sm:$0xff]
          %v7227 = vld [vmem:[#allocation21 + $0x150] sm:$0xff]
          %v7228 = vld [vmem:[#allocation21 + $0x158] sm:$0xff]
          %v7229 = vld [vmem:[#allocation21 + $0x160] sm:$0xff]
          %v7230 = vld [vmem:[#allocation21 + $0x168] sm:$0xff]
          %v7231 = vld [vmem:[#allocation21 + $0x170] sm:$0xff]
          %v7232 = vld [vmem:[#allocation21 + $0x178] sm:$0xff]
          %v7233 = vld [vmem:[#allocation21 + $0x180] sm:$0xff]
          %v7234 = vld [vmem:[#allocation21 + $0x188] sm:$0xff]
          %v7235 = vld [vmem:[#allocation21 + $0x190] sm:$0xff]
          %v7236 = vld [vmem:[#allocation21 + $0x198] sm:$0xff]
          %v7237 = vld [vmem:[#allocation21 + $0x1a0] sm:$0xff]
          %v7238 = vld [vmem:[#allocation21 + $0x1a8] sm:$0xff]
          %v7239 = vld [vmem:[#allocation21 + $0x1b0] sm:$0xff]
          %v7240 = vld [vmem:[#allocation21 + $0x1b8] sm:$0xff]
          %v7241 = vld [vmem:[#allocation21 + $0x1c0] sm:$0xff]
          %v7242 = vld [vmem:[#allocation21 + $0x1c8] sm:$0xff]
          %v7243 = vld [vmem:[#allocation21 + $0x1d0] sm:$0xff]
          %v7244 = vld [vmem:[#allocation21 + $0x1d8] sm:$0xff]
          %v7245 = vld [vmem:[#allocation21 + $0x1e0] sm:$0xff]
          %v7246 = vld [vmem:[#allocation21 + $0x1e8] sm:$0xff]
          %v7247 = vld [vmem:[#allocation21 + $0x1f0] sm:$0xff]
          %v7248 = vld [vmem:[#allocation21 + $0x1f8] sm:$0xff]
          %v7249 = vunpack.c.l.s8.bf16 %v7185
          %v7250 = vunpack.c.l.s8.bf16 %v7186
          %v7251 = vunpack.c.l.s8.bf16 %v7187
          %v7252 = vunpack.c.l.s8.bf16 %v7188
          %v7253 = vunpack.c.h.s8.bf16 %v7185
          %v7254 = vunpack.c.h.s8.bf16 %v7186
          %v7255 = vunpack.c.h.s8.bf16 %v7187
          %v7256 = vunpack.c.h.s8.bf16 %v7188
          %v7257 = vunpack.c.l.s8.bf16 %v7189
          %v7258 = vunpack.c.l.s8.bf16 %v7190
          %v7259 = vunpack.c.l.s8.bf16 %v7191
          %v7260 = vunpack.c.l.s8.bf16 %v7192
          %v7261 = vunpack.c.h.s8.bf16 %v7189
          %v7262 = vunpack.c.h.s8.bf16 %v7190
          %v7263 = vunpack.c.h.s8.bf16 %v7191
          %v7264 = vunpack.c.h.s8.bf16 %v7192
          %v7265 = vunpack.c.l.s8.bf16 %v7193
          %v7266 = vunpack.c.l.s8.bf16 %v7194
          %v7267 = vunpack.c.l.s8.bf16 %v7195
          %v7268 = vunpack.c.l.s8.bf16 %v7196
          %v7269 = vunpack.c.h.s8.bf16 %v7193
          %v7270 = vunpack.c.h.s8.bf16 %v7194
          %v7271 = vunpack.c.h.s8.bf16 %v7195
          %v7272 = vunpack.c.h.s8.bf16 %v7196
          %v7273 = vunpack.c.l.s8.bf16 %v7197
          %v7274 = vunpack.c.l.s8.bf16 %v7198
          %v7275 = vunpack.c.l.s8.bf16 %v7199
          %v7276 = vunpack.c.l.s8.bf16 %v7200
          %v7277 = vunpack.c.h.s8.bf16 %v7197
          %v7278 = vunpack.c.h.s8.bf16 %v7198
          %v7279 = vunpack.c.h.s8.bf16 %v7199
          %v7280 = vunpack.c.h.s8.bf16 %v7200
          %v7281 = vunpack.c.l.s8.bf16 %v7201
          %v7282 = vunpack.c.l.s8.bf16 %v7202
          %v7283 = vunpack.c.l.s8.bf16 %v7203
          %v7284 = vunpack.c.l.s8.bf16 %v7204
          %v7285 = vunpack.c.h.s8.bf16 %v7201
          %v7286 = vunpack.c.h.s8.bf16 %v7202
          %v7287 = vunpack.c.h.s8.bf16 %v7203
          %v7288 = vunpack.c.h.s8.bf16 %v7204
          %v7289 = vunpack.c.l.s8.bf16 %v7205
          %v7290 = vunpack.c.l.s8.bf16 %v7206
          %v7291 = vunpack.c.l.s8.bf16 %v7207
          %v7292 = vunpack.c.l.s8.bf16 %v7208
          %v7293 = vunpack.c.h.s8.bf16 %v7205
          %v7294 = vunpack.c.h.s8.bf16 %v7206
          %v7295 = vunpack.c.h.s8.bf16 %v7207
          %v7296 = vunpack.c.h.s8.bf16 %v7208
          %v7297 = vunpack.c.l.s8.bf16 %v7209
          %v7298 = vunpack.c.l.s8.bf16 %v7210
          %v7299 = vunpack.c.l.s8.bf16 %v7211
          %v7300 = vunpack.c.l.s8.bf16 %v7212
          %v7301 = vunpack.c.h.s8.bf16 %v7209
          %v7302 = vunpack.c.h.s8.bf16 %v7210
          %v7303 = vunpack.c.h.s8.bf16 %v7211
          %v7304 = vunpack.c.h.s8.bf16 %v7212
          %v7305 = vunpack.c.l.s8.bf16 %v7213
          %v7306 = vunpack.c.l.s8.bf16 %v7214
          %v7307 = vunpack.c.l.s8.bf16 %v7215
          %v7308 = vunpack.c.l.s8.bf16 %v7216
          %v7309 = vunpack.c.h.s8.bf16 %v7213
          %v7310 = vunpack.c.h.s8.bf16 %v7214
          %v7311 = vunpack.c.h.s8.bf16 %v7215
          %v7312 = vunpack.c.h.s8.bf16 %v7216
          %v7313 = vunpack.c.l.s8.bf16 %v7217
          %v7314 = vunpack.c.l.s8.bf16 %v7218
          %v7315 = vunpack.c.l.s8.bf16 %v7219
          %v7316 = vunpack.c.l.s8.bf16 %v7220
          %v7317 = vunpack.c.h.s8.bf16 %v7217
          %v7318 = vunpack.c.h.s8.bf16 %v7218
          %v7319 = vunpack.c.h.s8.bf16 %v7219
          %v7320 = vunpack.c.h.s8.bf16 %v7220
          %v7321 = vunpack.c.l.s8.bf16 %v7221
          %v7322 = vunpack.c.l.s8.bf16 %v7222
          %v7323 = vunpack.c.l.s8.bf16 %v7223
          %v7324 = vunpack.c.l.s8.bf16 %v7224
          %v7325 = vunpack.c.h.s8.bf16 %v7221
          %v7326 = vunpack.c.h.s8.bf16 %v7222
          %v7327 = vunpack.c.h.s8.bf16 %v7223
          %v7328 = vunpack.c.h.s8.bf16 %v7224
          %v7329 = vunpack.c.l.s8.bf16 %v7225
          %v7330 = vunpack.c.l.s8.bf16 %v7226
          %v7331 = vunpack.c.l.s8.bf16 %v7227
          %v7332 = vunpack.c.l.s8.bf16 %v7228
          %v7333 = vunpack.c.h.s8.bf16 %v7225
          %v7334 = vunpack.c.h.s8.bf16 %v7226
          %v7335 = vunpack.c.h.s8.bf16 %v7227
          %v7336 = vunpack.c.h.s8.bf16 %v7228
          %v7337 = vunpack.c.l.s8.bf16 %v7229
          %v7338 = vunpack.c.l.s8.bf16 %v7230
          %v7339 = vunpack.c.l.s8.bf16 %v7231
          %v7340 = vunpack.c.l.s8.bf16 %v7232
          %v7341 = vunpack.c.h.s8.bf16 %v7229
          %v7342 = vunpack.c.h.s8.bf16 %v7230
          %v7343 = vunpack.c.h.s8.bf16 %v7231
          %v7344 = vunpack.c.h.s8.bf16 %v7232
          %v7345 = vunpack.c.l.s8.bf16 %v7233
          %v7346 = vunpack.c.l.s8.bf16 %v7234
          %v7347 = vunpack.c.l.s8.bf16 %v7235
          %v7348 = vunpack.c.l.s8.bf16 %v7236
          %v7349 = vunpack.c.h.s8.bf16 %v7233
          %v7350 = vunpack.c.h.s8.bf16 %v7234
          %v7351 = vunpack.c.h.s8.bf16 %v7235
          %v7352 = vunpack.c.h.s8.bf16 %v7236
          %v7353 = vunpack.c.l.s8.bf16 %v7237
          %v7354 = vunpack.c.l.s8.bf16 %v7238
          %v7355 = vunpack.c.l.s8.bf16 %v7239
          %v7356 = vunpack.c.l.s8.bf16 %v7240
          %v7357 = vunpack.c.h.s8.bf16 %v7237
          %v7358 = vunpack.c.h.s8.bf16 %v7238
          %v7359 = vunpack.c.h.s8.bf16 %v7239
          %v7360 = vunpack.c.h.s8.bf16 %v7240
          %v7361 = vunpack.c.l.s8.bf16 %v7241
          %v7362 = vunpack.c.l.s8.bf16 %v7242
          %v7363 = vunpack.c.l.s8.bf16 %v7243
          %v7364 = vunpack.c.l.s8.bf16 %v7244
          %v7365 = vunpack.c.h.s8.bf16 %v7241
          %v7366 = vunpack.c.h.s8.bf16 %v7242
          %v7367 = vunpack.c.h.s8.bf16 %v7243
          %v7368 = vunpack.c.h.s8.bf16 %v7244
          %v7369 = vunpack.c.l.s8.bf16 %v7245
          %v7370 = vunpack.c.l.s8.bf16 %v7246
          %v7371 = vunpack.c.l.s8.bf16 %v7247
          %v7372 = vunpack.c.l.s8.bf16 %v7248
          %v7373 = vunpack.c.h.s8.bf16 %v7245
          %v7374 = vunpack.c.h.s8.bf16 %v7246
          %v7375 = vunpack.c.h.s8.bf16 %v7247
          %v7376 = vunpack.c.h.s8.bf16 %v7248
          %7377 = vmatprep.subr.bf16.mxu0 %v7250
          %7378 = vmatpush1.bf16.msra.mxu0 %v7249
          %7379 = vmatprep.subr.bf16.mxu0 %v7254
          %7380 = vmatpush1.bf16.msra.mxu0 %v7253
          %7381 = vmatprep.subr.bf16.mxu0 %v7258
          %7382 = vmatpush1.bf16.msra.mxu0 %v7257
          %7383 = vmatprep.subr.bf16.mxu0 %v7262
          %7384 = vmatpush1.bf16.msra.mxu0 %v7261
          %7385 = vmatprep.subr.bf16.mxu0 %v7266
          %7386 = vmatpush1.bf16.msra.mxu0 %v7265
          %7387 = vmatprep.subr.bf16.mxu0 %v7270
          %7388 = vmatpush1.bf16.msra.mxu0 %v7269
          %7389 = vmatprep.subr.bf16.mxu0 %v7274
          %7390 = vmatpush1.bf16.msra.mxu0 %v7273
          %7391 = vmatprep.subr.bf16.mxu0 %v7278
          %7392 = vmatpush1.bf16.msra.mxu0 %v7277
          %7393 = vmatprep.subr.bf16.mxu0 %v7282
          %7394 = vmatpush1.bf16.msra.mxu0 %v7281
          %7395 = vmatprep.subr.bf16.mxu0 %v7286
          %7396 = vmatpush1.bf16.msra.mxu0 %v7285
          %7397 = vmatprep.subr.bf16.mxu0 %v7290
          %7398 = vmatpush1.bf16.msra.mxu0 %v7289
          %7399 = vmatprep.subr.bf16.mxu0 %v7294
          %7400 = vmatpush1.bf16.msra.mxu0 %v7293
          %7401 = vmatprep.subr.bf16.mxu0 %v7298
          %7402 = vmatpush1.bf16.msra.mxu0 %v7297
          %7403 = vmatprep.subr.bf16.mxu0 %v7302
          %7404 = vmatpush1.bf16.msra.mxu0 %v7301
          %7405 = vmatprep.subr.bf16.mxu0 %v7306
          %7406 = vmatpush1.bf16.msra.mxu0 %v7305
          %7407 = vmatprep.subr.bf16.mxu0 %v7310
          %7408 = vmatpush1.bf16.msra.mxu0 %v7309
          %7409 = vmatprep.mubr.bf16.mxu0 %v7182
          %7410 = vmatmul.mubr.bf16.gmra.mrb[0].mxu0 %v7181
          %v7411 = vpop.f32.mrb[0].mxu0
          %v7412 = vadd.f32 0.0, %v7411
          %v7413 = vpop.f32.mrb[0].mxu0
          %v7414 = vadd.f32 0.0, %v7413
          %v7415 = vpop.f32.mrb[0].mxu0
          %v7416 = vpop.f32.mrb[0].mxu0
          %7417 = vdwg.mxu0
          %7418 = vmatprep.subr.bf16.mxu0 %v7314
          %7419 = vmatpush1.bf16.msra.mxu0 %v7313
          %7420 = vmatprep.subr.bf16.mxu0 %v7318
          %7421 = vmatpush1.bf16.msra.mxu0 %v7317
          %7422 = vmatprep.subr.bf16.mxu0 %v7322
          %7423 = vmatpush1.bf16.msra.mxu0 %v7321
          %7424 = vmatprep.subr.bf16.mxu0 %v7326
          %7425 = vmatpush1.bf16.msra.mxu0 %v7325
          %7426 = vmatprep.subr.bf16.mxu0 %v7330
          %7427 = vmatpush1.bf16.msra.mxu0 %v7329
          %7428 = vmatprep.subr.bf16.mxu0 %v7334
          %7429 = vmatpush1.bf16.msra.mxu0 %v7333
          %7430 = vmatprep.subr.bf16.mxu0 %v7338
          %7431 = vmatpush1.bf16.msra.mxu0 %v7337
          %7432 = vmatprep.subr.bf16.mxu0 %v7342
          %7433 = vmatpush1.bf16.msra.mxu0 %v7341
          %7434 = vmatprep.subr.bf16.mxu0 %v7346
          %7435 = vmatpush1.bf16.msra.mxu0 %v7345
          %7436 = vmatprep.subr.bf16.mxu0 %v7350
          %7437 = vmatpush1.bf16.msra.mxu0 %v7349
          %7438 = vmatprep.subr.bf16.mxu0 %v7354
          %7439 = vmatpush1.bf16.msra.mxu0 %v7353
          %7440 = vmatprep.subr.bf16.mxu0 %v7358
          %7441 = vmatpush1.bf16.msra.mxu0 %v7357
          %7442 = vmatprep.subr.bf16.mxu0 %v7362
          %7443 = vmatpush1.bf16.msra.mxu0 %v7361
          %7444 = vmatprep.subr.bf16.mxu0 %v7366
          %7445 = vmatpush1.bf16.msra.mxu0 %v7365
          %7446 = vmatprep.subr.bf16.mxu0 %v7370
          %7447 = vmatpush1.bf16.msra.mxu0 %v7369
          %7448 = vmatprep.subr.bf16.mxu0 %v7374
          %7449 = vmatpush1.bf16.msra.mxu0 %v7373
          %7450 = vmatprep.mubr.bf16.mxu0 %v7184
          %7451 = vmatmul.mubr.bf16.gmra.mrb[0].mxu0 %v7183
          %v7452 = vpop.f32.mrb[0].mxu0
          %v7453 = vadd.f32 %v7412, %v7452
          %v7454 = vpop.f32.mrb[0].mxu0
          %v7455 = vadd.f32 %v7414, %v7454
          %v7456 = vpop.f32.mrb[0].mxu0
          %v7457 = vpop.f32.mrb[0].mxu0
          %7458 = vdwg.mxu0
          %7459 = vmatprep.subr.bf16.mxu0 %v7252
          %7460 = vmatpush1.bf16.msra.mxu0 %v7251
          %7461 = vmatprep.subr.bf16.mxu0 %v7256
          %7462 = vmatpush1.bf16.msra.mxu0 %v7255
          %7463 = vmatprep.subr.bf16.mxu0 %v7260
          %7464 = vmatpush1.bf16.msra.mxu0 %v7259
          %7465 = vmatprep.subr.bf16.mxu0 %v7264
          %7466 = vmatpush1.bf16.msra.mxu0 %v7263
          %7467 = vmatprep.subr.bf16.mxu0 %v7268
          %7468 = vmatpush1.bf16.msra.mxu0 %v7267
          %7469 = vmatprep.subr.bf16.mxu0 %v7272
          %7470 = vmatpush1.bf16.msra.mxu0 %v7271
          %7471 = vmatprep.subr.bf16.mxu0 %v7276
          %7472 = vmatpush1.bf16.msra.mxu0 %v7275
          %7473 = vmatprep.subr.bf16.mxu0 %v7280
          %7474 = vmatpush1.bf16.msra.mxu0 %v7279
          %7475 = vmatprep.subr.bf16.mxu0 %v7284
          %7476 = vmatpush1.bf16.msra.mxu0 %v7283
          %7477 = vmatprep.subr.bf16.mxu0 %v7288
          %7478 = vmatpush1.bf16.msra.mxu0 %v7287
          %7479 = vmatprep.subr.bf16.mxu0 %v7292
          %7480 = vmatpush1.bf16.msra.mxu0 %v7291
          %7481 = vmatprep.subr.bf16.mxu0 %v7296
          %7482 = vmatpush1.bf16.msra.mxu0 %v7295
          %7483 = vmatprep.subr.bf16.mxu0 %v7300
          %7484 = vmatpush1.bf16.msra.mxu0 %v7299
          %7485 = vmatprep.subr.bf16.mxu0 %v7304
          %7486 = vmatpush1.bf16.msra.mxu0 %v7303
          %7487 = vmatprep.subr.bf16.mxu0 %v7308
          %7488 = vmatpush1.bf16.msra.mxu0 %v7307
          %7489 = vmatprep.subr.bf16.mxu0 %v7312
          %7490 = vmatpush1.bf16.msra.mxu0 %v7311
          %7491 = vmatprep.mubr.bf16.mxu0 %v7182
          %7492 = vmatmul.mubr.bf16.gmra.mrb[0].mxu0 %v7181
          %v7493 = vpop.f32.mrb[0].mxu0
          %v7494 = vadd.f32 0.0, %v7493
          %v7495 = vpop.f32.mrb[0].mxu0
          %v7496 = vadd.f32 0.0, %v7495
          %v7497 = vpop.f32.mrb[0].mxu0
          %v7498 = vpop.f32.mrb[0].mxu0
          %7499 = vdwg.mxu0
          %7500 = vmatprep.subr.bf16.mxu0 %v7316
          %7501 = vmatpush1.bf16.msra.mxu0 %v7315
          %7502 = vmatprep.subr.bf16.mxu0 %v7320
          %7503 = vmatpush1.bf16.msra.mxu0 %v7319
          %7504 = vmatprep.subr.bf16.mxu0 %v7324
          %7505 = vmatpush1.bf16.msra.mxu0 %v7323
          %7506 = vmatprep.subr.bf16.mxu0 %v7328
          %7507 = vmatpush1.bf16.msra.mxu0 %v7327
          %7508 = vmatprep.subr.bf16.mxu0 %v7332
          %7509 = vmatpush1.bf16.msra.mxu0 %v7331
          %7510 = vmatprep.subr.bf16.mxu0 %v7336
          %7511 = vmatpush1.bf16.msra.mxu0 %v7335
          %7512 = vmatprep.subr.bf16.mxu0 %v7340
          %7513 = vmatpush1.bf16.msra.mxu0 %v7339
          %7514 = vmatprep.subr.bf16.mxu0 %v7344
          %7515 = vmatpush1.bf16.msra.mxu0 %v7343
          %7516 = vmatprep.subr.bf16.mxu0 %v7348
          %7517 = vmatpush1.bf16.msra.mxu0 %v7347
          %7518 = vmatprep.subr.bf16.mxu0 %v7352
          %7519 = vmatpush1.bf16.msra.mxu0 %v7351
          %7520 = vmatprep.subr.bf16.mxu0 %v7356
          %7521 = vmatpush1.bf16.msra.mxu0 %v7355
          %7522 = vmatprep.subr.bf16.mxu0 %v7360
          %7523 = vmatpush1.bf16.msra.mxu0 %v7359
          %7524 = vmatprep.subr.bf16.mxu0 %v7364
          %7525 = vmatpush1.bf16.msra.mxu0 %v7363
          %7526 = vmatprep.subr.bf16.mxu0 %v7368
          %7527 = vmatpush1.bf16.msra.mxu0 %v7367
          %7528 = vmatprep.subr.bf16.mxu0 %v7372
          %7529 = vmatpush1.bf16.msra.mxu0 %v7371
          %7530 = vmatprep.subr.bf16.mxu0 %v7376
          %7531 = vmatpush1.bf16.msra.mxu0 %v7375
          %7532 = vmatprep.mubr.bf16.mxu0 %v7184
          %7533 = vmatmul.mubr.bf16.gmra.mrb[0].mxu0 %v7183
          %v7534 = vpop.f32.mrb[0].mxu0
          %v7535 = vadd.f32 %v7494, %v7534
          %v7536 = vpop.f32.mrb[0].mxu0
          %v7537 = vadd.f32 %v7496, %v7536
          %v7538 = vpop.f32.mrb[0].mxu0
          %v7539 = vpop.f32.mrb[0].mxu0
          %7540 = vdwg.mxu0
          %v7541 = vld [vmem:[#allocation22] sm:$0xf]
          %v7543 = vlaneseq
          %v7544 = vshrl.u32 %v7543, 7
          %v7545 = vsub.s32 0, %v7544
          %v7546 = vrot.slane %v7541, %v7545
          %v7547 = vlaneseq
          %v7548 = vshrl.u32 %v7547, 7
          %v7549 = vsub.s32 1, %v7548
          %v7550 = vrot.slane %v7541, %v7549
          %v7551 = vlaneseq
          %v7552 = vshrl.u32 %v7551, 7
          %v7553 = vsub.s32 2, %v7552
          %v7554 = vrot.slane %v7541, %v7553
          %v7555 = vlaneseq
          %v7556 = vshrl.u32 %v7555, 7
          %v7557 = vsub.s32 3, %v7556
          %v7558 = vrot.slane %v7541, %v7557
          %v7563 = vmul.f32 %v7453, %v7546
          %v7564 = vmul.f32 %v7455, %v7550
          %v7565 = vmul.f32 %v7535, %v7554
          %v7566 = vmul.f32 %v7537, %v7558
          %v7567 = vld [vmem:[#allocation24] sm:$0xf]
          %v7569 = vlaneseq
          %v7570 = vshrl.u32 %v7569, 7
          %v7571 = vsub.s32 0, %v7570
          %v7572 = vrot.slane %v7567, %v7571
          %v7573 = vlaneseq
          %v7574 = vshrl.u32 %v7573, 7
          %v7575 = vsub.s32 1, %v7574
          %v7576 = vrot.slane %v7567, %v7575
          %v7577 = vlaneseq
          %v7578 = vshrl.u32 %v7577, 7
          %v7579 = vsub.s32 2, %v7578
          %v7580 = vrot.slane %v7567, %v7579
          %v7581 = vlaneseq
          %v7582 = vshrl.u32 %v7581, 7
          %v7583 = vsub.s32 3, %v7582
          %v7584 = vrot.slane %v7567, %v7583
          %v7589 = vadd.f32 %v7563, %v7572
          %v7590 = vadd.f32 %v7564, %v7576
          %v7591 = vadd.f32 %v7565, %v7580
          %v7592 = vadd.f32 %v7566, %v7584
          %v7593 = vmax.f32 %v7589, 0.0
          %v7594 = vmax.f32 %v7590, 0.0
          %v7595 = vmax.f32 %v7591, 0.0
          %v7596 = vmax.f32 %v7592, 0.0
          %v7597 = vpack.c.bf16 %v7593, %v7593
          %v7598 = vpack.c.bf16 %v7594, %v7594
          %v7599 = vpack.c.bf16 %v7595, %v7595
          %v7600 = vpack.c.bf16 %v7596, %v7596
          %v7601 = vld [vmem:[#allocation25] sm:$0xff]
          %v7602 = vld [vmem:[#allocation25 + $0x8] sm:$0xff]
          %v7603 = vld [vmem:[#allocation25 + $0x10] sm:$0xff]
          %v7604 = vld [vmem:[#allocation25 + $0x18] sm:$0xff]
          %v7605 = vld [vmem:[#allocation25 + $0x20] sm:$0xff]
          %v7606 = vld [vmem:[#allocation25 + $0x28] sm:$0xff]
          %v7607 = vld [vmem:[#allocation25 + $0x30] sm:$0xff]
          %v7608 = vld [vmem:[#allocation25 + $0x38] sm:$0xff]
          %v7609 = vld [vmem:[#allocation25 + $0x40] sm:$0xff]
          %v7610 = vld [vmem:[#allocation25 + $0x48] sm:$0xff]
          %v7611 = vld [vmem:[#allocation25 + $0x50] sm:$0xff]
          %v7612 = vld [vmem:[#allocation25 + $0x58] sm:$0xff]
          %v7613 = vld [vmem:[#allocation25 + $0x60] sm:$0xff]
          %v7614 = vld [vmem:[#allocation25 + $0x68] sm:$0xff]
          %v7615 = vld [vmem:[#allocation25 + $0x70] sm:$0xff]
          %v7616 = vld [vmem:[#allocation25 + $0x78] sm:$0xff]
          %v7617 = vld [vmem:[#allocation25 + $0x80] sm:$0xff]
          %v7618 = vld [vmem:[#allocation25 + $0x88] sm:$0xff]
          %v7619 = vld [vmem:[#allocation25 + $0x90] sm:$0xff]
          %v7620 = vld [vmem:[#allocation25 + $0x98] sm:$0xff]
          %v7621 = vld [vmem:[#allocation25 + $0xa0] sm:$0xff]
          %v7622 = vld [vmem:[#allocation25 + $0xa8] sm:$0xff]
          %v7623 = vld [vmem:[#allocation25 + $0xb0] sm:$0xff]
          %v7624 = vld [vmem:[#allocation25 + $0xb8] sm:$0xff]
          %v7625 = vld [vmem:[#allocation25 + $0xc0] sm:$0xff]
          %v7626 = vld [vmem:[#allocation25 + $0xc8] sm:$0xff]
          %v7627 = vld [vmem:[#allocation25 + $0xd0] sm:$0xff]
          %v7628 = vld [vmem:[#allocation25 + $0xd8] sm:$0xff]
          %v7629 = vld [vmem:[#allocation25 + $0xe0] sm:$0xff]
          %v7630 = vld [vmem:[#allocation25 + $0xe8] sm:$0xff]
          %v7631 = vld [vmem:[#allocation25 + $0xf0] sm:$0xff]
          %v7632 = vld [vmem:[#allocation25 + $0xf8] sm:$0xff]
          %v7633 = vunpack.c.l.s8.bf16 %v7601
          %v7634 = vunpack.c.l.s8.bf16 %v7602
          %v7635 = vunpack.c.h.s8.bf16 %v7601
          %v7636 = vunpack.c.h.s8.bf16 %v7602
          %v7637 = vunpack.c.l.s8.bf16 %v7603
          %v7638 = vunpack.c.l.s8.bf16 %v7604
          %v7639 = vunpack.c.h.s8.bf16 %v7603
          %v7640 = vunpack.c.h.s8.bf16 %v7604
          %v7641 = vunpack.c.l.s8.bf16 %v7605
          %v7642 = vunpack.c.l.s8.bf16 %v7606
          %v7643 = vunpack.c.h.s8.bf16 %v7605
          %v7644 = vunpack.c.h.s8.bf16 %v7606
          %v7645 = vunpack.c.l.s8.bf16 %v7607
          %v7646 = vunpack.c.l.s8.bf16 %v7608
          %v7647 = vunpack.c.h.s8.bf16 %v7607
          %v7648 = vunpack.c.h.s8.bf16 %v7608
          %v7649 = vunpack.c.l.s8.bf16 %v7609
          %v7650 = vunpack.c.l.s8.bf16 %v7610
          %v7651 = vunpack.c.h.s8.bf16 %v7609
          %v7652 = vunpack.c.h.s8.bf16 %v7610
          %v7653 = vunpack.c.l.s8.bf16 %v7611
          %v7654 = vunpack.c.l.s8.bf16 %v7612
          %v7655 = vunpack.c.h.s8.bf16 %v7611
          %v7656 = vunpack.c.h.s8.bf16 %v7612
          %v7657 = vunpack.c.l.s8.bf16 %v7613
          %v7658 = vunpack.c.l.s8.bf16 %v7614
          %v7659 = vunpack.c.h.s8.bf16 %v7613
          %v7660 = vunpack.c.h.s8.bf16 %v7614
          %v7661 = vunpack.c.l.s8.bf16 %v7615
          %v7662 = vunpack.c.l.s8.bf16 %v7616
          %v7663 = vunpack.c.h.s8.bf16 %v7615
          %v7664 = vunpack.c.h.s8.bf16 %v7616
          %v7665 = vunpack.c.l.s8.bf16 %v7617
          %v7666 = vunpack.c.l.s8.bf16 %v7618
          %v7667 = vunpack.c.h.s8.bf16 %v7617
          %v7668 = vunpack.c.h.s8.bf16 %v7618
          %v7669 = vunpack.c.l.s8.bf16 %v7619
          %v7670 = vunpack.c.l.s8.bf16 %v7620
          %v7671 = vunpack.c.h.s8.bf16 %v7619
          %v7672 = vunpack.c.h.s8.bf16 %v7620
          %v7673 = vunpack.c.l.s8.bf16 %v7621
          %v7674 = vunpack.c.l.s8.bf16 %v7622
          %v7675 = vunpack.c.h.s8.bf16 %v7621
          %v7676 = vunpack.c.h.s8.bf16 %v7622
          %v7677 = vunpack.c.l.s8.bf16 %v7623
          %v7678 = vunpack.c.l.s8.bf16 %v7624
          %v7679 = vunpack.c.h.s8.bf16 %v7623
          %v7680 = vunpack.c.h.s8.bf16 %v7624
          %v7681 = vunpack.c.l.s8.bf16 %v7625
          %v7682 = vunpack.c.l.s8.bf16 %v7626
          %v7683 = vunpack.c.h.s8.bf16 %v7625
          %v7684 = vunpack.c.h.s8.bf16 %v7626
          %v7685 = vunpack.c.l.s8.bf16 %v7627
          %v7686 = vunpack.c.l.s8.bf16 %v7628
          %v7687 = vunpack.c.h.s8.bf16 %v7627
          %v7688 = vunpack.c.h.s8.bf16 %v7628
          %v7689 = vunpack.c.l.s8.bf16 %v7629
          %v7690 = vunpack.c.l.s8.bf16 %v7630
          %v7691 = vunpack.c.h.s8.bf16 %v7629
          %v7692 = vunpack.c.h.s8.bf16 %v7630
          %v7693 = vunpack.c.l.s8.bf16 %v7631
          %v7694 = vunpack.c.l.s8.bf16 %v7632
          %v7695 = vunpack.c.h.s8.bf16 %v7631
          %v7696 = vunpack.c.h.s8.bf16 %v7632
          %7697 = vmatprep.subr.bf16.mxu0 %v7634
          %7698 = vmatpush1.bf16.msra.mxu0 %v7633
          %7699 = vmatprep.subr.bf16.mxu0 %v7636
          %7700 = vmatpush1.bf16.msra.mxu0 %v7635
          %7701 = vmatprep.subr.bf16.mxu0 %v7638
          %7702 = vmatpush1.bf16.msra.mxu0 %v7637
          %7703 = vmatprep.subr.bf16.mxu0 %v7640
          %7704 = vmatpush1.bf16.msra.mxu0 %v7639
          %7705 = vmatprep.subr.bf16.mxu0 %v7642
          %7706 = vmatpush1.bf16.msra.mxu0 %v7641
          %7707 = vmatprep.subr.bf16.mxu0 %v7644
          %7708 = vmatpush1.bf16.msra.mxu0 %v7643
          %7709 = vmatprep.subr.bf16.mxu0 %v7646
          %7710 = vmatpush1.bf16.msra.mxu0 %v7645
          %7711 = vmatprep.subr.bf16.mxu0 %v7648
          %7712 = vmatpush1.bf16.msra.mxu0 %v7647
          %7713 = vmatprep.subr.bf16.mxu0 %v7650
          %7714 = vmatpush1.bf16.msra.mxu0 %v7649
          %7715 = vmatprep.subr.bf16.mxu0 %v7652
          %7716 = vmatpush1.bf16.msra.mxu0 %v7651
          %7717 = vmatprep.subr.bf16.mxu0 %v7654
          %7718 = vmatpush1.bf16.msra.mxu0 %v7653
          %7719 = vmatprep.subr.bf16.mxu0 %v7656
          %7720 = vmatpush1.bf16.msra.mxu0 %v7655
          %7721 = vmatprep.subr.bf16.mxu0 %v7658
          %7722 = vmatpush1.bf16.msra.mxu0 %v7657
          %7723 = vmatprep.subr.bf16.mxu0 %v7660
          %7724 = vmatpush1.bf16.msra.mxu0 %v7659
          %7725 = vmatprep.subr.bf16.mxu0 %v7662
          %7726 = vmatpush1.bf16.msra.mxu0 %v7661
          %7727 = vmatprep.subr.bf16.mxu0 %v7664
          %7728 = vmatpush1.bf16.msra.mxu0 %v7663
          %7729 = vmatprep.mubr.bf16.mxu0 %v7598
          %7730 = vmatmul.mubr.bf16.gmra.mrb[0].mxu0 %v7597
          %v7731 = vpop.f32.mrb[0].mxu0
          %v7732 = vadd.f32 0.0, %v7731
          %v7733 = vpop.f32.mrb[0].mxu0
          %v7734 = vadd.f32 0.0, %v7733
          %v7735 = vpop.f32.mrb[0].mxu0
          %v7736 = vpop.f32.mrb[0].mxu0
          %7737 = vdwg.mxu0
          %7738 = vmatprep.subr.bf16.mxu0 %v7666
          %7739 = vmatpush1.bf16.msra.mxu0 %v7665
          %7740 = vmatprep.subr.bf16.mxu0 %v7668
          %7741 = vmatpush1.bf16.msra.mxu0 %v7667
          %7742 = vmatprep.subr.bf16.mxu0 %v7670
          %7743 = vmatpush1.bf16.msra.mxu0 %v7669
          %7744 = vmatprep.subr.bf16.mxu0 %v7672
          %7745 = vmatpush1.bf16.msra.mxu0 %v7671
          %7746 = vmatprep.subr.bf16.mxu0 %v7674
          %7747 = vmatpush1.bf16.msra.mxu0 %v7673
          %7748 = vmatprep.subr.bf16.mxu0 %v7676
          %7749 = vmatpush1.bf16.msra.mxu0 %v7675
          %7750 = vmatprep.subr.bf16.mxu0 %v7678
          %7751 = vmatpush1.bf16.msra.mxu0 %v7677
          %7752 = vmatprep.subr.bf16.mxu0 %v7680
          %7753 = vmatpush1.bf16.msra.mxu0 %v7679
          %7754 = vmatprep.subr.bf16.mxu0 %v7682
          %7755 = vmatpush1.bf16.msra.mxu0 %v7681
          %7756 = vmatprep.subr.bf16.mxu0 %v7684
          %7757 = vmatpush1.bf16.msra.mxu0 %v7683
          %7758 = vmatprep.subr.bf16.mxu0 %v7686
          %7759 = vmatpush1.bf16.msra.mxu0 %v7685
          %7760 = vmatprep.subr.bf16.mxu0 %v7688
          %7761 = vmatpush1.bf16.msra.mxu0 %v7687
          %7762 = vmatprep.subr.bf16.mxu0 %v7690
          %7763 = vmatpush1.bf16.msra.mxu0 %v7689
          %7764 = vmatprep.subr.bf16.mxu0 %v7692
          %7765 = vmatpush1.bf16.msra.mxu0 %v7691
          %7766 = vmatprep.subr.bf16.mxu0 %v7694
          %7767 = vmatpush1.bf16.msra.mxu0 %v7693
          %7768 = vmatprep.subr.bf16.mxu0 %v7696
          %7769 = vmatpush1.bf16.msra.mxu0 %v7695
          %7770 = vmatprep.mubr.bf16.mxu0 %v7600
          %7771 = vmatmul.mubr.bf16.gmra.mrb[0].mxu0 %v7599
          %v7772 = vpop.f32.mrb[0].mxu0
          %v7773 = vadd.f32 %v7732, %v7772
          %v7774 = vpop.f32.mrb[0].mxu0
          %v7775 = vadd.f32 %v7734, %v7774
          %v7776 = vpop.f32.mrb[0].mxu0
          %v7777 = vpop.f32.mrb[0].mxu0
          %7778 = vdwg.mxu0
          %v7779 = vld [vmem:[#allocation27] sm:$0x3]
          %v7781 = vlaneseq
          %v7782 = vshrl.u32 %v7781, 7
          %v7783 = vsub.s32 0, %v7782
          %v7784 = vrot.slane %v7779, %v7783
          %v7785 = vlaneseq
          %v7786 = vshrl.u32 %v7785, 7
          %v7787 = vsub.s32 1, %v7786
          %v7788 = vrot.slane %v7779, %v7787
          %v7791 = vmul.f32 %v7773, %v7784
          %v7792 = vmul.f32 %v7775, %v7788
          %v7793 = vld [vmem:[#allocation28] sm:$0x3]
          %v7795 = vlaneseq
          %v7796 = vshrl.u32 %v7795, 7
          %v7797 = vsub.s32 0, %v7796
          %v7798 = vrot.slane %v7793, %v7797
          %v7799 = vlaneseq
          %v7800 = vshrl.u32 %v7799, 7
          %v7801 = vsub.s32 1, %v7800
          %v7802 = vrot.slane %v7793, %v7801
          %v7805 = vadd.f32 %v7791, %v7798
          %v7806 = vadd.f32 %v7792, %v7802
          %v7807 = vmax.f32 %v7805, 0.0
          %v7808 = vmax.f32 %v7806, 0.0
          %v7809 = vpack.c.bf16 %v7807, %v7807
          %v7810 = vpack.c.bf16 %v7808, %v7808
          %v7811 = vld [vmem:[#allocation30] sm:$0xff]
          %v7812 = vld [vmem:[#allocation30 + $0x8] sm:$0xff]
          %v7813 = vld [vmem:[#allocation30 + $0x10] sm:$0xff]
          %v7814 = vld [vmem:[#allocation30 + $0x18] sm:$0xff]
          %v7815 = vld [vmem:[#allocation30 + $0x20] sm:$0xff]
          %v7816 = vld [vmem:[#allocation30 + $0x28] sm:$0xff]
          %v7817 = vld [vmem:[#allocation30 + $0x30] sm:$0xff]
          %v7818 = vld [vmem:[#allocation30 + $0x38] sm:$0xff]
          %v7819 = vld [vmem:[#allocation30 + $0x40] sm:$0xff]
          %v7820 = vld [vmem:[#allocation30 + $0x48] sm:$0xff]
          %v7821 = vld [vmem:[#allocation30 + $0x50] sm:$0xff]
          %v7822 = vld [vmem:[#allocation30 + $0x58] sm:$0xff]
          %v7823 = vld [vmem:[#allocation30 + $0x60] sm:$0xff]
          %v7824 = vld [vmem:[#allocation30 + $0x68] sm:$0xff]
          %v7825 = vld [vmem:[#allocation30 + $0x70] sm:$0xff]
          %v7826 = vld [vmem:[#allocation30 + $0x78] sm:$0xff]
          %v7827 = vunpack.c.l.s8.bf16 %v7811
          %v7828 = vunpack.c.l.s8.bf16 %v7812
          %v7829 = vunpack.c.h.s8.bf16 %v7811
          %v7830 = vunpack.c.h.s8.bf16 %v7812
          %v7831 = vunpack.c.l.s8.bf16 %v7813
          %v7832 = vunpack.c.l.s8.bf16 %v7814
          %v7833 = vunpack.c.h.s8.bf16 %v7813
          %v7834 = vunpack.c.h.s8.bf16 %v7814
          %v7835 = vunpack.c.l.s8.bf16 %v7815
          %v7836 = vunpack.c.l.s8.bf16 %v7816
          %v7837 = vunpack.c.h.s8.bf16 %v7815
          %v7838 = vunpack.c.h.s8.bf16 %v7816
          %v7839 = vunpack.c.l.s8.bf16 %v7817
          %v7840 = vunpack.c.l.s8.bf16 %v7818
          %v7841 = vunpack.c.h.s8.bf16 %v7817
          %v7842 = vunpack.c.h.s8.bf16 %v7818
          %v7843 = vunpack.c.l.s8.bf16 %v7819
          %v7844 = vunpack.c.l.s8.bf16 %v7820
          %v7845 = vunpack.c.h.s8.bf16 %v7819
          %v7846 = vunpack.c.h.s8.bf16 %v7820
          %v7847 = vunpack.c.l.s8.bf16 %v7821
          %v7848 = vunpack.c.l.s8.bf16 %v7822
          %v7849 = vunpack.c.h.s8.bf16 %v7821
          %v7850 = vunpack.c.h.s8.bf16 %v7822
          %v7851 = vunpack.c.l.s8.bf16 %v7823
          %v7852 = vunpack.c.l.s8.bf16 %v7824
          %v7853 = vunpack.c.h.s8.bf16 %v7823
          %v7854 = vunpack.c.h.s8.bf16 %v7824
          %v7855 = vunpack.c.l.s8.bf16 %v7825
          %v7856 = vunpack.c.l.s8.bf16 %v7826
          %v7857 = vunpack.c.h.s8.bf16 %v7825
          %v7858 = vunpack.c.h.s8.bf16 %v7826
          %7859 = vmatprep.subr.bf16.mxu0 %v7828
          %7860 = vmatpush1.bf16.msra.mxu0 %v7827
          %7861 = vmatprep.subr.bf16.mxu0 %v7830
          %7862 = vmatpush1.bf16.msra.mxu0 %v7829
          %7863 = vmatprep.subr.bf16.mxu0 %v7832
          %7864 = vmatpush1.bf16.msra.mxu0 %v7831
          %7865 = vmatprep.subr.bf16.mxu0 %v7834
          %7866 = vmatpush1.bf16.msra.mxu0 %v7833
          %7867 = vmatprep.subr.bf16.mxu0 %v7836
          %7868 = vmatpush1.bf16.msra.mxu0 %v7835
          %7869 = vmatprep.subr.bf16.mxu0 %v7838
          %7870 = vmatpush1.bf16.msra.mxu0 %v7837
          %7871 = vmatprep.subr.bf16.mxu0 %v7840
          %7872 = vmatpush1.bf16.msra.mxu0 %v7839
          %7873 = vmatprep.subr.bf16.mxu0 %v7842
          %7874 = vmatpush1.bf16.msra.mxu0 %v7841
          %7875 = vmatprep.subr.bf16.mxu0 %v7844
          %7876 = vmatpush1.bf16.msra.mxu0 %v7843
          %7877 = vmatprep.subr.bf16.mxu0 %v7846
          %7878 = vmatpush1.bf16.msra.mxu0 %v7845
          %7879 = vmatprep.subr.bf16.mxu0 %v7848
          %7880 = vmatpush1.bf16.msra.mxu0 %v7847
          %7881 = vmatprep.subr.bf16.mxu0 %v7850
          %7882 = vmatpush1.bf16.msra.mxu0 %v7849
          %7883 = vmatprep.subr.bf16.mxu0 %v7852
          %7884 = vmatpush1.bf16.msra.mxu0 %v7851
          %7885 = vmatprep.subr.bf16.mxu0 %v7854
          %7886 = vmatpush1.bf16.msra.mxu0 %v7853
          %7887 = vmatprep.subr.bf16.mxu0 %v7856
          %7888 = vmatpush1.bf16.msra.mxu0 %v7855
          %7889 = vmatprep.subr.bf16.mxu0 %v7858
          %7890 = vmatpush1.bf16.msra.mxu0 %v7857
          %7891 = vmatprep.mubr.bf16.mxu0 %v7810
          %7892 = vmatmul.mubr.bf16.gmra.mrb[0].mxu0 %v7809
          %v7893 = vpop.f32.mrb[0].mxu0
          %v7894 = vadd.f32 0.0, %v7893
          %v7895 = vpop.f32.mrb[0].mxu0
          %v7896 = vadd.f32 0.0, %v7895
          %v7897 = vpop.f32.mrb[0].mxu0
          %v7898 = vpop.f32.mrb[0].mxu0
          %7899 = vdwg.mxu0
          %v7900 = vld [vmem:[#allocation31] sm:$0x3]
          %v7902 = vlaneseq
          %v7903 = vshrl.u32 %v7902, 7
          %v7904 = vsub.s32 0, %v7903
          %v7905 = vrot.slane %v7900, %v7904
          %v7906 = vlaneseq
          %v7907 = vshrl.u32 %v7906, 7
          %v7908 = vsub.s32 1, %v7907
          %v7909 = vrot.slane %v7900, %v7908
          %v7912 = vmul.f32 %v7894, %v7905
          %v7913 = vmul.f32 %v7896, %v7909
          %v7914 = vld [vmem:[#allocation33] sm:$0x3]
          %v7916 = vlaneseq
          %v7917 = vshrl.u32 %v7916, 7
          %v7918 = vsub.s32 0, %v7917
          %v7919 = vrot.slane %v7914, %v7918
          %v7920 = vlaneseq
          %v7921 = vshrl.u32 %v7920, 7
          %v7922 = vsub.s32 1, %v7921
          %v7923 = vrot.slane %v7914, %v7922
          %v7926 = vadd.f32 %v7912, %v7919
          %v7927 = vadd.f32 %v7913, %v7923
          %v7928 = vmax.f32 %v7926, 0.0
          %v7929 = vmax.f32 %v7927, 0.0
          %v7930 = vpack.c.bf16 %v7928, %v7928
          %v7931 = vpack.c.bf16 %v7929, %v7929
          %v7932 = vld [vmem:[#allocation34] sm:$0xff]
          %v7933 = vld [vmem:[#allocation34 + $0x8] sm:$0xff]
          %v7934 = vld [vmem:[#allocation34 + $0x10] sm:$0xff]
          %v7935 = vld [vmem:[#allocation34 + $0x18] sm:$0xff]
          %v7936 = vld [vmem:[#allocation34 + $0x20] sm:$0xff]
          %v7937 = vld [vmem:[#allocation34 + $0x28] sm:$0xff]
          %v7938 = vld [vmem:[#allocation34 + $0x30] sm:$0xff]
          %v7939 = vld [vmem:[#allocation34 + $0x38] sm:$0xff]
          %v7940 = vunpack.c.l.s8.bf16 %v7932
          %v7941 = vunpack.c.h.s8.bf16 %v7932
          %v7942 = vunpack.c.l.s8.bf16 %v7933
          %v7943 = vunpack.c.h.s8.bf16 %v7933
          %v7944 = vunpack.c.l.s8.bf16 %v7934
          %v7945 = vunpack.c.h.s8.bf16 %v7934
          %v7946 = vunpack.c.l.s8.bf16 %v7935
          %v7947 = vunpack.c.h.s8.bf16 %v7935
          %v7948 = vunpack.c.l.s8.bf16 %v7936
          %v7949 = vunpack.c.h.s8.bf16 %v7936
          %v7950 = vunpack.c.l.s8.bf16 %v7937
          %v7951 = vunpack.c.h.s8.bf16 %v7937
          %v7952 = vunpack.c.l.s8.bf16 %v7938
          %v7953 = vunpack.c.h.s8.bf16 %v7938
          %v7954 = vunpack.c.l.s8.bf16 %v7939
          %v7955 = vunpack.c.h.s8.bf16 %v7939
          %7956 = vmatprep.subr.bf16.mxu0 0
          %7957 = vmatpush1.bf16.msra.mxu0 %v7940
          %7958 = vmatprep.subr.bf16.mxu0 0
          %7959 = vmatpush1.bf16.msra.mxu0 %v7941
          %7960 = vmatprep.subr.bf16.mxu0 0
          %7961 = vmatpush1.bf16.msra.mxu0 %v7942
          %7962 = vmatprep.subr.bf16.mxu0 0
          %7963 = vmatpush1.bf16.msra.mxu0 %v7943
          %7964 = vmatprep.subr.bf16.mxu0 0
          %7965 = vmatpush1.bf16.msra.mxu0 %v7944
          %7966 = vmatprep.subr.bf16.mxu0 0
          %7967 = vmatpush1.bf16.msra.mxu0 %v7945
          %7968 = vmatprep.subr.bf16.mxu0 0
          %7969 = vmatpush1.bf16.msra.mxu0 %v7946
          %7970 = vmatprep.subr.bf16.mxu0 0
          %7971 = vmatpush1.bf16.msra.mxu0 %v7947
          %7972 = vmatprep.subr.bf16.mxu0 0
          %7973 = vmatpush1.bf16.msra.mxu0 %v7948
          %7974 = vmatprep.subr.bf16.mxu0 0
          %7975 = vmatpush1.bf16.msra.mxu0 %v7949
          %7976 = vmatprep.subr.bf16.mxu0 0
          %7977 = vmatpush1.bf16.msra.mxu0 %v7950
          %7978 = vmatprep.subr.bf16.mxu0 0
          %7979 = vmatpush1.bf16.msra.mxu0 %v7951
          %7980 = vmatprep.subr.bf16.mxu0 0
          %7981 = vmatpush1.bf16.msra.mxu0 %v7952
          %7982 = vmatprep.subr.bf16.mxu0 0
          %7983 = vmatpush1.bf16.msra.mxu0 %v7953
          %7984 = vmatprep.subr.bf16.mxu0 0
          %7985 = vmatpush1.bf16.msra.mxu0 %v7954
          %7986 = vmatprep.subr.bf16.mxu0 0
          %7987 = vmatpush1.bf16.msra.mxu0 %v7955
          %7988 = vmatprep.mubr.bf16.mxu0 %v7931
          %7989 = vmatmul.mubr.bf16.gmra.mrb[0].mxu0 %v7930
          %v7990 = vpop.f32.mrb[0].mxu0
          %v7991 = vadd.f32 0.0, %v7990
          %v7992 = vpop.f32.mrb[0].mxu0
          %v7993 = vpop.f32.mrb[0].mxu0
          %v7994 = vpop.f32.mrb[0].mxu0
          %7995 = vdwg.mxu0
          %v7996 = vld [vmem:[#allocation36] sm:$0x1]
          %v7998 = vlaneseq
          %v7999 = vshrl.u32 %v7998, 7
          %v8000 = vsub.s32 0, %v7999
          %v8001 = vrot.slane %v7996, %v8000
          %v8003 = vmul.f32 %v7991, %v8001
          %v8004 = vld [vmem:[#allocation37] sm:$0x1]
          %v8006 = vlaneseq
          %v8007 = vshrl.u32 %v8006, 7
          %v8008 = vsub.s32 0, %v8007
          %v8009 = vrot.slane %v8004, %v8008
          %v8011 = vadd.f32 %v8003, %v8009
          %v8012 = vmax.f32 %v8011, 0.0
          %v8013 = vpack.c.bf16 %v8012, %v8012
          %v8014 = vld [vmem:[%s45] sm:$0xff]
          %v8015 = vld [vmem:[%s45 + $0x8] sm:$0xff]
          %v8016 = vld [vmem:[%s45 + $0x10] sm:$0xff]
          %v8017 = vld [vmem:[%s45 + $0x18] sm:$0xff]
          %v8018 = vunpack.c.l.s8.bf16 %v8014
          %v8019 = vunpack.c.h.s8.bf16 %v8014
          %v8020 = vunpack.c.l.s8.bf16 %v8015
          %v8021 = vunpack.c.h.s8.bf16 %v8015
          %v8022 = vunpack.c.l.s8.bf16 %v8016
          %v8023 = vunpack.c.h.s8.bf16 %v8016
          %v8024 = vunpack.c.l.s8.bf16 %v8017
          %v8025 = vunpack.c.h.s8.bf16 %v8017
          %8026 = vmatprep.subr.bf16.mxu0 0
          %8027 = vmatpush1.bf16.msra.mxu0 %v8018
          %8028 = vmatprep.subr.bf16.mxu0 0
          %8029 = vmatpush1.bf16.msra.mxu0 %v8019
          %8030 = vmatprep.subr.bf16.mxu0 0
          %8031 = vmatpush1.bf16.msra.mxu0 %v8020
          %8032 = vmatprep.subr.bf16.mxu0 0
          %8033 = vmatpush1.bf16.msra.mxu0 %v8021
          %8034 = vmatprep.subr.bf16.mxu0 0
          %8035 = vmatpush1.bf16.msra.mxu0 %v8022
          %8036 = vmatprep.subr.bf16.mxu0 0
          %8037 = vmatpush1.bf16.msra.mxu0 %v8023
          %8038 = vmatprep.subr.bf16.mxu0 0
          %8039 = vmatpush1.bf16.msra.mxu0 %v8024
          %8040 = vmatprep.subr.bf16.mxu0 0
          %8041 = vmatpush1.bf16.msra.mxu0 %v8025
          %8042 = vmatprep.subr.bf16.mxu0 0
          %8043 = vmatpush1.bf16.msra.mxu0 0
          %8044 = vmatprep.subr.bf16.mxu0 0
          %8045 = vmatpush1.bf16.msra.mxu0 0
          %8046 = vmatprep.subr.bf16.mxu0 0
          %8047 = vmatpush1.bf16.msra.mxu0 0
          %8048 = vmatprep.subr.bf16.mxu0 0
          %8049 = vmatpush1.bf16.msra.mxu0 0
          %8050 = vmatprep.subr.bf16.mxu0 0
          %8051 = vmatpush1.bf16.msra.mxu0 0
          %8052 = vmatprep.subr.bf16.mxu0 0
          %8053 = vmatpush1.bf16.msra.mxu0 0
          %8054 = vmatprep.subr.bf16.mxu0 0
          %8055 = vmatpush1.bf16.msra.mxu0 0
          %8056 = vmatprep.subr.bf16.mxu0 0
          %8057 = vmatpush1.bf16.msra.mxu0 0
          %8058 = vmatprep.mubr.bf16.mxu0 0
          %8059 = vmatmul.mubr.bf16.gmra.mrb[0].mxu0 %v8013
          %v8060 = vpop.f32.mrb[0].mxu0
          %v8061 = vadd.f32 0.0, %v8060
          %v8062 = vpop.f32.mrb[0].mxu0
          %v8063 = vpop.f32.mrb[0].mxu0
          %v8064 = vpop.f32.mrb[0].mxu0
          %8065 = vdwg.mxu0
          %v8066 = vld [vmem:[#allocation39] sm:$0x1]
          %v8068 = vlaneseq
          %v8069 = vshrl.u32 %v8068, 7
          %v8070 = vsub.s32 0, %v8069
          %v8071 = vrot.slane %v8066, %v8070
          %v8073 = vmul.f32 %v8061, %v8071
          %v8074 = vld [vmem:[#allocation40] sm:$0x1]
          %v8076 = vlaneseq
          %v8077 = vshrl.u32 %v8076, 7
          %v8078 = vsub.s32 0, %v8077
          %v8079 = vrot.slane %v8074, %v8078
          %v8081 = vadd.f32 %v8073, %v8079
          %v8082 = vmax.f32 %v8081, 0.0
          %v8083 = vpack.c.bf16 %v8082, %v8082
          %v8084 = vld [vmem:[#allocation42] sm:$0xff]
          %v8085 = vld [vmem:[#allocation42 + $0x8] sm:$0xff]
          %v8086 = vunpack.c.l.s8.bf16 %v8084
          %v8087 = vunpack.c.h.s8.bf16 %v8084
          %v8088 = vunpack.c.l.s8.bf16 %v8085
          %v8089 = vunpack.c.h.s8.bf16 %v8085
          %vm8090 = vcmask 523264
          %v8092 = vsel %vm8090, %v8083, 0
          %8094 = vmatprep.subr.bf16.mxu0 0
          %8095 = vmatpush1.bf16.msra.mxu0 %v8086
          %8096 = vmatprep.subr.bf16.mxu0 0
          %8097 = vmatpush1.bf16.msra.mxu0 %v8087
          %8098 = vmatprep.subr.bf16.mxu0 0
          %8099 = vmatpush1.bf16.msra.mxu0 %v8088
          %8100 = vmatprep.subr.bf16.mxu0 0
          %8101 = vmatpush1.bf16.msra.mxu0 %v8089
          %8102 = vmatprep.subr.bf16.mxu0 0
          %8103 = vmatpush1.bf16.msra.mxu0 0
          %8104 = vmatprep.subr.bf16.mxu0 0
          %8105 = vmatpush1.bf16.msra.mxu0 0
          %8106 = vmatprep.subr.bf16.mxu0 0
          %8107 = vmatpush1.bf16.msra.mxu0 0
          %8108 = vmatprep.subr.bf16.mxu0 0
          %8109 = vmatpush1.bf16.msra.mxu0 0
          %8110 = vmatprep.subr.bf16.mxu0 0
          %8111 = vmatpush1.bf16.msra.mxu0 0
          %8112 = vmatprep.subr.bf16.mxu0 0
          %8113 = vmatpush1.bf16.msra.mxu0 0
          %8114 = vmatprep.subr.bf16.mxu0 0
          %8115 = vmatpush1.bf16.msra.mxu0 0
          %8116 = vmatprep.subr.bf16.mxu0 0
          %8117 = vmatpush1.bf16.msra.mxu0 0
          %8118 = vmatprep.subr.bf16.mxu0 0
          %8119 = vmatpush1.bf16.msra.mxu0 0
          %8120 = vmatprep.subr.bf16.mxu0 0
          %8121 = vmatpush1.bf16.msra.mxu0 0
          %8122 = vmatprep.subr.bf16.mxu0 0
          %8123 = vmatpush1.bf16.msra.mxu0 0
          %8124 = vmatprep.subr.bf16.mxu0 0
          %8125 = vmatpush1.bf16.msra.mxu0 0
          %8126 = vmatprep.mubr.bf16.mxu0 0
          %8127 = vmatmul.mubr.bf16.gmra.mrb[0].mxu0 %v8092
          %v8128 = vpop.f32.mrb[0].mxu0
          %v8129 = vadd.f32 0.0, %v8128
          %v8130 = vpop.f32.mrb[0].mxu0
          %v8131 = vpop.f32.mrb[0].mxu0
          %v8132 = vpop.f32.mrb[0].mxu0
          %8133 = vdwg.mxu0
          %v8134 = vld [vmem:[#allocation43] sm:$0x1]
          %v8136 = vlaneseq
          %v8137 = vshrl.u32 %v8136, 7
          %v8138 = vsub.s32 0, %v8137
          %v8139 = vrot.slane %v8134, %v8138
          %v8141 = vmul.f32 %v8129, %v8139
          %v8142 = vld [vmem:[#allocation45] sm:$0x1]
          %v8144 = vlaneseq
          %v8145 = vshrl.u32 %v8144, 7
          %v8146 = vsub.s32 0, %v8145
          %v8147 = vrot.slane %v8142, %v8146
          %v8149 = vadd.f32 %v8141, %v8147
          %v8150 = vmax.f32 %v8149, 0.0
          %v8151 = vpack.c.bf16 %v8150, %v8150
          %v8152 = vld [vmem:[%s57] sm:$0x3]
          %v8153 = vld [vmem:[%s57 + $0x2] sm:$0x3]
          %v8154 = vld [vmem:[%s57 + $0x4] sm:$0x3]
          %v8155 = vld [vmem:[%s57 + $0x6] sm:$0x3]
          %v8156 = vld [vmem:[%s57 + $0x8] sm:$0x3]
          %v8157 = vld [vmem:[%s57 + $0xa] sm:$0x3]
          %v8158 = vld [vmem:[%s57 + $0xc] sm:$0x3]
          %v8159 = vld [vmem:[%s57 + $0xe] sm:$0x3]
          %v8160 = vunpack.c.l.s8.bf16 %v8152
          %v8161 = vunpack.c.l.s8.bf16 %v8153
          %v8162 = vunpack.c.l.s8.bf16 %v8154
          %v8163 = vunpack.c.l.s8.bf16 %v8155
          %v8164 = vunpack.c.l.s8.bf16 %v8156
          %v8165 = vunpack.c.l.s8.bf16 %v8157
          %v8166 = vunpack.c.l.s8.bf16 %v8158
          %v8167 = vunpack.c.l.s8.bf16 %v8159
          %v8176 = vunpack.c.l.b16 %v8160
          %v8177 = vunpack.c.l.b16 %v8161
          %v8178 = vunpack.c.l.b16 %v8162
          %v8179 = vunpack.c.l.b16 %v8163
          %v8180 = vunpack.c.l.b16 %v8164
          %v8181 = vunpack.c.l.b16 %v8165
          %v8182 = vunpack.c.l.b16 %v8166
          %v8183 = vunpack.c.l.b16 %v8167
          %v8184 = vpack.c.b16 %v8177, %v8176
          %v8185 = vpack.c.b16 %v8179, %v8178
          %v8186 = vpack.c.b16 %v8181, %v8180
          %v8187 = vpack.c.b16 %v8183, %v8182
          %v8193 = vsel %vm8090, %v8151, 0
          %8195 = vmatprep.subr.bf16.mxu0 0
          %8196 = vmatpush1.bf16.msra.mxu0 %v8184
          %8197 = vmatprep.subr.bf16.mxu0 0
          %8198 = vmatpush1.bf16.msra.mxu0 %v8185
          %8199 = vmatprep.subr.bf16.mxu0 0
          %8200 = vmatpush1.bf16.msra.mxu0 %v8186
          %8201 = vmatprep.subr.bf16.mxu0 0
          %8202 = vmatpush1.bf16.msra.mxu0 %v8187
          %8203 = vmatprep.subr.bf16.mxu0 0
          %8204 = vmatpush1.bf16.msra.mxu0 0
          %8205 = vmatprep.subr.bf16.mxu0 0
          %8206 = vmatpush1.bf16.msra.mxu0 0
          %8207 = vmatprep.subr.bf16.mxu0 0
          %8208 = vmatpush1.bf16.msra.mxu0 0
          %8209 = vmatprep.subr.bf16.mxu0 0
          %8210 = vmatpush1.bf16.msra.mxu0 0
          %8211 = vmatprep.subr.bf16.mxu0 0
          %8212 = vmatpush1.bf16.msra.mxu0 0
          %8213 = vmatprep.subr.bf16.mxu0 0
          %8214 = vmatpush1.bf16.msra.mxu0 0
          %8215 = vmatprep.subr.bf16.mxu0 0
          %8216 = vmatpush1.bf16.msra.mxu0 0
          %8217 = vmatprep.subr.bf16.mxu0 0
          %8218 = vmatpush1.bf16.msra.mxu0 0
          %8219 = vmatprep.subr.bf16.mxu0 0
          %8220 = vmatpush1.bf16.msra.mxu0 0
          %8221 = vmatprep.subr.bf16.mxu0 0
          %8222 = vmatpush1.bf16.msra.mxu0 0
          %8223 = vmatprep.subr.bf16.mxu0 0
          %8224 = vmatpush1.bf16.msra.mxu0 0
          %8225 = vmatprep.subr.bf16.mxu0 0
          %8226 = vmatpush1.bf16.msra.mxu0 0
          %8227 = vmatprep.mubr.bf16.mxu0 0
          %8228 = vmatmul.mubr.bf16.gmra.mrb[0].mxu0 %v8193
          %v8229 = vpop.f32.mrb[0].mxu0
          %v8230 = vadd.f32 0.0, %v8229
          %v8231 = vpop.f32.mrb[0].mxu0
          %v8232 = vpop.f32.mrb[0].mxu0
          %v8233 = vpop.f32.mrb[0].mxu0
          %8234 = vdwg.mxu0
          %v8235 = vld [vmem:[#allocation3] sm:$0x1]
          %v8237 = vlaneseq
          %v8238 = vshrl.u32 %v8237, 7
          %v8239 = vsub.s32 0, %v8238
          %v8240 = vrot.slane %v8235, %v8239
          %v8242 = vmul.f32 %v8230, %v8240
          %v8243 = vld [vmem:[#allocation4] sm:$0x1]
          %v8245 = vlaneseq
          %v8246 = vshrl.u32 %v8245, 7
          %v8247 = vsub.s32 0, %v8246
          %v8248 = vrot.slane %v8243, %v8247
          %v8250 = vadd.f32 %v8242, %v8248
          %v8251 = vxor.u32 %v8250, 2147483648
          %v8252 = vmul.f32 %v8251, 1.442695
          %v8253 = vpow.pop %v8252
          %v8254 = vadd.f32 %v8253, 1.0
          %v8255 = vrcp.pop %v8254
          %v8256 = vmul.f32 1.0, %v8255
          %vm8257 = vcmask 7168
          %8258 = vst.msk [vmem:[%s1363] sm:$0xff] %vm8257, %v8256
        $region260: #{tpu_custom_call.1} parent=143 // pred_fallthru
          _
        %p8259 = scmp.lt.s32.totalorder %s100, 0
        %s8260 = scalar_select %p8259, %s100, 0
        %s8261 = smul.addr %s8260, 8
        %s8262 = scalar_lea.vmem %s63, %s8261
        // Predicated region
        $region261: #{tpu_custom_call.1} parent=143 // pred_check
          %p8263 = pneg %p789
        $region262: #{tpu_custom_call.1} parent=143 // pred_check_branch
          %8265 = sbr.rel (%p8263) target = $region264
        $region263: #{tpu_custom_call.1} parent=143 // pred_region
          _
        $region264: #{tpu_custom_call.1} parent=143 // pred_fallthru
          _
        // Predicated region
        $region265: #{tpu_custom_call.1} parent=143 // pred_check
          %p8266 = pneg %p789
        $region266: #{tpu_custom_call.1} parent=143 // pred_check_branch
          %8268 = sbr.rel (%p8266) target = $region268
        $region267: #{tpu_custom_call.1} parent=143 // pred_region
          %p8269 = scmp.lt.s32.totalorder %s100, 0
          %s8270 = scalar_select %p8269, %s100, 0
          %s8271 = smul.addr %s8270, 8
          %s8272 = scalar_lea.vmem %s63, %s8271
        $region268: #{tpu_custom_call.1} parent=143 // pred_fallthru
          _
      $region144: #{tpu_custom_call.1} parent=5 // pred_fallthru
        _
      %p8273 = scmp.le.s32.totalorder 2, %s91
      // Predicated region
      $region269: #{tpu_custom_call.1} parent=5 // pred_check
        %p8274 = pneg %p8273
      $region270: #{tpu_custom_call.1} parent=5 // pred_check_branch
        %8276 = sbr.rel (%p8274) target = $region272
      $region271: #{tpu_custom_call.1} parent=5 // pred_region
        %s8277 = ssub.s32 %s91, 2
      $region272: #{tpu_custom_call.1} parent=5 // pred_fallthru
        _
    $region6: #{tpu_custom_call.1} parent=1 // loop_footer
      %s95 = sadd.s32 1, %s91
    $region7: #{tpu_custom_call.1} parent=1 // loop_footer_branch
      %90 = sbr.rel target = $region3
    $region8: #{tpu_custom_call.1} parent=1 // loop_exit
      _
    %8278 = vsyncpa [#allocation6], 1
    %s8279 = scalar_lea.sflag [#allocation6], 1
    %8280 = vsyncpa %s8279, 1
    %8281 = vsyncpa [#allocation8], 1
    %s8282 = scalar_lea.sflag [#allocation8], 1
    %8283 = vsyncpa %s8282, 1
    %8284 = vsyncpa [#allocation11], 1
    %8285 = vsyncpa [#allocation14], 1
    %8286 = vsyncpa [#allocation17], 1
    %8287 = vsyncpa [#allocation20], 1
    %8288 = vsyncpa [#allocation23], 1
    %8289 = vsyncpa [#allocation26], 1
    %8290 = vsyncpa [#allocation29], 1
    %8291 = vsyncpa [#allocation32], 1
    %8292 = vsyncpa [#allocation35], 1
    %8293 = vsyncpa [#allocation38], 1
    %8294 = vsyncpa [#allocation41], 1
    %8295 = vsyncpa [#allocation44], 1

</llo_original>
